<compile_context>
chip_gen: v7x
topology: tpu7x:2x2x1
jax: 0.10.0
libtpu: 0.0.40
codegen_flags: <defaults>
</compile_context>

<pallas_src>
import functools

import jax
import jax.numpy as jnp
from jax import lax
from jax.experimental import pallas as pl
from jax.experimental.pallas import tpu as pltpu  # noqa: F401

# ---------------- model config (small, consistent with the module) ------------
VOCAB = 100
MAX_POS = 64
HIDDEN = 32            # roberta hidden_size
NUM_HEADS = 2
HEAD_DIM = HIDDEN // NUM_HEADS
FFN = 64
NUM_LAYERS = 1
LSTM_HIDDEN = 16       # lstm_hidden_dim  (bidirectional -> 2*16 = 32)
NUM_ASPECTS = 4
ASPECT_DIM = 8         # aspect_embedding_dim
NUM_LABELS = 3
SENT_DIM = 32          # fc_sentiment = nn.Linear(1, 32)


# ------------------------------- fused Pallas kernel ---------------------------
def _layernorm(v, g, b, eps=1e-5):
    mean = jnp.mean(v, axis=-1, keepdims=True)
    var = jnp.mean((v - mean) ** 2, axis=-1, keepdims=True)
    return (v - mean) * lax.rsqrt(var + eps) * g + b


def _fused_forward_kernel(
    # encoder inputs
    tok_ref,             # (B*L, 1) int32 token ids
    mask_ref,            # (B, L)   int32 attention mask (1 = token, 0 = pad)
    word_emb_ref,        # (VOCAB, H)
    pos_emb_ref,         # (L, H)
    emb_ln_g_ref, emb_ln_b_ref,                 # (1, H)
    # per-layer encoder params, stacked on a leading layer axis
    wqkv_ref, bqkv_ref,                         # (NL, H, 3H), (NL, 1, 3H)
    wo_ref, bo_ref,                             # (NL, H, H),  (NL, 1, H)
    ln1_g_ref, ln1_b_ref,                       # (NL, 1, H)
    w1_ref, b1_ref,                             # (NL, H, FFN), (NL, 1, FFN)
    w2_ref, b2_ref,                             # (NL, FFN, H), (NL, 1, H)
    ln2_g_ref, ln2_b_ref,                       # (NL, 1, H)
    # bidirectional LSTM params, per-gate stacked (PyTorch gate order i,f,g,o)
    wih_f_ref, whh_f_ref, b_f_ref,              # (4, H, hid), (4, hid, hid), (4, 1, hid)
    wih_b_ref, whh_b_ref, b_b_ref,
    # classifier head inputs / params
    asp_ids_ref,                                # (B, 1) int32 aspect ids
    aspect_tab_ref,                             # (A, asp_dim)
    sent_ref,                                   # (B, 1) sentiment score
    w_sent_ref, b_sent_ref,                     # (1, 32), (1, 32)
    w_cls_ref, b_cls_ref,                       # (2*hid+asp+32, 3), (1, 3)
    # output
    o_ref,                                      # (B, NUM_LABELS)
    *, batch, seq_len, num_layers, num_heads, head_dim, hidden, lstm_hidden,
    vocab):
    f32 = jnp.float32
    scale = 1.0 / (head_dim ** 0.5)
    rows = batch * seq_len

    # -------- token + positional embeddings (gather as one-hot MXU matmul) --
    tok = tok_ref[...]                                            # (B*L, 1)
    voc_iota = lax.broadcasted_iota(jnp.int32, (rows, vocab), 1)
    onehot_tok = (voc_iota == tok).astype(f32)                    # (B*L, VOCAB)
    emb = jnp.dot(onehot_tok, word_emb_ref[...], preferred_element_type=f32)
    pos = pos_emb_ref[...]                                        # (L, H)
    emb = emb + jnp.concatenate([pos] * batch, axis=0)            # (B*L, H)
    x = _layernorm(emb, emb_ln_g_ref[...], emb_ln_b_ref[...])

    # additive attention mask built in-kernel: 0 for tokens, -1e9 for padding
    mask_all = (mask_ref[...].astype(f32) - 1.0) * 1e9            # (B, L)

    # -------- transformer encoder (layers statically unrolled) --------------
    for li in range(num_layers):
        wqkv_l, bqkv_l = wqkv_ref[li], bqkv_ref[li]
        wo_l, bo_l = wo_ref[li], bo_ref[li]
        w1_l, b1_l = w1_ref[li], b1_ref[li]
        w2_l, b2_l = w2_ref[li], b2_ref[li]

        # fused QKV projection: one MXU pass instead of three
        qkv = jnp.dot(x, wqkv_l, preferred_element_type=f32) + bqkv_l
        q = qkv[:, 0 * hidden:1 * hidden]
        k = qkv[:, 1 * hidden:2 * hidden]
        v = qkv[:, 2 * hidden:3 * hidden]

        # all batches / heads in-program; fold per-head output directly into
        # the output projection (avoids lane-axis concat and transposes)
        batch_rows = []
        for b in range(batch):
            r0, r1 = b * seq_len, (b + 1) * seq_len
            qb, kb, vb = q[r0:r1, :], k[r0:r1, :], v[r0:r1, :]
            mb = mask_all[b:b + 1, :]                             # (1, L) additive
            acc = None
            for h in range(num_heads):
                c0, c1 = h * head_dim, (h + 1) * head_dim
                qh, kh, vh = qb[:, c0:c1], kb[:, c0:c1], vb[:, c0:c1]
                s = jnp.dot(qh, kh.T, preferred_element_type=f32) * scale + mb
                s = s - jnp.max(s, axis=-1, keepdims=True)
                p = jnp.exp(s)
                p = p / jnp.sum(p, axis=-1, keepdims=True)
                oh = jnp.dot(p, vh, preferred_element_type=f32)           # (L, dh)
                contrib = jnp.dot(oh, wo_l[c0:c1, :], preferred_element_type=f32)
                acc = contrib if acc is None else acc + contrib
            batch_rows.append(acc)
        attn = jnp.concatenate(batch_rows, axis=0) + bo_l                 # (B*L, H)
        x = _layernorm(x + attn, ln1_g_ref[li], ln1_b_ref[li])

        # TODO(synk): PyTorch RoBERTa uses exact erf-GELU; tanh approximation here.
        ff = jax.nn.gelu(jnp.dot(x, w1_l, preferred_element_type=f32) + b1_l,
                         approximate=True)
        ff = jnp.dot(ff, w2_l, preferred_element_type=f32) + b2_l
        x = _layernorm(x + ff, ln2_g_ref[li], ln2_b_ref[li])

    # -------- bidirectional LSTM (only the last-timestep output is used) ----
    # Hoist the input projection out of the recurrence: one matmul per gate
    # over all timesteps; gates are per-gate weight slabs (no 16-lane slicing
    # on the serial path).  PyTorch gate order: i, f, g, o.
    xproj = []
    for g in range(4):
        xg = jnp.dot(x, wih_f_ref[g], preferred_element_type=f32) + b_f_ref[g]
        xproj.append(xg.reshape(batch, seq_len, lstm_hidden))    # (B, L, hid)

    h = jnp.zeros((batch, lstm_hidden), f32)
    c = jnp.zeros((batch, lstm_hidden), f32)
    for t in range(seq_len):        # short fixed trip count -> fully unrolled
        i_g = jax.nn.sigmoid(xproj[0][:, t, :]
                             + jnp.dot(h, whh_f_ref[0], preferred_element_type=f32))
        f_g = jax.nn.sigmoid(xproj[1][:, t, :]
                             + jnp.dot(h, whh_f_ref[1], preferred_element_type=f32))
        g_g = jnp.tanh(xproj[2][:, t, :]
                       + jnp.dot(h, whh_f_ref[2], preferred_element_type=f32))
        o_g = jax.nn.sigmoid(xproj[3][:, t, :]
                             + jnp.dot(h, whh_f_ref[3], preferred_element_type=f32))
        c = f_g * c + i_g * g_g
        h = o_g * jnp.tanh(c)
    h_fwd = h                                                     # (B, hid)

    # lstm_output[:, -1, hid:]: the reverse direction at the last timestep has
    # processed only x[L-1] from a zero initial state (h0 = c0 = 0 => f-gate moot).
    x_last = x.reshape(batch, seq_len, hidden)[:, seq_len - 1, :]           # (B, H)
    i_b = jax.nn.sigmoid(jnp.dot(x_last, wih_b_ref[0], preferred_element_type=f32) + b_b_ref[0])
    g_b = jnp.tanh(jnp.dot(x_last, wih_b_ref[2], preferred_element_type=f32) + b_b_ref[2])
    o_b = jax.nn.sigmoid(jnp.dot(x_last, wih_b_ref[3], preferred_element_type=f32) + b_b_ref[3])
    h_bwd = o_b * jnp.tanh(i_b * g_b)                             # (B, hid)

    # -------- classifier head (aspect embedding + sentiment + classifier) ---
    ids = asp_ids_ref[...]                                        # (B, 1) int32
    num_aspects = aspect_tab_ref.shape[0]
    asp_dim = aspect_tab_ref.shape[1]
    asp_iota = lax.broadcasted_iota(jnp.int32, (batch, num_aspects), 1)
    onehot_asp = (asp_iota == ids).astype(f32)
    aspect = jnp.dot(onehot_asp, aspect_tab_ref[...], preferred_element_type=f32)   # (B, asp)
    sent = (jnp.dot(sent_ref[...], w_sent_ref[...], preferred_element_type=f32)
            + b_sent_ref[...])                                                # (B, 32)

    # TODO(synk): dropout(p=0.3) is identity in eval mode; training dropout not implemented.
    # classifier on concat(h_fwd, h_bwd, aspect, sent) == row-sliced weight matmul sum
    w_cls = w_cls_ref[...]
    r0 = lstm_hidden
    r1 = 2 * lstm_hidden
    r2 = r1 + asp_dim
    logits = (jnp.dot(h_fwd, w_cls[0:r0, :], preferred_element_type=f32)
              + jnp.dot(h_bwd, w_cls[r0:r1, :], preferred_element_type=f32)
              + jnp.dot(aspect, w_cls[r1:r2, :], preferred_element_type=f32)
              + jnp.dot(sent, w_cls[r2:, :], preferred_element_type=f32)
              + b_cls_ref[...])
    o_ref[...] = logits.astype(o_ref.dtype)


# ------------------------------ model orchestration ----------------------------
@jax.jit
def forward(p, input_ids, attention_mask, aspect_ids, sentiment_score):
    batch, seq_len = input_ids.shape

    kernel = functools.partial(
        _fused_forward_kernel,
        batch=batch, seq_len=seq_len, num_layers=NUM_LAYERS,
        num_heads=NUM_HEADS, head_dim=HEAD_DIM, hidden=HIDDEN,
        lstm_hidden=LSTM_HIDDEN, vocab=VOCAB)

    return pl.pallas_call(
        kernel,
        out_shape=jax.ShapeDtypeStruct((batch, NUM_LABELS), jnp.float32),
    )(
        input_ids.reshape(batch * seq_len, 1).astype(jnp.int32),
        attention_mask.astype(jnp.int32),
        p["word_emb"], p["pos_emb"][:seq_len],
        p["emb_ln_g"], p["emb_ln_b"],
        p["wqkv"], p["bqkv"], p["wo"], p["bo"], p["ln1_g"], p["ln1_b"],
        p["w1"], p["b1"], p["w2"], p["b2"], p["ln2_g"], p["ln2_b"],
        p["lstm_wih_f"], p["lstm_whh_f"], p["lstm_b_f"],
        p["lstm_wih_b"], p["lstm_whh_b"], p["lstm_b_b"],
        aspect_ids.reshape(batch, 1).astype(jnp.int32),
        p["aspect_table"],
        sentiment_score.reshape(batch, 1).astype(jnp.float32),
        p["w_sent"], p["b_sent"], p["w_cls"], p["b_cls"],
    )


# ------------------------------- parameter init ---------------------------------
def init_params(key):
    # TODO(synk): pretrained RoBERTa weights replaced by deterministic synthetic init.
    keys = iter(jax.random.split(key, 64))

    def nrm(shape, scale=0.02):
        return scale * jax.random.normal(next(keys), shape, jnp.float32)

    p = {
        "word_emb": nrm((VOCAB, HIDDEN)),
        "pos_emb": nrm((MAX_POS, HIDDEN)),
        "emb_ln_g": jnp.ones((1, HIDDEN), jnp.float32),
        "emb_ln_b": jnp.zeros((1, HIDDEN), jnp.float32),
    }

    # encoder layer params, stacked on a leading layer axis (QKV fused)
    stacks = {name: [] for name in
              ["wqkv", "bqkv", "wo", "bo", "ln1_g", "ln1_b",
               "w1", "b1", "w2", "b2", "ln2_g", "ln2_b"]}
    for _ in range(NUM_LAYERS):
        wq, wk, wv = nrm((HIDDEN, HIDDEN)), nrm((HIDDEN, HIDDEN)), nrm((HIDDEN, HIDDEN))
        stacks["wqkv"].append(jnp.concatenate([wq, wk, wv], axis=1))        # (H, 3H)
        stacks["bqkv"].append(jnp.zeros((1, 3 * HIDDEN), jnp.float32))
        stacks["wo"].append(nrm((HIDDEN, HIDDEN)))
        stacks["bo"].append(jnp.zeros((1, HIDDEN), jnp.float32))
        stacks["ln1_g"].append(jnp.ones((1, HIDDEN), jnp.float32))
        stacks["ln1_b"].append(jnp.zeros((1, HIDDEN), jnp.float32))
        stacks["w1"].append(nrm((HIDDEN, FFN)))
        stacks["b1"].append(jnp.zeros((1, FFN), jnp.float32))
        stacks["w2"].append(nrm((FFN, HIDDEN)))
        stacks["b2"].append(jnp.zeros((1, HIDDEN), jnp.float32))
        stacks["ln2_g"].append(jnp.ones((1, HIDDEN), jnp.float32))
        stacks["ln2_b"].append(jnp.zeros((1, HIDDEN), jnp.float32))
    for name, lst in stacks.items():
        p[name] = jnp.stack(lst, axis=0)

    # bidirectional LSTM, PyTorch gate order (i, f, g, o), weights pre-transposed
    # and split per gate (stacked on a leading gate axis); bias = b_ih + b_hh.
    def lstm_dir():
        wih = nrm((HIDDEN, 4 * LSTM_HIDDEN), 0.1)
        whh = nrm((LSTM_HIDDEN, 4 * LSTM_HIDDEN), 0.1)
        b = nrm((1, 4 * LSTM_HIDDEN), 0.1)
        split = lambda m: jnp.stack(
            [m[:, g * LSTM_HIDDEN:(g + 1) * LSTM_HIDDEN] for g in range(4)], axis=0)
        return split(wih), split(whh), split(b)

    p["lstm_wih_f"], p["lstm_whh_f"], p["lstm_b_f"] = lstm_dir()
    p["lstm_wih_b"], p["lstm_whh_b"], p["lstm_b_b"] = lstm_dir()

    p["aspect_table"] = nrm((NUM_ASPECTS, ASPECT_DIM), 1.0)
    p["w_sent"] = nrm((1, SENT_DIM), 0.5)
    p["b_sent"] = nrm((1, SENT_DIM), 0.5)
    p["w_cls"] = nrm((2 * LSTM_HIDDEN + ASPECT_DIM + SENT_DIM, NUM_LABELS), 0.1)
    p["b_cls"] = jnp.zeros((1, NUM_LABELS), jnp.float32)
    return p


# ------------------------------------ main ---------------------------------------
if __name__ == "__main__":
    root = jax.random.PRNGKey(0)
    pkey, dkey = jax.random.split(root)
    params = init_params(pkey)

    B, L = 2, 8
    k1, k2, k3 = jax.random.split(dkey, 3)
    input_ids = jax.random.randint(k1, (B, L), 0, VOCAB, dtype=jnp.int32)
    attention_mask = jnp.ones((B, L), dtype=jnp.int32).at[1, 6:].set(0)
    aspect_ids = jax.random.randint(k2, (B,), 0, NUM_ASPECTS, dtype=jnp.int32)
    sentiment_score = jax.random.uniform(k3, (B,), jnp.float32, -1.0, 1.0)

    logits = forward(params, input_ids, attention_mask, aspect_ids, sentiment_score)
    logits = jax.block_until_ready(logits)
    assert logits.shape == (B, NUM_LABELS) and logits.dtype == jnp.float32
    print("KERNEL_OK")
</pallas_src>

<mosaic_0001>
module attributes {stable_mosaic.version = 11 : i64} {
  func.func @_fused_forward_kernel(%arg0: memref<16x1xi32, #tpu.memory_space<vmem>>, %arg1: memref<2x8xi32, #tpu.memory_space<vmem>>, %arg2: memref<100x32xf32, #tpu.memory_space<vmem>>, %arg3: memref<8x32xf32, #tpu.memory_space<vmem>>, %arg4: memref<1x32xf32, #tpu.memory_space<vmem>>, %arg5: memref<1x32xf32, #tpu.memory_space<vmem>>, %arg6: memref<1x32x96xf32, #tpu.memory_space<vmem>>, %arg7: memref<1x1x96xf32, #tpu.memory_space<vmem>>, %arg8: memref<1x32x32xf32, #tpu.memory_space<vmem>>, %arg9: memref<1x1x32xf32, #tpu.memory_space<vmem>>, %arg10: memref<1x1x32xf32, #tpu.memory_space<vmem>>, %arg11: memref<1x1x32xf32, #tpu.memory_space<vmem>>, %arg12: memref<1x32x64xf32, #tpu.memory_space<vmem>>, %arg13: memref<1x1x64xf32, #tpu.memory_space<vmem>>, %arg14: memref<1x64x32xf32, #tpu.memory_space<vmem>>, %arg15: memref<1x1x32xf32, #tpu.memory_space<vmem>>, %arg16: memref<1x1x32xf32, #tpu.memory_space<vmem>>, %arg17: memref<1x1x32xf32, #tpu.memory_space<vmem>>, %arg18: memref<4x32x16xf32, #tpu.memory_space<vmem>>, %arg19: memref<4x16x16xf32, #tpu.memory_space<vmem>>, %arg20: memref<4x1x16xf32, #tpu.memory_space<vmem>>, %arg21: memref<4x32x16xf32, #tpu.memory_space<vmem>>, %arg22: memref<4x16x16xf32, #tpu.memory_space<vmem>>, %arg23: memref<4x1x16xf32, #tpu.memory_space<vmem>>, %arg24: memref<2x1xi32, #tpu.memory_space<vmem>>, %arg25: memref<4x8xf32, #tpu.memory_space<vmem>>, %arg26: memref<2x1xf32, #tpu.memory_space<vmem>>, %arg27: memref<1x32xf32, #tpu.memory_space<vmem>>, %arg28: memref<1x32xf32, #tpu.memory_space<vmem>>, %arg29: memref<72x3xf32, #tpu.memory_space<vmem>>, %arg30: memref<1x3xf32, #tpu.memory_space<vmem>>, %arg31: memref<2x3xf32, #tpu.memory_space<vmem>>) attributes {dimension_semantics = [], scalar_prefetch = 0 : i64, scratch_operands = 0 : i64, tpu.core_type = #tpu.core_type<tc>} {
    %c0 = arith.constant 0 : index
    %c0_0 = arith.constant 0 : index
    %0 = vector.load %arg0[%c0, %c0_0] : memref<16x1xi32, #tpu.memory_space<vmem>>, vector<16x1xi32>
    %1 = tpu.iota {dimensions = array<i32: 1>} : vector<16x100xi32>
    %2 = vector.broadcast %0 : vector<16x1xi32> to vector<16x100xi32>
    %3 = arith.cmpi eq, %1, %2 : vector<16x100xi32>
    %4 = arith.extui %3 : vector<16x100xi1> to vector<16x100xi32>
    %5 = arith.sitofp %4 : vector<16x100xi32> to vector<16x100xf32>
    %c0_1 = arith.constant 0 : index
    %c0_2 = arith.constant 0 : index
    %6 = vector.load %arg2[%c0_1, %c0_2] : memref<100x32xf32, #tpu.memory_space<vmem>>, vector<100x32xf32>
    %cst = arith.constant dense<0.000000e+00> : vector<16x32xf32>
    %7 = tpu.matmul %5, %6, %cst {dimension_numbers = #tpu.dot_dimension_numbers<[1], [0], [0], [1], [0, 0, 1, 1], [], []>} : vector<16x100xf32>, vector<100x32xf32>, vector<16x32xf32> -> vector<16x32xf32>
    %c0_3 = arith.constant 0 : index
    %c0_4 = arith.constant 0 : index
    %8 = vector.load %arg3[%c0_3, %c0_4] : memref<8x32xf32, #tpu.memory_space<vmem>>, vector<8x32xf32>
    %9 = tpu.concatenate %8, %8 in 0 : vector<8x32xf32>, vector<8x32xf32> -> vector<16x32xf32>
    %10 = arith.addf %7, %9 : vector<16x32xf32>
    %c0_5 = arith.constant 0 : index
    %c0_6 = arith.constant 0 : index
    %11 = vector.load %arg4[%c0_5, %c0_6] : memref<1x32xf32, #tpu.memory_space<vmem>>, vector<1x32xf32>
    %c0_7 = arith.constant 0 : index
    %c0_8 = arith.constant 0 : index
    %12 = vector.load %arg5[%c0_7, %c0_8] : memref<1x32xf32, #tpu.memory_space<vmem>>, vector<1x32xf32>
    %cst_9 = arith.constant dense<0.000000e+00> : vector<16xf32>
    %13 = vector.multi_reduction <add>, %10, %cst_9 [1] : vector<16x32xf32> to vector<16xf32>
    %14 = vector.shape_cast %13 : vector<16xf32> to vector<16x1xf32>
    %cst_10 = arith.constant 3.200000e+01 : f32
    %15 = vector.broadcast %cst_10 : f32 to vector<16x1xf32>
    %16 = arith.divf %14, %15 : vector<16x1xf32>
    %17 = vector.broadcast %16 : vector<16x1xf32> to vector<16x32xf32>
    %18 = arith.subf %10, %17 : vector<16x32xf32>
    %19 = arith.mulf %18, %18 : vector<16x32xf32>
    %cst_11 = arith.constant dense<0.000000e+00> : vector<16xf32>
    %20 = vector.multi_reduction <add>, %19, %cst_11 [1] : vector<16x32xf32> to vector<16xf32>
    %21 = vector.shape_cast %20 : vector<16xf32> to vector<16x1xf32>
    %cst_12 = arith.constant 3.200000e+01 : f32
    %22 = vector.broadcast %cst_12 : f32 to vector<16x1xf32>
    %23 = arith.divf %21, %22 : vector<16x1xf32>
    %24 = vector.broadcast %16 : vector<16x1xf32> to vector<16x32xf32>
    %25 = arith.subf %10, %24 : vector<16x32xf32>
    %cst_13 = arith.constant 9.99999974E-6 : f32
    %26 = vector.broadcast %cst_13 : f32 to vector<16x1xf32>
    %27 = arith.addf %23, %26 : vector<16x1xf32>
    %28 = math.rsqrt %27 : vector<16x1xf32>
    %29 = vector.broadcast %28 : vector<16x1xf32> to vector<16x32xf32>
    %30 = arith.mulf %25, %29 : vector<16x32xf32>
    %31 = vector.broadcast %11 : vector<1x32xf32> to vector<16x32xf32>
    %32 = arith.mulf %30, %31 : vector<16x32xf32>
    %33 = vector.broadcast %12 : vector<1x32xf32> to vector<16x32xf32>
    %34 = arith.addf %32, %33 : vector<16x32xf32>
    %c0_14 = arith.constant 0 : index
    %c0_15 = arith.constant 0 : index
    %35 = vector.load %arg1[%c0_14, %c0_15] : memref<2x8xi32, #tpu.memory_space<vmem>>, vector<2x8xi32>
    %36 = arith.sitofp %35 : vector<2x8xi32> to vector<2x8xf32>
    %cst_16 = arith.constant 1.000000e+00 : f32
    %37 = vector.broadcast %cst_16 : f32 to vector<2x8xf32>
    %38 = arith.subf %36, %37 : vector<2x8xf32>
    %cst_17 = arith.constant 1.000000e+09 : f32
    %39 = vector.broadcast %cst_17 : f32 to vector<2x8xf32>
    %40 = arith.mulf %38, %39 : vector<2x8xf32>
    %c0_18 = arith.constant 0 : index
    %c0_19 = arith.constant 0 : index
    %c0_20 = arith.constant 0 : index
    %41 = vector.load %arg6[%c0_18, %c0_19, %c0_20] : memref<1x32x96xf32, #tpu.memory_space<vmem>>, vector<1x32x96xf32>
    %42 = vector.shape_cast %41 : vector<1x32x96xf32> to vector<32x96xf32>
    %c0_21 = arith.constant 0 : index
    %c0_22 = arith.constant 0 : index
    %c0_23 = arith.constant 0 : index
    %43 = vector.load %arg7[%c0_21, %c0_22, %c0_23] : memref<1x1x96xf32, #tpu.memory_space<vmem>>, vector<1x1x96xf32>
    %44 = vector.shape_cast %43 : vector<1x1x96xf32> to vector<1x96xf32>
    %c0_24 = arith.constant 0 : index
    %c0_25 = arith.constant 0 : index
    %c0_26 = arith.constant 0 : index
    %45 = vector.load %arg8[%c0_24, %c0_25, %c0_26] : memref<1x32x32xf32, #tpu.memory_space<vmem>>, vector<1x32x32xf32>
    %46 = vector.shape_cast %45 : vector<1x32x32xf32> to vector<32x32xf32>
    %c0_27 = arith.constant 0 : index
    %c0_28 = arith.constant 0 : index
    %c0_29 = arith.constant 0 : index
    %47 = vector.load %arg9[%c0_27, %c0_28, %c0_29] : memref<1x1x32xf32, #tpu.memory_space<vmem>>, vector<1x1x32xf32>
    %48 = vector.shape_cast %47 : vector<1x1x32xf32> to vector<1x32xf32>
    %c0_30 = arith.constant 0 : index
    %c0_31 = arith.constant 0 : index
    %c0_32 = arith.constant 0 : index
    %49 = vector.load %arg12[%c0_30, %c0_31, %c0_32] : memref<1x32x64xf32, #tpu.memory_space<vmem>>, vector<1x32x64xf32>
    %50 = vector.shape_cast %49 : vector<1x32x64xf32> to vector<32x64xf32>
    %c0_33 = arith.constant 0 : index
    %c0_34 = arith.constant 0 : index
    %c0_35 = arith.constant 0 : index
    %51 = vector.load %arg13[%c0_33, %c0_34, %c0_35] : memref<1x1x64xf32, #tpu.memory_space<vmem>>, vector<1x1x64xf32>
    %52 = vector.shape_cast %51 : vector<1x1x64xf32> to vector<1x64xf32>
    %c0_36 = arith.constant 0 : index
    %c0_37 = arith.constant 0 : index
    %c0_38 = arith.constant 0 : index
    %53 = vector.load %arg14[%c0_36, %c0_37, %c0_38] : memref<1x64x32xf32, #tpu.memory_space<vmem>>, vector<1x64x32xf32>
    %54 = vector.shape_cast %53 : vector<1x64x32xf32> to vector<64x32xf32>
    %c0_39 = arith.constant 0 : index
    %c0_40 = arith.constant 0 : index
    %c0_41 = arith.constant 0 : index
    %55 = vector.load %arg15[%c0_39, %c0_40, %c0_41] : memref<1x1x32xf32, #tpu.memory_space<vmem>>, vector<1x1x32xf32>
    %56 = vector.shape_cast %55 : vector<1x1x32xf32> to vector<1x32xf32>
    %cst_42 = arith.constant dense<0.000000e+00> : vector<16x96xf32>
    %57 = tpu.matmul %34, %42, %cst_42 {dimension_numbers = #tpu.dot_dimension_numbers<[1], [0], [0], [1], [0, 0, 1, 1], [], []>} : vector<16x32xf32>, vector<32x96xf32>, vector<16x96xf32> -> vector<16x96xf32>
    %58 = vector.broadcast %44 : vector<1x96xf32> to vector<16x96xf32>
    %59 = arith.addf %57, %58 : vector<16x96xf32>
    %60 = vector.extract_strided_slice %59 {offsets = [0, 0], sizes = [16, 32], strides = [1, 1]} : vector<16x96xf32> to vector<16x32xf32>
    %61 = vector.extract_strided_slice %59 {offsets = [0, 32], sizes = [16, 32], strides = [1, 1]} : vector<16x96xf32> to vector<16x32xf32>
    %62 = vector.extract_strided_slice %59 {offsets = [0, 64], sizes = [16, 32], strides = [1, 1]} : vector<16x96xf32> to vector<16x32xf32>
    %63 = vector.extract_strided_slice %60 {offsets = [0, 0], sizes = [8, 32], strides = [1, 1]} : vector<16x32xf32> to vector<8x32xf32>
    %64 = vector.extract_strided_slice %61 {offsets = [0, 0], sizes = [8, 32], strides = [1, 1]} : vector<16x32xf32> to vector<8x32xf32>
    %65 = vector.extract_strided_slice %62 {offsets = [0, 0], sizes = [8, 32], strides = [1, 1]} : vector<16x32xf32> to vector<8x32xf32>
    %66 = vector.extract_strided_slice %40 {offsets = [0, 0], sizes = [1, 8], strides = [1, 1]} : vector<2x8xf32> to vector<1x8xf32>
    %67 = vector.extract_strided_slice %63 {offsets = [0, 0], sizes = [8, 16], strides = [1, 1]} : vector<8x32xf32> to vector<8x16xf32>
    %68 = vector.extract_strided_slice %64 {offsets = [0, 0], sizes = [8, 16], strides = [1, 1]} : vector<8x32xf32> to vector<8x16xf32>
    %69 = vector.extract_strided_slice %65 {offsets = [0, 0], sizes = [8, 16], strides = [1, 1]} : vector<8x32xf32> to vector<8x16xf32>
    %70 = tpu.transpose %68, [1, 0] : vector<8x16xf32> -> vector<16x8xf32>
    %cst_43 = arith.constant dense<0.000000e+00> : vector<8x8xf32>
    %71 = tpu.matmul %67, %70, %cst_43 {dimension_numbers = #tpu.dot_dimension_numbers<[1], [0], [0], [1], [0, 0, 1, 1], [], []>} : vector<8x16xf32>, vector<16x8xf32>, vector<8x8xf32> -> vector<8x8xf32>
    %cst_44 = arith.constant 2.500000e-01 : f32
    %72 = vector.broadcast %cst_44 : f32 to vector<8x8xf32>
    %73 = arith.mulf %71, %72 : vector<8x8xf32>
    %74 = vector.broadcast %66 : vector<1x8xf32> to vector<8x8xf32>
    %75 = arith.addf %73, %74 : vector<8x8xf32>
    %cst_45 = arith.constant dense<0xFF800000> : vector<8xf32>
    %76 = vector.multi_reduction <maximumf>, %75, %cst_45 [1] : vector<8x8xf32> to vector<8xf32>
    %77 = vector.shape_cast %76 : vector<8xf32> to vector<8x1xf32>
    %78 = vector.broadcast %77 : vector<8x1xf32> to vector<8x8xf32>
    %79 = arith.subf %75, %78 : vector<8x8xf32>
    %80 = math.exp %79 : vector<8x8xf32>
    %cst_46 = arith.constant dense<0.000000e+00> : vector<8xf32>
    %81 = vector.multi_reduction <add>, %80, %cst_46 [1] : vector<8x8xf32> to vector<8xf32>
    %82 = vector.shape_cast %81 : vector<8xf32> to vector<8x1xf32>
    %83 = vector.broadcast %82 : vector<8x1xf32> to vector<8x8xf32>
    %84 = arith.divf %80, %83 : vector<8x8xf32>
    %cst_47 = arith.constant dense<0.000000e+00> : vector<8x16xf32>
    %85 = tpu.matmul %84, %69, %cst_47 {dimension_numbers = #tpu.dot_dimension_numbers<[1], [0], [0], [1], [0, 0, 1, 1], [], []>} : vector<8x8xf32>, vector<8x16xf32>, vector<8x16xf32> -> vector<8x16xf32>
    %86 = vector.extract_strided_slice %46 {offsets = [0, 0], sizes = [16, 32], strides = [1, 1]} : vector<32x32xf32> to vector<16x32xf32>
    %cst_48 = arith.constant dense<0.000000e+00> : vector<8x32xf32>
    %87 = tpu.matmul %85, %86, %cst_48 {dimension_numbers = #tpu.dot_dimension_numbers<[1], [0], [0], [1], [0, 0, 1, 1], [], []>} : vector<8x16xf32>, vector<16x32xf32>, vector<8x32xf32> -> vector<8x32xf32>
    %88 = vector.extract_strided_slice %63 {offsets = [0, 16], sizes = [8, 16], strides = [1, 1]} : vector<8x32xf32> to vector<8x16xf32>
    %89 = vector.extract_strided_slice %64 {offsets = [0, 16], sizes = [8, 16], strides = [1, 1]} : vector<8x32xf32> to vector<8x16xf32>
    %90 = vector.extract_strided_slice %65 {offsets = [0, 16], sizes = [8, 16], strides = [1, 1]} : vector<8x32xf32> to vector<8x16xf32>
    %91 = tpu.transpose %89, [1, 0] : vector<8x16xf32> -> vector<16x8xf32>
    %cst_49 = arith.constant dense<0.000000e+00> : vector<8x8xf32>
    %92 = tpu.matmul %88, %91, %cst_49 {dimension_numbers = #tpu.dot_dimension_numbers<[1], [0], [0], [1], [0, 0, 1, 1], [], []>} : vector<8x16xf32>, vector<16x8xf32>, vector<8x8xf32> -> vector<8x8xf32>
    %cst_50 = arith.constant 2.500000e-01 : f32
    %93 = vector.broadcast %cst_50 : f32 to vector<8x8xf32>
    %94 = arith.mulf %92, %93 : vector<8x8xf32>
    %95 = vector.broadcast %66 : vector<1x8xf32> to vector<8x8xf32>
    %96 = arith.addf %94, %95 : vector<8x8xf32>
    %cst_51 = arith.constant dense<0xFF800000> : vector<8xf32>
    %97 = vector.multi_reduction <maximumf>, %96, %cst_51 [1] : vector<8x8xf32> to vector<8xf32>
    %98 = vector.shape_cast %97 : vector<8xf32> to vector<8x1xf32>
    %99 = vector.broadcast %98 : vector<8x1xf32> to vector<8x8xf32>
    %100 = arith.subf %96, %99 : vector<8x8xf32>
    %101 = math.exp %100 : vector<8x8xf32>
    %cst_52 = arith.constant dense<0.000000e+00> : vector<8xf32>
    %102 = vector.multi_reduction <add>, %101, %cst_52 [1] : vector<8x8xf32> to vector<8xf32>
    %103 = vector.shape_cast %102 : vector<8xf32> to vector<8x1xf32>
    %104 = vector.broadcast %103 : vector<8x1xf32> to vector<8x8xf32>
    %105 = arith.divf %101, %104 : vector<8x8xf32>
    %cst_53 = arith.constant dense<0.000000e+00> : vector<8x16xf32>
    %106 = tpu.matmul %105, %90, %cst_53 {dimension_numbers = #tpu.dot_dimension_numbers<[1], [0], [0], [1], [0, 0, 1, 1], [], []>} : vector<8x8xf32>, vector<8x16xf32>, vector<8x16xf32> -> vector<8x16xf32>
    %107 = vector.extract_strided_slice %46 {offsets = [16, 0], sizes = [16, 32], strides = [1, 1]} : vector<32x32xf32> to vector<16x32xf32>
    %cst_54 = arith.constant dense<0.000000e+00> : vector<8x32xf32>
    %108 = tpu.matmul %106, %107, %cst_54 {dimension_numbers = #tpu.dot_dimension_numbers<[1], [0], [0], [1], [0, 0, 1, 1], [], []>} : vector<8x16xf32>, vector<16x32xf32>, vector<8x32xf32> -> vector<8x32xf32>
    %109 = arith.addf %87, %108 : vector<8x32xf32>
    %110 = vector.extract_strided_slice %60 {offsets = [8, 0], sizes = [8, 32], strides = [1, 1]} : vector<16x32xf32> to vector<8x32xf32>
    %111 = vector.extract_strided_slice %61 {offsets = [8, 0], sizes = [8, 32], strides = [1, 1]} : vector<16x32xf32> to vector<8x32xf32>
    %112 = vector.extract_strided_slice %62 {offsets = [8, 0], sizes = [8, 32], strides = [1, 1]} : vector<16x32xf32> to vector<8x32xf32>
    %113 = vector.extract_strided_slice %40 {offsets = [1, 0], sizes = [1, 8], strides = [1, 1]} : vector<2x8xf32> to vector<1x8xf32>
    %114 = vector.extract_strided_slice %110 {offsets = [0, 0], sizes = [8, 16], strides = [1, 1]} : vector<8x32xf32> to vector<8x16xf32>
    %115 = vector.extract_strided_slice %111 {offsets = [0, 0], sizes = [8, 16], strides = [1, 1]} : vector<8x32xf32> to vector<8x16xf32>
    %116 = vector.extract_strided_slice %112 {offsets = [0, 0], sizes = [8, 16], strides = [1, 1]} : vector<8x32xf32> to vector<8x16xf32>
    %117 = tpu.transpose %115, [1, 0] : vector<8x16xf32> -> vector<16x8xf32>
    %cst_55 = arith.constant dense<0.000000e+00> : vector<8x8xf32>
    %118 = tpu.matmul %114, %117, %cst_55 {dimension_numbers = #tpu.dot_dimension_numbers<[1], [0], [0], [1], [0, 0, 1, 1], [], []>} : vector<8x16xf32>, vector<16x8xf32>, vector<8x8xf32> -> vector<8x8xf32>
    %cst_56 = arith.constant 2.500000e-01 : f32
    %119 = vector.broadcast %cst_56 : f32 to vector<8x8xf32>
    %120 = arith.mulf %118, %119 : vector<8x8xf32>
    %121 = vector.broadcast %113 : vector<1x8xf32> to vector<8x8xf32>
    %122 = arith.addf %120, %121 : vector<8x8xf32>
    %cst_57 = arith.constant dense<0xFF800000> : vector<8xf32>
    %123 = vector.multi_reduction <maximumf>, %122, %cst_57 [1] : vector<8x8xf32> to vector<8xf32>
    %124 = vector.shape_cast %123 : vector<8xf32> to vector<8x1xf32>
    %125 = vector.broadcast %124 : vector<8x1xf32> to vector<8x8xf32>
    %126 = arith.subf %122, %125 : vector<8x8xf32>
    %127 = math.exp %126 : vector<8x8xf32>
    %cst_58 = arith.constant dense<0.000000e+00> : vector<8xf32>
    %128 = vector.multi_reduction <add>, %127, %cst_58 [1] : vector<8x8xf32> to vector<8xf32>
    %129 = vector.shape_cast %128 : vector<8xf32> to vector<8x1xf32>
    %130 = vector.broadcast %129 : vector<8x1xf32> to vector<8x8xf32>
    %131 = arith.divf %127, %130 : vector<8x8xf32>
    %cst_59 = arith.constant dense<0.000000e+00> : vector<8x16xf32>
    %132 = tpu.matmul %131, %116, %cst_59 {dimension_numbers = #tpu.dot_dimension_numbers<[1], [0], [0], [1], [0, 0, 1, 1], [], []>} : vector<8x8xf32>, vector<8x16xf32>, vector<8x16xf32> -> vector<8x16xf32>
    %133 = vector.extract_strided_slice %46 {offsets = [0, 0], sizes = [16, 32], strides = [1, 1]} : vector<32x32xf32> to vector<16x32xf32>
    %cst_60 = arith.constant dense<0.000000e+00> : vector<8x32xf32>
    %134 = tpu.matmul %132, %133, %cst_60 {dimension_numbers = #tpu.dot_dimension_numbers<[1], [0], [0], [1], [0, 0, 1, 1], [], []>} : vector<8x16xf32>, vector<16x32xf32>, vector<8x32xf32> -> vector<8x32xf32>
    %135 = vector.extract_strided_slice %110 {offsets = [0, 16], sizes = [8, 16], strides = [1, 1]} : vector<8x32xf32> to vector<8x16xf32>
    %136 = vector.extract_strided_slice %111 {offsets = [0, 16], sizes = [8, 16], strides = [1, 1]} : vector<8x32xf32> to vector<8x16xf32>
    %137 = vector.extract_strided_slice %112 {offsets = [0, 16], sizes = [8, 16], strides = [1, 1]} : vector<8x32xf32> to vector<8x16xf32>
    %138 = tpu.transpose %136, [1, 0] : vector<8x16xf32> -> vector<16x8xf32>
    %cst_61 = arith.constant dense<0.000000e+00> : vector<8x8xf32>
    %139 = tpu.matmul %135, %138, %cst_61 {dimension_numbers = #tpu.dot_dimension_numbers<[1], [0], [0], [1], [0, 0, 1, 1], [], []>} : vector<8x16xf32>, vector<16x8xf32>, vector<8x8xf32> -> vector<8x8xf32>
    %cst_62 = arith.constant 2.500000e-01 : f32
    %140 = vector.broadcast %cst_62 : f32 to vector<8x8xf32>
    %141 = arith.mulf %139, %140 : vector<8x8xf32>
    %142 = vector.broadcast %113 : vector<1x8xf32> to vector<8x8xf32>
    %143 = arith.addf %141, %142 : vector<8x8xf32>
    %cst_63 = arith.constant dense<0xFF800000> : vector<8xf32>
    %144 = vector.multi_reduction <maximumf>, %143, %cst_63 [1] : vector<8x8xf32> to vector<8xf32>
    %145 = vector.shape_cast %144 : vector<8xf32> to vector<8x1xf32>
    %146 = vector.broadcast %145 : vector<8x1xf32> to vector<8x8xf32>
    %147 = arith.subf %143, %146 : vector<8x8xf32>
    %148 = math.exp %147 : vector<8x8xf32>
    %cst_64 = arith.constant dense<0.000000e+00> : vector<8xf32>
    %149 = vector.multi_reduction <add>, %148, %cst_64 [1] : vector<8x8xf32> to vector<8xf32>
    %150 = vector.shape_cast %149 : vector<8xf32> to vector<8x1xf32>
    %151 = vector.broadcast %150 : vector<8x1xf32> to vector<8x8xf32>
    %152 = arith.divf %148, %151 : vector<8x8xf32>
    %cst_65 = arith.constant dense<0.000000e+00> : vector<8x16xf32>
    %153 = tpu.matmul %152, %137, %cst_65 {dimension_numbers = #tpu.dot_dimension_numbers<[1], [0], [0], [1], [0, 0, 1, 1], [], []>} : vector<8x8xf32>, vector<8x16xf32>, vector<8x16xf32> -> vector<8x16xf32>
    %154 = vector.extract_strided_slice %46 {offsets = [16, 0], sizes = [16, 32], strides = [1, 1]} : vector<32x32xf32> to vector<16x32xf32>
    %cst_66 = arith.constant dense<0.000000e+00> : vector<8x32xf32>
    %155 = tpu.matmul %153, %154, %cst_66 {dimension_numbers = #tpu.dot_dimension_numbers<[1], [0], [0], [1], [0, 0, 1, 1], [], []>} : vector<8x16xf32>, vector<16x32xf32>, vector<8x32xf32> -> vector<8x32xf32>
    %156 = arith.addf %134, %155 : vector<8x32xf32>
    %157 = tpu.concatenate %109, %156 in 0 : vector<8x32xf32>, vector<8x32xf32> -> vector<16x32xf32>
    %158 = vector.broadcast %48 : vector<1x32xf32> to vector<16x32xf32>
    %159 = arith.addf %157, %158 : vector<16x32xf32>
    %160 = arith.addf %34, %159 : vector<16x32xf32>
    %c0_67 = arith.constant 0 : index
    %c0_68 = arith.constant 0 : index
    %c0_69 = arith.constant 0 : index
    %161 = vector.load %arg10[%c0_67, %c0_68, %c0_69] : memref<1x1x32xf32, #tpu.memory_space<vmem>>, vector<1x1x32xf32>
    %162 = vector.shape_cast %161 : vector<1x1x32xf32> to vector<1x32xf32>
    %c0_70 = arith.constant 0 : index
    %c0_71 = arith.constant 0 : index
    %c0_72 = arith.constant 0 : index
    %163 = vector.load %arg11[%c0_70, %c0_71, %c0_72] : memref<1x1x32xf32, #tpu.memory_space<vmem>>, vector<1x1x32xf32>
    %164 = vector.shape_cast %163 : vector<1x1x32xf32> to vector<1x32xf32>
    %cst_73 = arith.constant dense<0.000000e+00> : vector<16xf32>
    %165 = vector.multi_reduction <add>, %160, %cst_73 [1] : vector<16x32xf32> to vector<16xf32>
    %166 = vector.shape_cast %165 : vector<16xf32> to vector<16x1xf32>
    %cst_74 = arith.constant 3.200000e+01 : f32
    %167 = vector.broadcast %cst_74 : f32 to vector<16x1xf32>
    %168 = arith.divf %166, %167 : vector<16x1xf32>
    %169 = vector.broadcast %168 : vector<16x1xf32> to vector<16x32xf32>
    %170 = arith.subf %160, %169 : vector<16x32xf32>
    %171 = arith.mulf %170, %170 : vector<16x32xf32>
    %cst_75 = arith.constant dense<0.000000e+00> : vector<16xf32>
    %172 = vector.multi_reduction <add>, %171, %cst_75 [1] : vector<16x32xf32> to vector<16xf32>
    %173 = vector.shape_cast %172 : vector<16xf32> to vector<16x1xf32>
    %cst_76 = arith.constant 3.200000e+01 : f32
    %174 = vector.broadcast %cst_76 : f32 to vector<16x1xf32>
    %175 = arith.divf %173, %174 : vector<16x1xf32>
    %176 = vector.broadcast %168 : vector<16x1xf32> to vector<16x32xf32>
    %177 = arith.subf %160, %176 : vector<16x32xf32>
    %cst_77 = arith.constant 9.99999974E-6 : f32
    %178 = vector.broadcast %cst_77 : f32 to vector<16x1xf32>
    %179 = arith.addf %175, %178 : vector<16x1xf32>
    %180 = math.rsqrt %179 : vector<16x1xf32>
    %181 = vector.broadcast %180 : vector<16x1xf32> to vector<16x32xf32>
    %182 = arith.mulf %177, %181 : vector<16x32xf32>
    %183 = vector.broadcast %162 : vector<1x32xf32> to vector<16x32xf32>
    %184 = arith.mulf %182, %183 : vector<16x32xf32>
    %185 = vector.broadcast %164 : vector<1x32xf32> to vector<16x32xf32>
    %186 = arith.addf %184, %185 : vector<16x32xf32>
    %cst_78 = arith.constant dense<0.000000e+00> : vector<16x64xf32>
    %187 = tpu.matmul %186, %50, %cst_78 {dimension_numbers = #tpu.dot_dimension_numbers<[1], [0], [0], [1], [0, 0, 1, 1], [], []>} : vector<16x32xf32>, vector<32x64xf32>, vector<16x64xf32> -> vector<16x64xf32>
    %188 = vector.broadcast %52 : vector<1x64xf32> to vector<16x64xf32>
    %189 = arith.addf %187, %188 : vector<16x64xf32>
    %190 = arith.mulf %189, %189 : vector<16x64xf32>
    %191 = arith.mulf %189, %190 : vector<16x64xf32>
    %cst_79 = arith.constant 4.471500e-02 : f32
    %192 = vector.broadcast %cst_79 : f32 to vector<16x64xf32>
    %193 = arith.mulf %192, %191 : vector<16x64xf32>
    %194 = arith.addf %189, %193 : vector<16x64xf32>
    %cst_80 = arith.constant 0.797884583 : f32
    %195 = vector.broadcast %cst_80 : f32 to vector<16x64xf32>
    %196 = arith.mulf %195, %194 : vector<16x64xf32>
    %197 = math.tanh %196 : vector<16x64xf32>
    %cst_81 = arith.constant 1.000000e+00 : f32
    %198 = vector.broadcast %cst_81 : f32 to vector<16x64xf32>
    %199 = arith.addf %198, %197 : vector<16x64xf32>
    %cst_82 = arith.constant 5.000000e-01 : f32
    %200 = vector.broadcast %cst_82 : f32 to vector<16x64xf32>
    %201 = arith.mulf %200, %199 : vector<16x64xf32>
    %202 = arith.mulf %189, %201 : vector<16x64xf32>
    %cst_83 = arith.constant dense<0.000000e+00> : vector<16x32xf32>
    %203 = tpu.matmul %202, %54, %cst_83 {dimension_numbers = #tpu.dot_dimension_numbers<[1], [0], [0], [1], [0, 0, 1, 1], [], []>} : vector<16x64xf32>, vector<64x32xf32>, vector<16x32xf32> -> vector<16x32xf32>
    %204 = vector.broadcast %56 : vector<1x32xf32> to vector<16x32xf32>
    %205 = arith.addf %203, %204 : vector<16x32xf32>
    %206 = arith.addf %186, %205 : vector<16x32xf32>
    %c0_84 = arith.constant 0 : index
    %c0_85 = arith.constant 0 : index
    %c0_86 = arith.constant 0 : index
    %207 = vector.load %arg16[%c0_84, %c0_85, %c0_86] : memref<1x1x32xf32, #tpu.memory_space<vmem>>, vector<1x1x32xf32>
    %208 = vector.shape_cast %207 : vector<1x1x32xf32> to vector<1x32xf32>
    %c0_87 = arith.constant 0 : index
    %c0_88 = arith.constant 0 : index
    %c0_89 = arith.constant 0 : index
    %209 = vector.load %arg17[%c0_87, %c0_88, %c0_89] : memref<1x1x32xf32, #tpu.memory_space<vmem>>, vector<1x1x32xf32>
    %210 = vector.shape_cast %209 : vector<1x1x32xf32> to vector<1x32xf32>
    %cst_90 = arith.constant dense<0.000000e+00> : vector<16xf32>
    %211 = vector.multi_reduction <add>, %206, %cst_90 [1] : vector<16x32xf32> to vector<16xf32>
    %212 = vector.shape_cast %211 : vector<16xf32> to vector<16x1xf32>
    %cst_91 = arith.constant 3.200000e+01 : f32
    %213 = vector.broadcast %cst_91 : f32 to vector<16x1xf32>
    %214 = arith.divf %212, %213 : vector<16x1xf32>
    %215 = vector.broadcast %214 : vector<16x1xf32> to vector<16x32xf32>
    %216 = arith.subf %206, %215 : vector<16x32xf32>
    %217 = arith.mulf %216, %216 : vector<16x32xf32>
    %cst_92 = arith.constant dense<0.000000e+00> : vector<16xf32>
    %218 = vector.multi_reduction <add>, %217, %cst_92 [1] : vector<16x32xf32> to vector<16xf32>
    %219 = vector.shape_cast %218 : vector<16xf32> to vector<16x1xf32>
    %cst_93 = arith.constant 3.200000e+01 : f32
    %220 = vector.broadcast %cst_93 : f32 to vector<16x1xf32>
    %221 = arith.divf %219, %220 : vector<16x1xf32>
    %222 = vector.broadcast %214 : vector<16x1xf32> to vector<16x32xf32>
    %223 = arith.subf %206, %222 : vector<16x32xf32>
    %cst_94 = arith.constant 9.99999974E-6 : f32
    %224 = vector.broadcast %cst_94 : f32 to vector<16x1xf32>
    %225 = arith.addf %221, %224 : vector<16x1xf32>
    %226 = math.rsqrt %225 : vector<16x1xf32>
    %227 = vector.broadcast %226 : vector<16x1xf32> to vector<16x32xf32>
    %228 = arith.mulf %223, %227 : vector<16x32xf32>
    %229 = vector.broadcast %208 : vector<1x32xf32> to vector<16x32xf32>
    %230 = arith.mulf %228, %229 : vector<16x32xf32>
    %231 = vector.broadcast %210 : vector<1x32xf32> to vector<16x32xf32>
    %232 = arith.addf %230, %231 : vector<16x32xf32>
    %c0_95 = arith.constant 0 : index
    %c0_96 = arith.constant 0 : index
    %c0_97 = arith.constant 0 : index
    %233 = vector.load %arg18[%c0_95, %c0_96, %c0_97] : memref<4x32x16xf32, #tpu.memory_space<vmem>>, vector<1x32x16xf32>
    %234 = vector.shape_cast %233 : vector<1x32x16xf32> to vector<32x16xf32>
    %cst_98 = arith.constant dense<0.000000e+00> : vector<16x16xf32>
    %235 = tpu.matmul %232, %234, %cst_98 {dimension_numbers = #tpu.dot_dimension_numbers<[1], [0], [0], [1], [0, 0, 1, 1], [], []>} : vector<16x32xf32>, vector<32x16xf32>, vector<16x16xf32> -> vector<16x16xf32>
    %c0_99 = arith.constant 0 : index
    %c0_100 = arith.constant 0 : index
    %c0_101 = arith.constant 0 : index
    %236 = vector.load %arg20[%c0_99, %c0_100, %c0_101] : memref<4x1x16xf32, #tpu.memory_space<vmem>>, vector<1x1x16xf32>
    %237 = vector.shape_cast %236 : vector<1x1x16xf32> to vector<1x16xf32>
    %238 = vector.broadcast %237 : vector<1x16xf32> to vector<16x16xf32>
    %239 = arith.addf %235, %238 : vector<16x16xf32>
    %240 = vector.shape_cast %239 : vector<16x16xf32> to vector<2x8x16xf32>
    %c1 = arith.constant 1 : index
    %c0_102 = arith.constant 0 : index
    %c0_103 = arith.constant 0 : index
    %241 = vector.load %arg18[%c1, %c0_102, %c0_103] : memref<4x32x16xf32, #tpu.memory_space<vmem>>, vector<1x32x16xf32>
    %242 = vector.shape_cast %241 : vector<1x32x16xf32> to vector<32x16xf32>
    %cst_104 = arith.constant dense<0.000000e+00> : vector<16x16xf32>
    %243 = tpu.matmul %232, %242, %cst_104 {dimension_numbers = #tpu.dot_dimension_numbers<[1], [0], [0], [1], [0, 0, 1, 1], [], []>} : vector<16x32xf32>, vector<32x16xf32>, vector<16x16xf32> -> vector<16x16xf32>
    %c1_105 = arith.constant 1 : index
    %c0_106 = arith.constant 0 : index
    %c0_107 = arith.constant 0 : index
    %244 = vector.load %arg20[%c1_105, %c0_106, %c0_107] : memref<4x1x16xf32, #tpu.memory_space<vmem>>, vector<1x1x16xf32>
    %245 = vector.shape_cast %244 : vector<1x1x16xf32> to vector<1x16xf32>
    %246 = vector.broadcast %245 : vector<1x16xf32> to vector<16x16xf32>
    %247 = arith.addf %243, %246 : vector<16x16xf32>
    %248 = vector.shape_cast %247 : vector<16x16xf32> to vector<2x8x16xf32>
    %c2 = arith.constant 2 : index
    %c0_108 = arith.constant 0 : index
    %c0_109 = arith.constant 0 : index
    %249 = vector.load %arg18[%c2, %c0_108, %c0_109] : memref<4x32x16xf32, #tpu.memory_space<vmem>>, vector<1x32x16xf32>
    %250 = vector.shape_cast %249 : vector<1x32x16xf32> to vector<32x16xf32>
    %cst_110 = arith.constant dense<0.000000e+00> : vector<16x16xf32>
    %251 = tpu.matmul %232, %250, %cst_110 {dimension_numbers = #tpu.dot_dimension_numbers<[1], [0], [0], [1], [0, 0, 1, 1], [], []>} : vector<16x32xf32>, vector<32x16xf32>, vector<16x16xf32> -> vector<16x16xf32>
    %c2_111 = arith.constant 2 : index
    %c0_112 = arith.constant 0 : index
    %c0_113 = arith.constant 0 : index
    %252 = vector.load %arg20[%c2_111, %c0_112, %c0_113] : memref<4x1x16xf32, #tpu.memory_space<vmem>>, vector<1x1x16xf32>
    %253 = vector.shape_cast %252 : vector<1x1x16xf32> to vector<1x16xf32>
    %254 = vector.broadcast %253 : vector<1x16xf32> to vector<16x16xf32>
    %255 = arith.addf %251, %254 : vector<16x16xf32>
    %256 = vector.shape_cast %255 : vector<16x16xf32> to vector<2x8x16xf32>
    %c3 = arith.constant 3 : index
    %c0_114 = arith.constant 0 : index
    %c0_115 = arith.constant 0 : index
    %257 = vector.load %arg18[%c3, %c0_114, %c0_115] : memref<4x32x16xf32, #tpu.memory_space<vmem>>, vector<1x32x16xf32>
    %258 = vector.shape_cast %257 : vector<1x32x16xf32> to vector<32x16xf32>
    %cst_116 = arith.constant dense<0.000000e+00> : vector<16x16xf32>
    %259 = tpu.matmul %232, %258, %cst_116 {dimension_numbers = #tpu.dot_dimension_numbers<[1], [0], [0], [1], [0, 0, 1, 1], [], []>} : vector<16x32xf32>, vector<32x16xf32>, vector<16x16xf32> -> vector<16x16xf32>
    %c3_117 = arith.constant 3 : index
    %c0_118 = arith.constant 0 : index
    %c0_119 = arith.constant 0 : index
    %260 = vector.load %arg20[%c3_117, %c0_118, %c0_119] : memref<4x1x16xf32, #tpu.memory_space<vmem>>, vector<1x1x16xf32>
    %261 = vector.shape_cast %260 : vector<1x1x16xf32> to vector<1x16xf32>
    %262 = vector.broadcast %261 : vector<1x16xf32> to vector<16x16xf32>
    %263 = arith.addf %259, %262 : vector<16x16xf32>
    %264 = vector.shape_cast %263 : vector<16x16xf32> to vector<2x8x16xf32>
    %cst_120 = arith.constant 0.000000e+00 : f32
    %265 = vector.broadcast %cst_120 : f32 to vector<2x16xf32>
    %cst_121 = arith.constant 0.000000e+00 : f32
    %266 = vector.broadcast %cst_121 : f32 to vector<2x16xf32>
    %267 = vector.extract_strided_slice %240 {offsets = [0, 0, 0], sizes = [2, 1, 16], strides = [1, 1, 1]} : vector<2x8x16xf32> to vector<2x1x16xf32>
    %268 = vector.shape_cast %267 : vector<2x1x16xf32> to vector<2x16xf32>
    %c0_122 = arith.constant 0 : index
    %c0_123 = arith.constant 0 : index
    %c0_124 = arith.constant 0 : index
    %269 = vector.load %arg19[%c0_122, %c0_123, %c0_124] : memref<4x16x16xf32, #tpu.memory_space<vmem>>, vector<1x16x16xf32>
    %270 = vector.shape_cast %269 : vector<1x16x16xf32> to vector<16x16xf32>
    %cst_125 = arith.constant dense<0.000000e+00> : vector<2x16xf32>
    %271 = tpu.matmul %265, %270, %cst_125 {dimension_numbers = #tpu.dot_dimension_numbers<[1], [0], [0], [1], [0, 0, 1, 1], [], []>} : vector<2x16xf32>, vector<16x16xf32>, vector<2x16xf32> -> vector<2x16xf32>
    %272 = arith.addf %268, %271 : vector<2x16xf32>
    %273 = arith.negf %272 : vector<2x16xf32>
    %274 = math.exp %273 : vector<2x16xf32>
    %cst_126 = arith.constant 1.000000e+00 : f32
    %275 = vector.broadcast %cst_126 : f32 to vector<2x16xf32>
    %276 = arith.addf %275, %274 : vector<2x16xf32>
    %277 = arith.divf %275, %276 : vector<2x16xf32>
    %278 = vector.extract_strided_slice %248 {offsets = [0, 0, 0], sizes = [2, 1, 16], strides = [1, 1, 1]} : vector<2x8x16xf32> to vector<2x1x16xf32>
    %279 = vector.shape_cast %278 : vector<2x1x16xf32> to vector<2x16xf32>
    %c1_127 = arith.constant 1 : index
    %c0_128 = arith.constant 0 : index
    %c0_129 = arith.constant 0 : index
    %280 = vector.load %arg19[%c1_127, %c0_128, %c0_129] : memref<4x16x16xf32, #tpu.memory_space<vmem>>, vector<1x16x16xf32>
    %281 = vector.shape_cast %280 : vector<1x16x16xf32> to vector<16x16xf32>
    %cst_130 = arith.constant dense<0.000000e+00> : vector<2x16xf32>
    %282 = tpu.matmul %265, %281, %cst_130 {dimension_numbers = #tpu.dot_dimension_numbers<[1], [0], [0], [1], [0, 0, 1, 1], [], []>} : vector<2x16xf32>, vector<16x16xf32>, vector<2x16xf32> -> vector<2x16xf32>
    %283 = arith.addf %279, %282 : vector<2x16xf32>
    %284 = arith.negf %283 : vector<2x16xf32>
    %285 = math.exp %284 : vector<2x16xf32>
    %cst_131 = arith.constant 1.000000e+00 : f32
    %286 = vector.broadcast %cst_131 : f32 to vector<2x16xf32>
    %287 = arith.addf %286, %285 : vector<2x16xf32>
    %288 = arith.divf %286, %287 : vector<2x16xf32>
    %289 = vector.extract_strided_slice %256 {offsets = [0, 0, 0], sizes = [2, 1, 16], strides = [1, 1, 1]} : vector<2x8x16xf32> to vector<2x1x16xf32>
    %290 = vector.shape_cast %289 : vector<2x1x16xf32> to vector<2x16xf32>
    %c2_132 = arith.constant 2 : index
    %c0_133 = arith.constant 0 : index
    %c0_134 = arith.constant 0 : index
    %291 = vector.load %arg19[%c2_132, %c0_133, %c0_134] : memref<4x16x16xf32, #tpu.memory_space<vmem>>, vector<1x16x16xf32>
    %292 = vector.shape_cast %291 : vector<1x16x16xf32> to vector<16x16xf32>
    %cst_135 = arith.constant dense<0.000000e+00> : vector<2x16xf32>
    %293 = tpu.matmul %265, %292, %cst_135 {dimension_numbers = #tpu.dot_dimension_numbers<[1], [0], [0], [1], [0, 0, 1, 1], [], []>} : vector<2x16xf32>, vector<16x16xf32>, vector<2x16xf32> -> vector<2x16xf32>
    %294 = arith.addf %290, %293 : vector<2x16xf32>
    %295 = math.tanh %294 : vector<2x16xf32>
    %296 = vector.extract_strided_slice %264 {offsets = [0, 0, 0], sizes = [2, 1, 16], strides = [1, 1, 1]} : vector<2x8x16xf32> to vector<2x1x16xf32>
    %297 = vector.shape_cast %296 : vector<2x1x16xf32> to vector<2x16xf32>
    %c3_136 = arith.constant 3 : index
    %c0_137 = arith.constant 0 : index
    %c0_138 = arith.constant 0 : index
    %298 = vector.load %arg19[%c3_136, %c0_137, %c0_138] : memref<4x16x16xf32, #tpu.memory_space<vmem>>, vector<1x16x16xf32>
    %299 = vector.shape_cast %298 : vector<1x16x16xf32> to vector<16x16xf32>
    %cst_139 = arith.constant dense<0.000000e+00> : vector<2x16xf32>
    %300 = tpu.matmul %265, %299, %cst_139 {dimension_numbers = #tpu.dot_dimension_numbers<[1], [0], [0], [1], [0, 0, 1, 1], [], []>} : vector<2x16xf32>, vector<16x16xf32>, vector<2x16xf32> -> vector<2x16xf32>
    %301 = arith.addf %297, %300 : vector<2x16xf32>
    %302 = arith.negf %301 : vector<2x16xf32>
    %303 = math.exp %302 : vector<2x16xf32>
    %cst_140 = arith.constant 1.000000e+00 : f32
    %304 = vector.broadcast %cst_140 : f32 to vector<2x16xf32>
    %305 = arith.addf %304, %303 : vector<2x16xf32>
    %306 = arith.divf %304, %305 : vector<2x16xf32>
    %307 = arith.mulf %288, %266 : vector<2x16xf32>
    %308 = arith.mulf %277, %295 : vector<2x16xf32>
    %309 = arith.addf %307, %308 : vector<2x16xf32>
    %310 = math.tanh %309 : vector<2x16xf32>
    %311 = arith.mulf %306, %310 : vector<2x16xf32>
    %312 = vector.extract_strided_slice %240 {offsets = [0, 1, 0], sizes = [2, 1, 16], strides = [1, 1, 1]} : vector<2x8x16xf32> to vector<2x1x16xf32>
    %313 = vector.shape_cast %312 : vector<2x1x16xf32> to vector<2x16xf32>
    %c0_141 = arith.constant 0 : index
    %c0_142 = arith.constant 0 : index
    %c0_143 = arith.constant 0 : index
    %314 = vector.load %arg19[%c0_141, %c0_142, %c0_143] : memref<4x16x16xf32, #tpu.memory_space<vmem>>, vector<1x16x16xf32>
    %315 = vector.shape_cast %314 : vector<1x16x16xf32> to vector<16x16xf32>
    %cst_144 = arith.constant dense<0.000000e+00> : vector<2x16xf32>
    %316 = tpu.matmul %311, %315, %cst_144 {dimension_numbers = #tpu.dot_dimension_numbers<[1], [0], [0], [1], [0, 0, 1, 1], [], []>} : vector<2x16xf32>, vector<16x16xf32>, vector<2x16xf32> -> vector<2x16xf32>
    %317 = arith.addf %313, %316 : vector<2x16xf32>
    %318 = arith.negf %317 : vector<2x16xf32>
    %319 = math.exp %318 : vector<2x16xf32>
    %cst_145 = arith.constant 1.000000e+00 : f32
    %320 = vector.broadcast %cst_145 : f32 to vector<2x16xf32>
    %321 = arith.addf %320, %319 : vector<2x16xf32>
    %322 = arith.divf %320, %321 : vector<2x16xf32>
    %323 = vector.extract_strided_slice %248 {offsets = [0, 1, 0], sizes = [2, 1, 16], strides = [1, 1, 1]} : vector<2x8x16xf32> to vector<2x1x16xf32>
    %324 = vector.shape_cast %323 : vector<2x1x16xf32> to vector<2x16xf32>
    %c1_146 = arith.constant 1 : index
    %c0_147 = arith.constant 0 : index
    %c0_148 = arith.constant 0 : index
    %325 = vector.load %arg19[%c1_146, %c0_147, %c0_148] : memref<4x16x16xf32, #tpu.memory_space<vmem>>, vector<1x16x16xf32>
    %326 = vector.shape_cast %325 : vector<1x16x16xf32> to vector<16x16xf32>
    %cst_149 = arith.constant dense<0.000000e+00> : vector<2x16xf32>
    %327 = tpu.matmul %311, %326, %cst_149 {dimension_numbers = #tpu.dot_dimension_numbers<[1], [0], [0], [1], [0, 0, 1, 1], [], []>} : vector<2x16xf32>, vector<16x16xf32>, vector<2x16xf32> -> vector<2x16xf32>
    %328 = arith.addf %324, %327 : vector<2x16xf32>
    %329 = arith.negf %328 : vector<2x16xf32>
    %330 = math.exp %329 : vector<2x16xf32>
    %cst_150 = arith.constant 1.000000e+00 : f32
    %331 = vector.broadcast %cst_150 : f32 to vector<2x16xf32>
    %332 = arith.addf %331, %330 : vector<2x16xf32>
    %333 = arith.divf %331, %332 : vector<2x16xf32>
    %334 = vector.extract_strided_slice %256 {offsets = [0, 1, 0], sizes = [2, 1, 16], strides = [1, 1, 1]} : vector<2x8x16xf32> to vector<2x1x16xf32>
    %335 = vector.shape_cast %334 : vector<2x1x16xf32> to vector<2x16xf32>
    %c2_151 = arith.constant 2 : index
    %c0_152 = arith.constant 0 : index
    %c0_153 = arith.constant 0 : index
    %336 = vector.load %arg19[%c2_151, %c0_152, %c0_153] : memref<4x16x16xf32, #tpu.memory_space<vmem>>, vector<1x16x16xf32>
    %337 = vector.shape_cast %336 : vector<1x16x16xf32> to vector<16x16xf32>
    %cst_154 = arith.constant dense<0.000000e+00> : vector<2x16xf32>
    %338 = tpu.matmul %311, %337, %cst_154 {dimension_numbers = #tpu.dot_dimension_numbers<[1], [0], [0], [1], [0, 0, 1, 1], [], []>} : vector<2x16xf32>, vector<16x16xf32>, vector<2x16xf32> -> vector<2x16xf32>
    %339 = arith.addf %335, %338 : vector<2x16xf32>
    %340 = math.tanh %339 : vector<2x16xf32>
    %341 = vector.extract_strided_slice %264 {offsets = [0, 1, 0], sizes = [2, 1, 16], strides = [1, 1, 1]} : vector<2x8x16xf32> to vector<2x1x16xf32>
    %342 = vector.shape_cast %341 : vector<2x1x16xf32> to vector<2x16xf32>
    %c3_155 = arith.constant 3 : index
    %c0_156 = arith.constant 0 : index
    %c0_157 = arith.constant 0 : index
    %343 = vector.load %arg19[%c3_155, %c0_156, %c0_157] : memref<4x16x16xf32, #tpu.memory_space<vmem>>, vector<1x16x16xf32>
    %344 = vector.shape_cast %343 : vector<1x16x16xf32> to vector<16x16xf32>
    %cst_158 = arith.constant dense<0.000000e+00> : vector<2x16xf32>
    %345 = tpu.matmul %311, %344, %cst_158 {dimension_numbers = #tpu.dot_dimension_numbers<[1], [0], [0], [1], [0, 0, 1, 1], [], []>} : vector<2x16xf32>, vector<16x16xf32>, vector<2x16xf32> -> vector<2x16xf32>
    %346 = arith.addf %342, %345 : vector<2x16xf32>
    %347 = arith.negf %346 : vector<2x16xf32>
    %348 = math.exp %347 : vector<2x16xf32>
    %cst_159 = arith.constant 1.000000e+00 : f32
    %349 = vector.broadcast %cst_159 : f32 to vector<2x16xf32>
    %350 = arith.addf %349, %348 : vector<2x16xf32>
    %351 = arith.divf %349, %350 : vector<2x16xf32>
    %352 = arith.mulf %333, %309 : vector<2x16xf32>
    %353 = arith.mulf %322, %340 : vector<2x16xf32>
    %354 = arith.addf %352, %353 : vector<2x16xf32>
    %355 = math.tanh %354 : vector<2x16xf32>
    %356 = arith.mulf %351, %355 : vector<2x16xf32>
    %357 = vector.extract_strided_slice %240 {offsets = [0, 2, 0], sizes = [2, 1, 16], strides = [1, 1, 1]} : vector<2x8x16xf32> to vector<2x1x16xf32>
    %358 = vector.shape_cast %357 : vector<2x1x16xf32> to vector<2x16xf32>
    %c0_160 = arith.constant 0 : index
    %c0_161 = arith.constant 0 : index
    %c0_162 = arith.constant 0 : index
    %359 = vector.load %arg19[%c0_160, %c0_161, %c0_162] : memref<4x16x16xf32, #tpu.memory_space<vmem>>, vector<1x16x16xf32>
    %360 = vector.shape_cast %359 : vector<1x16x16xf32> to vector<16x16xf32>
    %cst_163 = arith.constant dense<0.000000e+00> : vector<2x16xf32>
    %361 = tpu.matmul %356, %360, %cst_163 {dimension_numbers = #tpu.dot_dimension_numbers<[1], [0], [0], [1], [0, 0, 1, 1], [], []>} : vector<2x16xf32>, vector<16x16xf32>, vector<2x16xf32> -> vector<2x16xf32>
    %362 = arith.addf %358, %361 : vector<2x16xf32>
    %363 = arith.negf %362 : vector<2x16xf32>
    %364 = math.exp %363 : vector<2x16xf32>
    %cst_164 = arith.constant 1.000000e+00 : f32
    %365 = vector.broadcast %cst_164 : f32 to vector<2x16xf32>
    %366 = arith.addf %365, %364 : vector<2x16xf32>
    %367 = arith.divf %365, %366 : vector<2x16xf32>
    %368 = vector.extract_strided_slice %248 {offsets = [0, 2, 0], sizes = [2, 1, 16], strides = [1, 1, 1]} : vector<2x8x16xf32> to vector<2x1x16xf32>
    %369 = vector.shape_cast %368 : vector<2x1x16xf32> to vector<2x16xf32>
    %c1_165 = arith.constant 1 : index
    %c0_166 = arith.constant 0 : index
    %c0_167 = arith.constant 0 : index
    %370 = vector.load %arg19[%c1_165, %c0_166, %c0_167] : memref<4x16x16xf32, #tpu.memory_space<vmem>>, vector<1x16x16xf32>
    %371 = vector.shape_cast %370 : vector<1x16x16xf32> to vector<16x16xf32>
    %cst_168 = arith.constant dense<0.000000e+00> : vector<2x16xf32>
    %372 = tpu.matmul %356, %371, %cst_168 {dimension_numbers = #tpu.dot_dimension_numbers<[1], [0], [0], [1], [0, 0, 1, 1], [], []>} : vector<2x16xf32>, vector<16x16xf32>, vector<2x16xf32> -> vector<2x16xf32>
    %373 = arith.addf %369, %372 : vector<2x16xf32>
    %374 = arith.negf %373 : vector<2x16xf32>
    %375 = math.exp %374 : vector<2x16xf32>
    %cst_169 = arith.constant 1.000000e+00 : f32
    %376 = vector.broadcast %cst_169 : f32 to vector<2x16xf32>
    %377 = arith.addf %376, %375 : vector<2x16xf32>
    %378 = arith.divf %376, %377 : vector<2x16xf32>
    %379 = vector.extract_strided_slice %256 {offsets = [0, 2, 0], sizes = [2, 1, 16], strides = [1, 1, 1]} : vector<2x8x16xf32> to vector<2x1x16xf32>
    %380 = vector.shape_cast %379 : vector<2x1x16xf32> to vector<2x16xf32>
    %c2_170 = arith.constant 2 : index
    %c0_171 = arith.constant 0 : index
    %c0_172 = arith.constant 0 : index
    %381 = vector.load %arg19[%c2_170, %c0_171, %c0_172] : memref<4x16x16xf32, #tpu.memory_space<vmem>>, vector<1x16x16xf32>
    %382 = vector.shape_cast %381 : vector<1x16x16xf32> to vector<16x16xf32>
    %cst_173 = arith.constant dense<0.000000e+00> : vector<2x16xf32>
    %383 = tpu.matmul %356, %382, %cst_173 {dimension_numbers = #tpu.dot_dimension_numbers<[1], [0], [0], [1], [0, 0, 1, 1], [], []>} : vector<2x16xf32>, vector<16x16xf32>, vector<2x16xf32> -> vector<2x16xf32>
    %384 = arith.addf %380, %383 : vector<2x16xf32>
    %385 = math.tanh %384 : vector<2x16xf32>
    %386 = vector.extract_strided_slice %264 {offsets = [0, 2, 0], sizes = [2, 1, 16], strides = [1, 1, 1]} : vector<2x8x16xf32> to vector<2x1x16xf32>
    %387 = vector.shape_cast %386 : vector<2x1x16xf32> to vector<2x16xf32>
    %c3_174 = arith.constant 3 : index
    %c0_175 = arith.constant 0 : index
    %c0_176 = arith.constant 0 : index
    %388 = vector.load %arg19[%c3_174, %c0_175, %c0_176] : memref<4x16x16xf32, #tpu.memory_space<vmem>>, vector<1x16x16xf32>
    %389 = vector.shape_cast %388 : vector<1x16x16xf32> to vector<16x16xf32>
    %cst_177 = arith.constant dense<0.000000e+00> : vector<2x16xf32>
    %390 = tpu.matmul %356, %389, %cst_177 {dimension_numbers = #tpu.dot_dimension_numbers<[1], [0], [0], [1], [0, 0, 1, 1], [], []>} : vector<2x16xf32>, vector<16x16xf32>, vector<2x16xf32> -> vector<2x16xf32>
    %391 = arith.addf %387, %390 : vector<2x16xf32>
    %392 = arith.negf %391 : vector<2x16xf32>
    %393 = math.exp %392 : vector<2x16xf32>
    %cst_178 = arith.constant 1.000000e+00 : f32
    %394 = vector.broadcast %cst_178 : f32 to vector<2x16xf32>
    %395 = arith.addf %394, %393 : vector<2x16xf32>
    %396 = arith.divf %394, %395 : vector<2x16xf32>
    %397 = arith.mulf %378, %354 : vector<2x16xf32>
    %398 = arith.mulf %367, %385 : vector<2x16xf32>
    %399 = arith.addf %397, %398 : vector<2x16xf32>
    %400 = math.tanh %399 : vector<2x16xf32>
    %401 = arith.mulf %396, %400 : vector<2x16xf32>
    %402 = vector.extract_strided_slice %240 {offsets = [0, 3, 0], sizes = [2, 1, 16], strides = [1, 1, 1]} : vector<2x8x16xf32> to vector<2x1x16xf32>
    %403 = vector.shape_cast %402 : vector<2x1x16xf32> to vector<2x16xf32>
    %c0_179 = arith.constant 0 : index
    %c0_180 = arith.constant 0 : index
    %c0_181 = arith.constant 0 : index
    %404 = vector.load %arg19[%c0_179, %c0_180, %c0_181] : memref<4x16x16xf32, #tpu.memory_space<vmem>>, vector<1x16x16xf32>
    %405 = vector.shape_cast %404 : vector<1x16x16xf32> to vector<16x16xf32>
    %cst_182 = arith.constant dense<0.000000e+00> : vector<2x16xf32>
    %406 = tpu.matmul %401, %405, %cst_182 {dimension_numbers = #tpu.dot_dimension_numbers<[1], [0], [0], [1], [0, 0, 1, 1], [], []>} : vector<2x16xf32>, vector<16x16xf32>, vector<2x16xf32> -> vector<2x16xf32>
    %407 = arith.addf %403, %406 : vector<2x16xf32>
    %408 = arith.negf %407 : vector<2x16xf32>
    %409 = math.exp %408 : vector<2x16xf32>
    %cst_183 = arith.constant 1.000000e+00 : f32
    %410 = vector.broadcast %cst_183 : f32 to vector<2x16xf32>
    %411 = arith.addf %410, %409 : vector<2x16xf32>
    %412 = arith.divf %410, %411 : vector<2x16xf32>
    %413 = vector.extract_strided_slice %248 {offsets = [0, 3, 0], sizes = [2, 1, 16], strides = [1, 1, 1]} : vector<2x8x16xf32> to vector<2x1x16xf32>
    %414 = vector.shape_cast %413 : vector<2x1x16xf32> to vector<2x16xf32>
    %c1_184 = arith.constant 1 : index
    %c0_185 = arith.constant 0 : index
    %c0_186 = arith.constant 0 : index
    %415 = vector.load %arg19[%c1_184, %c0_185, %c0_186] : memref<4x16x16xf32, #tpu.memory_space<vmem>>, vector<1x16x16xf32>
    %416 = vector.shape_cast %415 : vector<1x16x16xf32> to vector<16x16xf32>
    %cst_187 = arith.constant dense<0.000000e+00> : vector<2x16xf32>
    %417 = tpu.matmul %401, %416, %cst_187 {dimension_numbers = #tpu.dot_dimension_numbers<[1], [0], [0], [1], [0, 0, 1, 1], [], []>} : vector<2x16xf32>, vector<16x16xf32>, vector<2x16xf32> -> vector<2x16xf32>
    %418 = arith.addf %414, %417 : vector<2x16xf32>
    %419 = arith.negf %418 : vector<2x16xf32>
    %420 = math.exp %419 : vector<2x16xf32>
    %cst_188 = arith.constant 1.000000e+00 : f32
    %421 = vector.broadcast %cst_188 : f32 to vector<2x16xf32>
    %422 = arith.addf %421, %420 : vector<2x16xf32>
    %423 = arith.divf %421, %422 : vector<2x16xf32>
    %424 = vector.extract_strided_slice %256 {offsets = [0, 3, 0], sizes = [2, 1, 16], strides = [1, 1, 1]} : vector<2x8x16xf32> to vector<2x1x16xf32>
    %425 = vector.shape_cast %424 : vector<2x1x16xf32> to vector<2x16xf32>
    %c2_189 = arith.constant 2 : index
    %c0_190 = arith.constant 0 : index
    %c0_191 = arith.constant 0 : index
    %426 = vector.load %arg19[%c2_189, %c0_190, %c0_191] : memref<4x16x16xf32, #tpu.memory_space<vmem>>, vector<1x16x16xf32>
    %427 = vector.shape_cast %426 : vector<1x16x16xf32> to vector<16x16xf32>
    %cst_192 = arith.constant dense<0.000000e+00> : vector<2x16xf32>
    %428 = tpu.matmul %401, %427, %cst_192 {dimension_numbers = #tpu.dot_dimension_numbers<[1], [0], [0], [1], [0, 0, 1, 1], [], []>} : vector<2x16xf32>, vector<16x16xf32>, vector<2x16xf32> -> vector<2x16xf32>
    %429 = arith.addf %425, %428 : vector<2x16xf32>
    %430 = math.tanh %429 : vector<2x16xf32>
    %431 = vector.extract_strided_slice %264 {offsets = [0, 3, 0], sizes = [2, 1, 16], strides = [1, 1, 1]} : vector<2x8x16xf32> to vector<2x1x16xf32>
    %432 = vector.shape_cast %431 : vector<2x1x16xf32> to vector<2x16xf32>
    %c3_193 = arith.constant 3 : index
    %c0_194 = arith.constant 0 : index
    %c0_195 = arith.constant 0 : index
    %433 = vector.load %arg19[%c3_193, %c0_194, %c0_195] : memref<4x16x16xf32, #tpu.memory_space<vmem>>, vector<1x16x16xf32>
    %434 = vector.shape_cast %433 : vector<1x16x16xf32> to vector<16x16xf32>
    %cst_196 = arith.constant dense<0.000000e+00> : vector<2x16xf32>
    %435 = tpu.matmul %401, %434, %cst_196 {dimension_numbers = #tpu.dot_dimension_numbers<[1], [0], [0], [1], [0, 0, 1, 1], [], []>} : vector<2x16xf32>, vector<16x16xf32>, vector<2x16xf32> -> vector<2x16xf32>
    %436 = arith.addf %432, %435 : vector<2x16xf32>
    %437 = arith.negf %436 : vector<2x16xf32>
    %438 = math.exp %437 : vector<2x16xf32>
    %cst_197 = arith.constant 1.000000e+00 : f32
    %439 = vector.broadcast %cst_197 : f32 to vector<2x16xf32>
    %440 = arith.addf %439, %438 : vector<2x16xf32>
    %441 = arith.divf %439, %440 : vector<2x16xf32>
    %442 = arith.mulf %423, %399 : vector<2x16xf32>
    %443 = arith.mulf %412, %430 : vector<2x16xf32>
    %444 = arith.addf %442, %443 : vector<2x16xf32>
    %445 = math.tanh %444 : vector<2x16xf32>
    %446 = arith.mulf %441, %445 : vector<2x16xf32>
    %447 = vector.extract_strided_slice %240 {offsets = [0, 4, 0], sizes = [2, 1, 16], strides = [1, 1, 1]} : vector<2x8x16xf32> to vector<2x1x16xf32>
    %448 = vector.shape_cast %447 : vector<2x1x16xf32> to vector<2x16xf32>
    %c0_198 = arith.constant 0 : index
    %c0_199 = arith.constant 0 : index
    %c0_200 = arith.constant 0 : index
    %449 = vector.load %arg19[%c0_198, %c0_199, %c0_200] : memref<4x16x16xf32, #tpu.memory_space<vmem>>, vector<1x16x16xf32>
    %450 = vector.shape_cast %449 : vector<1x16x16xf32> to vector<16x16xf32>
    %cst_201 = arith.constant dense<0.000000e+00> : vector<2x16xf32>
    %451 = tpu.matmul %446, %450, %cst_201 {dimension_numbers = #tpu.dot_dimension_numbers<[1], [0], [0], [1], [0, 0, 1, 1], [], []>} : vector<2x16xf32>, vector<16x16xf32>, vector<2x16xf32> -> vector<2x16xf32>
    %452 = arith.addf %448, %451 : vector<2x16xf32>
    %453 = arith.negf %452 : vector<2x16xf32>
    %454 = math.exp %453 : vector<2x16xf32>
    %cst_202 = arith.constant 1.000000e+00 : f32
    %455 = vector.broadcast %cst_202 : f32 to vector<2x16xf32>
    %456 = arith.addf %455, %454 : vector<2x16xf32>
    %457 = arith.divf %455, %456 : vector<2x16xf32>
    %458 = vector.extract_strided_slice %248 {offsets = [0, 4, 0], sizes = [2, 1, 16], strides = [1, 1, 1]} : vector<2x8x16xf32> to vector<2x1x16xf32>
    %459 = vector.shape_cast %458 : vector<2x1x16xf32> to vector<2x16xf32>
    %c1_203 = arith.constant 1 : index
    %c0_204 = arith.constant 0 : index
    %c0_205 = arith.constant 0 : index
    %460 = vector.load %arg19[%c1_203, %c0_204, %c0_205] : memref<4x16x16xf32, #tpu.memory_space<vmem>>, vector<1x16x16xf32>
    %461 = vector.shape_cast %460 : vector<1x16x16xf32> to vector<16x16xf32>
    %cst_206 = arith.constant dense<0.000000e+00> : vector<2x16xf32>
    %462 = tpu.matmul %446, %461, %cst_206 {dimension_numbers = #tpu.dot_dimension_numbers<[1], [0], [0], [1], [0, 0, 1, 1], [], []>} : vector<2x16xf32>, vector<16x16xf32>, vector<2x16xf32> -> vector<2x16xf32>
    %463 = arith.addf %459, %462 : vector<2x16xf32>
    %464 = arith.negf %463 : vector<2x16xf32>
    %465 = math.exp %464 : vector<2x16xf32>
    %cst_207 = arith.constant 1.000000e+00 : f32
    %466 = vector.broadcast %cst_207 : f32 to vector<2x16xf32>
    %467 = arith.addf %466, %465 : vector<2x16xf32>
    %468 = arith.divf %466, %467 : vector<2x16xf32>
    %469 = vector.extract_strided_slice %256 {offsets = [0, 4, 0], sizes = [2, 1, 16], strides = [1, 1, 1]} : vector<2x8x16xf32> to vector<2x1x16xf32>
    %470 = vector.shape_cast %469 : vector<2x1x16xf32> to vector<2x16xf32>
    %c2_208 = arith.constant 2 : index
    %c0_209 = arith.constant 0 : index
    %c0_210 = arith.constant 0 : index
    %471 = vector.load %arg19[%c2_208, %c0_209, %c0_210] : memref<4x16x16xf32, #tpu.memory_space<vmem>>, vector<1x16x16xf32>
    %472 = vector.shape_cast %471 : vector<1x16x16xf32> to vector<16x16xf32>
    %cst_211 = arith.constant dense<0.000000e+00> : vector<2x16xf32>
    %473 = tpu.matmul %446, %472, %cst_211 {dimension_numbers = #tpu.dot_dimension_numbers<[1], [0], [0], [1], [0, 0, 1, 1], [], []>} : vector<2x16xf32>, vector<16x16xf32>, vector<2x16xf32> -> vector<2x16xf32>
    %474 = arith.addf %470, %473 : vector<2x16xf32>
    %475 = math.tanh %474 : vector<2x16xf32>
    %476 = vector.extract_strided_slice %264 {offsets = [0, 4, 0], sizes = [2, 1, 16], strides = [1, 1, 1]} : vector<2x8x16xf32> to vector<2x1x16xf32>
    %477 = vector.shape_cast %476 : vector<2x1x16xf32> to vector<2x16xf32>
    %c3_212 = arith.constant 3 : index
    %c0_213 = arith.constant 0 : index
    %c0_214 = arith.constant 0 : index
    %478 = vector.load %arg19[%c3_212, %c0_213, %c0_214] : memref<4x16x16xf32, #tpu.memory_space<vmem>>, vector<1x16x16xf32>
    %479 = vector.shape_cast %478 : vector<1x16x16xf32> to vector<16x16xf32>
    %cst_215 = arith.constant dense<0.000000e+00> : vector<2x16xf32>
    %480 = tpu.matmul %446, %479, %cst_215 {dimension_numbers = #tpu.dot_dimension_numbers<[1], [0], [0], [1], [0, 0, 1, 1], [], []>} : vector<2x16xf32>, vector<16x16xf32>, vector<2x16xf32> -> vector<2x16xf32>
    %481 = arith.addf %477, %480 : vector<2x16xf32>
    %482 = arith.negf %481 : vector<2x16xf32>
    %483 = math.exp %482 : vector<2x16xf32>
    %cst_216 = arith.constant 1.000000e+00 : f32
    %484 = vector.broadcast %cst_216 : f32 to vector<2x16xf32>
    %485 = arith.addf %484, %483 : vector<2x16xf32>
    %486 = arith.divf %484, %485 : vector<2x16xf32>
    %487 = arith.mulf %468, %444 : vector<2x16xf32>
    %488 = arith.mulf %457, %475 : vector<2x16xf32>
    %489 = arith.addf %487, %488 : vector<2x16xf32>
    %490 = math.tanh %489 : vector<2x16xf32>
    %491 = arith.mulf %486, %490 : vector<2x16xf32>
    %492 = vector.extract_strided_slice %240 {offsets = [0, 5, 0], sizes = [2, 1, 16], strides = [1, 1, 1]} : vector<2x8x16xf32> to vector<2x1x16xf32>
    %493 = vector.shape_cast %492 : vector<2x1x16xf32> to vector<2x16xf32>
    %c0_217 = arith.constant 0 : index
    %c0_218 = arith.constant 0 : index
    %c0_219 = arith.constant 0 : index
    %494 = vector.load %arg19[%c0_217, %c0_218, %c0_219] : memref<4x16x16xf32, #tpu.memory_space<vmem>>, vector<1x16x16xf32>
    %495 = vector.shape_cast %494 : vector<1x16x16xf32> to vector<16x16xf32>
    %cst_220 = arith.constant dense<0.000000e+00> : vector<2x16xf32>
    %496 = tpu.matmul %491, %495, %cst_220 {dimension_numbers = #tpu.dot_dimension_numbers<[1], [0], [0], [1], [0, 0, 1, 1], [], []>} : vector<2x16xf32>, vector<16x16xf32>, vector<2x16xf32> -> vector<2x16xf32>
    %497 = arith.addf %493, %496 : vector<2x16xf32>
    %498 = arith.negf %497 : vector<2x16xf32>
    %499 = math.exp %498 : vector<2x16xf32>
    %cst_221 = arith.constant 1.000000e+00 : f32
    %500 = vector.broadcast %cst_221 : f32 to vector<2x16xf32>
    %501 = arith.addf %500, %499 : vector<2x16xf32>
    %502 = arith.divf %500, %501 : vector<2x16xf32>
    %503 = vector.extract_strided_slice %248 {offsets = [0, 5, 0], sizes = [2, 1, 16], strides = [1, 1, 1]} : vector<2x8x16xf32> to vector<2x1x16xf32>
    %504 = vector.shape_cast %503 : vector<2x1x16xf32> to vector<2x16xf32>
    %c1_222 = arith.constant 1 : index
    %c0_223 = arith.constant 0 : index
    %c0_224 = arith.constant 0 : index
    %505 = vector.load %arg19[%c1_222, %c0_223, %c0_224] : memref<4x16x16xf32, #tpu.memory_space<vmem>>, vector<1x16x16xf32>
    %506 = vector.shape_cast %505 : vector<1x16x16xf32> to vector<16x16xf32>
    %cst_225 = arith.constant dense<0.000000e+00> : vector<2x16xf32>
    %507 = tpu.matmul %491, %506, %cst_225 {dimension_numbers = #tpu.dot_dimension_numbers<[1], [0], [0], [1], [0, 0, 1, 1], [], []>} : vector<2x16xf32>, vector<16x16xf32>, vector<2x16xf32> -> vector<2x16xf32>
    %508 = arith.addf %504, %507 : vector<2x16xf32>
    %509 = arith.negf %508 : vector<2x16xf32>
    %510 = math.exp %509 : vector<2x16xf32>
    %cst_226 = arith.constant 1.000000e+00 : f32
    %511 = vector.broadcast %cst_226 : f32 to vector<2x16xf32>
    %512 = arith.addf %511, %510 : vector<2x16xf32>
    %513 = arith.divf %511, %512 : vector<2x16xf32>
    %514 = vector.extract_strided_slice %256 {offsets = [0, 5, 0], sizes = [2, 1, 16], strides = [1, 1, 1]} : vector<2x8x16xf32> to vector<2x1x16xf32>
    %515 = vector.shape_cast %514 : vector<2x1x16xf32> to vector<2x16xf32>
    %c2_227 = arith.constant 2 : index
    %c0_228 = arith.constant 0 : index
    %c0_229 = arith.constant 0 : index
    %516 = vector.load %arg19[%c2_227, %c0_228, %c0_229] : memref<4x16x16xf32, #tpu.memory_space<vmem>>, vector<1x16x16xf32>
    %517 = vector.shape_cast %516 : vector<1x16x16xf32> to vector<16x16xf32>
    %cst_230 = arith.constant dense<0.000000e+00> : vector<2x16xf32>
    %518 = tpu.matmul %491, %517, %cst_230 {dimension_numbers = #tpu.dot_dimension_numbers<[1], [0], [0], [1], [0, 0, 1, 1], [], []>} : vector<2x16xf32>, vector<16x16xf32>, vector<2x16xf32> -> vector<2x16xf32>
    %519 = arith.addf %515, %518 : vector<2x16xf32>
    %520 = math.tanh %519 : vector<2x16xf32>
    %521 = vector.extract_strided_slice %264 {offsets = [0, 5, 0], sizes = [2, 1, 16], strides = [1, 1, 1]} : vector<2x8x16xf32> to vector<2x1x16xf32>
    %522 = vector.shape_cast %521 : vector<2x1x16xf32> to vector<2x16xf32>
    %c3_231 = arith.constant 3 : index
    %c0_232 = arith.constant 0 : index
    %c0_233 = arith.constant 0 : index
    %523 = vector.load %arg19[%c3_231, %c0_232, %c0_233] : memref<4x16x16xf32, #tpu.memory_space<vmem>>, vector<1x16x16xf32>
    %524 = vector.shape_cast %523 : vector<1x16x16xf32> to vector<16x16xf32>
    %cst_234 = arith.constant dense<0.000000e+00> : vector<2x16xf32>
    %525 = tpu.matmul %491, %524, %cst_234 {dimension_numbers = #tpu.dot_dimension_numbers<[1], [0], [0], [1], [0, 0, 1, 1], [], []>} : vector<2x16xf32>, vector<16x16xf32>, vector<2x16xf32> -> vector<2x16xf32>
    %526 = arith.addf %522, %525 : vector<2x16xf32>
    %527 = arith.negf %526 : vector<2x16xf32>
    %528 = math.exp %527 : vector<2x16xf32>
    %cst_235 = arith.constant 1.000000e+00 : f32
    %529 = vector.broadcast %cst_235 : f32 to vector<2x16xf32>
    %530 = arith.addf %529, %528 : vector<2x16xf32>
    %531 = arith.divf %529, %530 : vector<2x16xf32>
    %532 = arith.mulf %513, %489 : vector<2x16xf32>
    %533 = arith.mulf %502, %520 : vector<2x16xf32>
    %534 = arith.addf %532, %533 : vector<2x16xf32>
    %535 = math.tanh %534 : vector<2x16xf32>
    %536 = arith.mulf %531, %535 : vector<2x16xf32>
    %537 = vector.extract_strided_slice %240 {offsets = [0, 6, 0], sizes = [2, 1, 16], strides = [1, 1, 1]} : vector<2x8x16xf32> to vector<2x1x16xf32>
    %538 = vector.shape_cast %537 : vector<2x1x16xf32> to vector<2x16xf32>
    %c0_236 = arith.constant 0 : index
    %c0_237 = arith.constant 0 : index
    %c0_238 = arith.constant 0 : index
    %539 = vector.load %arg19[%c0_236, %c0_237, %c0_238] : memref<4x16x16xf32, #tpu.memory_space<vmem>>, vector<1x16x16xf32>
    %540 = vector.shape_cast %539 : vector<1x16x16xf32> to vector<16x16xf32>
    %cst_239 = arith.constant dense<0.000000e+00> : vector<2x16xf32>
    %541 = tpu.matmul %536, %540, %cst_239 {dimension_numbers = #tpu.dot_dimension_numbers<[1], [0], [0], [1], [0, 0, 1, 1], [], []>} : vector<2x16xf32>, vector<16x16xf32>, vector<2x16xf32> -> vector<2x16xf32>
    %542 = arith.addf %538, %541 : vector<2x16xf32>
    %543 = arith.negf %542 : vector<2x16xf32>
    %544 = math.exp %543 : vector<2x16xf32>
    %cst_240 = arith.constant 1.000000e+00 : f32
    %545 = vector.broadcast %cst_240 : f32 to vector<2x16xf32>
    %546 = arith.addf %545, %544 : vector<2x16xf32>
    %547 = arith.divf %545, %546 : vector<2x16xf32>
    %548 = vector.extract_strided_slice %248 {offsets = [0, 6, 0], sizes = [2, 1, 16], strides = [1, 1, 1]} : vector<2x8x16xf32> to vector<2x1x16xf32>
    %549 = vector.shape_cast %548 : vector<2x1x16xf32> to vector<2x16xf32>
    %c1_241 = arith.constant 1 : index
    %c0_242 = arith.constant 0 : index
    %c0_243 = arith.constant 0 : index
    %550 = vector.load %arg19[%c1_241, %c0_242, %c0_243] : memref<4x16x16xf32, #tpu.memory_space<vmem>>, vector<1x16x16xf32>
    %551 = vector.shape_cast %550 : vector<1x16x16xf32> to vector<16x16xf32>
    %cst_244 = arith.constant dense<0.000000e+00> : vector<2x16xf32>
    %552 = tpu.matmul %536, %551, %cst_244 {dimension_numbers = #tpu.dot_dimension_numbers<[1], [0], [0], [1], [0, 0, 1, 1], [], []>} : vector<2x16xf32>, vector<16x16xf32>, vector<2x16xf32> -> vector<2x16xf32>
    %553 = arith.addf %549, %552 : vector<2x16xf32>
    %554 = arith.negf %553 : vector<2x16xf32>
    %555 = math.exp %554 : vector<2x16xf32>
    %cst_245 = arith.constant 1.000000e+00 : f32
    %556 = vector.broadcast %cst_245 : f32 to vector<2x16xf32>
    %557 = arith.addf %556, %555 : vector<2x16xf32>
    %558 = arith.divf %556, %557 : vector<2x16xf32>
    %559 = vector.extract_strided_slice %256 {offsets = [0, 6, 0], sizes = [2, 1, 16], strides = [1, 1, 1]} : vector<2x8x16xf32> to vector<2x1x16xf32>
    %560 = vector.shape_cast %559 : vector<2x1x16xf32> to vector<2x16xf32>
    %c2_246 = arith.constant 2 : index
    %c0_247 = arith.constant 0 : index
    %c0_248 = arith.constant 0 : index
    %561 = vector.load %arg19[%c2_246, %c0_247, %c0_248] : memref<4x16x16xf32, #tpu.memory_space<vmem>>, vector<1x16x16xf32>
    %562 = vector.shape_cast %561 : vector<1x16x16xf32> to vector<16x16xf32>
    %cst_249 = arith.constant dense<0.000000e+00> : vector<2x16xf32>
    %563 = tpu.matmul %536, %562, %cst_249 {dimension_numbers = #tpu.dot_dimension_numbers<[1], [0], [0], [1], [0, 0, 1, 1], [], []>} : vector<2x16xf32>, vector<16x16xf32>, vector<2x16xf32> -> vector<2x16xf32>
    %564 = arith.addf %560, %563 : vector<2x16xf32>
    %565 = math.tanh %564 : vector<2x16xf32>
    %566 = vector.extract_strided_slice %264 {offsets = [0, 6, 0], sizes = [2, 1, 16], strides = [1, 1, 1]} : vector<2x8x16xf32> to vector<2x1x16xf32>
    %567 = vector.shape_cast %566 : vector<2x1x16xf32> to vector<2x16xf32>
    %c3_250 = arith.constant 3 : index
    %c0_251 = arith.constant 0 : index
    %c0_252 = arith.constant 0 : index
    %568 = vector.load %arg19[%c3_250, %c0_251, %c0_252] : memref<4x16x16xf32, #tpu.memory_space<vmem>>, vector<1x16x16xf32>
    %569 = vector.shape_cast %568 : vector<1x16x16xf32> to vector<16x16xf32>
    %cst_253 = arith.constant dense<0.000000e+00> : vector<2x16xf32>
    %570 = tpu.matmul %536, %569, %cst_253 {dimension_numbers = #tpu.dot_dimension_numbers<[1], [0], [0], [1], [0, 0, 1, 1], [], []>} : vector<2x16xf32>, vector<16x16xf32>, vector<2x16xf32> -> vector<2x16xf32>
    %571 = arith.addf %567, %570 : vector<2x16xf32>
    %572 = arith.negf %571 : vector<2x16xf32>
    %573 = math.exp %572 : vector<2x16xf32>
    %cst_254 = arith.constant 1.000000e+00 : f32
    %574 = vector.broadcast %cst_254 : f32 to vector<2x16xf32>
    %575 = arith.addf %574, %573 : vector<2x16xf32>
    %576 = arith.divf %574, %575 : vector<2x16xf32>
    %577 = arith.mulf %558, %534 : vector<2x16xf32>
    %578 = arith.mulf %547, %565 : vector<2x16xf32>
    %579 = arith.addf %577, %578 : vector<2x16xf32>
    %580 = math.tanh %579 : vector<2x16xf32>
    %581 = arith.mulf %576, %580 : vector<2x16xf32>
    %582 = vector.extract_strided_slice %240 {offsets = [0, 7, 0], sizes = [2, 1, 16], strides = [1, 1, 1]} : vector<2x8x16xf32> to vector<2x1x16xf32>
    %583 = vector.shape_cast %582 : vector<2x1x16xf32> to vector<2x16xf32>
    %c0_255 = arith.constant 0 : index
    %c0_256 = arith.constant 0 : index
    %c0_257 = arith.constant 0 : index
    %584 = vector.load %arg19[%c0_255, %c0_256, %c0_257] : memref<4x16x16xf32, #tpu.memory_space<vmem>>, vector<1x16x16xf32>
    %585 = vector.shape_cast %584 : vector<1x16x16xf32> to vector<16x16xf32>
    %cst_258 = arith.constant dense<0.000000e+00> : vector<2x16xf32>
    %586 = tpu.matmul %581, %585, %cst_258 {dimension_numbers = #tpu.dot_dimension_numbers<[1], [0], [0], [1], [0, 0, 1, 1], [], []>} : vector<2x16xf32>, vector<16x16xf32>, vector<2x16xf32> -> vector<2x16xf32>
    %587 = arith.addf %583, %586 : vector<2x16xf32>
    %588 = arith.negf %587 : vector<2x16xf32>
    %589 = math.exp %588 : vector<2x16xf32>
    %cst_259 = arith.constant 1.000000e+00 : f32
    %590 = vector.broadcast %cst_259 : f32 to vector<2x16xf32>
    %591 = arith.addf %590, %589 : vector<2x16xf32>
    %592 = arith.divf %590, %591 : vector<2x16xf32>
    %593 = vector.extract_strided_slice %248 {offsets = [0, 7, 0], sizes = [2, 1, 16], strides = [1, 1, 1]} : vector<2x8x16xf32> to vector<2x1x16xf32>
    %594 = vector.shape_cast %593 : vector<2x1x16xf32> to vector<2x16xf32>
    %c1_260 = arith.constant 1 : index
    %c0_261 = arith.constant 0 : index
    %c0_262 = arith.constant 0 : index
    %595 = vector.load %arg19[%c1_260, %c0_261, %c0_262] : memref<4x16x16xf32, #tpu.memory_space<vmem>>, vector<1x16x16xf32>
    %596 = vector.shape_cast %595 : vector<1x16x16xf32> to vector<16x16xf32>
    %cst_263 = arith.constant dense<0.000000e+00> : vector<2x16xf32>
    %597 = tpu.matmul %581, %596, %cst_263 {dimension_numbers = #tpu.dot_dimension_numbers<[1], [0], [0], [1], [0, 0, 1, 1], [], []>} : vector<2x16xf32>, vector<16x16xf32>, vector<2x16xf32> -> vector<2x16xf32>
    %598 = arith.addf %594, %597 : vector<2x16xf32>
    %599 = arith.negf %598 : vector<2x16xf32>
    %600 = math.exp %599 : vector<2x16xf32>
    %cst_264 = arith.constant 1.000000e+00 : f32
    %601 = vector.broadcast %cst_264 : f32 to vector<2x16xf32>
    %602 = arith.addf %601, %600 : vector<2x16xf32>
    %603 = arith.divf %601, %602 : vector<2x16xf32>
    %604 = vector.extract_strided_slice %256 {offsets = [0, 7, 0], sizes = [2, 1, 16], strides = [1, 1, 1]} : vector<2x8x16xf32> to vector<2x1x16xf32>
    %605 = vector.shape_cast %604 : vector<2x1x16xf32> to vector<2x16xf32>
    %c2_265 = arith.constant 2 : index
    %c0_266 = arith.constant 0 : index
    %c0_267 = arith.constant 0 : index
    %606 = vector.load %arg19[%c2_265, %c0_266, %c0_267] : memref<4x16x16xf32, #tpu.memory_space<vmem>>, vector<1x16x16xf32>
    %607 = vector.shape_cast %606 : vector<1x16x16xf32> to vector<16x16xf32>
    %cst_268 = arith.constant dense<0.000000e+00> : vector<2x16xf32>
    %608 = tpu.matmul %581, %607, %cst_268 {dimension_numbers = #tpu.dot_dimension_numbers<[1], [0], [0], [1], [0, 0, 1, 1], [], []>} : vector<2x16xf32>, vector<16x16xf32>, vector<2x16xf32> -> vector<2x16xf32>
    %609 = arith.addf %605, %608 : vector<2x16xf32>
    %610 = math.tanh %609 : vector<2x16xf32>
    %611 = vector.extract_strided_slice %264 {offsets = [0, 7, 0], sizes = [2, 1, 16], strides = [1, 1, 1]} : vector<2x8x16xf32> to vector<2x1x16xf32>
    %612 = vector.shape_cast %611 : vector<2x1x16xf32> to vector<2x16xf32>
    %c3_269 = arith.constant 3 : index
    %c0_270 = arith.constant 0 : index
    %c0_271 = arith.constant 0 : index
    %613 = vector.load %arg19[%c3_269, %c0_270, %c0_271] : memref<4x16x16xf32, #tpu.memory_space<vmem>>, vector<1x16x16xf32>
    %614 = vector.shape_cast %613 : vector<1x16x16xf32> to vector<16x16xf32>
    %cst_272 = arith.constant dense<0.000000e+00> : vector<2x16xf32>
    %615 = tpu.matmul %581, %614, %cst_272 {dimension_numbers = #tpu.dot_dimension_numbers<[1], [0], [0], [1], [0, 0, 1, 1], [], []>} : vector<2x16xf32>, vector<16x16xf32>, vector<2x16xf32> -> vector<2x16xf32>
    %616 = arith.addf %612, %615 : vector<2x16xf32>
    %617 = arith.negf %616 : vector<2x16xf32>
    %618 = math.exp %617 : vector<2x16xf32>
    %cst_273 = arith.constant 1.000000e+00 : f32
    %619 = vector.broadcast %cst_273 : f32 to vector<2x16xf32>
    %620 = arith.addf %619, %618 : vector<2x16xf32>
    %621 = arith.divf %619, %620 : vector<2x16xf32>
    %622 = arith.mulf %603, %579 : vector<2x16xf32>
    %623 = arith.mulf %592, %610 : vector<2x16xf32>
    %624 = arith.addf %622, %623 : vector<2x16xf32>
    %625 = math.tanh %624 : vector<2x16xf32>
    %626 = arith.mulf %621, %625 : vector<2x16xf32>
    %627 = vector.shape_cast %232 : vector<16x32xf32> to vector<2x8x32xf32>
    %628 = vector.extract_strided_slice %627 {offsets = [0, 7, 0], sizes = [2, 1, 32], strides = [1, 1, 1]} : vector<2x8x32xf32> to vector<2x1x32xf32>
    %629 = vector.shape_cast %628 : vector<2x1x32xf32> to vector<2x32xf32>
    %c0_274 = arith.constant 0 : index
    %c0_275 = arith.constant 0 : index
    %c0_276 = arith.constant 0 : index
    %630 = vector.load %arg21[%c0_274, %c0_275, %c0_276] : memref<4x32x16xf32, #tpu.memory_space<vmem>>, vector<1x32x16xf32>
    %631 = vector.shape_cast %630 : vector<1x32x16xf32> to vector<32x16xf32>
    %cst_277 = arith.constant dense<0.000000e+00> : vector<2x16xf32>
    %632 = tpu.matmul %629, %631, %cst_277 {dimension_numbers = #tpu.dot_dimension_numbers<[1], [0], [0], [1], [0, 0, 1, 1], [], []>} : vector<2x32xf32>, vector<32x16xf32>, vector<2x16xf32> -> vector<2x16xf32>
    %c0_278 = arith.constant 0 : index
    %c0_279 = arith.constant 0 : index
    %c0_280 = arith.constant 0 : index
    %633 = vector.load %arg23[%c0_278, %c0_279, %c0_280] : memref<4x1x16xf32, #tpu.memory_space<vmem>>, vector<1x1x16xf32>
    %634 = vector.shape_cast %633 : vector<1x1x16xf32> to vector<1x16xf32>
    %635 = vector.broadcast %634 : vector<1x16xf32> to vector<2x16xf32>
    %636 = arith.addf %632, %635 : vector<2x16xf32>
    %637 = arith.negf %636 : vector<2x16xf32>
    %638 = math.exp %637 : vector<2x16xf32>
    %cst_281 = arith.constant 1.000000e+00 : f32
    %639 = vector.broadcast %cst_281 : f32 to vector<2x16xf32>
    %640 = arith.addf %639, %638 : vector<2x16xf32>
    %641 = arith.divf %639, %640 : vector<2x16xf32>
    %c2_282 = arith.constant 2 : index
    %c0_283 = arith.constant 0 : index
    %c0_284 = arith.constant 0 : index
    %642 = vector.load %arg21[%c2_282, %c0_283, %c0_284] : memref<4x32x16xf32, #tpu.memory_space<vmem>>, vector<1x32x16xf32>
    %643 = vector.shape_cast %642 : vector<1x32x16xf32> to vector<32x16xf32>
    %cst_285 = arith.constant dense<0.000000e+00> : vector<2x16xf32>
    %644 = tpu.matmul %629, %643, %cst_285 {dimension_numbers = #tpu.dot_dimension_numbers<[1], [0], [0], [1], [0, 0, 1, 1], [], []>} : vector<2x32xf32>, vector<32x16xf32>, vector<2x16xf32> -> vector<2x16xf32>
    %c2_286 = arith.constant 2 : index
    %c0_287 = arith.constant 0 : index
    %c0_288 = arith.constant 0 : index
    %645 = vector.load %arg23[%c2_286, %c0_287, %c0_288] : memref<4x1x16xf32, #tpu.memory_space<vmem>>, vector<1x1x16xf32>
    %646 = vector.shape_cast %645 : vector<1x1x16xf32> to vector<1x16xf32>
    %647 = vector.broadcast %646 : vector<1x16xf32> to vector<2x16xf32>
    %648 = arith.addf %644, %647 : vector<2x16xf32>
    %649 = math.tanh %648 : vector<2x16xf32>
    %c3_289 = arith.constant 3 : index
    %c0_290 = arith.constant 0 : index
    %c0_291 = arith.constant 0 : index
    %650 = vector.load %arg21[%c3_289, %c0_290, %c0_291] : memref<4x32x16xf32, #tpu.memory_space<vmem>>, vector<1x32x16xf32>
    %651 = vector.shape_cast %650 : vector<1x32x16xf32> to vector<32x16xf32>
    %cst_292 = arith.constant dense<0.000000e+00> : vector<2x16xf32>
    %652 = tpu.matmul %629, %651, %cst_292 {dimension_numbers = #tpu.dot_dimension_numbers<[1], [0], [0], [1], [0, 0, 1, 1], [], []>} : vector<2x32xf32>, vector<32x16xf32>, vector<2x16xf32> -> vector<2x16xf32>
    %c3_293 = arith.constant 3 : index
    %c0_294 = arith.constant 0 : index
    %c0_295 = arith.constant 0 : index
    %653 = vector.load %arg23[%c3_293, %c0_294, %c0_295] : memref<4x1x16xf32, #tpu.memory_space<vmem>>, vector<1x1x16xf32>
    %654 = vector.shape_cast %653 : vector<1x1x16xf32> to vector<1x16xf32>
    %655 = vector.broadcast %654 : vector<1x16xf32> to vector<2x16xf32>
    %656 = arith.addf %652, %655 : vector<2x16xf32>
    %657 = arith.negf %656 : vector<2x16xf32>
    %658 = math.exp %657 : vector<2x16xf32>
    %cst_296 = arith.constant 1.000000e+00 : f32
    %659 = vector.broadcast %cst_296 : f32 to vector<2x16xf32>
    %660 = arith.addf %659, %658 : vector<2x16xf32>
    %661 = arith.divf %659, %660 : vector<2x16xf32>
    %662 = arith.mulf %641, %649 : vector<2x16xf32>
    %663 = math.tanh %662 : vector<2x16xf32>
    %664 = arith.mulf %661, %663 : vector<2x16xf32>
    %c0_297 = arith.constant 0 : index
    %c0_298 = arith.constant 0 : index
    %665 = vector.load %arg24[%c0_297, %c0_298] : memref<2x1xi32, #tpu.memory_space<vmem>>, vector<2x1xi32>
    %666 = tpu.iota {dimensions = array<i32: 1>} : vector<2x4xi32>
    %667 = vector.broadcast %665 : vector<2x1xi32> to vector<2x4xi32>
    %668 = arith.cmpi eq, %666, %667 : vector<2x4xi32>
    %669 = arith.extui %668 : vector<2x4xi1> to vector<2x4xi32>
    %670 = arith.sitofp %669 : vector<2x4xi32> to vector<2x4xf32>
    %c0_299 = arith.constant 0 : index
    %c0_300 = arith.constant 0 : index
    %671 = vector.load %arg25[%c0_299, %c0_300] : memref<4x8xf32, #tpu.memory_space<vmem>>, vector<4x8xf32>
    %cst_301 = arith.constant dense<0.000000e+00> : vector<2x8xf32>
    %672 = tpu.matmul %670, %671, %cst_301 {dimension_numbers = #tpu.dot_dimension_numbers<[1], [0], [0], [1], [0, 0, 1, 1], [], []>} : vector<2x4xf32>, vector<4x8xf32>, vector<2x8xf32> -> vector<2x8xf32>
    %c0_302 = arith.constant 0 : index
    %c0_303 = arith.constant 0 : index
    %673 = vector.load %arg26[%c0_302, %c0_303] : memref<2x1xf32, #tpu.memory_space<vmem>>, vector<2x1xf32>
    %c0_304 = arith.constant 0 : index
    %c0_305 = arith.constant 0 : index
    %674 = vector.load %arg27[%c0_304, %c0_305] : memref<1x32xf32, #tpu.memory_space<vmem>>, vector<1x32xf32>
    %cst_306 = arith.constant dense<0.000000e+00> : vector<2x32xf32>
    %675 = tpu.matmul %673, %674, %cst_306 {dimension_numbers = #tpu.dot_dimension_numbers<[1], [0], [0], [1], [0, 0, 1, 1], [], []>} : vector<2x1xf32>, vector<1x32xf32>, vector<2x32xf32> -> vector<2x32xf32>
    %c0_307 = arith.constant 0 : index
    %c0_308 = arith.constant 0 : index
    %676 = vector.load %arg28[%c0_307, %c0_308] : memref<1x32xf32, #tpu.memory_space<vmem>>, vector<1x32xf32>
    %677 = vector.broadcast %676 : vector<1x32xf32> to vector<2x32xf32>
    %678 = arith.addf %675, %677 : vector<2x32xf32>
    %c0_309 = arith.constant 0 : index
    %c0_310 = arith.constant 0 : index
    %679 = vector.load %arg29[%c0_309, %c0_310] : memref<72x3xf32, #tpu.memory_space<vmem>>, vector<72x3xf32>
    %680 = vector.extract_strided_slice %679 {offsets = [0, 0], sizes = [16, 3], strides = [1, 1]} : vector<72x3xf32> to vector<16x3xf32>
    %cst_311 = arith.constant dense<0.000000e+00> : vector<2x3xf32>
    %681 = tpu.matmul %626, %680, %cst_311 {dimension_numbers = #tpu.dot_dimension_numbers<[1], [0], [0], [1], [0, 0, 1, 1], [], []>} : vector<2x16xf32>, vector<16x3xf32>, vector<2x3xf32> -> vector<2x3xf32>
    %682 = vector.extract_strided_slice %679 {offsets = [16, 0], sizes = [16, 3], strides = [1, 1]} : vector<72x3xf32> to vector<16x3xf32>
    %cst_312 = arith.constant dense<0.000000e+00> : vector<2x3xf32>
    %683 = tpu.matmul %664, %682, %cst_312 {dimension_numbers = #tpu.dot_dimension_numbers<[1], [0], [0], [1], [0, 0, 1, 1], [], []>} : vector<2x16xf32>, vector<16x3xf32>, vector<2x3xf32> -> vector<2x3xf32>
    %684 = arith.addf %681, %683 : vector<2x3xf32>
    %685 = vector.extract_strided_slice %679 {offsets = [32, 0], sizes = [8, 3], strides = [1, 1]} : vector<72x3xf32> to vector<8x3xf32>
    %cst_313 = arith.constant dense<0.000000e+00> : vector<2x3xf32>
    %686 = tpu.matmul %672, %685, %cst_313 {dimension_numbers = #tpu.dot_dimension_numbers<[1], [0], [0], [1], [0, 0, 1, 1], [], []>} : vector<2x8xf32>, vector<8x3xf32>, vector<2x3xf32> -> vector<2x3xf32>
    %687 = arith.addf %684, %686 : vector<2x3xf32>
    %688 = vector.extract_strided_slice %679 {offsets = [40, 0], sizes = [32, 3], strides = [1, 1]} : vector<72x3xf32> to vector<32x3xf32>
    %cst_314 = arith.constant dense<0.000000e+00> : vector<2x3xf32>
    %689 = tpu.matmul %678, %688, %cst_314 {dimension_numbers = #tpu.dot_dimension_numbers<[1], [0], [0], [1], [0, 0, 1, 1], [], []>} : vector<2x32xf32>, vector<32x3xf32>, vector<2x3xf32> -> vector<2x3xf32>
    %690 = arith.addf %687, %689 : vector<2x3xf32>
    %c0_315 = arith.constant 0 : index
    %c0_316 = arith.constant 0 : index
    %691 = vector.load %arg30[%c0_315, %c0_316] : memref<1x3xf32, #tpu.memory_space<vmem>>, vector<1x3xf32>
    %692 = vector.broadcast %691 : vector<1x3xf32> to vector<2x3xf32>
    %693 = arith.addf %690, %692 : vector<2x3xf32>
    %c0_317 = arith.constant 0 : index
    %c0_318 = arith.constant 0 : index
    %694 = vector.load %arg31[%c0_317, %c0_318] : memref<2x3xf32, #tpu.memory_space<vmem>>, vector<2x3xf32>
    tpu.vector_store %arg31[%c0_317, %c0_318], %693 {strides = array<i32>} : memref<2x3xf32, #tpu.memory_space<vmem>>, vector<2x3xf32>,
    return
  }
}

</mosaic_0001>

<llo_original>
// kernel: forward.1
$region0: #{forward.1}
  #allocation0 [shape = 'u32[]', space=smem, size = 0x4, offset = 0x4, fixed_abs, tag = 'smem constant byte address 0x4 - core index']
  #allocation1 [shape = 'u32[144,128]{1,0:T(1,128)}', space=vmem, size = 0x12000, scoped, tag = 'internal scratch']
  %s0 = inlined_call_operand.smem [shape: u32[32], index: -1, kind: input, shape index: {}]
  %s1 = sld [smem:[%s0]]
  %s2 = scalar_lea.smem %s0, 1
  %s3 = sld [smem:[%s2]]
  %s4 = scalar_lea.smem %s0, 2
  %s5 = sld [smem:[%s4]]
  %s6 = scalar_lea.smem %s0, 3
  %s7 = sld [smem:[%s6]]
  %s8 = scalar_lea.smem %s0, 4
  %s9 = sld [smem:[%s8]]
  %s10 = scalar_lea.smem %s0, 5
  %s11 = sld [smem:[%s10]]
  %s12 = scalar_lea.smem %s0, 6
  %s13 = sld [smem:[%s12]]
  %s14 = scalar_lea.smem %s0, 7
  %s15 = sld [smem:[%s14]]
  %s16 = scalar_lea.smem %s0, 8
  %s17 = sld [smem:[%s16]]
  %s18 = scalar_lea.smem %s0, 9
  %s19 = sld [smem:[%s18]]
  %s20 = scalar_lea.smem %s0, 10
  %s21 = sld [smem:[%s20]]
  %s22 = scalar_lea.smem %s0, 11
  %s23 = sld [smem:[%s22]]
  %s24 = scalar_lea.smem %s0, 12
  %s25 = sld [smem:[%s24]]
  %s26 = scalar_lea.smem %s0, 13
  %s27 = sld [smem:[%s26]]
  %s28 = scalar_lea.smem %s0, 14
  %s29 = sld [smem:[%s28]]
  %s30 = scalar_lea.smem %s0, 15
  %s31 = sld [smem:[%s30]]
  %s32 = scalar_lea.smem %s0, 16
  %s33 = sld [smem:[%s32]]
  %s34 = scalar_lea.smem %s0, 17
  %s35 = sld [smem:[%s34]]
  %s36 = scalar_lea.smem %s0, 18
  %s37 = sld [smem:[%s36]]
  %s38 = scalar_lea.smem %s0, 19
  %s39 = sld [smem:[%s38]]
  %s40 = scalar_lea.smem %s0, 20
  %s41 = sld [smem:[%s40]]
  %s42 = scalar_lea.smem %s0, 21
  %s43 = sld [smem:[%s42]]
  %s44 = scalar_lea.smem %s0, 22
  %s45 = sld [smem:[%s44]]
  %s46 = scalar_lea.smem %s0, 23
  %s47 = sld [smem:[%s46]]
  %s48 = scalar_lea.smem %s0, 24
  %s49 = sld [smem:[%s48]]
  %s50 = scalar_lea.smem %s0, 25
  %s51 = sld [smem:[%s50]]
  %s52 = scalar_lea.smem %s0, 26
  %s53 = sld [smem:[%s52]]
  %s54 = scalar_lea.smem %s0, 27
  %s55 = sld [smem:[%s54]]
  %s56 = scalar_lea.smem %s0, 28
  %s57 = sld [smem:[%s56]]
  %s58 = scalar_lea.smem %s0, 29
  %s59 = sld [smem:[%s58]]
  %s60 = scalar_lea.smem %s0, 30
  %s61 = sld [smem:[%s60]]
  %s62 = scalar_lea.smem %s0, 31
  %s63 = sld [smem:[%s62]]
  %s64 = sld [smem:[#allocation0]]
  $region134: #{forward.1} parent=0
    _
  %s66 = ssub.s32 1, %s64
  %s67 = scalar_select 0, %s66, %s64
  $region1: #{forward.1} parent=0
    #allocation2 [shape = 'u8[1024]{0}', space=vmem, size = 0x400, scoped, tag = 'output window, operand 0, single buffered']
    #allocation3 [shape = 's32[1]{0}', space=sflag, size = 0x4, scoped, tag = 'scoped memory for forward.1']
    %68 = vsyncpa [#allocation3], 0
    // Predicated region
    $region2: #{forward.1} parent=1 // pred_check
      _
    $region3: #{forward.1} parent=1 // pred_check_branch
      %70 = sbr.rel (0) target = $region5
    $region4: #{forward.1} parent=1 // pred_region
      _
    $region5: #{forward.1} parent=1 // pred_fallthru
      _
    // Predicated region
    $region6: #{forward.1} parent=1 // pred_check
      _
    $region7: #{forward.1} parent=1 // pred_check_branch
      %72 = sbr.rel (0) target = $region9
    $region8: #{forward.1} parent=1 // pred_region
      _
    $region9: #{forward.1} parent=1 // pred_fallthru
      _
    // Predicated region
    $region10: #{forward.1} parent=1 // pred_check
      _
    $region11: #{forward.1} parent=1 // pred_check_branch
      %74 = sbr.rel (0) target = $region13
    $region12: #{forward.1} parent=1 // pred_region
      _
    $region13: #{forward.1} parent=1 // pred_fallthru
      _
    // Predicated region
    $region14: #{forward.1} parent=1 // pred_check
      _
    $region15: #{forward.1} parent=1 // pred_check_branch
      %76 = sbr.rel (0) target = $region17
    $region16: #{forward.1} parent=1 // pred_region
      _
    $region17: #{forward.1} parent=1 // pred_fallthru
      _
    // Predicated region
    $region18: #{forward.1} parent=1 // pred_check
      _
    $region19: #{forward.1} parent=1 // pred_check_branch
      %78 = sbr.rel (0) target = $region21
    $region20: #{forward.1} parent=1 // pred_region
      _
    $region21: #{forward.1} parent=1 // pred_fallthru
      _
    // Predicated region
    $region22: #{forward.1} parent=1 // pred_check
      _
    $region23: #{forward.1} parent=1 // pred_check_branch
      %80 = sbr.rel (0) target = $region25
    $region24: #{forward.1} parent=1 // pred_region
      _
    $region25: #{forward.1} parent=1 // pred_fallthru
      _
    // Predicated region
    $region26: #{forward.1} parent=1 // pred_check
      _
    $region27: #{forward.1} parent=1 // pred_check_branch
      %82 = sbr.rel (0) target = $region29
    $region28: #{forward.1} parent=1 // pred_region
      _
    $region29: #{forward.1} parent=1 // pred_fallthru
      _
    // Predicated region
    $region30: #{forward.1} parent=1 // pred_check
      _
    $region31: #{forward.1} parent=1 // pred_check_branch
      %84 = sbr.rel (0) target = $region33
    $region32: #{forward.1} parent=1 // pred_region
      _
    $region33: #{forward.1} parent=1 // pred_fallthru
      _
    // Predicated region
    $region34: #{forward.1} parent=1 // pred_check
      _
    $region35: #{forward.1} parent=1 // pred_check_branch
      %86 = sbr.rel (0) target = $region37
    $region36: #{forward.1} parent=1 // pred_region
      _
    $region37: #{forward.1} parent=1 // pred_fallthru
      _
    // Predicated region
    $region38: #{forward.1} parent=1 // pred_check
      _
    $region39: #{forward.1} parent=1 // pred_check_branch
      %88 = sbr.rel (0) target = $region41
    $region40: #{forward.1} parent=1 // pred_region
      _
    $region41: #{forward.1} parent=1 // pred_fallthru
      _
    // Predicated region
    $region42: #{forward.1} parent=1 // pred_check
      _
    $region43: #{forward.1} parent=1 // pred_check_branch
      %90 = sbr.rel (0) target = $region45
    $region44: #{forward.1} parent=1 // pred_region
      _
    $region45: #{forward.1} parent=1 // pred_fallthru
      _
    // Predicated region
    $region46: #{forward.1} parent=1 // pred_check
      _
    $region47: #{forward.1} parent=1 // pred_check_branch
      %92 = sbr.rel (0) target = $region49
    $region48: #{forward.1} parent=1 // pred_region
      _
    $region49: #{forward.1} parent=1 // pred_fallthru
      _
    // Predicated region
    $region50: #{forward.1} parent=1 // pred_check
      _
    $region51: #{forward.1} parent=1 // pred_check_branch
      %94 = sbr.rel (0) target = $region53
    $region52: #{forward.1} parent=1 // pred_region
      _
    $region53: #{forward.1} parent=1 // pred_fallthru
      _
    // Predicated region
    $region54: #{forward.1} parent=1 // pred_check
      _
    $region55: #{forward.1} parent=1 // pred_check_branch
      %96 = sbr.rel (0) target = $region57
    $region56: #{forward.1} parent=1 // pred_region
      _
    $region57: #{forward.1} parent=1 // pred_fallthru
      _
    // Predicated region
    $region58: #{forward.1} parent=1 // pred_check
      _
    $region59: #{forward.1} parent=1 // pred_check_branch
      %98 = sbr.rel (0) target = $region61
    $region60: #{forward.1} parent=1 // pred_region
      _
    $region61: #{forward.1} parent=1 // pred_fallthru
      _
    // Predicated region
    $region62: #{forward.1} parent=1 // pred_check
      _
    $region63: #{forward.1} parent=1 // pred_check_branch
      %100 = sbr.rel (0) target = $region65
    $region64: #{forward.1} parent=1 // pred_region
      _
    $region65: #{forward.1} parent=1 // pred_fallthru
      _
    // Predicated region
    $region66: #{forward.1} parent=1 // pred_check
      _
    $region67: #{forward.1} parent=1 // pred_check_branch
      %102 = sbr.rel (0) target = $region69
    $region68: #{forward.1} parent=1 // pred_region
      _
    $region69: #{forward.1} parent=1 // pred_fallthru
      _
    // Predicated region
    $region70: #{forward.1} parent=1 // pred_check
      _
    $region71: #{forward.1} parent=1 // pred_check_branch
      %104 = sbr.rel (0) target = $region73
    $region72: #{forward.1} parent=1 // pred_region
      _
    $region73: #{forward.1} parent=1 // pred_fallthru
      _
    // Predicated region
    $region74: #{forward.1} parent=1 // pred_check
      _
    $region75: #{forward.1} parent=1 // pred_check_branch
      %106 = sbr.rel (0) target = $region77
    $region76: #{forward.1} parent=1 // pred_region
      _
    $region77: #{forward.1} parent=1 // pred_fallthru
      _
    // Predicated region
    $region78: #{forward.1} parent=1 // pred_check
      _
    $region79: #{forward.1} parent=1 // pred_check_branch
      %108 = sbr.rel (0) target = $region81
    $region80: #{forward.1} parent=1 // pred_region
      _
    $region81: #{forward.1} parent=1 // pred_fallthru
      _
    // Predicated region
    $region82: #{forward.1} parent=1 // pred_check
      _
    $region83: #{forward.1} parent=1 // pred_check_branch
      %110 = sbr.rel (0) target = $region85
    $region84: #{forward.1} parent=1 // pred_region
      _
    $region85: #{forward.1} parent=1 // pred_fallthru
      _
    // Predicated region
    $region86: #{forward.1} parent=1 // pred_check
      _
    $region87: #{forward.1} parent=1 // pred_check_branch
      %112 = sbr.rel (0) target = $region89
    $region88: #{forward.1} parent=1 // pred_region
      _
    $region89: #{forward.1} parent=1 // pred_fallthru
      _
    // Predicated region
    $region90: #{forward.1} parent=1 // pred_check
      _
    $region91: #{forward.1} parent=1 // pred_check_branch
      %114 = sbr.rel (0) target = $region93
    $region92: #{forward.1} parent=1 // pred_region
      _
    $region93: #{forward.1} parent=1 // pred_fallthru
      _
    // Predicated region
    $region94: #{forward.1} parent=1 // pred_check
      _
    $region95: #{forward.1} parent=1 // pred_check_branch
      %116 = sbr.rel (0) target = $region97
    $region96: #{forward.1} parent=1 // pred_region
      _
    $region97: #{forward.1} parent=1 // pred_fallthru
      _
    // Predicated region
    $region98: #{forward.1} parent=1 // pred_check
      _
    $region99: #{forward.1} parent=1 // pred_check_branch
      %118 = sbr.rel (0) target = $region101
    $region100: #{forward.1} parent=1 // pred_region
      _
    $region101: #{forward.1} parent=1 // pred_fallthru
      _
    // Predicated region
    $region102: #{forward.1} parent=1 // pred_check
      _
    $region103: #{forward.1} parent=1 // pred_check_branch
      %120 = sbr.rel (0) target = $region105
    $region104: #{forward.1} parent=1 // pred_region
      _
    $region105: #{forward.1} parent=1 // pred_fallthru
      _
    // Predicated region
    $region106: #{forward.1} parent=1 // pred_check
      _
    $region107: #{forward.1} parent=1 // pred_check_branch
      %122 = sbr.rel (0) target = $region109
    $region108: #{forward.1} parent=1 // pred_region
      _
    $region109: #{forward.1} parent=1 // pred_fallthru
      _
    // Predicated region
    $region110: #{forward.1} parent=1 // pred_check
      _
    $region111: #{forward.1} parent=1 // pred_check_branch
      %124 = sbr.rel (0) target = $region113
    $region112: #{forward.1} parent=1 // pred_region
      _
    $region113: #{forward.1} parent=1 // pred_fallthru
      _
    // Predicated region
    $region114: #{forward.1} parent=1 // pred_check
      _
    $region115: #{forward.1} parent=1 // pred_check_branch
      %126 = sbr.rel (0) target = $region117
    $region116: #{forward.1} parent=1 // pred_region
      _
    $region117: #{forward.1} parent=1 // pred_fallthru
      _
    // Predicated region
    $region118: #{forward.1} parent=1 // pred_check
      _
    $region119: #{forward.1} parent=1 // pred_check_branch
      %128 = sbr.rel (0) target = $region121
    $region120: #{forward.1} parent=1 // pred_region
      _
    $region121: #{forward.1} parent=1 // pred_fallthru
      _
    // Predicated region
    $region122: #{forward.1} parent=1 // pred_check
      _
    $region123: #{forward.1} parent=1 // pred_check_branch
      %130 = sbr.rel (0) target = $region125
    $region124: #{forward.1} parent=1 // pred_region
      _
    $region125: #{forward.1} parent=1 // pred_fallthru
      _
    %v131 = vld [vmem:[%s1] sm:$0xff]
    %v132 = vld [vmem:[%s1 + $0x8] sm:$0xff]
    %v133 = vlaneseq
    %v134 = vand.u32 %v133, 127
    %135 = vset.pattern.permute.xlu0 0
    %136 = vperm.xlu0 %135, %v131
    %v137 = vpop.permute.xlu0 %136
    %138 = vset.pattern.permute.xlu0 0
    %139 = vperm.xlu0 %138, %v132
    %v140 = vpop.permute.xlu0 %139
    %vm141 = vcmp.eq.s32.totalorder %v134, %v137
    %vm142 = vcmp.eq.s32.totalorder %v134, %v140
    %v143 = vsel %vm141, 1, 0
    %v144 = vsel %vm142, 1, 0
    %v145 = vcvt.s32.f32 %v143
    %v146 = vcvt.s32.f32 %v144
    %v147 = vld [vmem:[%s5] sm:$0xff]
    %v148 = vld [vmem:[%s5 + $0x8] sm:$0xff]
    %v149 = vld [vmem:[%s5 + $0x10] sm:$0xff]
    %v150 = vld [vmem:[%s5 + $0x18] sm:$0xff]
    %v151 = vld [vmem:[%s5 + $0x20] sm:$0xff]
    %v152 = vld [vmem:[%s5 + $0x28] sm:$0xff]
    %v153 = vld [vmem:[%s5 + $0x30] sm:$0xff]
    %v154 = vld [vmem:[%s5 + $0x38] sm:$0xff]
    %v155 = vld [vmem:[%s5 + $0x40] sm:$0xff]
    %v156 = vld [vmem:[%s5 + $0x48] sm:$0xff]
    %v157 = vld [vmem:[%s5 + $0x50] sm:$0xff]
    %v158 = vld [vmem:[%s5 + $0x58] sm:$0xff]
    %v159 = vld [vmem:[%s5 + $0x60] sm:$0xf]
    %v160 = vld [vmem:[%s7] sm:$0xff]
    %vm161 = vcmask 818176
    %v163 = vsel %vm161, %v145, 0
    %v166 = vsel %vm161, %v146, 0
    %vm168 = vcmask 1043456
    %v170 = vsel %vm168, %v159, 0
    %172 = vmatprep.subr.mxu0 0.0
    %173 = vmatpush1.msra.mxu0 %v147
    %174 = vmatprep.subr.mxu0 0.0
    %175 = vmatpush1.msra.mxu0 %v148
    %176 = vmatprep.subr.mxu0 0.0
    %177 = vmatpush1.msra.mxu0 %v149
    %178 = vmatprep.subr.mxu0 0.0
    %179 = vmatpush1.msra.mxu0 %v150
    %180 = vmatprep.subr.mxu0 0.0
    %181 = vmatpush1.msra.mxu0 %v151
    %182 = vmatprep.subr.mxu0 0.0
    %183 = vmatpush1.msra.mxu0 %v152
    %184 = vmatprep.subr.mxu0 0.0
    %185 = vmatpush1.msra.mxu0 %v153
    %186 = vmatprep.subr.mxu0 0.0
    %187 = vmatpush1.msra.mxu0 %v154
    %188 = vmatprep.subr.mxu0 0.0
    %189 = vmatpush1.msra.mxu0 %v155
    %190 = vmatprep.subr.mxu0 0.0
    %191 = vmatpush1.msra.mxu0 %v156
    %192 = vmatprep.subr.mxu0 0.0
    %193 = vmatpush1.msra.mxu0 %v157
    %194 = vmatprep.subr.mxu0 0.0
    %195 = vmatpush1.msra.mxu0 %v158
    %196 = vmatprep.subr.mxu0 0.0
    %197 = vmatpush1.msra.mxu0 %v170
    %198 = vmatprep.subr.mxu0 0.0
    %199 = vmatpush1.msra.mxu0 0.0
    %200 = vmatprep.subr.mxu0 0.0
    %201 = vmatpush1.msra.mxu0 0.0
    %202 = vmatprep.subr.mxu0 0.0
    %203 = vmatpush1.msra.mxu0 0.0
    %204 = vmatprep.subr.mxu0 0.0
    %205 = vmatpush1.msra.mxu0 0.0
    %206 = vmatprep.subr.mxu0 0.0
    %207 = vmatpush1.msra.mxu0 0.0
    %208 = vmatprep.subr.mxu0 0.0
    %209 = vmatpush1.msra.mxu0 0.0
    %210 = vmatprep.subr.mxu0 0.0
    %211 = vmatpush1.msra.mxu0 0.0
    %212 = vmatprep.subr.mxu0 0.0
    %213 = vmatpush1.msra.mxu0 0.0
    %214 = vmatprep.subr.mxu0 0.0
    %215 = vmatpush1.msra.mxu0 0.0
    %216 = vmatprep.subr.mxu0 0.0
    %217 = vmatpush1.msra.mxu0 0.0
    %218 = vmatprep.subr.mxu0 0.0
    %219 = vmatpush1.msra.mxu0 0.0
    %220 = vmatprep.subr.mxu0 0.0
    %221 = vmatpush1.msra.mxu0 0.0
    %222 = vmatprep.subr.mxu0 0.0
    %223 = vmatpush1.msra.mxu0 0.0
    %224 = vmatprep.subr.mxu0 0.0
    %225 = vmatpush1.msra.mxu0 0.0
    %226 = vmatprep.subr.mxu0 0.0
    %227 = vmatpush1.msra.mxu0 0.0
    %228 = vmatprep.subr.mxu0 0.0
    %229 = vmatpush1.msra.mxu0 0.0
    %230 = vmatprep.subr.mxu0 0.0
    %231 = vmatpush1.msra.mxu0 0.0
    %232 = vmatprep.subr.mxu0 0.0
    %233 = vmatpush1.msra.mxu0 0.0
    %234 = vmatprep.subr.mxu0 0.0
    %235 = vmatpush1.msra.mxu0 0.0
    %236 = vmatprep.mubr.f32.mxu0 0.0
    %237 = vmatmul.mubr.f32.gmra.mrb[0].mxu0 %v163
    %v238 = vpop.f32.mrb[0].mxu0
    %v239 = vadd.f32 %v160, %v238
    %v240 = vpop.f32.mrb[0].mxu0
    %241 = vmatprep.mubr.f32.mxu0 0.0
    %242 = vmatmul.mubr.f32.gmra.mrb[0].mxu0 %v166
    %v243 = vpop.f32.mrb[0].mxu0
    %v244 = vadd.f32 %v160, %v243
    %v245 = vpop.f32.mrb[0].mxu0
    %246 = vdwg.mxu0
    %v247 = vld [vmem:[%s9] sm:$0x1]
    %v248 = vld [vmem:[%s11] sm:$0x1]
    %vm249 = vcmask 261120
    %v250 = vsel %vm249, %v239, 0.0
    %251 = vadd.xlane.f32.xlu0 %v250
    %v252 = vpop.xlane.xlu0 %251
    %v253 = vsel %vm249, %v244, 0.0
    %254 = vadd.xlane.f32.xlu0 %v253
    %v255 = vpop.xlane.xlu0 %254
    %v256 = vrcp.pop 32.0
    %v257 = vmul.f32 %v252, %v256
    %v258 = vmul.f32 %v255, %v256
    %v259 = vsub.f32 %v239, %v257
    %v260 = vsub.f32 %v244, %v258
    %v261 = vmul.f32 %v259, %v259
    %v262 = vmul.f32 %v260, %v260
    %v263 = vsel %vm249, %v261, 0.0
    %264 = vadd.xlane.f32.xlu0 %v263
    %v265 = vpop.xlane.xlu0 %264
    %v266 = vsel %vm249, %v262, 0.0
    %267 = vadd.xlane.f32.xlu0 %v266
    %v268 = vpop.xlane.xlu0 %267
    %v269 = vmul.f32 %v265, %v256
    %v270 = vmul.f32 %v268, %v256
    %v271 = vadd.f32 %v269, 1e-05
    %v272 = vadd.f32 %v270, 1e-05
    %v273 = vrsqrt.pop %v271
    %v274 = vrsqrt.pop %v272
    %v275 = vmul.f32 %v259, %v273
    %v276 = vmul.f32 %v260, %v274
    %v278 = vlaneseq
    %v279 = vshrl.u32 %v278, 7
    %v280 = vsub.s32 0, %v279
    %v281 = vrot.slane %v247, %v280
    %v283 = vmul.f32 %v275, %v281
    %v284 = vmul.f32 %v276, %v281
    %v286 = vlaneseq
    %v287 = vshrl.u32 %v286, 7
    %v288 = vsub.s32 0, %v287
    %v289 = vrot.slane %v248, %v288
    %v291 = vadd.f32 %v283, %v289
    %v292 = vadd.f32 %v284, %v289
    %v293 = vld [vmem:[%s3] sm:$0x3]
    %v294 = vcvt.s32.f32 %v293
    %v295 = vsub.f32 %v294, 1.0
    %v296 = vmul.f32 %v295, 1e+09
    %v297 = vld [vmem:[%s13] sm:$0xff]
    %v298 = vld [vmem:[%s13 + $0x8] sm:$0xff]
    %v299 = vld [vmem:[%s13 + $0x10] sm:$0xff]
    %v300 = vld [vmem:[%s13 + $0x18] sm:$0xff]
    %v301 = vld [vmem:[%s15] sm:$0x1]
    %v302 = vld [vmem:[%s17] sm:$0xff]
    %v303 = vld [vmem:[%s17 + $0x8] sm:$0xff]
    %v304 = vld [vmem:[%s17 + $0x10] sm:$0xff]
    %v305 = vld [vmem:[%s17 + $0x18] sm:$0xff]
    %v306 = vld [vmem:[%s19] sm:$0x1]
    %v307 = vld [vmem:[%s25] sm:$0xff]
    %v308 = vld [vmem:[%s25 + $0x8] sm:$0xff]
    %v309 = vld [vmem:[%s25 + $0x10] sm:$0xff]
    %v310 = vld [vmem:[%s25 + $0x18] sm:$0xff]
    %v311 = vld [vmem:[%s27] sm:$0x1]
    %v312 = vld [vmem:[%s29] sm:$0xff]
    %v313 = vld [vmem:[%s29 + $0x8] sm:$0xff]
    %v314 = vld [vmem:[%s29 + $0x10] sm:$0xff]
    %v315 = vld [vmem:[%s29 + $0x18] sm:$0xff]
    %v316 = vld [vmem:[%s29 + $0x20] sm:$0xff]
    %v317 = vld [vmem:[%s29 + $0x28] sm:$0xff]
    %v318 = vld [vmem:[%s29 + $0x30] sm:$0xff]
    %v319 = vld [vmem:[%s29 + $0x38] sm:$0xff]
    %v320 = vld [vmem:[%s31] sm:$0x1]
    %v322 = vlaneseq
    %v323 = vshrl.u32 %v322, 7
    %v324 = vsub.s32 0, %v323
    %v325 = vrot.slane %v301, %v324
    %v328 = vsel %vm249, %v291, 0
    %v331 = vsel %vm249, %v292, 0
    %333 = vmatprep.subr.mxu0 0.0
    %334 = vmatpush1.msra.mxu0 %v297
    %335 = vmatprep.subr.mxu0 0.0
    %336 = vmatpush1.msra.mxu0 %v298
    %337 = vmatprep.subr.mxu0 0.0
    %338 = vmatpush1.msra.mxu0 %v299
    %339 = vmatprep.subr.mxu0 0.0
    %340 = vmatpush1.msra.mxu0 %v300
    %341 = vmatprep.subr.mxu0 0.0
    %342 = vmatpush1.msra.mxu0 0.0
    %343 = vmatprep.subr.mxu0 0.0
    %344 = vmatpush1.msra.mxu0 0.0
    %345 = vmatprep.subr.mxu0 0.0
    %346 = vmatpush1.msra.mxu0 0.0
    %347 = vmatprep.subr.mxu0 0.0
    %348 = vmatpush1.msra.mxu0 0.0
    %349 = vmatprep.subr.mxu0 0.0
    %350 = vmatpush1.msra.mxu0 0.0
    %351 = vmatprep.subr.mxu0 0.0
    %352 = vmatpush1.msra.mxu0 0.0
    %353 = vmatprep.subr.mxu0 0.0
    %354 = vmatpush1.msra.mxu0 0.0
    %355 = vmatprep.subr.mxu0 0.0
    %356 = vmatpush1.msra.mxu0 0.0
    %357 = vmatprep.subr.mxu0 0.0
    %358 = vmatpush1.msra.mxu0 0.0
    %359 = vmatprep.subr.mxu0 0.0
    %360 = vmatpush1.msra.mxu0 0.0
    %361 = vmatprep.subr.mxu0 0.0
    %362 = vmatpush1.msra.mxu0 0.0
    %363 = vmatprep.subr.mxu0 0.0
    %364 = vmatpush1.msra.mxu0 0.0
    %365 = vmatprep.subr.mxu0 0.0
    %366 = vmatpush1.msra.mxu0 0.0
    %367 = vmatprep.subr.mxu0 0.0
    %368 = vmatpush1.msra.mxu0 0.0
    %369 = vmatprep.subr.mxu0 0.0
    %370 = vmatpush1.msra.mxu0 0.0
    %371 = vmatprep.subr.mxu0 0.0
    %372 = vmatpush1.msra.mxu0 0.0
    %373 = vmatprep.subr.mxu0 0.0
    %374 = vmatpush1.msra.mxu0 0.0
    %375 = vmatprep.subr.mxu0 0.0
    %376 = vmatpush1.msra.mxu0 0.0
    %377 = vmatprep.subr.mxu0 0.0
    %378 = vmatpush1.msra.mxu0 0.0
    %379 = vmatprep.subr.mxu0 0.0
    %380 = vmatpush1.msra.mxu0 0.0
    %381 = vmatprep.subr.mxu0 0.0
    %382 = vmatpush1.msra.mxu0 0.0
    %383 = vmatprep.subr.mxu0 0.0
    %384 = vmatpush1.msra.mxu0 0.0
    %385 = vmatprep.subr.mxu0 0.0
    %386 = vmatpush1.msra.mxu0 0.0
    %387 = vmatprep.subr.mxu0 0.0
    %388 = vmatpush1.msra.mxu0 0.0
    %389 = vmatprep.subr.mxu0 0.0
    %390 = vmatpush1.msra.mxu0 0.0
    %391 = vmatprep.subr.mxu0 0.0
    %392 = vmatpush1.msra.mxu0 0.0
    %393 = vmatprep.subr.mxu0 0.0
    %394 = vmatpush1.msra.mxu0 0.0
    %395 = vmatprep.subr.mxu0 0.0
    %396 = vmatpush1.msra.mxu0 0.0
    %397 = vmatprep.mubr.f32.mxu0 0.0
    %398 = vmatmul.mubr.f32.gmra.mrb[0].mxu0 %v328
    %v399 = vpop.f32.mrb[0].mxu0
    %v400 = vadd.f32 %v325, %v399
    %v401 = vpop.f32.mrb[0].mxu0
    %402 = vmatprep.mubr.f32.mxu0 0.0
    %403 = vmatmul.mubr.f32.gmra.mrb[0].mxu0 %v331
    %v404 = vpop.f32.mrb[0].mxu0
    %v405 = vadd.f32 %v325, %v404
    %v406 = vpop.f32.mrb[0].mxu0
    %407 = vdwg.mxu0
    %409 = vrot.lane.b32.xlu0 %v400, 96
    %v410 = vpop.permute.xlu0 %409
    %vm411 = vcmask 130048
    %v412 = vsel %vm411, %v400, 0
    %v414 = vsel %vm411, %v410, 0
    %416 = vmatprep.subr.mxu0 0.0
    %417 = vmatpush1.xpose.msra.mxu0 %v414
    %418 = vmatprep.subr.mxu0 0.0
    %419 = vmatpush1.xpose.msra.mxu0 0.0
    %420 = vmatprep.subr.mxu0 0.0
    %421 = vmatpush1.xpose.msra.mxu0 0.0
    %422 = vmatprep.subr.mxu0 0.0
    %423 = vmatpush1.xpose.msra.mxu0 0.0
    %424 = vmatprep.subr.mxu0 0.0
    %425 = vmatpush1.xpose.msra.mxu0 0.0
    %426 = vmatprep.subr.mxu0 0.0
    %427 = vmatpush1.xpose.msra.mxu0 0.0
    %428 = vmatprep.subr.mxu0 0.0
    %429 = vmatpush1.xpose.msra.mxu0 0.0
    %430 = vmatprep.subr.mxu0 0.0
    %431 = vmatpush1.xpose.msra.mxu0 0.0
    %432 = vmatprep.subr.mxu0 0.0
    %433 = vmatpush1.xpose.msra.mxu0 0.0
    %434 = vmatprep.subr.mxu0 0.0
    %435 = vmatpush1.xpose.msra.mxu0 0.0
    %436 = vmatprep.subr.mxu0 0.0
    %437 = vmatpush1.xpose.msra.mxu0 0.0
    %438 = vmatprep.subr.mxu0 0.0
    %439 = vmatpush1.xpose.msra.mxu0 0.0
    %440 = vmatprep.subr.mxu0 0.0
    %441 = vmatpush1.xpose.msra.mxu0 0.0
    %442 = vmatprep.subr.mxu0 0.0
    %443 = vmatpush1.xpose.msra.mxu0 0.0
    %444 = vmatprep.subr.mxu0 0.0
    %445 = vmatpush1.xpose.msra.mxu0 0.0
    %446 = vmatprep.subr.mxu0 0.0
    %447 = vmatpush1.xpose.msra.mxu0 0.0
    %448 = vmatprep.subr.mxu0 0.0
    %449 = vmatpush1.xpose.msra.mxu0 0.0
    %450 = vmatprep.subr.mxu0 0.0
    %451 = vmatpush1.xpose.msra.mxu0 0.0
    %452 = vmatprep.subr.mxu0 0.0
    %453 = vmatpush1.xpose.msra.mxu0 0.0
    %454 = vmatprep.subr.mxu0 0.0
    %455 = vmatpush1.xpose.msra.mxu0 0.0
    %456 = vmatprep.subr.mxu0 0.0
    %457 = vmatpush1.xpose.msra.mxu0 0.0
    %458 = vmatprep.subr.mxu0 0.0
    %459 = vmatpush1.xpose.msra.mxu0 0.0
    %460 = vmatprep.subr.mxu0 0.0
    %461 = vmatpush1.xpose.msra.mxu0 0.0
    %462 = vmatprep.subr.mxu0 0.0
    %463 = vmatpush1.xpose.msra.mxu0 0.0
    %464 = vmatprep.subr.mxu0 0.0
    %465 = vmatpush1.xpose.msra.mxu0 0.0
    %466 = vmatprep.subr.mxu0 0.0
    %467 = vmatpush1.xpose.msra.mxu0 0.0
    %468 = vmatprep.subr.mxu0 0.0
    %469 = vmatpush1.xpose.msra.mxu0 0.0
    %470 = vmatprep.subr.mxu0 0.0
    %471 = vmatpush1.xpose.msra.mxu0 0.0
    %472 = vmatprep.subr.mxu0 0.0
    %473 = vmatpush1.xpose.msra.mxu0 0.0
    %474 = vmatprep.subr.mxu0 0.0
    %475 = vmatpush1.xpose.msra.mxu0 0.0
    %476 = vmatprep.subr.mxu0 0.0
    %477 = vmatpush1.xpose.msra.mxu0 0.0
    %478 = vmatprep.subr.mxu0 0.0
    %479 = vmatpush1.xpose.msra.mxu0 0.0
    %480 = vmatprep.mubr.f32.mxu0 0.0
    %481 = vmatmul.mubr.f32.gmra.mrb[0].mxu0 %v412
    %v482 = vpop.f32.mrb[0].mxu0
    %v483 = vadd.f32 0.0, %v482
    %v484 = vpop.f32.mrb[0].mxu0
    %485 = vdwg.mxu0
    %v486 = vmul.f32 %v483, 0.25
    %v487 = vlaneseq
    %v488 = vshrl.u32 %v487, 7
    %v489 = vsub.s32 0, %v488
    %v490 = vrot.slane %v296, %v489
    %v491 = vadd.f32 %v486, %v490
    %vm492 = vcmask 64512
    %v493 = vsel %vm492, %v491, -inf
    %494 = vmax.xlane.f32.xlu0 %v493
    %v495 = vpop.xlane.xlu0 %494
    %v496 = vsub.f32 %v491, %v495
    %v497 = vmul.f32 %v496, 1.442695
    %v498 = vpow.pop %v497
    %v499 = vsel %vm492, %v498, 0.0
    %500 = vadd.xlane.f32.xlu0 %v499
    %v501 = vpop.xlane.xlu0 %500
    %v502 = vrcp.pop %v501
    %v503 = vmul.f32 %v498, %v502
    %504 = vrot.lane.b32.xlu0 %v400, 64
    %v505 = vpop.permute.xlu0 %504
    %v508 = vsel %vm492, %v503, 0
    %510 = vmatprep.subr.mxu0 0.0
    %511 = vmatpush1.msra.mxu0 %v505
    %512 = vmatprep.subr.mxu0 0.0
    %513 = vmatpush1.msra.mxu0 0.0
    %514 = vmatprep.subr.mxu0 0.0
    %515 = vmatpush1.msra.mxu0 0.0
    %516 = vmatprep.subr.mxu0 0.0
    %517 = vmatpush1.msra.mxu0 0.0
    %518 = vmatprep.subr.mxu0 0.0
    %519 = vmatpush1.msra.mxu0 0.0
    %520 = vmatprep.subr.mxu0 0.0
    %521 = vmatpush1.msra.mxu0 0.0
    %522 = vmatprep.subr.mxu0 0.0
    %523 = vmatpush1.msra.mxu0 0.0
    %524 = vmatprep.subr.mxu0 0.0
    %525 = vmatpush1.msra.mxu0 0.0
    %526 = vmatprep.subr.mxu0 0.0
    %527 = vmatpush1.msra.mxu0 0.0
    %528 = vmatprep.subr.mxu0 0.0
    %529 = vmatpush1.msra.mxu0 0.0
    %530 = vmatprep.subr.mxu0 0.0
    %531 = vmatpush1.msra.mxu0 0.0
    %532 = vmatprep.subr.mxu0 0.0
    %533 = vmatpush1.msra.mxu0 0.0
    %534 = vmatprep.subr.mxu0 0.0
    %535 = vmatpush1.msra.mxu0 0.0
    %536 = vmatprep.subr.mxu0 0.0
    %537 = vmatpush1.msra.mxu0 0.0
    %538 = vmatprep.subr.mxu0 0.0
    %539 = vmatpush1.msra.mxu0 0.0
    %540 = vmatprep.subr.mxu0 0.0
    %541 = vmatpush1.msra.mxu0 0.0
    %542 = vmatprep.subr.mxu0 0.0
    %543 = vmatpush1.msra.mxu0 0.0
    %544 = vmatprep.subr.mxu0 0.0
    %545 = vmatpush1.msra.mxu0 0.0
    %546 = vmatprep.subr.mxu0 0.0
    %547 = vmatpush1.msra.mxu0 0.0
    %548 = vmatprep.subr.mxu0 0.0
    %549 = vmatpush1.msra.mxu0 0.0
    %550 = vmatprep.subr.mxu0 0.0
    %551 = vmatpush1.msra.mxu0 0.0
    %552 = vmatprep.subr.mxu0 0.0
    %553 = vmatpush1.msra.mxu0 0.0
    %554 = vmatprep.subr.mxu0 0.0
    %555 = vmatpush1.msra.mxu0 0.0
    %556 = vmatprep.subr.mxu0 0.0
    %557 = vmatpush1.msra.mxu0 0.0
    %558 = vmatprep.subr.mxu0 0.0
    %559 = vmatpush1.msra.mxu0 0.0
    %560 = vmatprep.subr.mxu0 0.0
    %561 = vmatpush1.msra.mxu0 0.0
    %562 = vmatprep.subr.mxu0 0.0
    %563 = vmatpush1.msra.mxu0 0.0
    %564 = vmatprep.subr.mxu0 0.0
    %565 = vmatpush1.msra.mxu0 0.0
    %566 = vmatprep.subr.mxu0 0.0
    %567 = vmatpush1.msra.mxu0 0.0
    %568 = vmatprep.subr.mxu0 0.0
    %569 = vmatpush1.msra.mxu0 0.0
    %570 = vmatprep.subr.mxu0 0.0
    %571 = vmatpush1.msra.mxu0 0.0
    %572 = vmatprep.subr.mxu0 0.0
    %573 = vmatpush1.msra.mxu0 0.0
    %574 = vmatprep.mubr.f32.mxu0 0.0
    %575 = vmatmul.mubr.f32.gmra.mrb[0].mxu0 %v508
    %v576 = vpop.f32.mrb[0].mxu0
    %v577 = vadd.f32 0.0, %v576
    %v578 = vpop.f32.mrb[0].mxu0
    %579 = vdwg.mxu0
    %580 = vrot.lane.b32.xlu0 %v400, 112
    %v581 = vpop.permute.xlu0 %580
    %582 = vrot.lane.b32.xlu0 %v400, 80
    %v583 = vpop.permute.xlu0 %582
    %v584 = vsel %vm411, %v581, 0
    %v586 = vsel %vm411, %v583, 0
    %588 = vmatprep.subr.mxu0 0.0
    %589 = vmatpush1.xpose.msra.mxu0 %v586
    %590 = vmatprep.subr.mxu0 0.0
    %591 = vmatpush1.xpose.msra.mxu0 0.0
    %592 = vmatprep.subr.mxu0 0.0
    %593 = vmatpush1.xpose.msra.mxu0 0.0
    %594 = vmatprep.subr.mxu0 0.0
    %595 = vmatpush1.xpose.msra.mxu0 0.0
    %596 = vmatprep.subr.mxu0 0.0
    %597 = vmatpush1.xpose.msra.mxu0 0.0
    %598 = vmatprep.subr.mxu0 0.0
    %599 = vmatpush1.xpose.msra.mxu0 0.0
    %600 = vmatprep.subr.mxu0 0.0
    %601 = vmatpush1.xpose.msra.mxu0 0.0
    %602 = vmatprep.subr.mxu0 0.0
    %603 = vmatpush1.xpose.msra.mxu0 0.0
    %604 = vmatprep.subr.mxu0 0.0
    %605 = vmatpush1.xpose.msra.mxu0 0.0
    %606 = vmatprep.subr.mxu0 0.0
    %607 = vmatpush1.xpose.msra.mxu0 0.0
    %608 = vmatprep.subr.mxu0 0.0
    %609 = vmatpush1.xpose.msra.mxu0 0.0
    %610 = vmatprep.subr.mxu0 0.0
    %611 = vmatpush1.xpose.msra.mxu0 0.0
    %612 = vmatprep.subr.mxu0 0.0
    %613 = vmatpush1.xpose.msra.mxu0 0.0
    %614 = vmatprep.subr.mxu0 0.0
    %615 = vmatpush1.xpose.msra.mxu0 0.0
    %616 = vmatprep.subr.mxu0 0.0
    %617 = vmatpush1.xpose.msra.mxu0 0.0
    %618 = vmatprep.subr.mxu0 0.0
    %619 = vmatpush1.xpose.msra.mxu0 0.0
    %620 = vmatprep.subr.mxu0 0.0
    %621 = vmatpush1.xpose.msra.mxu0 0.0
    %622 = vmatprep.subr.mxu0 0.0
    %623 = vmatpush1.xpose.msra.mxu0 0.0
    %624 = vmatprep.subr.mxu0 0.0
    %625 = vmatpush1.xpose.msra.mxu0 0.0
    %626 = vmatprep.subr.mxu0 0.0
    %627 = vmatpush1.xpose.msra.mxu0 0.0
    %628 = vmatprep.subr.mxu0 0.0
    %629 = vmatpush1.xpose.msra.mxu0 0.0
    %630 = vmatprep.subr.mxu0 0.0
    %631 = vmatpush1.xpose.msra.mxu0 0.0
    %632 = vmatprep.subr.mxu0 0.0
    %633 = vmatpush1.xpose.msra.mxu0 0.0
    %634 = vmatprep.subr.mxu0 0.0
    %635 = vmatpush1.xpose.msra.mxu0 0.0
    %636 = vmatprep.subr.mxu0 0.0
    %637 = vmatpush1.xpose.msra.mxu0 0.0
    %638 = vmatprep.subr.mxu0 0.0
    %639 = vmatpush1.xpose.msra.mxu0 0.0
    %640 = vmatprep.subr.mxu0 0.0
    %641 = vmatpush1.xpose.msra.mxu0 0.0
    %642 = vmatprep.subr.mxu0 0.0
    %643 = vmatpush1.xpose.msra.mxu0 0.0
    %644 = vmatprep.subr.mxu0 0.0
    %645 = vmatpush1.xpose.msra.mxu0 0.0
    %646 = vmatprep.subr.mxu0 0.0
    %647 = vmatpush1.xpose.msra.mxu0 0.0
    %648 = vmatprep.subr.mxu0 0.0
    %649 = vmatpush1.xpose.msra.mxu0 0.0
    %650 = vmatprep.subr.mxu0 0.0
    %651 = vmatpush1.xpose.msra.mxu0 0.0
    %652 = vmatprep.mubr.f32.mxu0 0.0
    %653 = vmatmul.mubr.f32.gmra.mrb[0].mxu0 %v584
    %v654 = vpop.f32.mrb[0].mxu0
    %v655 = vadd.f32 0.0, %v654
    %v656 = vpop.f32.mrb[0].mxu0
    %657 = vdwg.mxu0
    %v658 = vmul.f32 %v655, 0.25
    %v659 = vadd.f32 %v658, %v490
    %v660 = vsel %vm492, %v659, -inf
    %661 = vmax.xlane.f32.xlu0 %v660
    %v662 = vpop.xlane.xlu0 %661
    %v663 = vsub.f32 %v659, %v662
    %v664 = vmul.f32 %v663, 1.442695
    %v665 = vpow.pop %v664
    %v666 = vsel %vm492, %v665, 0.0
    %667 = vadd.xlane.f32.xlu0 %v666
    %v668 = vpop.xlane.xlu0 %667
    %v669 = vrcp.pop %v668
    %v670 = vmul.f32 %v665, %v669
    %671 = vrot.lane.b32.xlu0 %v400, 48
    %v672 = vpop.permute.xlu0 %671
    %v675 = vsel %vm492, %v670, 0
    %677 = vmatprep.subr.mxu0 0.0
    %678 = vmatpush1.msra.mxu0 %v672
    %679 = vmatprep.subr.mxu0 0.0
    %680 = vmatpush1.msra.mxu0 0.0
    %681 = vmatprep.subr.mxu0 0.0
    %682 = vmatpush1.msra.mxu0 0.0
    %683 = vmatprep.subr.mxu0 0.0
    %684 = vmatpush1.msra.mxu0 0.0
    %685 = vmatprep.subr.mxu0 0.0
    %686 = vmatpush1.msra.mxu0 0.0
    %687 = vmatprep.subr.mxu0 0.0
    %688 = vmatpush1.msra.mxu0 0.0
    %689 = vmatprep.subr.mxu0 0.0
    %690 = vmatpush1.msra.mxu0 0.0
    %691 = vmatprep.subr.mxu0 0.0
    %692 = vmatpush1.msra.mxu0 0.0
    %693 = vmatprep.subr.mxu0 0.0
    %694 = vmatpush1.msra.mxu0 0.0
    %695 = vmatprep.subr.mxu0 0.0
    %696 = vmatpush1.msra.mxu0 0.0
    %697 = vmatprep.subr.mxu0 0.0
    %698 = vmatpush1.msra.mxu0 0.0
    %699 = vmatprep.subr.mxu0 0.0
    %700 = vmatpush1.msra.mxu0 0.0
    %701 = vmatprep.subr.mxu0 0.0
    %702 = vmatpush1.msra.mxu0 0.0
    %703 = vmatprep.subr.mxu0 0.0
    %704 = vmatpush1.msra.mxu0 0.0
    %705 = vmatprep.subr.mxu0 0.0
    %706 = vmatpush1.msra.mxu0 0.0
    %707 = vmatprep.subr.mxu0 0.0
    %708 = vmatpush1.msra.mxu0 0.0
    %709 = vmatprep.subr.mxu0 0.0
    %710 = vmatpush1.msra.mxu0 0.0
    %711 = vmatprep.subr.mxu0 0.0
    %712 = vmatpush1.msra.mxu0 0.0
    %713 = vmatprep.subr.mxu0 0.0
    %714 = vmatpush1.msra.mxu0 0.0
    %715 = vmatprep.subr.mxu0 0.0
    %716 = vmatpush1.msra.mxu0 0.0
    %717 = vmatprep.subr.mxu0 0.0
    %718 = vmatpush1.msra.mxu0 0.0
    %719 = vmatprep.subr.mxu0 0.0
    %720 = vmatpush1.msra.mxu0 0.0
    %721 = vmatprep.subr.mxu0 0.0
    %722 = vmatpush1.msra.mxu0 0.0
    %723 = vmatprep.subr.mxu0 0.0
    %724 = vmatpush1.msra.mxu0 0.0
    %725 = vmatprep.subr.mxu0 0.0
    %726 = vmatpush1.msra.mxu0 0.0
    %727 = vmatprep.subr.mxu0 0.0
    %728 = vmatpush1.msra.mxu0 0.0
    %729 = vmatprep.subr.mxu0 0.0
    %730 = vmatpush1.msra.mxu0 0.0
    %731 = vmatprep.subr.mxu0 0.0
    %732 = vmatpush1.msra.mxu0 0.0
    %733 = vmatprep.subr.mxu0 0.0
    %734 = vmatpush1.msra.mxu0 0.0
    %735 = vmatprep.subr.mxu0 0.0
    %736 = vmatpush1.msra.mxu0 0.0
    %737 = vmatprep.subr.mxu0 0.0
    %738 = vmatpush1.msra.mxu0 0.0
    %739 = vmatprep.subr.mxu0 0.0
    %740 = vmatpush1.msra.mxu0 0.0
    %741 = vmatprep.mubr.f32.mxu0 0.0
    %742 = vmatmul.mubr.f32.gmra.mrb[0].mxu0 %v675
    %v743 = vpop.f32.mrb[0].mxu0
    %v744 = vadd.f32 0.0, %v743
    %v745 = vpop.f32.mrb[0].mxu0
    %746 = vdwg.mxu0
    %v748 = vsel %vm411, %v744, 0
    %750 = vmatprep.subr.mxu0 0.0
    %751 = vmatpush1.msra.mxu0 %v304
    %752 = vmatprep.subr.mxu0 0.0
    %753 = vmatpush1.msra.mxu0 %v305
    %754 = vmatprep.subr.mxu0 0.0
    %755 = vmatpush1.msra.mxu0 0.0
    %756 = vmatprep.subr.mxu0 0.0
    %757 = vmatpush1.msra.mxu0 0.0
    %758 = vmatprep.subr.mxu0 0.0
    %759 = vmatpush1.msra.mxu0 0.0
    %760 = vmatprep.subr.mxu0 0.0
    %761 = vmatpush1.msra.mxu0 0.0
    %762 = vmatprep.subr.mxu0 0.0
    %763 = vmatpush1.msra.mxu0 0.0
    %764 = vmatprep.subr.mxu0 0.0
    %765 = vmatpush1.msra.mxu0 0.0
    %766 = vmatprep.subr.mxu0 0.0
    %767 = vmatpush1.msra.mxu0 0.0
    %768 = vmatprep.subr.mxu0 0.0
    %769 = vmatpush1.msra.mxu0 0.0
    %770 = vmatprep.subr.mxu0 0.0
    %771 = vmatpush1.msra.mxu0 0.0
    %772 = vmatprep.subr.mxu0 0.0
    %773 = vmatpush1.msra.mxu0 0.0
    %774 = vmatprep.subr.mxu0 0.0
    %775 = vmatpush1.msra.mxu0 0.0
    %776 = vmatprep.subr.mxu0 0.0
    %777 = vmatpush1.msra.mxu0 0.0
    %778 = vmatprep.subr.mxu0 0.0
    %779 = vmatpush1.msra.mxu0 0.0
    %780 = vmatprep.subr.mxu0 0.0
    %781 = vmatpush1.msra.mxu0 0.0
    %782 = vmatprep.subr.mxu0 0.0
    %783 = vmatpush1.msra.mxu0 0.0
    %784 = vmatprep.subr.mxu0 0.0
    %785 = vmatpush1.msra.mxu0 0.0
    %786 = vmatprep.subr.mxu0 0.0
    %787 = vmatpush1.msra.mxu0 0.0
    %788 = vmatprep.subr.mxu0 0.0
    %789 = vmatpush1.msra.mxu0 0.0
    %790 = vmatprep.subr.mxu0 0.0
    %791 = vmatpush1.msra.mxu0 0.0
    %792 = vmatprep.subr.mxu0 0.0
    %793 = vmatpush1.msra.mxu0 0.0
    %794 = vmatprep.subr.mxu0 0.0
    %795 = vmatpush1.msra.mxu0 0.0
    %796 = vmatprep.subr.mxu0 0.0
    %797 = vmatpush1.msra.mxu0 0.0
    %798 = vmatprep.subr.mxu0 0.0
    %799 = vmatpush1.msra.mxu0 0.0
    %800 = vmatprep.subr.mxu0 0.0
    %801 = vmatpush1.msra.mxu0 0.0
    %802 = vmatprep.subr.mxu0 0.0
    %803 = vmatpush1.msra.mxu0 0.0
    %804 = vmatprep.subr.mxu0 0.0
    %805 = vmatpush1.msra.mxu0 0.0
    %806 = vmatprep.subr.mxu0 0.0
    %807 = vmatpush1.msra.mxu0 0.0
    %808 = vmatprep.subr.mxu0 0.0
    %809 = vmatpush1.msra.mxu0 0.0
    %810 = vmatprep.subr.mxu0 0.0
    %811 = vmatpush1.msra.mxu0 0.0
    %812 = vmatprep.subr.mxu0 0.0
    %813 = vmatpush1.msra.mxu0 0.0
    %814 = vmatprep.mubr.f32.mxu0 0.0
    %815 = vmatmul.mubr.f32.gmra.mrb[0].mxu0 %v748
    %v816 = vpop.f32.mrb[0].mxu0
    %v817 = vadd.f32 0.0, %v816
    %v818 = vpop.f32.mrb[0].mxu0
    %819 = vdwg.mxu0
    %v821 = vsel %vm411, %v577, 0
    %823 = vmatprep.subr.mxu0 0.0
    %824 = vmatpush1.msra.mxu0 %v302
    %825 = vmatprep.subr.mxu0 0.0
    %826 = vmatpush1.msra.mxu0 %v303
    %827 = vmatprep.subr.mxu0 0.0
    %828 = vmatpush1.msra.mxu0 0.0
    %829 = vmatprep.subr.mxu0 0.0
    %830 = vmatpush1.msra.mxu0 0.0
    %831 = vmatprep.subr.mxu0 0.0
    %832 = vmatpush1.msra.mxu0 0.0
    %833 = vmatprep.subr.mxu0 0.0
    %834 = vmatpush1.msra.mxu0 0.0
    %835 = vmatprep.subr.mxu0 0.0
    %836 = vmatpush1.msra.mxu0 0.0
    %837 = vmatprep.subr.mxu0 0.0
    %838 = vmatpush1.msra.mxu0 0.0
    %839 = vmatprep.subr.mxu0 0.0
    %840 = vmatpush1.msra.mxu0 0.0
    %841 = vmatprep.subr.mxu0 0.0
    %842 = vmatpush1.msra.mxu0 0.0
    %843 = vmatprep.subr.mxu0 0.0
    %844 = vmatpush1.msra.mxu0 0.0
    %845 = vmatprep.subr.mxu0 0.0
    %846 = vmatpush1.msra.mxu0 0.0
    %847 = vmatprep.subr.mxu0 0.0
    %848 = vmatpush1.msra.mxu0 0.0
    %849 = vmatprep.subr.mxu0 0.0
    %850 = vmatpush1.msra.mxu0 0.0
    %851 = vmatprep.subr.mxu0 0.0
    %852 = vmatpush1.msra.mxu0 0.0
    %853 = vmatprep.subr.mxu0 0.0
    %854 = vmatpush1.msra.mxu0 0.0
    %855 = vmatprep.subr.mxu0 0.0
    %856 = vmatpush1.msra.mxu0 0.0
    %857 = vmatprep.subr.mxu0 0.0
    %858 = vmatpush1.msra.mxu0 0.0
    %859 = vmatprep.subr.mxu0 0.0
    %860 = vmatpush1.msra.mxu0 0.0
    %861 = vmatprep.subr.mxu0 0.0
    %862 = vmatpush1.msra.mxu0 0.0
    %863 = vmatprep.subr.mxu0 0.0
    %864 = vmatpush1.msra.mxu0 0.0
    %865 = vmatprep.subr.mxu0 0.0
    %866 = vmatpush1.msra.mxu0 0.0
    %867 = vmatprep.subr.mxu0 0.0
    %868 = vmatpush1.msra.mxu0 0.0
    %869 = vmatprep.subr.mxu0 0.0
    %870 = vmatpush1.msra.mxu0 0.0
    %871 = vmatprep.subr.mxu0 0.0
    %872 = vmatpush1.msra.mxu0 0.0
    %873 = vmatprep.subr.mxu0 0.0
    %874 = vmatpush1.msra.mxu0 0.0
    %875 = vmatprep.subr.mxu0 0.0
    %876 = vmatpush1.msra.mxu0 0.0
    %877 = vmatprep.subr.mxu0 0.0
    %878 = vmatpush1.msra.mxu0 0.0
    %879 = vmatprep.subr.mxu0 0.0
    %880 = vmatpush1.msra.mxu0 0.0
    %881 = vmatprep.subr.mxu0 0.0
    %882 = vmatpush1.msra.mxu0 0.0
    %883 = vmatprep.subr.mxu0 0.0
    %884 = vmatpush1.msra.mxu0 0.0
    %885 = vmatprep.subr.mxu0 0.0
    %886 = vmatpush1.msra.mxu0 0.0
    %887 = vmatprep.mubr.f32.mxu0 0.0
    %888 = vmatmul.mubr.f32.gmra.mrb[0].mxu0 %v821
    %v889 = vpop.f32.mrb[0].mxu0
    %v890 = vadd.f32 %v817, %v889
    %v891 = vpop.f32.mrb[0].mxu0
    %892 = vdwg.mxu0
    %894 = vrot.lane.b32.xlu0 %v405, 96
    %v895 = vpop.permute.xlu0 %894
    %v896 = vsel %vm411, %v405, 0
    %v898 = vsel %vm411, %v895, 0
    %900 = vmatprep.subr.mxu0 0.0
    %901 = vmatpush1.xpose.msra.mxu0 %v898
    %902 = vmatprep.subr.mxu0 0.0
    %903 = vmatpush1.xpose.msra.mxu0 0.0
    %904 = vmatprep.subr.mxu0 0.0
    %905 = vmatpush1.xpose.msra.mxu0 0.0
    %906 = vmatprep.subr.mxu0 0.0
    %907 = vmatpush1.xpose.msra.mxu0 0.0
    %908 = vmatprep.subr.mxu0 0.0
    %909 = vmatpush1.xpose.msra.mxu0 0.0
    %910 = vmatprep.subr.mxu0 0.0
    %911 = vmatpush1.xpose.msra.mxu0 0.0
    %912 = vmatprep.subr.mxu0 0.0
    %913 = vmatpush1.xpose.msra.mxu0 0.0
    %914 = vmatprep.subr.mxu0 0.0
    %915 = vmatpush1.xpose.msra.mxu0 0.0
    %916 = vmatprep.subr.mxu0 0.0
    %917 = vmatpush1.xpose.msra.mxu0 0.0
    %918 = vmatprep.subr.mxu0 0.0
    %919 = vmatpush1.xpose.msra.mxu0 0.0
    %920 = vmatprep.subr.mxu0 0.0
    %921 = vmatpush1.xpose.msra.mxu0 0.0
    %922 = vmatprep.subr.mxu0 0.0
    %923 = vmatpush1.xpose.msra.mxu0 0.0
    %924 = vmatprep.subr.mxu0 0.0
    %925 = vmatpush1.xpose.msra.mxu0 0.0
    %926 = vmatprep.subr.mxu0 0.0
    %927 = vmatpush1.xpose.msra.mxu0 0.0
    %928 = vmatprep.subr.mxu0 0.0
    %929 = vmatpush1.xpose.msra.mxu0 0.0
    %930 = vmatprep.subr.mxu0 0.0
    %931 = vmatpush1.xpose.msra.mxu0 0.0
    %932 = vmatprep.subr.mxu0 0.0
    %933 = vmatpush1.xpose.msra.mxu0 0.0
    %934 = vmatprep.subr.mxu0 0.0
    %935 = vmatpush1.xpose.msra.mxu0 0.0
    %936 = vmatprep.subr.mxu0 0.0
    %937 = vmatpush1.xpose.msra.mxu0 0.0
    %938 = vmatprep.subr.mxu0 0.0
    %939 = vmatpush1.xpose.msra.mxu0 0.0
    %940 = vmatprep.subr.mxu0 0.0
    %941 = vmatpush1.xpose.msra.mxu0 0.0
    %942 = vmatprep.subr.mxu0 0.0
    %943 = vmatpush1.xpose.msra.mxu0 0.0
    %944 = vmatprep.subr.mxu0 0.0
    %945 = vmatpush1.xpose.msra.mxu0 0.0
    %946 = vmatprep.subr.mxu0 0.0
    %947 = vmatpush1.xpose.msra.mxu0 0.0
    %948 = vmatprep.subr.mxu0 0.0
    %949 = vmatpush1.xpose.msra.mxu0 0.0
    %950 = vmatprep.subr.mxu0 0.0
    %951 = vmatpush1.xpose.msra.mxu0 0.0
    %952 = vmatprep.subr.mxu0 0.0
    %953 = vmatpush1.xpose.msra.mxu0 0.0
    %954 = vmatprep.subr.mxu0 0.0
    %955 = vmatpush1.xpose.msra.mxu0 0.0
    %956 = vmatprep.subr.mxu0 0.0
    %957 = vmatpush1.xpose.msra.mxu0 0.0
    %958 = vmatprep.subr.mxu0 0.0
    %959 = vmatpush1.xpose.msra.mxu0 0.0
    %960 = vmatprep.subr.mxu0 0.0
    %961 = vmatpush1.xpose.msra.mxu0 0.0
    %962 = vmatprep.subr.mxu0 0.0
    %963 = vmatpush1.xpose.msra.mxu0 0.0
    %964 = vmatprep.mubr.f32.mxu0 0.0
    %965 = vmatmul.mubr.f32.gmra.mrb[0].mxu0 %v896
    %v966 = vpop.f32.mrb[0].mxu0
    %v967 = vadd.f32 0.0, %v966
    %v968 = vpop.f32.mrb[0].mxu0
    %969 = vdwg.mxu0
    %v970 = vmul.f32 %v967, 0.25
    %v971 = vlaneseq
    %v972 = vshrl.u32 %v971, 7
    %v973 = vsub.s32 1, %v972
    %v974 = vrot.slane %v296, %v973
    %v975 = vadd.f32 %v970, %v974
    %v976 = vsel %vm492, %v975, -inf
    %977 = vmax.xlane.f32.xlu0 %v976
    %v978 = vpop.xlane.xlu0 %977
    %v979 = vsub.f32 %v975, %v978
    %v980 = vmul.f32 %v979, 1.442695
    %v981 = vpow.pop %v980
    %v982 = vsel %vm492, %v981, 0.0
    %983 = vadd.xlane.f32.xlu0 %v982
    %v984 = vpop.xlane.xlu0 %983
    %v985 = vrcp.pop %v984
    %v986 = vmul.f32 %v981, %v985
    %987 = vrot.lane.b32.xlu0 %v405, 64
    %v988 = vpop.permute.xlu0 %987
    %v991 = vsel %vm492, %v986, 0
    %993 = vmatprep.subr.mxu0 0.0
    %994 = vmatpush1.msra.mxu0 %v988
    %995 = vmatprep.subr.mxu0 0.0
    %996 = vmatpush1.msra.mxu0 0.0
    %997 = vmatprep.subr.mxu0 0.0
    %998 = vmatpush1.msra.mxu0 0.0
    %999 = vmatprep.subr.mxu0 0.0
    %1000 = vmatpush1.msra.mxu0 0.0
    %1001 = vmatprep.subr.mxu0 0.0
    %1002 = vmatpush1.msra.mxu0 0.0
    %1003 = vmatprep.subr.mxu0 0.0
    %1004 = vmatpush1.msra.mxu0 0.0
    %1005 = vmatprep.subr.mxu0 0.0
    %1006 = vmatpush1.msra.mxu0 0.0
    %1007 = vmatprep.subr.mxu0 0.0
    %1008 = vmatpush1.msra.mxu0 0.0
    %1009 = vmatprep.subr.mxu0 0.0
    %1010 = vmatpush1.msra.mxu0 0.0
    %1011 = vmatprep.subr.mxu0 0.0
    %1012 = vmatpush1.msra.mxu0 0.0
    %1013 = vmatprep.subr.mxu0 0.0
    %1014 = vmatpush1.msra.mxu0 0.0
    %1015 = vmatprep.subr.mxu0 0.0
    %1016 = vmatpush1.msra.mxu0 0.0
    %1017 = vmatprep.subr.mxu0 0.0
    %1018 = vmatpush1.msra.mxu0 0.0
    %1019 = vmatprep.subr.mxu0 0.0
    %1020 = vmatpush1.msra.mxu0 0.0
    %1021 = vmatprep.subr.mxu0 0.0
    %1022 = vmatpush1.msra.mxu0 0.0
    %1023 = vmatprep.subr.mxu0 0.0
    %1024 = vmatpush1.msra.mxu0 0.0
    %1025 = vmatprep.subr.mxu0 0.0
    %1026 = vmatpush1.msra.mxu0 0.0
    %1027 = vmatprep.subr.mxu0 0.0
    %1028 = vmatpush1.msra.mxu0 0.0
    %1029 = vmatprep.subr.mxu0 0.0
    %1030 = vmatpush1.msra.mxu0 0.0
    %1031 = vmatprep.subr.mxu0 0.0
    %1032 = vmatpush1.msra.mxu0 0.0
    %1033 = vmatprep.subr.mxu0 0.0
    %1034 = vmatpush1.msra.mxu0 0.0
    %1035 = vmatprep.subr.mxu0 0.0
    %1036 = vmatpush1.msra.mxu0 0.0
    %1037 = vmatprep.subr.mxu0 0.0
    %1038 = vmatpush1.msra.mxu0 0.0
    %1039 = vmatprep.subr.mxu0 0.0
    %1040 = vmatpush1.msra.mxu0 0.0
    %1041 = vmatprep.subr.mxu0 0.0
    %1042 = vmatpush1.msra.mxu0 0.0
    %1043 = vmatprep.subr.mxu0 0.0
    %1044 = vmatpush1.msra.mxu0 0.0
    %1045 = vmatprep.subr.mxu0 0.0
    %1046 = vmatpush1.msra.mxu0 0.0
    %1047 = vmatprep.subr.mxu0 0.0
    %1048 = vmatpush1.msra.mxu0 0.0
    %1049 = vmatprep.subr.mxu0 0.0
    %1050 = vmatpush1.msra.mxu0 0.0
    %1051 = vmatprep.subr.mxu0 0.0
    %1052 = vmatpush1.msra.mxu0 0.0
    %1053 = vmatprep.subr.mxu0 0.0
    %1054 = vmatpush1.msra.mxu0 0.0
    %1055 = vmatprep.subr.mxu0 0.0
    %1056 = vmatpush1.msra.mxu0 0.0
    %1057 = vmatprep.mubr.f32.mxu0 0.0
    %1058 = vmatmul.mubr.f32.gmra.mrb[0].mxu0 %v991
    %v1059 = vpop.f32.mrb[0].mxu0
    %v1060 = vadd.f32 0.0, %v1059
    %v1061 = vpop.f32.mrb[0].mxu0
    %1062 = vdwg.mxu0
    %1063 = vrot.lane.b32.xlu0 %v405, 112
    %v1064 = vpop.permute.xlu0 %1063
    %1065 = vrot.lane.b32.xlu0 %v405, 80
    %v1066 = vpop.permute.xlu0 %1065
    %v1067 = vsel %vm411, %v1064, 0
    %v1069 = vsel %vm411, %v1066, 0
    %1071 = vmatprep.subr.mxu0 0.0
    %1072 = vmatpush1.xpose.msra.mxu0 %v1069
    %1073 = vmatprep.subr.mxu0 0.0
    %1074 = vmatpush1.xpose.msra.mxu0 0.0
    %1075 = vmatprep.subr.mxu0 0.0
    %1076 = vmatpush1.xpose.msra.mxu0 0.0
    %1077 = vmatprep.subr.mxu0 0.0
    %1078 = vmatpush1.xpose.msra.mxu0 0.0
    %1079 = vmatprep.subr.mxu0 0.0
    %1080 = vmatpush1.xpose.msra.mxu0 0.0
    %1081 = vmatprep.subr.mxu0 0.0
    %1082 = vmatpush1.xpose.msra.mxu0 0.0
    %1083 = vmatprep.subr.mxu0 0.0
    %1084 = vmatpush1.xpose.msra.mxu0 0.0
    %1085 = vmatprep.subr.mxu0 0.0
    %1086 = vmatpush1.xpose.msra.mxu0 0.0
    %1087 = vmatprep.subr.mxu0 0.0
    %1088 = vmatpush1.xpose.msra.mxu0 0.0
    %1089 = vmatprep.subr.mxu0 0.0
    %1090 = vmatpush1.xpose.msra.mxu0 0.0
    %1091 = vmatprep.subr.mxu0 0.0
    %1092 = vmatpush1.xpose.msra.mxu0 0.0
    %1093 = vmatprep.subr.mxu0 0.0
    %1094 = vmatpush1.xpose.msra.mxu0 0.0
    %1095 = vmatprep.subr.mxu0 0.0
    %1096 = vmatpush1.xpose.msra.mxu0 0.0
    %1097 = vmatprep.subr.mxu0 0.0
    %1098 = vmatpush1.xpose.msra.mxu0 0.0
    %1099 = vmatprep.subr.mxu0 0.0
    %1100 = vmatpush1.xpose.msra.mxu0 0.0
    %1101 = vmatprep.subr.mxu0 0.0
    %1102 = vmatpush1.xpose.msra.mxu0 0.0
    %1103 = vmatprep.subr.mxu0 0.0
    %1104 = vmatpush1.xpose.msra.mxu0 0.0
    %1105 = vmatprep.subr.mxu0 0.0
    %1106 = vmatpush1.xpose.msra.mxu0 0.0
    %1107 = vmatprep.subr.mxu0 0.0
    %1108 = vmatpush1.xpose.msra.mxu0 0.0
    %1109 = vmatprep.subr.mxu0 0.0
    %1110 = vmatpush1.xpose.msra.mxu0 0.0
    %1111 = vmatprep.subr.mxu0 0.0
    %1112 = vmatpush1.xpose.msra.mxu0 0.0
    %1113 = vmatprep.subr.mxu0 0.0
    %1114 = vmatpush1.xpose.msra.mxu0 0.0
    %1115 = vmatprep.subr.mxu0 0.0
    %1116 = vmatpush1.xpose.msra.mxu0 0.0
    %1117 = vmatprep.subr.mxu0 0.0
    %1118 = vmatpush1.xpose.msra.mxu0 0.0
    %1119 = vmatprep.subr.mxu0 0.0
    %1120 = vmatpush1.xpose.msra.mxu0 0.0
    %1121 = vmatprep.subr.mxu0 0.0
    %1122 = vmatpush1.xpose.msra.mxu0 0.0
    %1123 = vmatprep.subr.mxu0 0.0
    %1124 = vmatpush1.xpose.msra.mxu0 0.0
    %1125 = vmatprep.subr.mxu0 0.0
    %1126 = vmatpush1.xpose.msra.mxu0 0.0
    %1127 = vmatprep.subr.mxu0 0.0
    %1128 = vmatpush1.xpose.msra.mxu0 0.0
    %1129 = vmatprep.subr.mxu0 0.0
    %1130 = vmatpush1.xpose.msra.mxu0 0.0
    %1131 = vmatprep.subr.mxu0 0.0
    %1132 = vmatpush1.xpose.msra.mxu0 0.0
    %1133 = vmatprep.subr.mxu0 0.0
    %1134 = vmatpush1.xpose.msra.mxu0 0.0
    %1135 = vmatprep.mubr.f32.mxu0 0.0
    %1136 = vmatmul.mubr.f32.gmra.mrb[0].mxu0 %v1067
    %v1137 = vpop.f32.mrb[0].mxu0
    %v1138 = vadd.f32 0.0, %v1137
    %v1139 = vpop.f32.mrb[0].mxu0
    %1140 = vdwg.mxu0
    %v1141 = vmul.f32 %v1138, 0.25
    %v1142 = vadd.f32 %v1141, %v974
    %v1143 = vsel %vm492, %v1142, -inf
    %1144 = vmax.xlane.f32.xlu0 %v1143
    %v1145 = vpop.xlane.xlu0 %1144
    %v1146 = vsub.f32 %v1142, %v1145
    %v1147 = vmul.f32 %v1146, 1.442695
    %v1148 = vpow.pop %v1147
    %v1149 = vsel %vm492, %v1148, 0.0
    %1150 = vadd.xlane.f32.xlu0 %v1149
    %v1151 = vpop.xlane.xlu0 %1150
    %v1152 = vrcp.pop %v1151
    %v1153 = vmul.f32 %v1148, %v1152
    %1154 = vrot.lane.b32.xlu0 %v405, 48
    %v1155 = vpop.permute.xlu0 %1154
    %v1158 = vsel %vm492, %v1153, 0
    %1160 = vmatprep.subr.mxu0 0.0
    %1161 = vmatpush1.msra.mxu0 %v1155
    %1162 = vmatprep.subr.mxu0 0.0
    %1163 = vmatpush1.msra.mxu0 0.0
    %1164 = vmatprep.subr.mxu0 0.0
    %1165 = vmatpush1.msra.mxu0 0.0
    %1166 = vmatprep.subr.mxu0 0.0
    %1167 = vmatpush1.msra.mxu0 0.0
    %1168 = vmatprep.subr.mxu0 0.0
    %1169 = vmatpush1.msra.mxu0 0.0
    %1170 = vmatprep.subr.mxu0 0.0
    %1171 = vmatpush1.msra.mxu0 0.0
    %1172 = vmatprep.subr.mxu0 0.0
    %1173 = vmatpush1.msra.mxu0 0.0
    %1174 = vmatprep.subr.mxu0 0.0
    %1175 = vmatpush1.msra.mxu0 0.0
    %1176 = vmatprep.subr.mxu0 0.0
    %1177 = vmatpush1.msra.mxu0 0.0
    %1178 = vmatprep.subr.mxu0 0.0
    %1179 = vmatpush1.msra.mxu0 0.0
    %1180 = vmatprep.subr.mxu0 0.0
    %1181 = vmatpush1.msra.mxu0 0.0
    %1182 = vmatprep.subr.mxu0 0.0
    %1183 = vmatpush1.msra.mxu0 0.0
    %1184 = vmatprep.subr.mxu0 0.0
    %1185 = vmatpush1.msra.mxu0 0.0
    %1186 = vmatprep.subr.mxu0 0.0
    %1187 = vmatpush1.msra.mxu0 0.0
    %1188 = vmatprep.subr.mxu0 0.0
    %1189 = vmatpush1.msra.mxu0 0.0
    %1190 = vmatprep.subr.mxu0 0.0
    %1191 = vmatpush1.msra.mxu0 0.0
    %1192 = vmatprep.subr.mxu0 0.0
    %1193 = vmatpush1.msra.mxu0 0.0
    %1194 = vmatprep.subr.mxu0 0.0
    %1195 = vmatpush1.msra.mxu0 0.0
    %1196 = vmatprep.subr.mxu0 0.0
    %1197 = vmatpush1.msra.mxu0 0.0
    %1198 = vmatprep.subr.mxu0 0.0
    %1199 = vmatpush1.msra.mxu0 0.0
    %1200 = vmatprep.subr.mxu0 0.0
    %1201 = vmatpush1.msra.mxu0 0.0
    %1202 = vmatprep.subr.mxu0 0.0
    %1203 = vmatpush1.msra.mxu0 0.0
    %1204 = vmatprep.subr.mxu0 0.0
    %1205 = vmatpush1.msra.mxu0 0.0
    %1206 = vmatprep.subr.mxu0 0.0
    %1207 = vmatpush1.msra.mxu0 0.0
    %1208 = vmatprep.subr.mxu0 0.0
    %1209 = vmatpush1.msra.mxu0 0.0
    %1210 = vmatprep.subr.mxu0 0.0
    %1211 = vmatpush1.msra.mxu0 0.0
    %1212 = vmatprep.subr.mxu0 0.0
    %1213 = vmatpush1.msra.mxu0 0.0
    %1214 = vmatprep.subr.mxu0 0.0
    %1215 = vmatpush1.msra.mxu0 0.0
    %1216 = vmatprep.subr.mxu0 0.0
    %1217 = vmatpush1.msra.mxu0 0.0
    %1218 = vmatprep.subr.mxu0 0.0
    %1219 = vmatpush1.msra.mxu0 0.0
    %1220 = vmatprep.subr.mxu0 0.0
    %1221 = vmatpush1.msra.mxu0 0.0
    %1222 = vmatprep.subr.mxu0 0.0
    %1223 = vmatpush1.msra.mxu0 0.0
    %1224 = vmatprep.mubr.f32.mxu0 0.0
    %1225 = vmatmul.mubr.f32.gmra.mrb[0].mxu0 %v1158
    %v1226 = vpop.f32.mrb[0].mxu0
    %v1227 = vadd.f32 0.0, %v1226
    %v1228 = vpop.f32.mrb[0].mxu0
    %1229 = vdwg.mxu0
    %v1231 = vsel %vm411, %v1227, 0
    %1233 = vmatprep.subr.mxu0 0.0
    %1234 = vmatpush1.msra.mxu0 %v304
    %1235 = vmatprep.subr.mxu0 0.0
    %1236 = vmatpush1.msra.mxu0 %v305
    %1237 = vmatprep.subr.mxu0 0.0
    %1238 = vmatpush1.msra.mxu0 0.0
    %1239 = vmatprep.subr.mxu0 0.0
    %1240 = vmatpush1.msra.mxu0 0.0
    %1241 = vmatprep.subr.mxu0 0.0
    %1242 = vmatpush1.msra.mxu0 0.0
    %1243 = vmatprep.subr.mxu0 0.0
    %1244 = vmatpush1.msra.mxu0 0.0
    %1245 = vmatprep.subr.mxu0 0.0
    %1246 = vmatpush1.msra.mxu0 0.0
    %1247 = vmatprep.subr.mxu0 0.0
    %1248 = vmatpush1.msra.mxu0 0.0
    %1249 = vmatprep.subr.mxu0 0.0
    %1250 = vmatpush1.msra.mxu0 0.0
    %1251 = vmatprep.subr.mxu0 0.0
    %1252 = vmatpush1.msra.mxu0 0.0
    %1253 = vmatprep.subr.mxu0 0.0
    %1254 = vmatpush1.msra.mxu0 0.0
    %1255 = vmatprep.subr.mxu0 0.0
    %1256 = vmatpush1.msra.mxu0 0.0
    %1257 = vmatprep.subr.mxu0 0.0
    %1258 = vmatpush1.msra.mxu0 0.0
    %1259 = vmatprep.subr.mxu0 0.0
    %1260 = vmatpush1.msra.mxu0 0.0
    %1261 = vmatprep.subr.mxu0 0.0
    %1262 = vmatpush1.msra.mxu0 0.0
    %1263 = vmatprep.subr.mxu0 0.0
    %1264 = vmatpush1.msra.mxu0 0.0
    %1265 = vmatprep.subr.mxu0 0.0
    %1266 = vmatpush1.msra.mxu0 0.0
    %1267 = vmatprep.subr.mxu0 0.0
    %1268 = vmatpush1.msra.mxu0 0.0
    %1269 = vmatprep.subr.mxu0 0.0
    %1270 = vmatpush1.msra.mxu0 0.0
    %1271 = vmatprep.subr.mxu0 0.0
    %1272 = vmatpush1.msra.mxu0 0.0
    %1273 = vmatprep.subr.mxu0 0.0
    %1274 = vmatpush1.msra.mxu0 0.0
    %1275 = vmatprep.subr.mxu0 0.0
    %1276 = vmatpush1.msra.mxu0 0.0
    %1277 = vmatprep.subr.mxu0 0.0
    %1278 = vmatpush1.msra.mxu0 0.0
    %1279 = vmatprep.subr.mxu0 0.0
    %1280 = vmatpush1.msra.mxu0 0.0
    %1281 = vmatprep.subr.mxu0 0.0
    %1282 = vmatpush1.msra.mxu0 0.0
    %1283 = vmatprep.subr.mxu0 0.0
    %1284 = vmatpush1.msra.mxu0 0.0
    %1285 = vmatprep.subr.mxu0 0.0
    %1286 = vmatpush1.msra.mxu0 0.0
    %1287 = vmatprep.subr.mxu0 0.0
    %1288 = vmatpush1.msra.mxu0 0.0
    %1289 = vmatprep.subr.mxu0 0.0
    %1290 = vmatpush1.msra.mxu0 0.0
    %1291 = vmatprep.subr.mxu0 0.0
    %1292 = vmatpush1.msra.mxu0 0.0
    %1293 = vmatprep.subr.mxu0 0.0
    %1294 = vmatpush1.msra.mxu0 0.0
    %1295 = vmatprep.subr.mxu0 0.0
    %1296 = vmatpush1.msra.mxu0 0.0
    %1297 = vmatprep.mubr.f32.mxu0 0.0
    %1298 = vmatmul.mubr.f32.gmra.mrb[0].mxu0 %v1231
    %v1299 = vpop.f32.mrb[0].mxu0
    %v1300 = vadd.f32 0.0, %v1299
    %v1301 = vpop.f32.mrb[0].mxu0
    %1302 = vdwg.mxu0
    %v1304 = vsel %vm411, %v1060, 0
    %1306 = vmatprep.subr.mxu0 0.0
    %1307 = vmatpush1.msra.mxu0 %v302
    %1308 = vmatprep.subr.mxu0 0.0
    %1309 = vmatpush1.msra.mxu0 %v303
    %1310 = vmatprep.subr.mxu0 0.0
    %1311 = vmatpush1.msra.mxu0 0.0
    %1312 = vmatprep.subr.mxu0 0.0
    %1313 = vmatpush1.msra.mxu0 0.0
    %1314 = vmatprep.subr.mxu0 0.0
    %1315 = vmatpush1.msra.mxu0 0.0
    %1316 = vmatprep.subr.mxu0 0.0
    %1317 = vmatpush1.msra.mxu0 0.0
    %1318 = vmatprep.subr.mxu0 0.0
    %1319 = vmatpush1.msra.mxu0 0.0
    %1320 = vmatprep.subr.mxu0 0.0
    %1321 = vmatpush1.msra.mxu0 0.0
    %1322 = vmatprep.subr.mxu0 0.0
    %1323 = vmatpush1.msra.mxu0 0.0
    %1324 = vmatprep.subr.mxu0 0.0
    %1325 = vmatpush1.msra.mxu0 0.0
    %1326 = vmatprep.subr.mxu0 0.0
    %1327 = vmatpush1.msra.mxu0 0.0
    %1328 = vmatprep.subr.mxu0 0.0
    %1329 = vmatpush1.msra.mxu0 0.0
    %1330 = vmatprep.subr.mxu0 0.0
    %1331 = vmatpush1.msra.mxu0 0.0
    %1332 = vmatprep.subr.mxu0 0.0
    %1333 = vmatpush1.msra.mxu0 0.0
    %1334 = vmatprep.subr.mxu0 0.0
    %1335 = vmatpush1.msra.mxu0 0.0
    %1336 = vmatprep.subr.mxu0 0.0
    %1337 = vmatpush1.msra.mxu0 0.0
    %1338 = vmatprep.subr.mxu0 0.0
    %1339 = vmatpush1.msra.mxu0 0.0
    %1340 = vmatprep.subr.mxu0 0.0
    %1341 = vmatpush1.msra.mxu0 0.0
    %1342 = vmatprep.subr.mxu0 0.0
    %1343 = vmatpush1.msra.mxu0 0.0
    %1344 = vmatprep.subr.mxu0 0.0
    %1345 = vmatpush1.msra.mxu0 0.0
    %1346 = vmatprep.subr.mxu0 0.0
    %1347 = vmatpush1.msra.mxu0 0.0
    %1348 = vmatprep.subr.mxu0 0.0
    %1349 = vmatpush1.msra.mxu0 0.0
    %1350 = vmatprep.subr.mxu0 0.0
    %1351 = vmatpush1.msra.mxu0 0.0
    %1352 = vmatprep.subr.mxu0 0.0
    %1353 = vmatpush1.msra.mxu0 0.0
    %1354 = vmatprep.subr.mxu0 0.0
    %1355 = vmatpush1.msra.mxu0 0.0
    %1356 = vmatprep.subr.mxu0 0.0
    %1357 = vmatpush1.msra.mxu0 0.0
    %1358 = vmatprep.subr.mxu0 0.0
    %1359 = vmatpush1.msra.mxu0 0.0
    %1360 = vmatprep.subr.mxu0 0.0
    %1361 = vmatpush1.msra.mxu0 0.0
    %1362 = vmatprep.subr.mxu0 0.0
    %1363 = vmatpush1.msra.mxu0 0.0
    %1364 = vmatprep.subr.mxu0 0.0
    %1365 = vmatpush1.msra.mxu0 0.0
    %1366 = vmatprep.subr.mxu0 0.0
    %1367 = vmatpush1.msra.mxu0 0.0
    %1368 = vmatprep.subr.mxu0 0.0
    %1369 = vmatpush1.msra.mxu0 0.0
    %1370 = vmatprep.mubr.f32.mxu0 0.0
    %1371 = vmatmul.mubr.f32.gmra.mrb[0].mxu0 %v1304
    %v1372 = vpop.f32.mrb[0].mxu0
    %v1373 = vadd.f32 %v1300, %v1372
    %v1374 = vpop.f32.mrb[0].mxu0
    %1375 = vdwg.mxu0
    %v1377 = vlaneseq
    %v1378 = vshrl.u32 %v1377, 7
    %v1379 = vsub.s32 0, %v1378
    %v1380 = vrot.slane %v306, %v1379
    %v1382 = vadd.f32 %v890, %v1380
    %v1383 = vadd.f32 %v1373, %v1380
    %v1384 = vadd.f32 %v291, %v1382
    %v1385 = vadd.f32 %v292, %v1383
    %v1386 = vld [vmem:[%s21] sm:$0x1]
    %v1387 = vld [vmem:[%s23] sm:$0x1]
    %v1388 = vsel %vm249, %v1384, 0.0
    %1389 = vadd.xlane.f32.xlu0 %v1388
    %v1390 = vpop.xlane.xlu0 %1389
    %v1391 = vsel %vm249, %v1385, 0.0
    %1392 = vadd.xlane.f32.xlu0 %v1391
    %v1393 = vpop.xlane.xlu0 %1392
    %v1394 = vmul.f32 %v1390, %v256
    %v1395 = vmul.f32 %v1393, %v256
    %v1396 = vsub.f32 %v1384, %v1394
    %v1397 = vsub.f32 %v1385, %v1395
    %v1398 = vmul.f32 %v1396, %v1396
    %v1399 = vmul.f32 %v1397, %v1397
    %v1400 = vsel %vm249, %v1398, 0.0
    %1401 = vadd.xlane.f32.xlu0 %v1400
    %v1402 = vpop.xlane.xlu0 %1401
    %v1403 = vsel %vm249, %v1399, 0.0
    %1404 = vadd.xlane.f32.xlu0 %v1403
    %v1405 = vpop.xlane.xlu0 %1404
    %v1406 = vmul.f32 %v1402, %v256
    %v1407 = vmul.f32 %v1405, %v256
    %v1408 = vadd.f32 %v1406, 1e-05
    %v1409 = vadd.f32 %v1407, 1e-05
    %v1410 = vrsqrt.pop %v1408
    %v1411 = vrsqrt.pop %v1409
    %v1412 = vmul.f32 %v1396, %v1410
    %v1413 = vmul.f32 %v1397, %v1411
    %v1415 = vlaneseq
    %v1416 = vshrl.u32 %v1415, 7
    %v1417 = vsub.s32 0, %v1416
    %v1418 = vrot.slane %v1386, %v1417
    %v1420 = vmul.f32 %v1412, %v1418
    %v1421 = vmul.f32 %v1413, %v1418
    %v1423 = vlaneseq
    %v1424 = vshrl.u32 %v1423, 7
    %v1425 = vsub.s32 0, %v1424
    %v1426 = vrot.slane %v1387, %v1425
    %v1428 = vadd.f32 %v1420, %v1426
    %v1429 = vadd.f32 %v1421, %v1426
    %v1431 = vlaneseq
    %v1432 = vshrl.u32 %v1431, 7
    %v1433 = vsub.s32 0, %v1432
    %v1434 = vrot.slane %v311, %v1433
    %v1437 = vsel %vm249, %v1428, 0
    %v1440 = vsel %vm249, %v1429, 0
    %1442 = vmatprep.subr.mxu0 0.0
    %1443 = vmatpush1.msra.mxu0 %v307
    %1444 = vmatprep.subr.mxu0 0.0
    %1445 = vmatpush1.msra.mxu0 %v308
    %1446 = vmatprep.subr.mxu0 0.0
    %1447 = vmatpush1.msra.mxu0 %v309
    %1448 = vmatprep.subr.mxu0 0.0
    %1449 = vmatpush1.msra.mxu0 %v310
    %1450 = vmatprep.subr.mxu0 0.0
    %1451 = vmatpush1.msra.mxu0 0.0
    %1452 = vmatprep.subr.mxu0 0.0
    %1453 = vmatpush1.msra.mxu0 0.0
    %1454 = vmatprep.subr.mxu0 0.0
    %1455 = vmatpush1.msra.mxu0 0.0
    %1456 = vmatprep.subr.mxu0 0.0
    %1457 = vmatpush1.msra.mxu0 0.0
    %1458 = vmatprep.subr.mxu0 0.0
    %1459 = vmatpush1.msra.mxu0 0.0
    %1460 = vmatprep.subr.mxu0 0.0
    %1461 = vmatpush1.msra.mxu0 0.0
    %1462 = vmatprep.subr.mxu0 0.0
    %1463 = vmatpush1.msra.mxu0 0.0
    %1464 = vmatprep.subr.mxu0 0.0
    %1465 = vmatpush1.msra.mxu0 0.0
    %1466 = vmatprep.subr.mxu0 0.0
    %1467 = vmatpush1.msra.mxu0 0.0
    %1468 = vmatprep.subr.mxu0 0.0
    %1469 = vmatpush1.msra.mxu0 0.0
    %1470 = vmatprep.subr.mxu0 0.0
    %1471 = vmatpush1.msra.mxu0 0.0
    %1472 = vmatprep.subr.mxu0 0.0
    %1473 = vmatpush1.msra.mxu0 0.0
    %1474 = vmatprep.subr.mxu0 0.0
    %1475 = vmatpush1.msra.mxu0 0.0
    %1476 = vmatprep.subr.mxu0 0.0
    %1477 = vmatpush1.msra.mxu0 0.0
    %1478 = vmatprep.subr.mxu0 0.0
    %1479 = vmatpush1.msra.mxu0 0.0
    %1480 = vmatprep.subr.mxu0 0.0
    %1481 = vmatpush1.msra.mxu0 0.0
    %1482 = vmatprep.subr.mxu0 0.0
    %1483 = vmatpush1.msra.mxu0 0.0
    %1484 = vmatprep.subr.mxu0 0.0
    %1485 = vmatpush1.msra.mxu0 0.0
    %1486 = vmatprep.subr.mxu0 0.0
    %1487 = vmatpush1.msra.mxu0 0.0
    %1488 = vmatprep.subr.mxu0 0.0
    %1489 = vmatpush1.msra.mxu0 0.0
    %1490 = vmatprep.subr.mxu0 0.0
    %1491 = vmatpush1.msra.mxu0 0.0
    %1492 = vmatprep.subr.mxu0 0.0
    %1493 = vmatpush1.msra.mxu0 0.0
    %1494 = vmatprep.subr.mxu0 0.0
    %1495 = vmatpush1.msra.mxu0 0.0
    %1496 = vmatprep.subr.mxu0 0.0
    %1497 = vmatpush1.msra.mxu0 0.0
    %1498 = vmatprep.subr.mxu0 0.0
    %1499 = vmatpush1.msra.mxu0 0.0
    %1500 = vmatprep.subr.mxu0 0.0
    %1501 = vmatpush1.msra.mxu0 0.0
    %1502 = vmatprep.subr.mxu0 0.0
    %1503 = vmatpush1.msra.mxu0 0.0
    %1504 = vmatprep.subr.mxu0 0.0
    %1505 = vmatpush1.msra.mxu0 0.0
    %1506 = vmatprep.mubr.f32.mxu0 0.0
    %1507 = vmatmul.mubr.f32.gmra.mrb[0].mxu0 %v1437
    %v1508 = vpop.f32.mrb[0].mxu0
    %v1509 = vadd.f32 %v1434, %v1508
    %v1510 = vpop.f32.mrb[0].mxu0
    %1511 = vmatprep.mubr.f32.mxu0 0.0
    %1512 = vmatmul.mubr.f32.gmra.mrb[0].mxu0 %v1440
    %v1513 = vpop.f32.mrb[0].mxu0
    %v1514 = vadd.f32 %v1434, %v1513
    %v1515 = vpop.f32.mrb[0].mxu0
    %1516 = vdwg.mxu0
    %v1517 = vmul.f32 %v1509, %v1509
    %v1518 = vmul.f32 %v1514, %v1514
    %v1519 = vmul.f32 %v1509, %v1517
    %v1520 = vmul.f32 %v1514, %v1518
    %v1521 = vmul.f32 %v1519, 0.044715
    %v1522 = vmul.f32 %v1520, 0.044715
    %v1523 = vadd.f32 %v1509, %v1521
    %v1524 = vadd.f32 %v1514, %v1522
    %v1525 = vmul.f32 %v1523, 0.7978846
    %v1526 = vmul.f32 %v1524, 0.7978846
    %v1527 = vtanh.pop %v1525
    %v1528 = vtanh.pop %v1526
    %v1529 = vadd.f32 %v1527, 1.0
    %v1530 = vadd.f32 %v1528, 1.0
    %v1531 = vmul.f32 %v1529, 0.5
    %v1532 = vmul.f32 %v1530, 0.5
    %v1533 = vmul.f32 %v1509, %v1531
    %v1534 = vmul.f32 %v1514, %v1532
    %v1536 = vlaneseq
    %v1537 = vshrl.u32 %v1536, 7
    %v1538 = vsub.s32 0, %v1537
    %v1539 = vrot.slane %v320, %v1538
    %vm1541 = vcmask 523264
    %v1543 = vsel %vm1541, %v1533, 0
    %v1546 = vsel %vm1541, %v1534, 0
    %1548 = vmatprep.subr.mxu0 0.0
    %1549 = vmatpush1.msra.mxu0 %v312
    %1550 = vmatprep.subr.mxu0 0.0
    %1551 = vmatpush1.msra.mxu0 %v313
    %1552 = vmatprep.subr.mxu0 0.0
    %1553 = vmatpush1.msra.mxu0 %v314
    %1554 = vmatprep.subr.mxu0 0.0
    %1555 = vmatpush1.msra.mxu0 %v315
    %1556 = vmatprep.subr.mxu0 0.0
    %1557 = vmatpush1.msra.mxu0 %v316
    %1558 = vmatprep.subr.mxu0 0.0
    %1559 = vmatpush1.msra.mxu0 %v317
    %1560 = vmatprep.subr.mxu0 0.0
    %1561 = vmatpush1.msra.mxu0 %v318
    %1562 = vmatprep.subr.mxu0 0.0
    %1563 = vmatpush1.msra.mxu0 %v319
    %1564 = vmatprep.subr.mxu0 0.0
    %1565 = vmatpush1.msra.mxu0 0.0
    %1566 = vmatprep.subr.mxu0 0.0
    %1567 = vmatpush1.msra.mxu0 0.0
    %1568 = vmatprep.subr.mxu0 0.0
    %1569 = vmatpush1.msra.mxu0 0.0
    %1570 = vmatprep.subr.mxu0 0.0
    %1571 = vmatpush1.msra.mxu0 0.0
    %1572 = vmatprep.subr.mxu0 0.0
    %1573 = vmatpush1.msra.mxu0 0.0
    %1574 = vmatprep.subr.mxu0 0.0
    %1575 = vmatpush1.msra.mxu0 0.0
    %1576 = vmatprep.subr.mxu0 0.0
    %1577 = vmatpush1.msra.mxu0 0.0
    %1578 = vmatprep.subr.mxu0 0.0
    %1579 = vmatpush1.msra.mxu0 0.0
    %1580 = vmatprep.subr.mxu0 0.0
    %1581 = vmatpush1.msra.mxu0 0.0
    %1582 = vmatprep.subr.mxu0 0.0
    %1583 = vmatpush1.msra.mxu0 0.0
    %1584 = vmatprep.subr.mxu0 0.0
    %1585 = vmatpush1.msra.mxu0 0.0
    %1586 = vmatprep.subr.mxu0 0.0
    %1587 = vmatpush1.msra.mxu0 0.0
    %1588 = vmatprep.subr.mxu0 0.0
    %1589 = vmatpush1.msra.mxu0 0.0
    %1590 = vmatprep.subr.mxu0 0.0
    %1591 = vmatpush1.msra.mxu0 0.0
    %1592 = vmatprep.subr.mxu0 0.0
    %1593 = vmatpush1.msra.mxu0 0.0
    %1594 = vmatprep.subr.mxu0 0.0
    %1595 = vmatpush1.msra.mxu0 0.0
    %1596 = vmatprep.subr.mxu0 0.0
    %1597 = vmatpush1.msra.mxu0 0.0
    %1598 = vmatprep.subr.mxu0 0.0
    %1599 = vmatpush1.msra.mxu0 0.0
    %1600 = vmatprep.subr.mxu0 0.0
    %1601 = vmatpush1.msra.mxu0 0.0
    %1602 = vmatprep.subr.mxu0 0.0
    %1603 = vmatpush1.msra.mxu0 0.0
    %1604 = vmatprep.subr.mxu0 0.0
    %1605 = vmatpush1.msra.mxu0 0.0
    %1606 = vmatprep.subr.mxu0 0.0
    %1607 = vmatpush1.msra.mxu0 0.0
    %1608 = vmatprep.subr.mxu0 0.0
    %1609 = vmatpush1.msra.mxu0 0.0
    %1610 = vmatprep.subr.mxu0 0.0
    %1611 = vmatpush1.msra.mxu0 0.0
    %1612 = vmatprep.mubr.f32.mxu0 0.0
    %1613 = vmatmul.mubr.f32.gmra.mrb[0].mxu0 %v1543
    %v1614 = vpop.f32.mrb[0].mxu0
    %v1615 = vadd.f32 %v1539, %v1614
    %v1616 = vpop.f32.mrb[0].mxu0
    %1617 = vmatprep.mubr.f32.mxu0 0.0
    %1618 = vmatmul.mubr.f32.gmra.mrb[0].mxu0 %v1546
    %v1619 = vpop.f32.mrb[0].mxu0
    %v1620 = vadd.f32 %v1539, %v1619
    %v1621 = vpop.f32.mrb[0].mxu0
    %1622 = vdwg.mxu0
    %v1623 = vadd.f32 %v1428, %v1615
    %v1624 = vadd.f32 %v1429, %v1620
    %v1625 = vld [vmem:[%s33] sm:$0x1]
    %v1626 = vld [vmem:[%s35] sm:$0x1]
    %v1627 = vsel %vm249, %v1623, 0.0
    %1628 = vadd.xlane.f32.xlu0 %v1627
    %v1629 = vpop.xlane.xlu0 %1628
    %v1630 = vsel %vm249, %v1624, 0.0
    %1631 = vadd.xlane.f32.xlu0 %v1630
    %v1632 = vpop.xlane.xlu0 %1631
    %v1633 = vmul.f32 %v1629, %v256
    %v1634 = vmul.f32 %v1632, %v256
    %v1635 = vsub.f32 %v1623, %v1633
    %v1636 = vsub.f32 %v1624, %v1634
    %v1637 = vmul.f32 %v1635, %v1635
    %v1638 = vmul.f32 %v1636, %v1636
    %v1639 = vsel %vm249, %v1637, 0.0
    %1640 = vadd.xlane.f32.xlu0 %v1639
    %v1641 = vpop.xlane.xlu0 %1640
    %v1642 = vsel %vm249, %v1638, 0.0
    %1643 = vadd.xlane.f32.xlu0 %v1642
    %v1644 = vpop.xlane.xlu0 %1643
    %v1645 = vmul.f32 %v1641, %v256
    %v1646 = vmul.f32 %v1644, %v256
    %v1647 = vadd.f32 %v1645, 1e-05
    %v1648 = vadd.f32 %v1646, 1e-05
    %v1649 = vrsqrt.pop %v1647
    %v1650 = vrsqrt.pop %v1648
    %v1651 = vmul.f32 %v1635, %v1649
    %v1652 = vmul.f32 %v1636, %v1650
    %v1654 = vlaneseq
    %v1655 = vshrl.u32 %v1654, 7
    %v1656 = vsub.s32 0, %v1655
    %v1657 = vrot.slane %v1625, %v1656
    %v1659 = vmul.f32 %v1651, %v1657
    %v1660 = vmul.f32 %v1652, %v1657
    %v1662 = vlaneseq
    %v1663 = vshrl.u32 %v1662, 7
    %v1664 = vsub.s32 0, %v1663
    %v1665 = vrot.slane %v1626, %v1664
    %v1667 = vadd.f32 %v1659, %v1665
    %v1668 = vadd.f32 %v1660, %v1665
    %v1669 = vld [vmem:[%s37] sm:$0xff]
    %v1670 = vld [vmem:[%s37 + $0x8] sm:$0xff]
    %v1671 = vld [vmem:[%s37 + $0x10] sm:$0xff]
    %v1672 = vld [vmem:[%s37 + $0x18] sm:$0xff]
    %v1673 = vld [vmem:[%s41] sm:$0x1]
    %v1675 = vlaneseq
    %v1676 = vshrl.u32 %v1675, 7
    %v1677 = vsub.s32 0, %v1676
    %v1678 = vrot.slane %v1673, %v1677
    %v1681 = vsel %vm249, %v1667, 0
    %v1684 = vsel %vm249, %v1668, 0
    %1686 = vmatprep.subr.mxu0 0.0
    %1687 = vmatpush1.msra.mxu0 %v1669
    %1688 = vmatprep.subr.mxu0 0.0
    %1689 = vmatpush1.msra.mxu0 %v1670
    %1690 = vmatprep.subr.mxu0 0.0
    %1691 = vmatpush1.msra.mxu0 %v1671
    %1692 = vmatprep.subr.mxu0 0.0
    %1693 = vmatpush1.msra.mxu0 %v1672
    %1694 = vmatprep.subr.mxu0 0.0
    %1695 = vmatpush1.msra.mxu0 0.0
    %1696 = vmatprep.subr.mxu0 0.0
    %1697 = vmatpush1.msra.mxu0 0.0
    %1698 = vmatprep.subr.mxu0 0.0
    %1699 = vmatpush1.msra.mxu0 0.0
    %1700 = vmatprep.subr.mxu0 0.0
    %1701 = vmatpush1.msra.mxu0 0.0
    %1702 = vmatprep.subr.mxu0 0.0
    %1703 = vmatpush1.msra.mxu0 0.0
    %1704 = vmatprep.subr.mxu0 0.0
    %1705 = vmatpush1.msra.mxu0 0.0
    %1706 = vmatprep.subr.mxu0 0.0
    %1707 = vmatpush1.msra.mxu0 0.0
    %1708 = vmatprep.subr.mxu0 0.0
    %1709 = vmatpush1.msra.mxu0 0.0
    %1710 = vmatprep.subr.mxu0 0.0
    %1711 = vmatpush1.msra.mxu0 0.0
    %1712 = vmatprep.subr.mxu0 0.0
    %1713 = vmatpush1.msra.mxu0 0.0
    %1714 = vmatprep.subr.mxu0 0.0
    %1715 = vmatpush1.msra.mxu0 0.0
    %1716 = vmatprep.subr.mxu0 0.0
    %1717 = vmatpush1.msra.mxu0 0.0
    %1718 = vmatprep.subr.mxu0 0.0
    %1719 = vmatpush1.msra.mxu0 0.0
    %1720 = vmatprep.subr.mxu0 0.0
    %1721 = vmatpush1.msra.mxu0 0.0
    %1722 = vmatprep.subr.mxu0 0.0
    %1723 = vmatpush1.msra.mxu0 0.0
    %1724 = vmatprep.subr.mxu0 0.0
    %1725 = vmatpush1.msra.mxu0 0.0
    %1726 = vmatprep.subr.mxu0 0.0
    %1727 = vmatpush1.msra.mxu0 0.0
    %1728 = vmatprep.subr.mxu0 0.0
    %1729 = vmatpush1.msra.mxu0 0.0
    %1730 = vmatprep.subr.mxu0 0.0
    %1731 = vmatpush1.msra.mxu0 0.0
    %1732 = vmatprep.subr.mxu0 0.0
    %1733 = vmatpush1.msra.mxu0 0.0
    %1734 = vmatprep.subr.mxu0 0.0
    %1735 = vmatpush1.msra.mxu0 0.0
    %1736 = vmatprep.subr.mxu0 0.0
    %1737 = vmatpush1.msra.mxu0 0.0
    %1738 = vmatprep.subr.mxu0 0.0
    %1739 = vmatpush1.msra.mxu0 0.0
    %1740 = vmatprep.subr.mxu0 0.0
    %1741 = vmatpush1.msra.mxu0 0.0
    %1742 = vmatprep.subr.mxu0 0.0
    %1743 = vmatpush1.msra.mxu0 0.0
    %1744 = vmatprep.subr.mxu0 0.0
    %1745 = vmatpush1.msra.mxu0 0.0
    %1746 = vmatprep.subr.mxu0 0.0
    %1747 = vmatpush1.msra.mxu0 0.0
    %1748 = vmatprep.subr.mxu0 0.0
    %1749 = vmatpush1.msra.mxu0 0.0
    %1750 = vmatprep.mubr.f32.mxu0 0.0
    %1751 = vmatmul.mubr.f32.gmra.mrb[0].mxu0 %v1681
    %v1752 = vpop.f32.mrb[0].mxu0
    %v1753 = vadd.f32 %v1678, %v1752
    %v1754 = vpop.f32.mrb[0].mxu0
    %1755 = vmatprep.mubr.f32.mxu0 0.0
    %1756 = vmatmul.mubr.f32.gmra.mrb[0].mxu0 %v1684
    %v1757 = vpop.f32.mrb[0].mxu0
    %v1758 = vadd.f32 %v1678, %v1757
    %v1759 = vpop.f32.mrb[0].mxu0
    %1760 = vdwg.mxu0
    %s1761 = scalar_lea.vmem %s37, 32
    %v1762 = vld [vmem:[%s1761] sm:$0xff]
    %v1763 = vld [vmem:[%s1761 + $0x8] sm:$0xff]
    %v1764 = vld [vmem:[%s1761 + $0x10] sm:$0xff]
    %v1765 = vld [vmem:[%s1761 + $0x18] sm:$0xff]
    %s1766 = scalar_lea.vmem %s41, 1
    %v1767 = vld [vmem:[%s1766] sm:$0x1]
    %v1769 = vlaneseq
    %v1770 = vshrl.u32 %v1769, 7
    %v1771 = vsub.s32 0, %v1770
    %v1772 = vrot.slane %v1767, %v1771
    %1774 = vmatprep.subr.mxu0 0.0
    %1775 = vmatpush1.msra.mxu0 %v1762
    %1776 = vmatprep.subr.mxu0 0.0
    %1777 = vmatpush1.msra.mxu0 %v1763
    %1778 = vmatprep.subr.mxu0 0.0
    %1779 = vmatpush1.msra.mxu0 %v1764
    %1780 = vmatprep.subr.mxu0 0.0
    %1781 = vmatpush1.msra.mxu0 %v1765
    %1782 = vmatprep.subr.mxu0 0.0
    %1783 = vmatpush1.msra.mxu0 0.0
    %1784 = vmatprep.subr.mxu0 0.0
    %1785 = vmatpush1.msra.mxu0 0.0
    %1786 = vmatprep.subr.mxu0 0.0
    %1787 = vmatpush1.msra.mxu0 0.0
    %1788 = vmatprep.subr.mxu0 0.0
    %1789 = vmatpush1.msra.mxu0 0.0
    %1790 = vmatprep.subr.mxu0 0.0
    %1791 = vmatpush1.msra.mxu0 0.0
    %1792 = vmatprep.subr.mxu0 0.0
    %1793 = vmatpush1.msra.mxu0 0.0
    %1794 = vmatprep.subr.mxu0 0.0
    %1795 = vmatpush1.msra.mxu0 0.0
    %1796 = vmatprep.subr.mxu0 0.0
    %1797 = vmatpush1.msra.mxu0 0.0
    %1798 = vmatprep.subr.mxu0 0.0
    %1799 = vmatpush1.msra.mxu0 0.0
    %1800 = vmatprep.subr.mxu0 0.0
    %1801 = vmatpush1.msra.mxu0 0.0
    %1802 = vmatprep.subr.mxu0 0.0
    %1803 = vmatpush1.msra.mxu0 0.0
    %1804 = vmatprep.subr.mxu0 0.0
    %1805 = vmatpush1.msra.mxu0 0.0
    %1806 = vmatprep.subr.mxu0 0.0
    %1807 = vmatpush1.msra.mxu0 0.0
    %1808 = vmatprep.subr.mxu0 0.0
    %1809 = vmatpush1.msra.mxu0 0.0
    %1810 = vmatprep.subr.mxu0 0.0
    %1811 = vmatpush1.msra.mxu0 0.0
    %1812 = vmatprep.subr.mxu0 0.0
    %1813 = vmatpush1.msra.mxu0 0.0
    %1814 = vmatprep.subr.mxu0 0.0
    %1815 = vmatpush1.msra.mxu0 0.0
    %1816 = vmatprep.subr.mxu0 0.0
    %1817 = vmatpush1.msra.mxu0 0.0
    %1818 = vmatprep.subr.mxu0 0.0
    %1819 = vmatpush1.msra.mxu0 0.0
    %1820 = vmatprep.subr.mxu0 0.0
    %1821 = vmatpush1.msra.mxu0 0.0
    %1822 = vmatprep.subr.mxu0 0.0
    %1823 = vmatpush1.msra.mxu0 0.0
    %1824 = vmatprep.subr.mxu0 0.0
    %1825 = vmatpush1.msra.mxu0 0.0
    %1826 = vmatprep.subr.mxu0 0.0
    %1827 = vmatpush1.msra.mxu0 0.0
    %1828 = vmatprep.subr.mxu0 0.0
    %1829 = vmatpush1.msra.mxu0 0.0
    %1830 = vmatprep.subr.mxu0 0.0
    %1831 = vmatpush1.msra.mxu0 0.0
    %1832 = vmatprep.subr.mxu0 0.0
    %1833 = vmatpush1.msra.mxu0 0.0
    %1834 = vmatprep.subr.mxu0 0.0
    %1835 = vmatpush1.msra.mxu0 0.0
    %1836 = vmatprep.subr.mxu0 0.0
    %1837 = vmatpush1.msra.mxu0 0.0
    %1838 = vmatprep.mubr.f32.mxu0 0.0
    %1839 = vmatmul.mubr.f32.gmra.mrb[0].mxu0 %v1681
    %v1840 = vpop.f32.mrb[0].mxu0
    %v1841 = vadd.f32 %v1772, %v1840
    %v1842 = vpop.f32.mrb[0].mxu0
    %1843 = vmatprep.mubr.f32.mxu0 0.0
    %1844 = vmatmul.mubr.f32.gmra.mrb[0].mxu0 %v1684
    %v1845 = vpop.f32.mrb[0].mxu0
    %v1846 = vadd.f32 %v1772, %v1845
    %v1847 = vpop.f32.mrb[0].mxu0
    %1848 = vdwg.mxu0
    %s1849 = scalar_lea.vmem %s37, 64
    %v1850 = vld [vmem:[%s1849] sm:$0xff]
    %v1851 = vld [vmem:[%s1849 + $0x8] sm:$0xff]
    %v1852 = vld [vmem:[%s1849 + $0x10] sm:$0xff]
    %v1853 = vld [vmem:[%s1849 + $0x18] sm:$0xff]
    %s1854 = scalar_lea.vmem %s41, 2
    %v1855 = vld [vmem:[%s1854] sm:$0x1]
    %v1857 = vlaneseq
    %v1858 = vshrl.u32 %v1857, 7
    %v1859 = vsub.s32 0, %v1858
    %v1860 = vrot.slane %v1855, %v1859
    %1862 = vmatprep.subr.mxu0 0.0
    %1863 = vmatpush1.msra.mxu0 %v1850
    %1864 = vmatprep.subr.mxu0 0.0
    %1865 = vmatpush1.msra.mxu0 %v1851
    %1866 = vmatprep.subr.mxu0 0.0
    %1867 = vmatpush1.msra.mxu0 %v1852
    %1868 = vmatprep.subr.mxu0 0.0
    %1869 = vmatpush1.msra.mxu0 %v1853
    %1870 = vmatprep.subr.mxu0 0.0
    %1871 = vmatpush1.msra.mxu0 0.0
    %1872 = vmatprep.subr.mxu0 0.0
    %1873 = vmatpush1.msra.mxu0 0.0
    %1874 = vmatprep.subr.mxu0 0.0
    %1875 = vmatpush1.msra.mxu0 0.0
    %1876 = vmatprep.subr.mxu0 0.0
    %1877 = vmatpush1.msra.mxu0 0.0
    %1878 = vmatprep.subr.mxu0 0.0
    %1879 = vmatpush1.msra.mxu0 0.0
    %1880 = vmatprep.subr.mxu0 0.0
    %1881 = vmatpush1.msra.mxu0 0.0
    %1882 = vmatprep.subr.mxu0 0.0
    %1883 = vmatpush1.msra.mxu0 0.0
    %1884 = vmatprep.subr.mxu0 0.0
    %1885 = vmatpush1.msra.mxu0 0.0
    %1886 = vmatprep.subr.mxu0 0.0
    %1887 = vmatpush1.msra.mxu0 0.0
    %1888 = vmatprep.subr.mxu0 0.0
    %1889 = vmatpush1.msra.mxu0 0.0
    %1890 = vmatprep.subr.mxu0 0.0
    %1891 = vmatpush1.msra.mxu0 0.0
    %1892 = vmatprep.subr.mxu0 0.0
    %1893 = vmatpush1.msra.mxu0 0.0
    %1894 = vmatprep.subr.mxu0 0.0
    %1895 = vmatpush1.msra.mxu0 0.0
    %1896 = vmatprep.subr.mxu0 0.0
    %1897 = vmatpush1.msra.mxu0 0.0
    %1898 = vmatprep.subr.mxu0 0.0
    %1899 = vmatpush1.msra.mxu0 0.0
    %1900 = vmatprep.subr.mxu0 0.0
    %1901 = vmatpush1.msra.mxu0 0.0
    %1902 = vmatprep.subr.mxu0 0.0
    %1903 = vmatpush1.msra.mxu0 0.0
    %1904 = vmatprep.subr.mxu0 0.0
    %1905 = vmatpush1.msra.mxu0 0.0
    %1906 = vmatprep.subr.mxu0 0.0
    %1907 = vmatpush1.msra.mxu0 0.0
    %1908 = vmatprep.subr.mxu0 0.0
    %1909 = vmatpush1.msra.mxu0 0.0
    %1910 = vmatprep.subr.mxu0 0.0
    %1911 = vmatpush1.msra.mxu0 0.0
    %1912 = vmatprep.subr.mxu0 0.0
    %1913 = vmatpush1.msra.mxu0 0.0
    %1914 = vmatprep.subr.mxu0 0.0
    %1915 = vmatpush1.msra.mxu0 0.0
    %1916 = vmatprep.subr.mxu0 0.0
    %1917 = vmatpush1.msra.mxu0 0.0
    %1918 = vmatprep.subr.mxu0 0.0
    %1919 = vmatpush1.msra.mxu0 0.0
    %1920 = vmatprep.subr.mxu0 0.0
    %1921 = vmatpush1.msra.mxu0 0.0
    %1922 = vmatprep.subr.mxu0 0.0
    %1923 = vmatpush1.msra.mxu0 0.0
    %1924 = vmatprep.subr.mxu0 0.0
    %1925 = vmatpush1.msra.mxu0 0.0
    %1926 = vmatprep.mubr.f32.mxu0 0.0
    %1927 = vmatmul.mubr.f32.gmra.mrb[0].mxu0 %v1681
    %v1928 = vpop.f32.mrb[0].mxu0
    %v1929 = vadd.f32 %v1860, %v1928
    %v1930 = vpop.f32.mrb[0].mxu0
    %1931 = vmatprep.mubr.f32.mxu0 0.0
    %1932 = vmatmul.mubr.f32.gmra.mrb[0].mxu0 %v1684
    %v1933 = vpop.f32.mrb[0].mxu0
    %v1934 = vadd.f32 %v1860, %v1933
    %v1935 = vpop.f32.mrb[0].mxu0
    %1936 = vdwg.mxu0
    %s1937 = scalar_lea.vmem %s37, 96
    %v1938 = vld [vmem:[%s1937] sm:$0xff]
    %v1939 = vld [vmem:[%s1937 + $0x8] sm:$0xff]
    %v1940 = vld [vmem:[%s1937 + $0x10] sm:$0xff]
    %v1941 = vld [vmem:[%s1937 + $0x18] sm:$0xff]
    %s1942 = scalar_lea.vmem %s41, 3
    %v1943 = vld [vmem:[%s1942] sm:$0x1]
    %v1945 = vlaneseq
    %v1946 = vshrl.u32 %v1945, 7
    %v1947 = vsub.s32 0, %v1946
    %v1948 = vrot.slane %v1943, %v1947
    %1950 = vmatprep.subr.mxu0 0.0
    %1951 = vmatpush1.msra.mxu0 %v1938
    %1952 = vmatprep.subr.mxu0 0.0
    %1953 = vmatpush1.msra.mxu0 %v1939
    %1954 = vmatprep.subr.mxu0 0.0
    %1955 = vmatpush1.msra.mxu0 %v1940
    %1956 = vmatprep.subr.mxu0 0.0
    %1957 = vmatpush1.msra.mxu0 %v1941
    %1958 = vmatprep.subr.mxu0 0.0
    %1959 = vmatpush1.msra.mxu0 0.0
    %1960 = vmatprep.subr.mxu0 0.0
    %1961 = vmatpush1.msra.mxu0 0.0
    %1962 = vmatprep.subr.mxu0 0.0
    %1963 = vmatpush1.msra.mxu0 0.0
    %1964 = vmatprep.subr.mxu0 0.0
    %1965 = vmatpush1.msra.mxu0 0.0
    %1966 = vmatprep.subr.mxu0 0.0
    %1967 = vmatpush1.msra.mxu0 0.0
    %1968 = vmatprep.subr.mxu0 0.0
    %1969 = vmatpush1.msra.mxu0 0.0
    %1970 = vmatprep.subr.mxu0 0.0
    %1971 = vmatpush1.msra.mxu0 0.0
    %1972 = vmatprep.subr.mxu0 0.0
    %1973 = vmatpush1.msra.mxu0 0.0
    %1974 = vmatprep.subr.mxu0 0.0
    %1975 = vmatpush1.msra.mxu0 0.0
    %1976 = vmatprep.subr.mxu0 0.0
    %1977 = vmatpush1.msra.mxu0 0.0
    %1978 = vmatprep.subr.mxu0 0.0
    %1979 = vmatpush1.msra.mxu0 0.0
    %1980 = vmatprep.subr.mxu0 0.0
    %1981 = vmatpush1.msra.mxu0 0.0
    %1982 = vmatprep.subr.mxu0 0.0
    %1983 = vmatpush1.msra.mxu0 0.0
    %1984 = vmatprep.subr.mxu0 0.0
    %1985 = vmatpush1.msra.mxu0 0.0
    %1986 = vmatprep.subr.mxu0 0.0
    %1987 = vmatpush1.msra.mxu0 0.0
    %1988 = vmatprep.subr.mxu0 0.0
    %1989 = vmatpush1.msra.mxu0 0.0
    %1990 = vmatprep.subr.mxu0 0.0
    %1991 = vmatpush1.msra.mxu0 0.0
    %1992 = vmatprep.subr.mxu0 0.0
    %1993 = vmatpush1.msra.mxu0 0.0
    %1994 = vmatprep.subr.mxu0 0.0
    %1995 = vmatpush1.msra.mxu0 0.0
    %1996 = vmatprep.subr.mxu0 0.0
    %1997 = vmatpush1.msra.mxu0 0.0
    %1998 = vmatprep.subr.mxu0 0.0
    %1999 = vmatpush1.msra.mxu0 0.0
    %2000 = vmatprep.subr.mxu0 0.0
    %2001 = vmatpush1.msra.mxu0 0.0
    %2002 = vmatprep.subr.mxu0 0.0
    %2003 = vmatpush1.msra.mxu0 0.0
    %2004 = vmatprep.subr.mxu0 0.0
    %2005 = vmatpush1.msra.mxu0 0.0
    %2006 = vmatprep.subr.mxu0 0.0
    %2007 = vmatpush1.msra.mxu0 0.0
    %2008 = vmatprep.subr.mxu0 0.0
    %2009 = vmatpush1.msra.mxu0 0.0
    %2010 = vmatprep.subr.mxu0 0.0
    %2011 = vmatpush1.msra.mxu0 0.0
    %2012 = vmatprep.subr.mxu0 0.0
    %2013 = vmatpush1.msra.mxu0 0.0
    %2014 = vmatprep.mubr.f32.mxu0 0.0
    %2015 = vmatmul.mubr.f32.gmra.mrb[0].mxu0 %v1681
    %v2016 = vpop.f32.mrb[0].mxu0
    %v2017 = vadd.f32 %v1948, %v2016
    %v2018 = vpop.f32.mrb[0].mxu0
    %2019 = vmatprep.mubr.f32.mxu0 0.0
    %2020 = vmatmul.mubr.f32.gmra.mrb[0].mxu0 %v1684
    %v2021 = vpop.f32.mrb[0].mxu0
    %v2022 = vadd.f32 %v1948, %v2021
    %v2023 = vpop.f32.mrb[0].mxu0
    %2024 = vdwg.mxu0
    %v2025 = vld [vmem:[%s39] sm:$0xff]
    %v2026 = vld [vmem:[%s39 + $0x8] sm:$0xff]
    %v2028 = vsel %vm411, 0.0, 0
    %2030 = vmatprep.subr.mxu0 0.0
    %2031 = vmatpush1.msra.mxu0 %v2025
    %2032 = vmatprep.subr.mxu0 0.0
    %2033 = vmatpush1.msra.mxu0 %v2026
    %2034 = vmatprep.subr.mxu0 0.0
    %2035 = vmatpush1.msra.mxu0 0.0
    %2036 = vmatprep.subr.mxu0 0.0
    %2037 = vmatpush1.msra.mxu0 0.0
    %2038 = vmatprep.subr.mxu0 0.0
    %2039 = vmatpush1.msra.mxu0 0.0
    %2040 = vmatprep.subr.mxu0 0.0
    %2041 = vmatpush1.msra.mxu0 0.0
    %2042 = vmatprep.subr.mxu0 0.0
    %2043 = vmatpush1.msra.mxu0 0.0
    %2044 = vmatprep.subr.mxu0 0.0
    %2045 = vmatpush1.msra.mxu0 0.0
    %2046 = vmatprep.subr.mxu0 0.0
    %2047 = vmatpush1.msra.mxu0 0.0
    %2048 = vmatprep.subr.mxu0 0.0
    %2049 = vmatpush1.msra.mxu0 0.0
    %2050 = vmatprep.subr.mxu0 0.0
    %2051 = vmatpush1.msra.mxu0 0.0
    %2052 = vmatprep.subr.mxu0 0.0
    %2053 = vmatpush1.msra.mxu0 0.0
    %2054 = vmatprep.subr.mxu0 0.0
    %2055 = vmatpush1.msra.mxu0 0.0
    %2056 = vmatprep.subr.mxu0 0.0
    %2057 = vmatpush1.msra.mxu0 0.0
    %2058 = vmatprep.subr.mxu0 0.0
    %2059 = vmatpush1.msra.mxu0 0.0
    %2060 = vmatprep.subr.mxu0 0.0
    %2061 = vmatpush1.msra.mxu0 0.0
    %2062 = vmatprep.subr.mxu0 0.0
    %2063 = vmatpush1.msra.mxu0 0.0
    %2064 = vmatprep.subr.mxu0 0.0
    %2065 = vmatpush1.msra.mxu0 0.0
    %2066 = vmatprep.subr.mxu0 0.0
    %2067 = vmatpush1.msra.mxu0 0.0
    %2068 = vmatprep.subr.mxu0 0.0
    %2069 = vmatpush1.msra.mxu0 0.0
    %2070 = vmatprep.subr.mxu0 0.0
    %2071 = vmatpush1.msra.mxu0 0.0
    %2072 = vmatprep.subr.mxu0 0.0
    %2073 = vmatpush1.msra.mxu0 0.0
    %2074 = vmatprep.subr.mxu0 0.0
    %2075 = vmatpush1.msra.mxu0 0.0
    %2076 = vmatprep.subr.mxu0 0.0
    %2077 = vmatpush1.msra.mxu0 0.0
    %2078 = vmatprep.subr.mxu0 0.0
    %2079 = vmatpush1.msra.mxu0 0.0
    %2080 = vmatprep.subr.mxu0 0.0
    %2081 = vmatpush1.msra.mxu0 0.0
    %2082 = vmatprep.subr.mxu0 0.0
    %2083 = vmatpush1.msra.mxu0 0.0
    %2084 = vmatprep.subr.mxu0 0.0
    %2085 = vmatpush1.msra.mxu0 0.0
    %2086 = vmatprep.subr.mxu0 0.0
    %2087 = vmatpush1.msra.mxu0 0.0
    %2088 = vmatprep.subr.mxu0 0.0
    %2089 = vmatpush1.msra.mxu0 0.0
    %2090 = vmatprep.subr.mxu0 0.0
    %2091 = vmatpush1.msra.mxu0 0.0
    %2092 = vmatprep.subr.mxu0 0.0
    %2093 = vmatpush1.msra.mxu0 0.0
    %2094 = vmatprep.mubr.f32.mxu0 0.0
    %2095 = vmatmul.mubr.f32.gmra.mrb[0].mxu0 %v2028
    %v2096 = vpop.f32.mrb[0].mxu0
    %v2097 = vadd.f32 0.0, %v2096
    %v2098 = vpop.f32.mrb[0].mxu0
    %2099 = vdwg.mxu0
    %v2101 = vrot.slane %v2097, 1
    %v2104 = vadd.f32 %v1753, %v2097
    %v2105 = vadd.f32 %v1758, %v2101
    %v2106 = vxor.u32 %v2104, 2147483648
    %v2107 = vxor.u32 %v2105, 2147483648
    %v2108 = vmul.f32 %v2106, 1.442695
    %v2109 = vpow.pop %v2108
    %v2110 = vmul.f32 %v2107, 1.442695
    %v2111 = vpow.pop %v2110
    %v2112 = vadd.f32 %v2109, 1.0
    %v2113 = vadd.f32 %v2111, 1.0
    %v2114 = vrcp.pop %v2112
    %v2115 = vmul.f32 1.0, %v2114
    %v2116 = vrcp.pop %v2113
    %v2117 = vmul.f32 1.0, %v2116
    %s2118 = scalar_lea.vmem %s39, 16
    %v2119 = vld [vmem:[%s2118] sm:$0xff]
    %v2120 = vld [vmem:[%s2118 + $0x8] sm:$0xff]
    %2121 = vmatprep.subr.mxu0 0.0
    %2122 = vmatpush1.msra.mxu0 %v2119
    %2123 = vmatprep.subr.mxu0 0.0
    %2124 = vmatpush1.msra.mxu0 %v2120
    %2125 = vmatprep.subr.mxu0 0.0
    %2126 = vmatpush1.msra.mxu0 0.0
    %2127 = vmatprep.subr.mxu0 0.0
    %2128 = vmatpush1.msra.mxu0 0.0
    %2129 = vmatprep.subr.mxu0 0.0
    %2130 = vmatpush1.msra.mxu0 0.0
    %2131 = vmatprep.subr.mxu0 0.0
    %2132 = vmatpush1.msra.mxu0 0.0
    %2133 = vmatprep.subr.mxu0 0.0
    %2134 = vmatpush1.msra.mxu0 0.0
    %2135 = vmatprep.subr.mxu0 0.0
    %2136 = vmatpush1.msra.mxu0 0.0
    %2137 = vmatprep.subr.mxu0 0.0
    %2138 = vmatpush1.msra.mxu0 0.0
    %2139 = vmatprep.subr.mxu0 0.0
    %2140 = vmatpush1.msra.mxu0 0.0
    %2141 = vmatprep.subr.mxu0 0.0
    %2142 = vmatpush1.msra.mxu0 0.0
    %2143 = vmatprep.subr.mxu0 0.0
    %2144 = vmatpush1.msra.mxu0 0.0
    %2145 = vmatprep.subr.mxu0 0.0
    %2146 = vmatpush1.msra.mxu0 0.0
    %2147 = vmatprep.subr.mxu0 0.0
    %2148 = vmatpush1.msra.mxu0 0.0
    %2149 = vmatprep.subr.mxu0 0.0
    %2150 = vmatpush1.msra.mxu0 0.0
    %2151 = vmatprep.subr.mxu0 0.0
    %2152 = vmatpush1.msra.mxu0 0.0
    %2153 = vmatprep.subr.mxu0 0.0
    %2154 = vmatpush1.msra.mxu0 0.0
    %2155 = vmatprep.subr.mxu0 0.0
    %2156 = vmatpush1.msra.mxu0 0.0
    %2157 = vmatprep.subr.mxu0 0.0
    %2158 = vmatpush1.msra.mxu0 0.0
    %2159 = vmatprep.subr.mxu0 0.0
    %2160 = vmatpush1.msra.mxu0 0.0
    %2161 = vmatprep.subr.mxu0 0.0
    %2162 = vmatpush1.msra.mxu0 0.0
    %2163 = vmatprep.subr.mxu0 0.0
    %2164 = vmatpush1.msra.mxu0 0.0
    %2165 = vmatprep.subr.mxu0 0.0
    %2166 = vmatpush1.msra.mxu0 0.0
    %2167 = vmatprep.subr.mxu0 0.0
    %2168 = vmatpush1.msra.mxu0 0.0
    %2169 = vmatprep.subr.mxu0 0.0
    %2170 = vmatpush1.msra.mxu0 0.0
    %2171 = vmatprep.subr.mxu0 0.0
    %2172 = vmatpush1.msra.mxu0 0.0
    %2173 = vmatprep.subr.mxu0 0.0
    %2174 = vmatpush1.msra.mxu0 0.0
    %2175 = vmatprep.subr.mxu0 0.0
    %2176 = vmatpush1.msra.mxu0 0.0
    %2177 = vmatprep.subr.mxu0 0.0
    %2178 = vmatpush1.msra.mxu0 0.0
    %2179 = vmatprep.subr.mxu0 0.0
    %2180 = vmatpush1.msra.mxu0 0.0
    %2181 = vmatprep.subr.mxu0 0.0
    %2182 = vmatpush1.msra.mxu0 0.0
    %2183 = vmatprep.subr.mxu0 0.0
    %2184 = vmatpush1.msra.mxu0 0.0
    %2185 = vmatprep.mubr.f32.mxu0 0.0
    %2186 = vmatmul.mubr.f32.gmra.mrb[0].mxu0 %v2028
    %v2187 = vpop.f32.mrb[0].mxu0
    %v2188 = vadd.f32 0.0, %v2187
    %v2189 = vpop.f32.mrb[0].mxu0
    %2190 = vdwg.mxu0
    %v2192 = vrot.slane %v2188, 1
    %v2195 = vadd.f32 %v1841, %v2188
    %v2196 = vadd.f32 %v1846, %v2192
    %v2197 = vxor.u32 %v2195, 2147483648
    %v2198 = vxor.u32 %v2196, 2147483648
    %v2199 = vmul.f32 %v2197, 1.442695
    %v2200 = vpow.pop %v2199
    %v2201 = vmul.f32 %v2198, 1.442695
    %v2202 = vpow.pop %v2201
    %v2203 = vadd.f32 %v2200, 1.0
    %v2204 = vadd.f32 %v2202, 1.0
    %v2205 = vrcp.pop %v2203
    %v2206 = vmul.f32 1.0, %v2205
    %v2207 = vrcp.pop %v2204
    %v2208 = vmul.f32 1.0, %v2207
    %s2209 = scalar_lea.vmem %s39, 32
    %v2210 = vld [vmem:[%s2209] sm:$0xff]
    %v2211 = vld [vmem:[%s2209 + $0x8] sm:$0xff]
    %2212 = vmatprep.subr.mxu0 0.0
    %2213 = vmatpush1.msra.mxu0 %v2210
    %2214 = vmatprep.subr.mxu0 0.0
    %2215 = vmatpush1.msra.mxu0 %v2211
    %2216 = vmatprep.subr.mxu0 0.0
    %2217 = vmatpush1.msra.mxu0 0.0
    %2218 = vmatprep.subr.mxu0 0.0
    %2219 = vmatpush1.msra.mxu0 0.0
    %2220 = vmatprep.subr.mxu0 0.0
    %2221 = vmatpush1.msra.mxu0 0.0
    %2222 = vmatprep.subr.mxu0 0.0
    %2223 = vmatpush1.msra.mxu0 0.0
    %2224 = vmatprep.subr.mxu0 0.0
    %2225 = vmatpush1.msra.mxu0 0.0
    %2226 = vmatprep.subr.mxu0 0.0
    %2227 = vmatpush1.msra.mxu0 0.0
    %2228 = vmatprep.subr.mxu0 0.0
    %2229 = vmatpush1.msra.mxu0 0.0
    %2230 = vmatprep.subr.mxu0 0.0
    %2231 = vmatpush1.msra.mxu0 0.0
    %2232 = vmatprep.subr.mxu0 0.0
    %2233 = vmatpush1.msra.mxu0 0.0
    %2234 = vmatprep.subr.mxu0 0.0
    %2235 = vmatpush1.msra.mxu0 0.0
    %2236 = vmatprep.subr.mxu0 0.0
    %2237 = vmatpush1.msra.mxu0 0.0
    %2238 = vmatprep.subr.mxu0 0.0
    %2239 = vmatpush1.msra.mxu0 0.0
    %2240 = vmatprep.subr.mxu0 0.0
    %2241 = vmatpush1.msra.mxu0 0.0
    %2242 = vmatprep.subr.mxu0 0.0
    %2243 = vmatpush1.msra.mxu0 0.0
    %2244 = vmatprep.subr.mxu0 0.0
    %2245 = vmatpush1.msra.mxu0 0.0
    %2246 = vmatprep.subr.mxu0 0.0
    %2247 = vmatpush1.msra.mxu0 0.0
    %2248 = vmatprep.subr.mxu0 0.0
    %2249 = vmatpush1.msra.mxu0 0.0
    %2250 = vmatprep.subr.mxu0 0.0
    %2251 = vmatpush1.msra.mxu0 0.0
    %2252 = vmatprep.subr.mxu0 0.0
    %2253 = vmatpush1.msra.mxu0 0.0
    %2254 = vmatprep.subr.mxu0 0.0
    %2255 = vmatpush1.msra.mxu0 0.0
    %2256 = vmatprep.subr.mxu0 0.0
    %2257 = vmatpush1.msra.mxu0 0.0
    %2258 = vmatprep.subr.mxu0 0.0
    %2259 = vmatpush1.msra.mxu0 0.0
    %2260 = vmatprep.subr.mxu0 0.0
    %2261 = vmatpush1.msra.mxu0 0.0
    %2262 = vmatprep.subr.mxu0 0.0
    %2263 = vmatpush1.msra.mxu0 0.0
    %2264 = vmatprep.subr.mxu0 0.0
    %2265 = vmatpush1.msra.mxu0 0.0
    %2266 = vmatprep.subr.mxu0 0.0
    %2267 = vmatpush1.msra.mxu0 0.0
    %2268 = vmatprep.subr.mxu0 0.0
    %2269 = vmatpush1.msra.mxu0 0.0
    %2270 = vmatprep.subr.mxu0 0.0
    %2271 = vmatpush1.msra.mxu0 0.0
    %2272 = vmatprep.subr.mxu0 0.0
    %2273 = vmatpush1.msra.mxu0 0.0
    %2274 = vmatprep.subr.mxu0 0.0
    %2275 = vmatpush1.msra.mxu0 0.0
    %2276 = vmatprep.mubr.f32.mxu0 0.0
    %2277 = vmatmul.mubr.f32.gmra.mrb[0].mxu0 %v2028
    %v2278 = vpop.f32.mrb[0].mxu0
    %v2279 = vadd.f32 0.0, %v2278
    %v2280 = vpop.f32.mrb[0].mxu0
    %2281 = vdwg.mxu0
    %v2283 = vrot.slane %v2279, 1
    %v2286 = vadd.f32 %v1929, %v2279
    %v2287 = vadd.f32 %v1934, %v2283
    %v2288 = vtanh.pop %v2286
    %v2289 = vtanh.pop %v2287
    %s2290 = scalar_lea.vmem %s39, 48
    %v2291 = vld [vmem:[%s2290] sm:$0xff]
    %v2292 = vld [vmem:[%s2290 + $0x8] sm:$0xff]
    %2293 = vmatprep.subr.mxu0 0.0
    %2294 = vmatpush1.msra.mxu0 %v2291
    %2295 = vmatprep.subr.mxu0 0.0
    %2296 = vmatpush1.msra.mxu0 %v2292
    %2297 = vmatprep.subr.mxu0 0.0
    %2298 = vmatpush1.msra.mxu0 0.0
    %2299 = vmatprep.subr.mxu0 0.0
    %2300 = vmatpush1.msra.mxu0 0.0
    %2301 = vmatprep.subr.mxu0 0.0
    %2302 = vmatpush1.msra.mxu0 0.0
    %2303 = vmatprep.subr.mxu0 0.0
    %2304 = vmatpush1.msra.mxu0 0.0
    %2305 = vmatprep.subr.mxu0 0.0
    %2306 = vmatpush1.msra.mxu0 0.0
    %2307 = vmatprep.subr.mxu0 0.0
    %2308 = vmatpush1.msra.mxu0 0.0
    %2309 = vmatprep.subr.mxu0 0.0
    %2310 = vmatpush1.msra.mxu0 0.0
    %2311 = vmatprep.subr.mxu0 0.0
    %2312 = vmatpush1.msra.mxu0 0.0
    %2313 = vmatprep.subr.mxu0 0.0
    %2314 = vmatpush1.msra.mxu0 0.0
    %2315 = vmatprep.subr.mxu0 0.0
    %2316 = vmatpush1.msra.mxu0 0.0
    %2317 = vmatprep.subr.mxu0 0.0
    %2318 = vmatpush1.msra.mxu0 0.0
    %2319 = vmatprep.subr.mxu0 0.0
    %2320 = vmatpush1.msra.mxu0 0.0
    %2321 = vmatprep.subr.mxu0 0.0
    %2322 = vmatpush1.msra.mxu0 0.0
    %2323 = vmatprep.subr.mxu0 0.0
    %2324 = vmatpush1.msra.mxu0 0.0
    %2325 = vmatprep.subr.mxu0 0.0
    %2326 = vmatpush1.msra.mxu0 0.0
    %2327 = vmatprep.subr.mxu0 0.0
    %2328 = vmatpush1.msra.mxu0 0.0
    %2329 = vmatprep.subr.mxu0 0.0
    %2330 = vmatpush1.msra.mxu0 0.0
    %2331 = vmatprep.subr.mxu0 0.0
    %2332 = vmatpush1.msra.mxu0 0.0
    %2333 = vmatprep.subr.mxu0 0.0
    %2334 = vmatpush1.msra.mxu0 0.0
    %2335 = vmatprep.subr.mxu0 0.0
    %2336 = vmatpush1.msra.mxu0 0.0
    %2337 = vmatprep.subr.mxu0 0.0
    %2338 = vmatpush1.msra.mxu0 0.0
    %2339 = vmatprep.subr.mxu0 0.0
    %2340 = vmatpush1.msra.mxu0 0.0
    %2341 = vmatprep.subr.mxu0 0.0
    %2342 = vmatpush1.msra.mxu0 0.0
    %2343 = vmatprep.subr.mxu0 0.0
    %2344 = vmatpush1.msra.mxu0 0.0
    %2345 = vmatprep.subr.mxu0 0.0
    %2346 = vmatpush1.msra.mxu0 0.0
    %2347 = vmatprep.subr.mxu0 0.0
    %2348 = vmatpush1.msra.mxu0 0.0
    %2349 = vmatprep.subr.mxu0 0.0
    %2350 = vmatpush1.msra.mxu0 0.0
    %2351 = vmatprep.subr.mxu0 0.0
    %2352 = vmatpush1.msra.mxu0 0.0
    %2353 = vmatprep.subr.mxu0 0.0
    %2354 = vmatpush1.msra.mxu0 0.0
    %2355 = vmatprep.subr.mxu0 0.0
    %2356 = vmatpush1.msra.mxu0 0.0
    %2357 = vmatprep.mubr.f32.mxu0 0.0
    %2358 = vmatmul.mubr.f32.gmra.mrb[0].mxu0 %v2028
    %v2359 = vpop.f32.mrb[0].mxu0
    %v2360 = vadd.f32 0.0, %v2359
    %v2361 = vpop.f32.mrb[0].mxu0
    %2362 = vdwg.mxu0
    %v2364 = vrot.slane %v2360, 1
    %v2367 = vadd.f32 %v2017, %v2360
    %v2368 = vadd.f32 %v2022, %v2364
    %v2369 = vxor.u32 %v2367, 2147483648
    %v2370 = vxor.u32 %v2368, 2147483648
    %v2371 = vmul.f32 %v2369, 1.442695
    %v2372 = vpow.pop %v2371
    %v2373 = vmul.f32 %v2370, 1.442695
    %v2374 = vpow.pop %v2373
    %v2375 = vadd.f32 %v2372, 1.0
    %v2376 = vadd.f32 %v2374, 1.0
    %v2377 = vrcp.pop %v2375
    %v2378 = vmul.f32 1.0, %v2377
    %v2379 = vrcp.pop %v2376
    %v2380 = vmul.f32 1.0, %v2379
    %v2381 = vmul.f32 %v2206, 0.0
    %v2382 = vmul.f32 %v2208, 0.0
    %v2383 = vmul.f32 %v2115, %v2288
    %v2384 = vmul.f32 %v2117, %v2289
    %v2385 = vadd.f32 %v2381, %v2383
    %v2386 = vadd.f32 %v2382, %v2384
    %v2387 = vtanh.pop %v2385
    %v2388 = vtanh.pop %v2386
    %v2389 = vmul.f32 %v2378, %v2387
    %v2390 = vmul.f32 %v2380, %v2388
    %v2393 = vrot.slane %v2390, 7
    %vm2394 = vcmask 1041409
    %v2395 = vsel %vm2394, %v2393, %v2389
    %v2396 = vsel %vm411, %v2395, 0
    %2398 = vmatprep.subr.mxu0 0.0
    %2399 = vmatpush1.msra.mxu0 %v2025
    %2400 = vmatprep.subr.mxu0 0.0
    %2401 = vmatpush1.msra.mxu0 %v2026
    %2402 = vmatprep.subr.mxu0 0.0
    %2403 = vmatpush1.msra.mxu0 0.0
    %2404 = vmatprep.subr.mxu0 0.0
    %2405 = vmatpush1.msra.mxu0 0.0
    %2406 = vmatprep.subr.mxu0 0.0
    %2407 = vmatpush1.msra.mxu0 0.0
    %2408 = vmatprep.subr.mxu0 0.0
    %2409 = vmatpush1.msra.mxu0 0.0
    %2410 = vmatprep.subr.mxu0 0.0
    %2411 = vmatpush1.msra.mxu0 0.0
    %2412 = vmatprep.subr.mxu0 0.0
    %2413 = vmatpush1.msra.mxu0 0.0
    %2414 = vmatprep.subr.mxu0 0.0
    %2415 = vmatpush1.msra.mxu0 0.0
    %2416 = vmatprep.subr.mxu0 0.0
    %2417 = vmatpush1.msra.mxu0 0.0
    %2418 = vmatprep.subr.mxu0 0.0
    %2419 = vmatpush1.msra.mxu0 0.0
    %2420 = vmatprep.subr.mxu0 0.0
    %2421 = vmatpush1.msra.mxu0 0.0
    %2422 = vmatprep.subr.mxu0 0.0
    %2423 = vmatpush1.msra.mxu0 0.0
    %2424 = vmatprep.subr.mxu0 0.0
    %2425 = vmatpush1.msra.mxu0 0.0
    %2426 = vmatprep.subr.mxu0 0.0
    %2427 = vmatpush1.msra.mxu0 0.0
    %2428 = vmatprep.subr.mxu0 0.0
    %2429 = vmatpush1.msra.mxu0 0.0
    %2430 = vmatprep.subr.mxu0 0.0
    %2431 = vmatpush1.msra.mxu0 0.0
    %2432 = vmatprep.subr.mxu0 0.0
    %2433 = vmatpush1.msra.mxu0 0.0
    %2434 = vmatprep.subr.mxu0 0.0
    %2435 = vmatpush1.msra.mxu0 0.0
    %2436 = vmatprep.subr.mxu0 0.0
    %2437 = vmatpush1.msra.mxu0 0.0
    %2438 = vmatprep.subr.mxu0 0.0
    %2439 = vmatpush1.msra.mxu0 0.0
    %2440 = vmatprep.subr.mxu0 0.0
    %2441 = vmatpush1.msra.mxu0 0.0
    %2442 = vmatprep.subr.mxu0 0.0
    %2443 = vmatpush1.msra.mxu0 0.0
    %2444 = vmatprep.subr.mxu0 0.0
    %2445 = vmatpush1.msra.mxu0 0.0
    %2446 = vmatprep.subr.mxu0 0.0
    %2447 = vmatpush1.msra.mxu0 0.0
    %2448 = vmatprep.subr.mxu0 0.0
    %2449 = vmatpush1.msra.mxu0 0.0
    %2450 = vmatprep.subr.mxu0 0.0
    %2451 = vmatpush1.msra.mxu0 0.0
    %2452 = vmatprep.subr.mxu0 0.0
    %2453 = vmatpush1.msra.mxu0 0.0
    %2454 = vmatprep.subr.mxu0 0.0
    %2455 = vmatpush1.msra.mxu0 0.0
    %2456 = vmatprep.subr.mxu0 0.0
    %2457 = vmatpush1.msra.mxu0 0.0
    %2458 = vmatprep.subr.mxu0 0.0
    %2459 = vmatpush1.msra.mxu0 0.0
    %2460 = vmatprep.subr.mxu0 0.0
    %2461 = vmatpush1.msra.mxu0 0.0
    %2462 = vmatprep.mubr.f32.mxu0 0.0
    %2463 = vmatmul.mubr.f32.gmra.mrb[0].mxu0 %v2396
    %v2464 = vpop.f32.mrb[0].mxu0
    %v2465 = vadd.f32 0.0, %v2464
    %v2466 = vpop.f32.mrb[0].mxu0
    %2467 = vdwg.mxu0
    %v2469 = vrot.slane %v2465, 7
    %v2472 = vadd.f32 %v1753, %v2469
    %v2473 = vadd.f32 %v1758, %v2465
    %v2474 = vxor.u32 %v2472, 2147483648
    %v2475 = vxor.u32 %v2473, 2147483648
    %v2476 = vmul.f32 %v2474, 1.442695
    %v2477 = vpow.pop %v2476
    %v2478 = vmul.f32 %v2475, 1.442695
    %v2479 = vpow.pop %v2478
    %v2480 = vadd.f32 %v2477, 1.0
    %v2481 = vadd.f32 %v2479, 1.0
    %v2482 = vrcp.pop %v2480
    %v2483 = vmul.f32 1.0, %v2482
    %v2484 = vrcp.pop %v2481
    %v2485 = vmul.f32 1.0, %v2484
    %2486 = vmatprep.subr.mxu0 0.0
    %2487 = vmatpush1.msra.mxu0 %v2119
    %2488 = vmatprep.subr.mxu0 0.0
    %2489 = vmatpush1.msra.mxu0 %v2120
    %2490 = vmatprep.subr.mxu0 0.0
    %2491 = vmatpush1.msra.mxu0 0.0
    %2492 = vmatprep.subr.mxu0 0.0
    %2493 = vmatpush1.msra.mxu0 0.0
    %2494 = vmatprep.subr.mxu0 0.0
    %2495 = vmatpush1.msra.mxu0 0.0
    %2496 = vmatprep.subr.mxu0 0.0
    %2497 = vmatpush1.msra.mxu0 0.0
    %2498 = vmatprep.subr.mxu0 0.0
    %2499 = vmatpush1.msra.mxu0 0.0
    %2500 = vmatprep.subr.mxu0 0.0
    %2501 = vmatpush1.msra.mxu0 0.0
    %2502 = vmatprep.subr.mxu0 0.0
    %2503 = vmatpush1.msra.mxu0 0.0
    %2504 = vmatprep.subr.mxu0 0.0
    %2505 = vmatpush1.msra.mxu0 0.0
    %2506 = vmatprep.subr.mxu0 0.0
    %2507 = vmatpush1.msra.mxu0 0.0
    %2508 = vmatprep.subr.mxu0 0.0
    %2509 = vmatpush1.msra.mxu0 0.0
    %2510 = vmatprep.subr.mxu0 0.0
    %2511 = vmatpush1.msra.mxu0 0.0
    %2512 = vmatprep.subr.mxu0 0.0
    %2513 = vmatpush1.msra.mxu0 0.0
    %2514 = vmatprep.subr.mxu0 0.0
    %2515 = vmatpush1.msra.mxu0 0.0
    %2516 = vmatprep.subr.mxu0 0.0
    %2517 = vmatpush1.msra.mxu0 0.0
    %2518 = vmatprep.subr.mxu0 0.0
    %2519 = vmatpush1.msra.mxu0 0.0
    %2520 = vmatprep.subr.mxu0 0.0
    %2521 = vmatpush1.msra.mxu0 0.0
    %2522 = vmatprep.subr.mxu0 0.0
    %2523 = vmatpush1.msra.mxu0 0.0
    %2524 = vmatprep.subr.mxu0 0.0
    %2525 = vmatpush1.msra.mxu0 0.0
    %2526 = vmatprep.subr.mxu0 0.0
    %2527 = vmatpush1.msra.mxu0 0.0
    %2528 = vmatprep.subr.mxu0 0.0
    %2529 = vmatpush1.msra.mxu0 0.0
    %2530 = vmatprep.subr.mxu0 0.0
    %2531 = vmatpush1.msra.mxu0 0.0
    %2532 = vmatprep.subr.mxu0 0.0
    %2533 = vmatpush1.msra.mxu0 0.0
    %2534 = vmatprep.subr.mxu0 0.0
    %2535 = vmatpush1.msra.mxu0 0.0
    %2536 = vmatprep.subr.mxu0 0.0
    %2537 = vmatpush1.msra.mxu0 0.0
    %2538 = vmatprep.subr.mxu0 0.0
    %2539 = vmatpush1.msra.mxu0 0.0
    %2540 = vmatprep.subr.mxu0 0.0
    %2541 = vmatpush1.msra.mxu0 0.0
    %2542 = vmatprep.subr.mxu0 0.0
    %2543 = vmatpush1.msra.mxu0 0.0
    %2544 = vmatprep.subr.mxu0 0.0
    %2545 = vmatpush1.msra.mxu0 0.0
    %2546 = vmatprep.subr.mxu0 0.0
    %2547 = vmatpush1.msra.mxu0 0.0
    %2548 = vmatprep.subr.mxu0 0.0
    %2549 = vmatpush1.msra.mxu0 0.0
    %2550 = vmatprep.mubr.f32.mxu0 0.0
    %2551 = vmatmul.mubr.f32.gmra.mrb[0].mxu0 %v2396
    %v2552 = vpop.f32.mrb[0].mxu0
    %v2553 = vadd.f32 0.0, %v2552
    %v2554 = vpop.f32.mrb[0].mxu0
    %2555 = vdwg.mxu0
    %v2557 = vrot.slane %v2553, 7
    %v2560 = vadd.f32 %v1841, %v2557
    %v2561 = vadd.f32 %v1846, %v2553
    %v2562 = vxor.u32 %v2560, 2147483648
    %v2563 = vxor.u32 %v2561, 2147483648
    %v2564 = vmul.f32 %v2562, 1.442695
    %v2565 = vpow.pop %v2564
    %v2566 = vmul.f32 %v2563, 1.442695
    %v2567 = vpow.pop %v2566
    %v2568 = vadd.f32 %v2565, 1.0
    %v2569 = vadd.f32 %v2567, 1.0
    %v2570 = vrcp.pop %v2568
    %v2571 = vmul.f32 1.0, %v2570
    %v2572 = vrcp.pop %v2569
    %v2573 = vmul.f32 1.0, %v2572
    %2574 = vmatprep.subr.mxu0 0.0
    %2575 = vmatpush1.msra.mxu0 %v2210
    %2576 = vmatprep.subr.mxu0 0.0
    %2577 = vmatpush1.msra.mxu0 %v2211
    %2578 = vmatprep.subr.mxu0 0.0
    %2579 = vmatpush1.msra.mxu0 0.0
    %2580 = vmatprep.subr.mxu0 0.0
    %2581 = vmatpush1.msra.mxu0 0.0
    %2582 = vmatprep.subr.mxu0 0.0
    %2583 = vmatpush1.msra.mxu0 0.0
    %2584 = vmatprep.subr.mxu0 0.0
    %2585 = vmatpush1.msra.mxu0 0.0
    %2586 = vmatprep.subr.mxu0 0.0
    %2587 = vmatpush1.msra.mxu0 0.0
    %2588 = vmatprep.subr.mxu0 0.0
    %2589 = vmatpush1.msra.mxu0 0.0
    %2590 = vmatprep.subr.mxu0 0.0
    %2591 = vmatpush1.msra.mxu0 0.0
    %2592 = vmatprep.subr.mxu0 0.0
    %2593 = vmatpush1.msra.mxu0 0.0
    %2594 = vmatprep.subr.mxu0 0.0
    %2595 = vmatpush1.msra.mxu0 0.0
    %2596 = vmatprep.subr.mxu0 0.0
    %2597 = vmatpush1.msra.mxu0 0.0
    %2598 = vmatprep.subr.mxu0 0.0
    %2599 = vmatpush1.msra.mxu0 0.0
    %2600 = vmatprep.subr.mxu0 0.0
    %2601 = vmatpush1.msra.mxu0 0.0
    %2602 = vmatprep.subr.mxu0 0.0
    %2603 = vmatpush1.msra.mxu0 0.0
    %2604 = vmatprep.subr.mxu0 0.0
    %2605 = vmatpush1.msra.mxu0 0.0
    %2606 = vmatprep.subr.mxu0 0.0
    %2607 = vmatpush1.msra.mxu0 0.0
    %2608 = vmatprep.subr.mxu0 0.0
    %2609 = vmatpush1.msra.mxu0 0.0
    %2610 = vmatprep.subr.mxu0 0.0
    %2611 = vmatpush1.msra.mxu0 0.0
    %2612 = vmatprep.subr.mxu0 0.0
    %2613 = vmatpush1.msra.mxu0 0.0
    %2614 = vmatprep.subr.mxu0 0.0
    %2615 = vmatpush1.msra.mxu0 0.0
    %2616 = vmatprep.subr.mxu0 0.0
    %2617 = vmatpush1.msra.mxu0 0.0
    %2618 = vmatprep.subr.mxu0 0.0
    %2619 = vmatpush1.msra.mxu0 0.0
    %2620 = vmatprep.subr.mxu0 0.0
    %2621 = vmatpush1.msra.mxu0 0.0
    %2622 = vmatprep.subr.mxu0 0.0
    %2623 = vmatpush1.msra.mxu0 0.0
    %2624 = vmatprep.subr.mxu0 0.0
    %2625 = vmatpush1.msra.mxu0 0.0
    %2626 = vmatprep.subr.mxu0 0.0
    %2627 = vmatpush1.msra.mxu0 0.0
    %2628 = vmatprep.subr.mxu0 0.0
    %2629 = vmatpush1.msra.mxu0 0.0
    %2630 = vmatprep.subr.mxu0 0.0
    %2631 = vmatpush1.msra.mxu0 0.0
    %2632 = vmatprep.subr.mxu0 0.0
    %2633 = vmatpush1.msra.mxu0 0.0
    %2634 = vmatprep.subr.mxu0 0.0
    %2635 = vmatpush1.msra.mxu0 0.0
    %2636 = vmatprep.subr.mxu0 0.0
    %2637 = vmatpush1.msra.mxu0 0.0
    %2638 = vmatprep.mubr.f32.mxu0 0.0
    %2639 = vmatmul.mubr.f32.gmra.mrb[0].mxu0 %v2396
    %v2640 = vpop.f32.mrb[0].mxu0
    %v2641 = vadd.f32 0.0, %v2640
    %v2642 = vpop.f32.mrb[0].mxu0
    %2643 = vdwg.mxu0
    %v2645 = vrot.slane %v2641, 7
    %v2648 = vadd.f32 %v1929, %v2645
    %v2649 = vadd.f32 %v1934, %v2641
    %v2650 = vtanh.pop %v2648
    %v2651 = vtanh.pop %v2649
    %2652 = vmatprep.subr.mxu0 0.0
    %2653 = vmatpush1.msra.mxu0 %v2291
    %2654 = vmatprep.subr.mxu0 0.0
    %2655 = vmatpush1.msra.mxu0 %v2292
    %2656 = vmatprep.subr.mxu0 0.0
    %2657 = vmatpush1.msra.mxu0 0.0
    %2658 = vmatprep.subr.mxu0 0.0
    %2659 = vmatpush1.msra.mxu0 0.0
    %2660 = vmatprep.subr.mxu0 0.0
    %2661 = vmatpush1.msra.mxu0 0.0
    %2662 = vmatprep.subr.mxu0 0.0
    %2663 = vmatpush1.msra.mxu0 0.0
    %2664 = vmatprep.subr.mxu0 0.0
    %2665 = vmatpush1.msra.mxu0 0.0
    %2666 = vmatprep.subr.mxu0 0.0
    %2667 = vmatpush1.msra.mxu0 0.0
    %2668 = vmatprep.subr.mxu0 0.0
    %2669 = vmatpush1.msra.mxu0 0.0
    %2670 = vmatprep.subr.mxu0 0.0
    %2671 = vmatpush1.msra.mxu0 0.0
    %2672 = vmatprep.subr.mxu0 0.0
    %2673 = vmatpush1.msra.mxu0 0.0
    %2674 = vmatprep.subr.mxu0 0.0
    %2675 = vmatpush1.msra.mxu0 0.0
    %2676 = vmatprep.subr.mxu0 0.0
    %2677 = vmatpush1.msra.mxu0 0.0
    %2678 = vmatprep.subr.mxu0 0.0
    %2679 = vmatpush1.msra.mxu0 0.0
    %2680 = vmatprep.subr.mxu0 0.0
    %2681 = vmatpush1.msra.mxu0 0.0
    %2682 = vmatprep.subr.mxu0 0.0
    %2683 = vmatpush1.msra.mxu0 0.0
    %2684 = vmatprep.subr.mxu0 0.0
    %2685 = vmatpush1.msra.mxu0 0.0
    %2686 = vmatprep.subr.mxu0 0.0
    %2687 = vmatpush1.msra.mxu0 0.0
    %2688 = vmatprep.subr.mxu0 0.0
    %2689 = vmatpush1.msra.mxu0 0.0
    %2690 = vmatprep.subr.mxu0 0.0
    %2691 = vmatpush1.msra.mxu0 0.0
    %2692 = vmatprep.subr.mxu0 0.0
    %2693 = vmatpush1.msra.mxu0 0.0
    %2694 = vmatprep.subr.mxu0 0.0
    %2695 = vmatpush1.msra.mxu0 0.0
    %2696 = vmatprep.subr.mxu0 0.0
    %2697 = vmatpush1.msra.mxu0 0.0
    %2698 = vmatprep.subr.mxu0 0.0
    %2699 = vmatpush1.msra.mxu0 0.0
    %2700 = vmatprep.subr.mxu0 0.0
    %2701 = vmatpush1.msra.mxu0 0.0
    %2702 = vmatprep.subr.mxu0 0.0
    %2703 = vmatpush1.msra.mxu0 0.0
    %2704 = vmatprep.subr.mxu0 0.0
    %2705 = vmatpush1.msra.mxu0 0.0
    %2706 = vmatprep.subr.mxu0 0.0
    %2707 = vmatpush1.msra.mxu0 0.0
    %2708 = vmatprep.subr.mxu0 0.0
    %2709 = vmatpush1.msra.mxu0 0.0
    %2710 = vmatprep.subr.mxu0 0.0
    %2711 = vmatpush1.msra.mxu0 0.0
    %2712 = vmatprep.subr.mxu0 0.0
    %2713 = vmatpush1.msra.mxu0 0.0
    %2714 = vmatprep.subr.mxu0 0.0
    %2715 = vmatpush1.msra.mxu0 0.0
    %2716 = vmatprep.mubr.f32.mxu0 0.0
    %2717 = vmatmul.mubr.f32.gmra.mrb[0].mxu0 %v2396
    %v2718 = vpop.f32.mrb[0].mxu0
    %v2719 = vadd.f32 0.0, %v2718
    %v2720 = vpop.f32.mrb[0].mxu0
    %2721 = vdwg.mxu0
    %v2723 = vrot.slane %v2719, 7
    %v2726 = vadd.f32 %v2017, %v2723
    %v2727 = vadd.f32 %v2022, %v2719
    %v2728 = vxor.u32 %v2726, 2147483648
    %v2729 = vxor.u32 %v2727, 2147483648
    %v2730 = vmul.f32 %v2728, 1.442695
    %v2731 = vpow.pop %v2730
    %v2732 = vmul.f32 %v2729, 1.442695
    %v2733 = vpow.pop %v2732
    %v2734 = vadd.f32 %v2731, 1.0
    %v2735 = vadd.f32 %v2733, 1.0
    %v2736 = vrcp.pop %v2734
    %v2737 = vmul.f32 1.0, %v2736
    %v2738 = vrcp.pop %v2735
    %v2739 = vmul.f32 1.0, %v2738
    %v2742 = vrot.slane %v2385, 7
    %v2743 = vrot.slane %v2386, 7
    %v2746 = vmul.f32 %v2571, %v2742
    %v2747 = vmul.f32 %v2573, %v2743
    %v2748 = vmul.f32 %v2483, %v2650
    %v2749 = vmul.f32 %v2485, %v2651
    %v2750 = vadd.f32 %v2746, %v2748
    %v2751 = vadd.f32 %v2747, %v2749
    %v2752 = vtanh.pop %v2750
    %v2753 = vtanh.pop %v2751
    %v2754 = vmul.f32 %v2737, %v2752
    %v2755 = vmul.f32 %v2739, %v2753
    %v2758 = vrot.slane %v2754, 1
    %v2759 = vsel %vm2394, %v2755, %v2758
    %v2760 = vsel %vm411, %v2759, 0
    %2762 = vmatprep.subr.mxu0 0.0
    %2763 = vmatpush1.msra.mxu0 %v2025
    %2764 = vmatprep.subr.mxu0 0.0
    %2765 = vmatpush1.msra.mxu0 %v2026
    %2766 = vmatprep.subr.mxu0 0.0
    %2767 = vmatpush1.msra.mxu0 0.0
    %2768 = vmatprep.subr.mxu0 0.0
    %2769 = vmatpush1.msra.mxu0 0.0
    %2770 = vmatprep.subr.mxu0 0.0
    %2771 = vmatpush1.msra.mxu0 0.0
    %2772 = vmatprep.subr.mxu0 0.0
    %2773 = vmatpush1.msra.mxu0 0.0
    %2774 = vmatprep.subr.mxu0 0.0
    %2775 = vmatpush1.msra.mxu0 0.0
    %2776 = vmatprep.subr.mxu0 0.0
    %2777 = vmatpush1.msra.mxu0 0.0
    %2778 = vmatprep.subr.mxu0 0.0
    %2779 = vmatpush1.msra.mxu0 0.0
    %2780 = vmatprep.subr.mxu0 0.0
    %2781 = vmatpush1.msra.mxu0 0.0
    %2782 = vmatprep.subr.mxu0 0.0
    %2783 = vmatpush1.msra.mxu0 0.0
    %2784 = vmatprep.subr.mxu0 0.0
    %2785 = vmatpush1.msra.mxu0 0.0
    %2786 = vmatprep.subr.mxu0 0.0
    %2787 = vmatpush1.msra.mxu0 0.0
    %2788 = vmatprep.subr.mxu0 0.0
    %2789 = vmatpush1.msra.mxu0 0.0
    %2790 = vmatprep.subr.mxu0 0.0
    %2791 = vmatpush1.msra.mxu0 0.0
    %2792 = vmatprep.subr.mxu0 0.0
    %2793 = vmatpush1.msra.mxu0 0.0
    %2794 = vmatprep.subr.mxu0 0.0
    %2795 = vmatpush1.msra.mxu0 0.0
    %2796 = vmatprep.subr.mxu0 0.0
    %2797 = vmatpush1.msra.mxu0 0.0
    %2798 = vmatprep.subr.mxu0 0.0
    %2799 = vmatpush1.msra.mxu0 0.0
    %2800 = vmatprep.subr.mxu0 0.0
    %2801 = vmatpush1.msra.mxu0 0.0
    %2802 = vmatprep.subr.mxu0 0.0
    %2803 = vmatpush1.msra.mxu0 0.0
    %2804 = vmatprep.subr.mxu0 0.0
    %2805 = vmatpush1.msra.mxu0 0.0
    %2806 = vmatprep.subr.mxu0 0.0
    %2807 = vmatpush1.msra.mxu0 0.0
    %2808 = vmatprep.subr.mxu0 0.0
    %2809 = vmatpush1.msra.mxu0 0.0
    %2810 = vmatprep.subr.mxu0 0.0
    %2811 = vmatpush1.msra.mxu0 0.0
    %2812 = vmatprep.subr.mxu0 0.0
    %2813 = vmatpush1.msra.mxu0 0.0
    %2814 = vmatprep.subr.mxu0 0.0
    %2815 = vmatpush1.msra.mxu0 0.0
    %2816 = vmatprep.subr.mxu0 0.0
    %2817 = vmatpush1.msra.mxu0 0.0
    %2818 = vmatprep.subr.mxu0 0.0
    %2819 = vmatpush1.msra.mxu0 0.0
    %2820 = vmatprep.subr.mxu0 0.0
    %2821 = vmatpush1.msra.mxu0 0.0
    %2822 = vmatprep.subr.mxu0 0.0
    %2823 = vmatpush1.msra.mxu0 0.0
    %2824 = vmatprep.subr.mxu0 0.0
    %2825 = vmatpush1.msra.mxu0 0.0
    %2826 = vmatprep.mubr.f32.mxu0 0.0
    %2827 = vmatmul.mubr.f32.gmra.mrb[0].mxu0 %v2760
    %v2828 = vpop.f32.mrb[0].mxu0
    %v2829 = vadd.f32 0.0, %v2828
    %v2830 = vpop.f32.mrb[0].mxu0
    %2831 = vdwg.mxu0
    %v2833 = vrot.slane %v2829, 6
    %v2834 = vrot.slane %v2829, 7
    %v2837 = vadd.f32 %v1753, %v2833
    %v2838 = vadd.f32 %v1758, %v2834
    %v2839 = vxor.u32 %v2837, 2147483648
    %v2840 = vxor.u32 %v2838, 2147483648
    %v2841 = vmul.f32 %v2839, 1.442695
    %v2842 = vpow.pop %v2841
    %v2843 = vmul.f32 %v2840, 1.442695
    %v2844 = vpow.pop %v2843
    %v2845 = vadd.f32 %v2842, 1.0
    %v2846 = vadd.f32 %v2844, 1.0
    %v2847 = vrcp.pop %v2845
    %v2848 = vmul.f32 1.0, %v2847
    %v2849 = vrcp.pop %v2846
    %v2850 = vmul.f32 1.0, %v2849
    %2851 = vmatprep.subr.mxu0 0.0
    %2852 = vmatpush1.msra.mxu0 %v2119
    %2853 = vmatprep.subr.mxu0 0.0
    %2854 = vmatpush1.msra.mxu0 %v2120
    %2855 = vmatprep.subr.mxu0 0.0
    %2856 = vmatpush1.msra.mxu0 0.0
    %2857 = vmatprep.subr.mxu0 0.0
    %2858 = vmatpush1.msra.mxu0 0.0
    %2859 = vmatprep.subr.mxu0 0.0
    %2860 = vmatpush1.msra.mxu0 0.0
    %2861 = vmatprep.subr.mxu0 0.0
    %2862 = vmatpush1.msra.mxu0 0.0
    %2863 = vmatprep.subr.mxu0 0.0
    %2864 = vmatpush1.msra.mxu0 0.0
    %2865 = vmatprep.subr.mxu0 0.0
    %2866 = vmatpush1.msra.mxu0 0.0
    %2867 = vmatprep.subr.mxu0 0.0
    %2868 = vmatpush1.msra.mxu0 0.0
    %2869 = vmatprep.subr.mxu0 0.0
    %2870 = vmatpush1.msra.mxu0 0.0
    %2871 = vmatprep.subr.mxu0 0.0
    %2872 = vmatpush1.msra.mxu0 0.0
    %2873 = vmatprep.subr.mxu0 0.0
    %2874 = vmatpush1.msra.mxu0 0.0
    %2875 = vmatprep.subr.mxu0 0.0
    %2876 = vmatpush1.msra.mxu0 0.0
    %2877 = vmatprep.subr.mxu0 0.0
    %2878 = vmatpush1.msra.mxu0 0.0
    %2879 = vmatprep.subr.mxu0 0.0
    %2880 = vmatpush1.msra.mxu0 0.0
    %2881 = vmatprep.subr.mxu0 0.0
    %2882 = vmatpush1.msra.mxu0 0.0
    %2883 = vmatprep.subr.mxu0 0.0
    %2884 = vmatpush1.msra.mxu0 0.0
    %2885 = vmatprep.subr.mxu0 0.0
    %2886 = vmatpush1.msra.mxu0 0.0
    %2887 = vmatprep.subr.mxu0 0.0
    %2888 = vmatpush1.msra.mxu0 0.0
    %2889 = vmatprep.subr.mxu0 0.0
    %2890 = vmatpush1.msra.mxu0 0.0
    %2891 = vmatprep.subr.mxu0 0.0
    %2892 = vmatpush1.msra.mxu0 0.0
    %2893 = vmatprep.subr.mxu0 0.0
    %2894 = vmatpush1.msra.mxu0 0.0
    %2895 = vmatprep.subr.mxu0 0.0
    %2896 = vmatpush1.msra.mxu0 0.0
    %2897 = vmatprep.subr.mxu0 0.0
    %2898 = vmatpush1.msra.mxu0 0.0
    %2899 = vmatprep.subr.mxu0 0.0
    %2900 = vmatpush1.msra.mxu0 0.0
    %2901 = vmatprep.subr.mxu0 0.0
    %2902 = vmatpush1.msra.mxu0 0.0
    %2903 = vmatprep.subr.mxu0 0.0
    %2904 = vmatpush1.msra.mxu0 0.0
    %2905 = vmatprep.subr.mxu0 0.0
    %2906 = vmatpush1.msra.mxu0 0.0
    %2907 = vmatprep.subr.mxu0 0.0
    %2908 = vmatpush1.msra.mxu0 0.0
    %2909 = vmatprep.subr.mxu0 0.0
    %2910 = vmatpush1.msra.mxu0 0.0
    %2911 = vmatprep.subr.mxu0 0.0
    %2912 = vmatpush1.msra.mxu0 0.0
    %2913 = vmatprep.subr.mxu0 0.0
    %2914 = vmatpush1.msra.mxu0 0.0
    %2915 = vmatprep.mubr.f32.mxu0 0.0
    %2916 = vmatmul.mubr.f32.gmra.mrb[0].mxu0 %v2760
    %v2917 = vpop.f32.mrb[0].mxu0
    %v2918 = vadd.f32 0.0, %v2917
    %v2919 = vpop.f32.mrb[0].mxu0
    %2920 = vdwg.mxu0
    %v2922 = vrot.slane %v2918, 6
    %v2923 = vrot.slane %v2918, 7
    %v2926 = vadd.f32 %v1841, %v2922
    %v2927 = vadd.f32 %v1846, %v2923
    %v2928 = vxor.u32 %v2926, 2147483648
    %v2929 = vxor.u32 %v2927, 2147483648
    %v2930 = vmul.f32 %v2928, 1.442695
    %v2931 = vpow.pop %v2930
    %v2932 = vmul.f32 %v2929, 1.442695
    %v2933 = vpow.pop %v2932
    %v2934 = vadd.f32 %v2931, 1.0
    %v2935 = vadd.f32 %v2933, 1.0
    %v2936 = vrcp.pop %v2934
    %v2937 = vmul.f32 1.0, %v2936
    %v2938 = vrcp.pop %v2935
    %v2939 = vmul.f32 1.0, %v2938
    %2940 = vmatprep.subr.mxu0 0.0
    %2941 = vmatpush1.msra.mxu0 %v2210
    %2942 = vmatprep.subr.mxu0 0.0
    %2943 = vmatpush1.msra.mxu0 %v2211
    %2944 = vmatprep.subr.mxu0 0.0
    %2945 = vmatpush1.msra.mxu0 0.0
    %2946 = vmatprep.subr.mxu0 0.0
    %2947 = vmatpush1.msra.mxu0 0.0
    %2948 = vmatprep.subr.mxu0 0.0
    %2949 = vmatpush1.msra.mxu0 0.0
    %2950 = vmatprep.subr.mxu0 0.0
    %2951 = vmatpush1.msra.mxu0 0.0
    %2952 = vmatprep.subr.mxu0 0.0
    %2953 = vmatpush1.msra.mxu0 0.0
    %2954 = vmatprep.subr.mxu0 0.0
    %2955 = vmatpush1.msra.mxu0 0.0
    %2956 = vmatprep.subr.mxu0 0.0
    %2957 = vmatpush1.msra.mxu0 0.0
    %2958 = vmatprep.subr.mxu0 0.0
    %2959 = vmatpush1.msra.mxu0 0.0
    %2960 = vmatprep.subr.mxu0 0.0
    %2961 = vmatpush1.msra.mxu0 0.0
    %2962 = vmatprep.subr.mxu0 0.0
    %2963 = vmatpush1.msra.mxu0 0.0
    %2964 = vmatprep.subr.mxu0 0.0
    %2965 = vmatpush1.msra.mxu0 0.0
    %2966 = vmatprep.subr.mxu0 0.0
    %2967 = vmatpush1.msra.mxu0 0.0
    %2968 = vmatprep.subr.mxu0 0.0
    %2969 = vmatpush1.msra.mxu0 0.0
    %2970 = vmatprep.subr.mxu0 0.0
    %2971 = vmatpush1.msra.mxu0 0.0
    %2972 = vmatprep.subr.mxu0 0.0
    %2973 = vmatpush1.msra.mxu0 0.0
    %2974 = vmatprep.subr.mxu0 0.0
    %2975 = vmatpush1.msra.mxu0 0.0
    %2976 = vmatprep.subr.mxu0 0.0
    %2977 = vmatpush1.msra.mxu0 0.0
    %2978 = vmatprep.subr.mxu0 0.0
    %2979 = vmatpush1.msra.mxu0 0.0
    %2980 = vmatprep.subr.mxu0 0.0
    %2981 = vmatpush1.msra.mxu0 0.0
    %2982 = vmatprep.subr.mxu0 0.0
    %2983 = vmatpush1.msra.mxu0 0.0
    %2984 = vmatprep.subr.mxu0 0.0
    %2985 = vmatpush1.msra.mxu0 0.0
    %2986 = vmatprep.subr.mxu0 0.0
    %2987 = vmatpush1.msra.mxu0 0.0
    %2988 = vmatprep.subr.mxu0 0.0
    %2989 = vmatpush1.msra.mxu0 0.0
    %2990 = vmatprep.subr.mxu0 0.0
    %2991 = vmatpush1.msra.mxu0 0.0
    %2992 = vmatprep.subr.mxu0 0.0
    %2993 = vmatpush1.msra.mxu0 0.0
    %2994 = vmatprep.subr.mxu0 0.0
    %2995 = vmatpush1.msra.mxu0 0.0
    %2996 = vmatprep.subr.mxu0 0.0
    %2997 = vmatpush1.msra.mxu0 0.0
    %2998 = vmatprep.subr.mxu0 0.0
    %2999 = vmatpush1.msra.mxu0 0.0
    %3000 = vmatprep.subr.mxu0 0.0
    %3001 = vmatpush1.msra.mxu0 0.0
    %3002 = vmatprep.subr.mxu0 0.0
    %3003 = vmatpush1.msra.mxu0 0.0
    %3004 = vmatprep.mubr.f32.mxu0 0.0
    %3005 = vmatmul.mubr.f32.gmra.mrb[0].mxu0 %v2760
    %v3006 = vpop.f32.mrb[0].mxu0
    %v3007 = vadd.f32 0.0, %v3006
    %v3008 = vpop.f32.mrb[0].mxu0
    %3009 = vdwg.mxu0
    %v3011 = vrot.slane %v3007, 6
    %v3012 = vrot.slane %v3007, 7
    %v3015 = vadd.f32 %v1929, %v3011
    %v3016 = vadd.f32 %v1934, %v3012
    %v3017 = vtanh.pop %v3015
    %v3018 = vtanh.pop %v3016
    %3019 = vmatprep.subr.mxu0 0.0
    %3020 = vmatpush1.msra.mxu0 %v2291
    %3021 = vmatprep.subr.mxu0 0.0
    %3022 = vmatpush1.msra.mxu0 %v2292
    %3023 = vmatprep.subr.mxu0 0.0
    %3024 = vmatpush1.msra.mxu0 0.0
    %3025 = vmatprep.subr.mxu0 0.0
    %3026 = vmatpush1.msra.mxu0 0.0
    %3027 = vmatprep.subr.mxu0 0.0
    %3028 = vmatpush1.msra.mxu0 0.0
    %3029 = vmatprep.subr.mxu0 0.0
    %3030 = vmatpush1.msra.mxu0 0.0
    %3031 = vmatprep.subr.mxu0 0.0
    %3032 = vmatpush1.msra.mxu0 0.0
    %3033 = vmatprep.subr.mxu0 0.0
    %3034 = vmatpush1.msra.mxu0 0.0
    %3035 = vmatprep.subr.mxu0 0.0
    %3036 = vmatpush1.msra.mxu0 0.0
    %3037 = vmatprep.subr.mxu0 0.0
    %3038 = vmatpush1.msra.mxu0 0.0
    %3039 = vmatprep.subr.mxu0 0.0
    %3040 = vmatpush1.msra.mxu0 0.0
    %3041 = vmatprep.subr.mxu0 0.0
    %3042 = vmatpush1.msra.mxu0 0.0
    %3043 = vmatprep.subr.mxu0 0.0
    %3044 = vmatpush1.msra.mxu0 0.0
    %3045 = vmatprep.subr.mxu0 0.0
    %3046 = vmatpush1.msra.mxu0 0.0
    %3047 = vmatprep.subr.mxu0 0.0
    %3048 = vmatpush1.msra.mxu0 0.0
    %3049 = vmatprep.subr.mxu0 0.0
    %3050 = vmatpush1.msra.mxu0 0.0
    %3051 = vmatprep.subr.mxu0 0.0
    %3052 = vmatpush1.msra.mxu0 0.0
    %3053 = vmatprep.subr.mxu0 0.0
    %3054 = vmatpush1.msra.mxu0 0.0
    %3055 = vmatprep.subr.mxu0 0.0
    %3056 = vmatpush1.msra.mxu0 0.0
    %3057 = vmatprep.subr.mxu0 0.0
    %3058 = vmatpush1.msra.mxu0 0.0
    %3059 = vmatprep.subr.mxu0 0.0
    %3060 = vmatpush1.msra.mxu0 0.0
    %3061 = vmatprep.subr.mxu0 0.0
    %3062 = vmatpush1.msra.mxu0 0.0
    %3063 = vmatprep.subr.mxu0 0.0
    %3064 = vmatpush1.msra.mxu0 0.0
    %3065 = vmatprep.subr.mxu0 0.0
    %3066 = vmatpush1.msra.mxu0 0.0
    %3067 = vmatprep.subr.mxu0 0.0
    %3068 = vmatpush1.msra.mxu0 0.0
    %3069 = vmatprep.subr.mxu0 0.0
    %3070 = vmatpush1.msra.mxu0 0.0
    %3071 = vmatprep.subr.mxu0 0.0
    %3072 = vmatpush1.msra.mxu0 0.0
    %3073 = vmatprep.subr.mxu0 0.0
    %3074 = vmatpush1.msra.mxu0 0.0
    %3075 = vmatprep.subr.mxu0 0.0
    %3076 = vmatpush1.msra.mxu0 0.0
    %3077 = vmatprep.subr.mxu0 0.0
    %3078 = vmatpush1.msra.mxu0 0.0
    %3079 = vmatprep.subr.mxu0 0.0
    %3080 = vmatpush1.msra.mxu0 0.0
    %3081 = vmatprep.subr.mxu0 0.0
    %3082 = vmatpush1.msra.mxu0 0.0
    %3083 = vmatprep.mubr.f32.mxu0 0.0
    %3084 = vmatmul.mubr.f32.gmra.mrb[0].mxu0 %v2760
    %v3085 = vpop.f32.mrb[0].mxu0
    %v3086 = vadd.f32 0.0, %v3085
    %v3087 = vpop.f32.mrb[0].mxu0
    %3088 = vdwg.mxu0
    %v3090 = vrot.slane %v3086, 6
    %v3091 = vrot.slane %v3086, 7
    %v3094 = vadd.f32 %v2017, %v3090
    %v3095 = vadd.f32 %v2022, %v3091
    %v3096 = vxor.u32 %v3094, 2147483648
    %v3097 = vxor.u32 %v3095, 2147483648
    %v3098 = vmul.f32 %v3096, 1.442695
    %v3099 = vpow.pop %v3098
    %v3100 = vmul.f32 %v3097, 1.442695
    %v3101 = vpow.pop %v3100
    %v3102 = vadd.f32 %v3099, 1.0
    %v3103 = vadd.f32 %v3101, 1.0
    %v3104 = vrcp.pop %v3102
    %v3105 = vmul.f32 1.0, %v3104
    %v3106 = vrcp.pop %v3103
    %v3107 = vmul.f32 1.0, %v3106
    %v3110 = vrot.slane %v2750, 7
    %v3111 = vrot.slane %v2751, 7
    %v3114 = vmul.f32 %v2937, %v3110
    %v3115 = vmul.f32 %v2939, %v3111
    %v3116 = vmul.f32 %v2848, %v3017
    %v3117 = vmul.f32 %v2850, %v3018
    %v3118 = vadd.f32 %v3114, %v3116
    %v3119 = vadd.f32 %v3115, %v3117
    %v3120 = vtanh.pop %v3118
    %v3121 = vtanh.pop %v3119
    %v3122 = vmul.f32 %v3105, %v3120
    %v3123 = vmul.f32 %v3107, %v3121
    %v3126 = vrot.slane %v3122, 2
    %v3127 = vrot.slane %v3123, 1
    %v3128 = vsel %vm2394, %v3127, %v3126
    %v3129 = vsel %vm411, %v3128, 0
    %3131 = vmatprep.subr.mxu0 0.0
    %3132 = vmatpush1.msra.mxu0 %v2025
    %3133 = vmatprep.subr.mxu0 0.0
    %3134 = vmatpush1.msra.mxu0 %v2026
    %3135 = vmatprep.subr.mxu0 0.0
    %3136 = vmatpush1.msra.mxu0 0.0
    %3137 = vmatprep.subr.mxu0 0.0
    %3138 = vmatpush1.msra.mxu0 0.0
    %3139 = vmatprep.subr.mxu0 0.0
    %3140 = vmatpush1.msra.mxu0 0.0
    %3141 = vmatprep.subr.mxu0 0.0
    %3142 = vmatpush1.msra.mxu0 0.0
    %3143 = vmatprep.subr.mxu0 0.0
    %3144 = vmatpush1.msra.mxu0 0.0
    %3145 = vmatprep.subr.mxu0 0.0
    %3146 = vmatpush1.msra.mxu0 0.0
    %3147 = vmatprep.subr.mxu0 0.0
    %3148 = vmatpush1.msra.mxu0 0.0
    %3149 = vmatprep.subr.mxu0 0.0
    %3150 = vmatpush1.msra.mxu0 0.0
    %3151 = vmatprep.subr.mxu0 0.0
    %3152 = vmatpush1.msra.mxu0 0.0
    %3153 = vmatprep.subr.mxu0 0.0
    %3154 = vmatpush1.msra.mxu0 0.0
    %3155 = vmatprep.subr.mxu0 0.0
    %3156 = vmatpush1.msra.mxu0 0.0
    %3157 = vmatprep.subr.mxu0 0.0
    %3158 = vmatpush1.msra.mxu0 0.0
    %3159 = vmatprep.subr.mxu0 0.0
    %3160 = vmatpush1.msra.mxu0 0.0
    %3161 = vmatprep.subr.mxu0 0.0
    %3162 = vmatpush1.msra.mxu0 0.0
    %3163 = vmatprep.subr.mxu0 0.0
    %3164 = vmatpush1.msra.mxu0 0.0
    %3165 = vmatprep.subr.mxu0 0.0
    %3166 = vmatpush1.msra.mxu0 0.0
    %3167 = vmatprep.subr.mxu0 0.0
    %3168 = vmatpush1.msra.mxu0 0.0
    %3169 = vmatprep.subr.mxu0 0.0
    %3170 = vmatpush1.msra.mxu0 0.0
    %3171 = vmatprep.subr.mxu0 0.0
    %3172 = vmatpush1.msra.mxu0 0.0
    %3173 = vmatprep.subr.mxu0 0.0
    %3174 = vmatpush1.msra.mxu0 0.0
    %3175 = vmatprep.subr.mxu0 0.0
    %3176 = vmatpush1.msra.mxu0 0.0
    %3177 = vmatprep.subr.mxu0 0.0
    %3178 = vmatpush1.msra.mxu0 0.0
    %3179 = vmatprep.subr.mxu0 0.0
    %3180 = vmatpush1.msra.mxu0 0.0
    %3181 = vmatprep.subr.mxu0 0.0
    %3182 = vmatpush1.msra.mxu0 0.0
    %3183 = vmatprep.subr.mxu0 0.0
    %3184 = vmatpush1.msra.mxu0 0.0
    %3185 = vmatprep.subr.mxu0 0.0
    %3186 = vmatpush1.msra.mxu0 0.0
    %3187 = vmatprep.subr.mxu0 0.0
    %3188 = vmatpush1.msra.mxu0 0.0
    %3189 = vmatprep.subr.mxu0 0.0
    %3190 = vmatpush1.msra.mxu0 0.0
    %3191 = vmatprep.subr.mxu0 0.0
    %3192 = vmatpush1.msra.mxu0 0.0
    %3193 = vmatprep.subr.mxu0 0.0
    %3194 = vmatpush1.msra.mxu0 0.0
    %3195 = vmatprep.mubr.f32.mxu0 0.0
    %3196 = vmatmul.mubr.f32.gmra.mrb[0].mxu0 %v3129
    %v3197 = vpop.f32.mrb[0].mxu0
    %v3198 = vadd.f32 0.0, %v3197
    %v3199 = vpop.f32.mrb[0].mxu0
    %3200 = vdwg.mxu0
    %v3202 = vrot.slane %v3198, 5
    %v3203 = vrot.slane %v3198, 6
    %v3206 = vadd.f32 %v1753, %v3202
    %v3207 = vadd.f32 %v1758, %v3203
    %v3208 = vxor.u32 %v3206, 2147483648
    %v3209 = vxor.u32 %v3207, 2147483648
    %v3210 = vmul.f32 %v3208, 1.442695
    %v3211 = vpow.pop %v3210
    %v3212 = vmul.f32 %v3209, 1.442695
    %v3213 = vpow.pop %v3212
    %v3214 = vadd.f32 %v3211, 1.0
    %v3215 = vadd.f32 %v3213, 1.0
    %v3216 = vrcp.pop %v3214
    %v3217 = vmul.f32 1.0, %v3216
    %v3218 = vrcp.pop %v3215
    %v3219 = vmul.f32 1.0, %v3218
    %3220 = vmatprep.subr.mxu0 0.0
    %3221 = vmatpush1.msra.mxu0 %v2119
    %3222 = vmatprep.subr.mxu0 0.0
    %3223 = vmatpush1.msra.mxu0 %v2120
    %3224 = vmatprep.subr.mxu0 0.0
    %3225 = vmatpush1.msra.mxu0 0.0
    %3226 = vmatprep.subr.mxu0 0.0
    %3227 = vmatpush1.msra.mxu0 0.0
    %3228 = vmatprep.subr.mxu0 0.0
    %3229 = vmatpush1.msra.mxu0 0.0
    %3230 = vmatprep.subr.mxu0 0.0
    %3231 = vmatpush1.msra.mxu0 0.0
    %3232 = vmatprep.subr.mxu0 0.0
    %3233 = vmatpush1.msra.mxu0 0.0
    %3234 = vmatprep.subr.mxu0 0.0
    %3235 = vmatpush1.msra.mxu0 0.0
    %3236 = vmatprep.subr.mxu0 0.0
    %3237 = vmatpush1.msra.mxu0 0.0
    %3238 = vmatprep.subr.mxu0 0.0
    %3239 = vmatpush1.msra.mxu0 0.0
    %3240 = vmatprep.subr.mxu0 0.0
    %3241 = vmatpush1.msra.mxu0 0.0
    %3242 = vmatprep.subr.mxu0 0.0
    %3243 = vmatpush1.msra.mxu0 0.0
    %3244 = vmatprep.subr.mxu0 0.0
    %3245 = vmatpush1.msra.mxu0 0.0
    %3246 = vmatprep.subr.mxu0 0.0
    %3247 = vmatpush1.msra.mxu0 0.0
    %3248 = vmatprep.subr.mxu0 0.0
    %3249 = vmatpush1.msra.mxu0 0.0
    %3250 = vmatprep.subr.mxu0 0.0
    %3251 = vmatpush1.msra.mxu0 0.0
    %3252 = vmatprep.subr.mxu0 0.0
    %3253 = vmatpush1.msra.mxu0 0.0
    %3254 = vmatprep.subr.mxu0 0.0
    %3255 = vmatpush1.msra.mxu0 0.0
    %3256 = vmatprep.subr.mxu0 0.0
    %3257 = vmatpush1.msra.mxu0 0.0
    %3258 = vmatprep.subr.mxu0 0.0
    %3259 = vmatpush1.msra.mxu0 0.0
    %3260 = vmatprep.subr.mxu0 0.0
    %3261 = vmatpush1.msra.mxu0 0.0
    %3262 = vmatprep.subr.mxu0 0.0
    %3263 = vmatpush1.msra.mxu0 0.0
    %3264 = vmatprep.subr.mxu0 0.0
    %3265 = vmatpush1.msra.mxu0 0.0
    %3266 = vmatprep.subr.mxu0 0.0
    %3267 = vmatpush1.msra.mxu0 0.0
    %3268 = vmatprep.subr.mxu0 0.0
    %3269 = vmatpush1.msra.mxu0 0.0
    %3270 = vmatprep.subr.mxu0 0.0
    %3271 = vmatpush1.msra.mxu0 0.0
    %3272 = vmatprep.subr.mxu0 0.0
    %3273 = vmatpush1.msra.mxu0 0.0
    %3274 = vmatprep.subr.mxu0 0.0
    %3275 = vmatpush1.msra.mxu0 0.0
    %3276 = vmatprep.subr.mxu0 0.0
    %3277 = vmatpush1.msra.mxu0 0.0
    %3278 = vmatprep.subr.mxu0 0.0
    %3279 = vmatpush1.msra.mxu0 0.0
    %3280 = vmatprep.subr.mxu0 0.0
    %3281 = vmatpush1.msra.mxu0 0.0
    %3282 = vmatprep.subr.mxu0 0.0
    %3283 = vmatpush1.msra.mxu0 0.0
    %3284 = vmatprep.mubr.f32.mxu0 0.0
    %3285 = vmatmul.mubr.f32.gmra.mrb[0].mxu0 %v3129
    %v3286 = vpop.f32.mrb[0].mxu0
    %v3287 = vadd.f32 0.0, %v3286
    %v3288 = vpop.f32.mrb[0].mxu0
    %3289 = vdwg.mxu0
    %v3291 = vrot.slane %v3287, 5
    %v3292 = vrot.slane %v3287, 6
    %v3295 = vadd.f32 %v1841, %v3291
    %v3296 = vadd.f32 %v1846, %v3292
    %v3297 = vxor.u32 %v3295, 2147483648
    %v3298 = vxor.u32 %v3296, 2147483648
    %v3299 = vmul.f32 %v3297, 1.442695
    %v3300 = vpow.pop %v3299
    %v3301 = vmul.f32 %v3298, 1.442695
    %v3302 = vpow.pop %v3301
    %v3303 = vadd.f32 %v3300, 1.0
    %v3304 = vadd.f32 %v3302, 1.0
    %v3305 = vrcp.pop %v3303
    %v3306 = vmul.f32 1.0, %v3305
    %v3307 = vrcp.pop %v3304
    %v3308 = vmul.f32 1.0, %v3307
    %3309 = vmatprep.subr.mxu0 0.0
    %3310 = vmatpush1.msra.mxu0 %v2210
    %3311 = vmatprep.subr.mxu0 0.0
    %3312 = vmatpush1.msra.mxu0 %v2211
    %3313 = vmatprep.subr.mxu0 0.0
    %3314 = vmatpush1.msra.mxu0 0.0
    %3315 = vmatprep.subr.mxu0 0.0
    %3316 = vmatpush1.msra.mxu0 0.0
    %3317 = vmatprep.subr.mxu0 0.0
    %3318 = vmatpush1.msra.mxu0 0.0
    %3319 = vmatprep.subr.mxu0 0.0
    %3320 = vmatpush1.msra.mxu0 0.0
    %3321 = vmatprep.subr.mxu0 0.0
    %3322 = vmatpush1.msra.mxu0 0.0
    %3323 = vmatprep.subr.mxu0 0.0
    %3324 = vmatpush1.msra.mxu0 0.0
    %3325 = vmatprep.subr.mxu0 0.0
    %3326 = vmatpush1.msra.mxu0 0.0
    %3327 = vmatprep.subr.mxu0 0.0
    %3328 = vmatpush1.msra.mxu0 0.0
    %3329 = vmatprep.subr.mxu0 0.0
    %3330 = vmatpush1.msra.mxu0 0.0
    %3331 = vmatprep.subr.mxu0 0.0
    %3332 = vmatpush1.msra.mxu0 0.0
    %3333 = vmatprep.subr.mxu0 0.0
    %3334 = vmatpush1.msra.mxu0 0.0
    %3335 = vmatprep.subr.mxu0 0.0
    %3336 = vmatpush1.msra.mxu0 0.0
    %3337 = vmatprep.subr.mxu0 0.0
    %3338 = vmatpush1.msra.mxu0 0.0
    %3339 = vmatprep.subr.mxu0 0.0
    %3340 = vmatpush1.msra.mxu0 0.0
    %3341 = vmatprep.subr.mxu0 0.0
    %3342 = vmatpush1.msra.mxu0 0.0
    %3343 = vmatprep.subr.mxu0 0.0
    %3344 = vmatpush1.msra.mxu0 0.0
    %3345 = vmatprep.subr.mxu0 0.0
    %3346 = vmatpush1.msra.mxu0 0.0
    %3347 = vmatprep.subr.mxu0 0.0
    %3348 = vmatpush1.msra.mxu0 0.0
    %3349 = vmatprep.subr.mxu0 0.0
    %3350 = vmatpush1.msra.mxu0 0.0
    %3351 = vmatprep.subr.mxu0 0.0
    %3352 = vmatpush1.msra.mxu0 0.0
    %3353 = vmatprep.subr.mxu0 0.0
    %3354 = vmatpush1.msra.mxu0 0.0
    %3355 = vmatprep.subr.mxu0 0.0
    %3356 = vmatpush1.msra.mxu0 0.0
    %3357 = vmatprep.subr.mxu0 0.0
    %3358 = vmatpush1.msra.mxu0 0.0
    %3359 = vmatprep.subr.mxu0 0.0
    %3360 = vmatpush1.msra.mxu0 0.0
    %3361 = vmatprep.subr.mxu0 0.0
    %3362 = vmatpush1.msra.mxu0 0.0
    %3363 = vmatprep.subr.mxu0 0.0
    %3364 = vmatpush1.msra.mxu0 0.0
    %3365 = vmatprep.subr.mxu0 0.0
    %3366 = vmatpush1.msra.mxu0 0.0
    %3367 = vmatprep.subr.mxu0 0.0
    %3368 = vmatpush1.msra.mxu0 0.0
    %3369 = vmatprep.subr.mxu0 0.0
    %3370 = vmatpush1.msra.mxu0 0.0
    %3371 = vmatprep.subr.mxu0 0.0
    %3372 = vmatpush1.msra.mxu0 0.0
    %3373 = vmatprep.mubr.f32.mxu0 0.0
    %3374 = vmatmul.mubr.f32.gmra.mrb[0].mxu0 %v3129
    %v3375 = vpop.f32.mrb[0].mxu0
    %v3376 = vadd.f32 0.0, %v3375
    %v3377 = vpop.f32.mrb[0].mxu0
    %3378 = vdwg.mxu0
    %v3380 = vrot.slane %v3376, 5
    %v3381 = vrot.slane %v3376, 6
    %v3384 = vadd.f32 %v1929, %v3380
    %v3385 = vadd.f32 %v1934, %v3381
    %v3386 = vtanh.pop %v3384
    %v3387 = vtanh.pop %v3385
    %3388 = vmatprep.subr.mxu0 0.0
    %3389 = vmatpush1.msra.mxu0 %v2291
    %3390 = vmatprep.subr.mxu0 0.0
    %3391 = vmatpush1.msra.mxu0 %v2292
    %3392 = vmatprep.subr.mxu0 0.0
    %3393 = vmatpush1.msra.mxu0 0.0
    %3394 = vmatprep.subr.mxu0 0.0
    %3395 = vmatpush1.msra.mxu0 0.0
    %3396 = vmatprep.subr.mxu0 0.0
    %3397 = vmatpush1.msra.mxu0 0.0
    %3398 = vmatprep.subr.mxu0 0.0
    %3399 = vmatpush1.msra.mxu0 0.0
    %3400 = vmatprep.subr.mxu0 0.0
    %3401 = vmatpush1.msra.mxu0 0.0
    %3402 = vmatprep.subr.mxu0 0.0
    %3403 = vmatpush1.msra.mxu0 0.0
    %3404 = vmatprep.subr.mxu0 0.0
    %3405 = vmatpush1.msra.mxu0 0.0
    %3406 = vmatprep.subr.mxu0 0.0
    %3407 = vmatpush1.msra.mxu0 0.0
    %3408 = vmatprep.subr.mxu0 0.0
    %3409 = vmatpush1.msra.mxu0 0.0
    %3410 = vmatprep.subr.mxu0 0.0
    %3411 = vmatpush1.msra.mxu0 0.0
    %3412 = vmatprep.subr.mxu0 0.0
    %3413 = vmatpush1.msra.mxu0 0.0
    %3414 = vmatprep.subr.mxu0 0.0
    %3415 = vmatpush1.msra.mxu0 0.0
    %3416 = vmatprep.subr.mxu0 0.0
    %3417 = vmatpush1.msra.mxu0 0.0
    %3418 = vmatprep.subr.mxu0 0.0
    %3419 = vmatpush1.msra.mxu0 0.0
    %3420 = vmatprep.subr.mxu0 0.0
    %3421 = vmatpush1.msra.mxu0 0.0
    %3422 = vmatprep.subr.mxu0 0.0
    %3423 = vmatpush1.msra.mxu0 0.0
    %3424 = vmatprep.subr.mxu0 0.0
    %3425 = vmatpush1.msra.mxu0 0.0
    %3426 = vmatprep.subr.mxu0 0.0
    %3427 = vmatpush1.msra.mxu0 0.0
    %3428 = vmatprep.subr.mxu0 0.0
    %3429 = vmatpush1.msra.mxu0 0.0
    %3430 = vmatprep.subr.mxu0 0.0
    %3431 = vmatpush1.msra.mxu0 0.0
    %3432 = vmatprep.subr.mxu0 0.0
    %3433 = vmatpush1.msra.mxu0 0.0
    %3434 = vmatprep.subr.mxu0 0.0
    %3435 = vmatpush1.msra.mxu0 0.0
    %3436 = vmatprep.subr.mxu0 0.0
    %3437 = vmatpush1.msra.mxu0 0.0
    %3438 = vmatprep.subr.mxu0 0.0
    %3439 = vmatpush1.msra.mxu0 0.0
    %3440 = vmatprep.subr.mxu0 0.0
    %3441 = vmatpush1.msra.mxu0 0.0
    %3442 = vmatprep.subr.mxu0 0.0
    %3443 = vmatpush1.msra.mxu0 0.0
    %3444 = vmatprep.subr.mxu0 0.0
    %3445 = vmatpush1.msra.mxu0 0.0
    %3446 = vmatprep.subr.mxu0 0.0
    %3447 = vmatpush1.msra.mxu0 0.0
    %3448 = vmatprep.subr.mxu0 0.0
    %3449 = vmatpush1.msra.mxu0 0.0
    %3450 = vmatprep.subr.mxu0 0.0
    %3451 = vmatpush1.msra.mxu0 0.0
    %3452 = vmatprep.mubr.f32.mxu0 0.0
    %3453 = vmatmul.mubr.f32.gmra.mrb[0].mxu0 %v3129
    %v3454 = vpop.f32.mrb[0].mxu0
    %v3455 = vadd.f32 0.0, %v3454
    %v3456 = vpop.f32.mrb[0].mxu0
    %3457 = vdwg.mxu0
    %v3459 = vrot.slane %v3455, 5
    %v3460 = vrot.slane %v3455, 6
    %v3463 = vadd.f32 %v2017, %v3459
    %v3464 = vadd.f32 %v2022, %v3460
    %v3465 = vxor.u32 %v3463, 2147483648
    %v3466 = vxor.u32 %v3464, 2147483648
    %v3467 = vmul.f32 %v3465, 1.442695
    %v3468 = vpow.pop %v3467
    %v3469 = vmul.f32 %v3466, 1.442695
    %v3470 = vpow.pop %v3469
    %v3471 = vadd.f32 %v3468, 1.0
    %v3472 = vadd.f32 %v3470, 1.0
    %v3473 = vrcp.pop %v3471
    %v3474 = vmul.f32 1.0, %v3473
    %v3475 = vrcp.pop %v3472
    %v3476 = vmul.f32 1.0, %v3475
    %v3479 = vrot.slane %v3118, 7
    %v3480 = vrot.slane %v3119, 7
    %v3483 = vmul.f32 %v3306, %v3479
    %v3484 = vmul.f32 %v3308, %v3480
    %v3485 = vmul.f32 %v3217, %v3386
    %v3486 = vmul.f32 %v3219, %v3387
    %v3487 = vadd.f32 %v3483, %v3485
    %v3488 = vadd.f32 %v3484, %v3486
    %v3489 = vtanh.pop %v3487
    %v3490 = vtanh.pop %v3488
    %v3491 = vmul.f32 %v3474, %v3489
    %v3492 = vmul.f32 %v3476, %v3490
    %v3495 = vrot.slane %v3491, 3
    %v3496 = vrot.slane %v3492, 2
    %v3497 = vsel %vm2394, %v3496, %v3495
    %v3498 = vsel %vm411, %v3497, 0
    %3500 = vmatprep.subr.mxu0 0.0
    %3501 = vmatpush1.msra.mxu0 %v2025
    %3502 = vmatprep.subr.mxu0 0.0
    %3503 = vmatpush1.msra.mxu0 %v2026
    %3504 = vmatprep.subr.mxu0 0.0
    %3505 = vmatpush1.msra.mxu0 0.0
    %3506 = vmatprep.subr.mxu0 0.0
    %3507 = vmatpush1.msra.mxu0 0.0
    %3508 = vmatprep.subr.mxu0 0.0
    %3509 = vmatpush1.msra.mxu0 0.0
    %3510 = vmatprep.subr.mxu0 0.0
    %3511 = vmatpush1.msra.mxu0 0.0
    %3512 = vmatprep.subr.mxu0 0.0
    %3513 = vmatpush1.msra.mxu0 0.0
    %3514 = vmatprep.subr.mxu0 0.0
    %3515 = vmatpush1.msra.mxu0 0.0
    %3516 = vmatprep.subr.mxu0 0.0
    %3517 = vmatpush1.msra.mxu0 0.0
    %3518 = vmatprep.subr.mxu0 0.0
    %3519 = vmatpush1.msra.mxu0 0.0
    %3520 = vmatprep.subr.mxu0 0.0
    %3521 = vmatpush1.msra.mxu0 0.0
    %3522 = vmatprep.subr.mxu0 0.0
    %3523 = vmatpush1.msra.mxu0 0.0
    %3524 = vmatprep.subr.mxu0 0.0
    %3525 = vmatpush1.msra.mxu0 0.0
    %3526 = vmatprep.subr.mxu0 0.0
    %3527 = vmatpush1.msra.mxu0 0.0
    %3528 = vmatprep.subr.mxu0 0.0
    %3529 = vmatpush1.msra.mxu0 0.0
    %3530 = vmatprep.subr.mxu0 0.0
    %3531 = vmatpush1.msra.mxu0 0.0
    %3532 = vmatprep.subr.mxu0 0.0
    %3533 = vmatpush1.msra.mxu0 0.0
    %3534 = vmatprep.subr.mxu0 0.0
    %3535 = vmatpush1.msra.mxu0 0.0
    %3536 = vmatprep.subr.mxu0 0.0
    %3537 = vmatpush1.msra.mxu0 0.0
    %3538 = vmatprep.subr.mxu0 0.0
    %3539 = vmatpush1.msra.mxu0 0.0
    %3540 = vmatprep.subr.mxu0 0.0
    %3541 = vmatpush1.msra.mxu0 0.0
    %3542 = vmatprep.subr.mxu0 0.0
    %3543 = vmatpush1.msra.mxu0 0.0
    %3544 = vmatprep.subr.mxu0 0.0
    %3545 = vmatpush1.msra.mxu0 0.0
    %3546 = vmatprep.subr.mxu0 0.0
    %3547 = vmatpush1.msra.mxu0 0.0
    %3548 = vmatprep.subr.mxu0 0.0
    %3549 = vmatpush1.msra.mxu0 0.0
    %3550 = vmatprep.subr.mxu0 0.0
    %3551 = vmatpush1.msra.mxu0 0.0
    %3552 = vmatprep.subr.mxu0 0.0
    %3553 = vmatpush1.msra.mxu0 0.0
    %3554 = vmatprep.subr.mxu0 0.0
    %3555 = vmatpush1.msra.mxu0 0.0
    %3556 = vmatprep.subr.mxu0 0.0
    %3557 = vmatpush1.msra.mxu0 0.0
    %3558 = vmatprep.subr.mxu0 0.0
    %3559 = vmatpush1.msra.mxu0 0.0
    %3560 = vmatprep.subr.mxu0 0.0
    %3561 = vmatpush1.msra.mxu0 0.0
    %3562 = vmatprep.subr.mxu0 0.0
    %3563 = vmatpush1.msra.mxu0 0.0
    %3564 = vmatprep.mubr.f32.mxu0 0.0
    %3565 = vmatmul.mubr.f32.gmra.mrb[0].mxu0 %v3498
    %v3566 = vpop.f32.mrb[0].mxu0
    %v3567 = vadd.f32 0.0, %v3566
    %v3568 = vpop.f32.mrb[0].mxu0
    %3569 = vdwg.mxu0
    %v3571 = vrot.slane %v3567, 4
    %v3572 = vrot.slane %v3567, 5
    %v3575 = vadd.f32 %v1753, %v3571
    %v3576 = vadd.f32 %v1758, %v3572
    %v3577 = vxor.u32 %v3575, 2147483648
    %v3578 = vxor.u32 %v3576, 2147483648
    %v3579 = vmul.f32 %v3577, 1.442695
    %v3580 = vpow.pop %v3579
    %v3581 = vmul.f32 %v3578, 1.442695
    %v3582 = vpow.pop %v3581
    %v3583 = vadd.f32 %v3580, 1.0
    %v3584 = vadd.f32 %v3582, 1.0
    %v3585 = vrcp.pop %v3583
    %v3586 = vmul.f32 1.0, %v3585
    %v3587 = vrcp.pop %v3584
    %v3588 = vmul.f32 1.0, %v3587
    %3589 = vmatprep.subr.mxu0 0.0
    %3590 = vmatpush1.msra.mxu0 %v2119
    %3591 = vmatprep.subr.mxu0 0.0
    %3592 = vmatpush1.msra.mxu0 %v2120
    %3593 = vmatprep.subr.mxu0 0.0
    %3594 = vmatpush1.msra.mxu0 0.0
    %3595 = vmatprep.subr.mxu0 0.0
    %3596 = vmatpush1.msra.mxu0 0.0
    %3597 = vmatprep.subr.mxu0 0.0
    %3598 = vmatpush1.msra.mxu0 0.0
    %3599 = vmatprep.subr.mxu0 0.0
    %3600 = vmatpush1.msra.mxu0 0.0
    %3601 = vmatprep.subr.mxu0 0.0
    %3602 = vmatpush1.msra.mxu0 0.0
    %3603 = vmatprep.subr.mxu0 0.0
    %3604 = vmatpush1.msra.mxu0 0.0
    %3605 = vmatprep.subr.mxu0 0.0
    %3606 = vmatpush1.msra.mxu0 0.0
    %3607 = vmatprep.subr.mxu0 0.0
    %3608 = vmatpush1.msra.mxu0 0.0
    %3609 = vmatprep.subr.mxu0 0.0
    %3610 = vmatpush1.msra.mxu0 0.0
    %3611 = vmatprep.subr.mxu0 0.0
    %3612 = vmatpush1.msra.mxu0 0.0
    %3613 = vmatprep.subr.mxu0 0.0
    %3614 = vmatpush1.msra.mxu0 0.0
    %3615 = vmatprep.subr.mxu0 0.0
    %3616 = vmatpush1.msra.mxu0 0.0
    %3617 = vmatprep.subr.mxu0 0.0
    %3618 = vmatpush1.msra.mxu0 0.0
    %3619 = vmatprep.subr.mxu0 0.0
    %3620 = vmatpush1.msra.mxu0 0.0
    %3621 = vmatprep.subr.mxu0 0.0
    %3622 = vmatpush1.msra.mxu0 0.0
    %3623 = vmatprep.subr.mxu0 0.0
    %3624 = vmatpush1.msra.mxu0 0.0
    %3625 = vmatprep.subr.mxu0 0.0
    %3626 = vmatpush1.msra.mxu0 0.0
    %3627 = vmatprep.subr.mxu0 0.0
    %3628 = vmatpush1.msra.mxu0 0.0
    %3629 = vmatprep.subr.mxu0 0.0
    %3630 = vmatpush1.msra.mxu0 0.0
    %3631 = vmatprep.subr.mxu0 0.0
    %3632 = vmatpush1.msra.mxu0 0.0
    %3633 = vmatprep.subr.mxu0 0.0
    %3634 = vmatpush1.msra.mxu0 0.0
    %3635 = vmatprep.subr.mxu0 0.0
    %3636 = vmatpush1.msra.mxu0 0.0
    %3637 = vmatprep.subr.mxu0 0.0
    %3638 = vmatpush1.msra.mxu0 0.0
    %3639 = vmatprep.subr.mxu0 0.0
    %3640 = vmatpush1.msra.mxu0 0.0
    %3641 = vmatprep.subr.mxu0 0.0
    %3642 = vmatpush1.msra.mxu0 0.0
    %3643 = vmatprep.subr.mxu0 0.0
    %3644 = vmatpush1.msra.mxu0 0.0
    %3645 = vmatprep.subr.mxu0 0.0
    %3646 = vmatpush1.msra.mxu0 0.0
    %3647 = vmatprep.subr.mxu0 0.0
    %3648 = vmatpush1.msra.mxu0 0.0
    %3649 = vmatprep.subr.mxu0 0.0
    %3650 = vmatpush1.msra.mxu0 0.0
    %3651 = vmatprep.subr.mxu0 0.0
    %3652 = vmatpush1.msra.mxu0 0.0
    %3653 = vmatprep.mubr.f32.mxu0 0.0
    %3654 = vmatmul.mubr.f32.gmra.mrb[0].mxu0 %v3498
    %v3655 = vpop.f32.mrb[0].mxu0
    %v3656 = vadd.f32 0.0, %v3655
    %v3657 = vpop.f32.mrb[0].mxu0
    %3658 = vdwg.mxu0
    %v3660 = vrot.slane %v3656, 4
    %v3661 = vrot.slane %v3656, 5
    %v3664 = vadd.f32 %v1841, %v3660
    %v3665 = vadd.f32 %v1846, %v3661
    %v3666 = vxor.u32 %v3664, 2147483648
    %v3667 = vxor.u32 %v3665, 2147483648
    %v3668 = vmul.f32 %v3666, 1.442695
    %v3669 = vpow.pop %v3668
    %v3670 = vmul.f32 %v3667, 1.442695
    %v3671 = vpow.pop %v3670
    %v3672 = vadd.f32 %v3669, 1.0
    %v3673 = vadd.f32 %v3671, 1.0
    %v3674 = vrcp.pop %v3672
    %v3675 = vmul.f32 1.0, %v3674
    %v3676 = vrcp.pop %v3673
    %v3677 = vmul.f32 1.0, %v3676
    %3678 = vmatprep.subr.mxu0 0.0
    %3679 = vmatpush1.msra.mxu0 %v2210
    %3680 = vmatprep.subr.mxu0 0.0
    %3681 = vmatpush1.msra.mxu0 %v2211
    %3682 = vmatprep.subr.mxu0 0.0
    %3683 = vmatpush1.msra.mxu0 0.0
    %3684 = vmatprep.subr.mxu0 0.0
    %3685 = vmatpush1.msra.mxu0 0.0
    %3686 = vmatprep.subr.mxu0 0.0
    %3687 = vmatpush1.msra.mxu0 0.0
    %3688 = vmatprep.subr.mxu0 0.0
    %3689 = vmatpush1.msra.mxu0 0.0
    %3690 = vmatprep.subr.mxu0 0.0
    %3691 = vmatpush1.msra.mxu0 0.0
    %3692 = vmatprep.subr.mxu0 0.0
    %3693 = vmatpush1.msra.mxu0 0.0
    %3694 = vmatprep.subr.mxu0 0.0
    %3695 = vmatpush1.msra.mxu0 0.0
    %3696 = vmatprep.subr.mxu0 0.0
    %3697 = vmatpush1.msra.mxu0 0.0
    %3698 = vmatprep.subr.mxu0 0.0
    %3699 = vmatpush1.msra.mxu0 0.0
    %3700 = vmatprep.subr.mxu0 0.0
    %3701 = vmatpush1.msra.mxu0 0.0
    %3702 = vmatprep.subr.mxu0 0.0
    %3703 = vmatpush1.msra.mxu0 0.0
    %3704 = vmatprep.subr.mxu0 0.0
    %3705 = vmatpush1.msra.mxu0 0.0
    %3706 = vmatprep.subr.mxu0 0.0
    %3707 = vmatpush1.msra.mxu0 0.0
    %3708 = vmatprep.subr.mxu0 0.0
    %3709 = vmatpush1.msra.mxu0 0.0
    %3710 = vmatprep.subr.mxu0 0.0
    %3711 = vmatpush1.msra.mxu0 0.0
    %3712 = vmatprep.subr.mxu0 0.0
    %3713 = vmatpush1.msra.mxu0 0.0
    %3714 = vmatprep.subr.mxu0 0.0
    %3715 = vmatpush1.msra.mxu0 0.0
    %3716 = vmatprep.subr.mxu0 0.0
    %3717 = vmatpush1.msra.mxu0 0.0
    %3718 = vmatprep.subr.mxu0 0.0
    %3719 = vmatpush1.msra.mxu0 0.0
    %3720 = vmatprep.subr.mxu0 0.0
    %3721 = vmatpush1.msra.mxu0 0.0
    %3722 = vmatprep.subr.mxu0 0.0
    %3723 = vmatpush1.msra.mxu0 0.0
    %3724 = vmatprep.subr.mxu0 0.0
    %3725 = vmatpush1.msra.mxu0 0.0
    %3726 = vmatprep.subr.mxu0 0.0
    %3727 = vmatpush1.msra.mxu0 0.0
    %3728 = vmatprep.subr.mxu0 0.0
    %3729 = vmatpush1.msra.mxu0 0.0
    %3730 = vmatprep.subr.mxu0 0.0
    %3731 = vmatpush1.msra.mxu0 0.0
    %3732 = vmatprep.subr.mxu0 0.0
    %3733 = vmatpush1.msra.mxu0 0.0
    %3734 = vmatprep.subr.mxu0 0.0
    %3735 = vmatpush1.msra.mxu0 0.0
    %3736 = vmatprep.subr.mxu0 0.0
    %3737 = vmatpush1.msra.mxu0 0.0
    %3738 = vmatprep.subr.mxu0 0.0
    %3739 = vmatpush1.msra.mxu0 0.0
    %3740 = vmatprep.subr.mxu0 0.0
    %3741 = vmatpush1.msra.mxu0 0.0
    %3742 = vmatprep.mubr.f32.mxu0 0.0
    %3743 = vmatmul.mubr.f32.gmra.mrb[0].mxu0 %v3498
    %v3744 = vpop.f32.mrb[0].mxu0
    %v3745 = vadd.f32 0.0, %v3744
    %v3746 = vpop.f32.mrb[0].mxu0
    %3747 = vdwg.mxu0
    %v3749 = vrot.slane %v3745, 4
    %v3750 = vrot.slane %v3745, 5
    %v3753 = vadd.f32 %v1929, %v3749
    %v3754 = vadd.f32 %v1934, %v3750
    %v3755 = vtanh.pop %v3753
    %v3756 = vtanh.pop %v3754
    %3757 = vmatprep.subr.mxu0 0.0
    %3758 = vmatpush1.msra.mxu0 %v2291
    %3759 = vmatprep.subr.mxu0 0.0
    %3760 = vmatpush1.msra.mxu0 %v2292
    %3761 = vmatprep.subr.mxu0 0.0
    %3762 = vmatpush1.msra.mxu0 0.0
    %3763 = vmatprep.subr.mxu0 0.0
    %3764 = vmatpush1.msra.mxu0 0.0
    %3765 = vmatprep.subr.mxu0 0.0
    %3766 = vmatpush1.msra.mxu0 0.0
    %3767 = vmatprep.subr.mxu0 0.0
    %3768 = vmatpush1.msra.mxu0 0.0
    %3769 = vmatprep.subr.mxu0 0.0
    %3770 = vmatpush1.msra.mxu0 0.0
    %3771 = vmatprep.subr.mxu0 0.0
    %3772 = vmatpush1.msra.mxu0 0.0
    %3773 = vmatprep.subr.mxu0 0.0
    %3774 = vmatpush1.msra.mxu0 0.0
    %3775 = vmatprep.subr.mxu0 0.0
    %3776 = vmatpush1.msra.mxu0 0.0
    %3777 = vmatprep.subr.mxu0 0.0
    %3778 = vmatpush1.msra.mxu0 0.0
    %3779 = vmatprep.subr.mxu0 0.0
    %3780 = vmatpush1.msra.mxu0 0.0
    %3781 = vmatprep.subr.mxu0 0.0
    %3782 = vmatpush1.msra.mxu0 0.0
    %3783 = vmatprep.subr.mxu0 0.0
    %3784 = vmatpush1.msra.mxu0 0.0
    %3785 = vmatprep.subr.mxu0 0.0
    %3786 = vmatpush1.msra.mxu0 0.0
    %3787 = vmatprep.subr.mxu0 0.0
    %3788 = vmatpush1.msra.mxu0 0.0
    %3789 = vmatprep.subr.mxu0 0.0
    %3790 = vmatpush1.msra.mxu0 0.0
    %3791 = vmatprep.subr.mxu0 0.0
    %3792 = vmatpush1.msra.mxu0 0.0
    %3793 = vmatprep.subr.mxu0 0.0
    %3794 = vmatpush1.msra.mxu0 0.0
    %3795 = vmatprep.subr.mxu0 0.0
    %3796 = vmatpush1.msra.mxu0 0.0
    %3797 = vmatprep.subr.mxu0 0.0
    %3798 = vmatpush1.msra.mxu0 0.0
    %3799 = vmatprep.subr.mxu0 0.0
    %3800 = vmatpush1.msra.mxu0 0.0
    %3801 = vmatprep.subr.mxu0 0.0
    %3802 = vmatpush1.msra.mxu0 0.0
    %3803 = vmatprep.subr.mxu0 0.0
    %3804 = vmatpush1.msra.mxu0 0.0
    %3805 = vmatprep.subr.mxu0 0.0
    %3806 = vmatpush1.msra.mxu0 0.0
    %3807 = vmatprep.subr.mxu0 0.0
    %3808 = vmatpush1.msra.mxu0 0.0
    %3809 = vmatprep.subr.mxu0 0.0
    %3810 = vmatpush1.msra.mxu0 0.0
    %3811 = vmatprep.subr.mxu0 0.0
    %3812 = vmatpush1.msra.mxu0 0.0
    %3813 = vmatprep.subr.mxu0 0.0
    %3814 = vmatpush1.msra.mxu0 0.0
    %3815 = vmatprep.subr.mxu0 0.0
    %3816 = vmatpush1.msra.mxu0 0.0
    %3817 = vmatprep.subr.mxu0 0.0
    %3818 = vmatpush1.msra.mxu0 0.0
    %3819 = vmatprep.subr.mxu0 0.0
    %3820 = vmatpush1.msra.mxu0 0.0
    %3821 = vmatprep.mubr.f32.mxu0 0.0
    %3822 = vmatmul.mubr.f32.gmra.mrb[0].mxu0 %v3498
    %v3823 = vpop.f32.mrb[0].mxu0
    %v3824 = vadd.f32 0.0, %v3823
    %v3825 = vpop.f32.mrb[0].mxu0
    %3826 = vdwg.mxu0
    %v3828 = vrot.slane %v3824, 4
    %v3829 = vrot.slane %v3824, 5
    %v3832 = vadd.f32 %v2017, %v3828
    %v3833 = vadd.f32 %v2022, %v3829
    %v3834 = vxor.u32 %v3832, 2147483648
    %v3835 = vxor.u32 %v3833, 2147483648
    %v3836 = vmul.f32 %v3834, 1.442695
    %v3837 = vpow.pop %v3836
    %v3838 = vmul.f32 %v3835, 1.442695
    %v3839 = vpow.pop %v3838
    %v3840 = vadd.f32 %v3837, 1.0
    %v3841 = vadd.f32 %v3839, 1.0
    %v3842 = vrcp.pop %v3840
    %v3843 = vmul.f32 1.0, %v3842
    %v3844 = vrcp.pop %v3841
    %v3845 = vmul.f32 1.0, %v3844
    %v3848 = vrot.slane %v3487, 7
    %v3849 = vrot.slane %v3488, 7
    %v3852 = vmul.f32 %v3675, %v3848
    %v3853 = vmul.f32 %v3677, %v3849
    %v3854 = vmul.f32 %v3586, %v3755
    %v3855 = vmul.f32 %v3588, %v3756
    %v3856 = vadd.f32 %v3852, %v3854
    %v3857 = vadd.f32 %v3853, %v3855
    %v3858 = vtanh.pop %v3856
    %v3859 = vtanh.pop %v3857
    %v3860 = vmul.f32 %v3843, %v3858
    %v3861 = vmul.f32 %v3845, %v3859
    %v3864 = vrot.slane %v3860, 4
    %v3865 = vrot.slane %v3861, 3
    %v3866 = vsel %vm2394, %v3865, %v3864
    %v3867 = vsel %vm411, %v3866, 0
    %3869 = vmatprep.subr.mxu0 0.0
    %3870 = vmatpush1.msra.mxu0 %v2025
    %3871 = vmatprep.subr.mxu0 0.0
    %3872 = vmatpush1.msra.mxu0 %v2026
    %3873 = vmatprep.subr.mxu0 0.0
    %3874 = vmatpush1.msra.mxu0 0.0
    %3875 = vmatprep.subr.mxu0 0.0
    %3876 = vmatpush1.msra.mxu0 0.0
    %3877 = vmatprep.subr.mxu0 0.0
    %3878 = vmatpush1.msra.mxu0 0.0
    %3879 = vmatprep.subr.mxu0 0.0
    %3880 = vmatpush1.msra.mxu0 0.0
    %3881 = vmatprep.subr.mxu0 0.0
    %3882 = vmatpush1.msra.mxu0 0.0
    %3883 = vmatprep.subr.mxu0 0.0
    %3884 = vmatpush1.msra.mxu0 0.0
    %3885 = vmatprep.subr.mxu0 0.0
    %3886 = vmatpush1.msra.mxu0 0.0
    %3887 = vmatprep.subr.mxu0 0.0
    %3888 = vmatpush1.msra.mxu0 0.0
    %3889 = vmatprep.subr.mxu0 0.0
    %3890 = vmatpush1.msra.mxu0 0.0
    %3891 = vmatprep.subr.mxu0 0.0
    %3892 = vmatpush1.msra.mxu0 0.0
    %3893 = vmatprep.subr.mxu0 0.0
    %3894 = vmatpush1.msra.mxu0 0.0
    %3895 = vmatprep.subr.mxu0 0.0
    %3896 = vmatpush1.msra.mxu0 0.0
    %3897 = vmatprep.subr.mxu0 0.0
    %3898 = vmatpush1.msra.mxu0 0.0
    %3899 = vmatprep.subr.mxu0 0.0
    %3900 = vmatpush1.msra.mxu0 0.0
    %3901 = vmatprep.subr.mxu0 0.0
    %3902 = vmatpush1.msra.mxu0 0.0
    %3903 = vmatprep.subr.mxu0 0.0
    %3904 = vmatpush1.msra.mxu0 0.0
    %3905 = vmatprep.subr.mxu0 0.0
    %3906 = vmatpush1.msra.mxu0 0.0
    %3907 = vmatprep.subr.mxu0 0.0
    %3908 = vmatpush1.msra.mxu0 0.0
    %3909 = vmatprep.subr.mxu0 0.0
    %3910 = vmatpush1.msra.mxu0 0.0
    %3911 = vmatprep.subr.mxu0 0.0
    %3912 = vmatpush1.msra.mxu0 0.0
    %3913 = vmatprep.subr.mxu0 0.0
    %3914 = vmatpush1.msra.mxu0 0.0
    %3915 = vmatprep.subr.mxu0 0.0
    %3916 = vmatpush1.msra.mxu0 0.0
    %3917 = vmatprep.subr.mxu0 0.0
    %3918 = vmatpush1.msra.mxu0 0.0
    %3919 = vmatprep.subr.mxu0 0.0
    %3920 = vmatpush1.msra.mxu0 0.0
    %3921 = vmatprep.subr.mxu0 0.0
    %3922 = vmatpush1.msra.mxu0 0.0
    %3923 = vmatprep.subr.mxu0 0.0
    %3924 = vmatpush1.msra.mxu0 0.0
    %3925 = vmatprep.subr.mxu0 0.0
    %3926 = vmatpush1.msra.mxu0 0.0
    %3927 = vmatprep.subr.mxu0 0.0
    %3928 = vmatpush1.msra.mxu0 0.0
    %3929 = vmatprep.subr.mxu0 0.0
    %3930 = vmatpush1.msra.mxu0 0.0
    %3931 = vmatprep.subr.mxu0 0.0
    %3932 = vmatpush1.msra.mxu0 0.0
    %3933 = vmatprep.mubr.f32.mxu0 0.0
    %3934 = vmatmul.mubr.f32.gmra.mrb[0].mxu0 %v3867
    %v3935 = vpop.f32.mrb[0].mxu0
    %v3936 = vadd.f32 0.0, %v3935
    %v3937 = vpop.f32.mrb[0].mxu0
    %3938 = vdwg.mxu0
    %v3940 = vrot.slane %v3936, 3
    %v3941 = vrot.slane %v3936, 4
    %v3944 = vadd.f32 %v1753, %v3940
    %v3945 = vadd.f32 %v1758, %v3941
    %v3946 = vxor.u32 %v3944, 2147483648
    %v3947 = vxor.u32 %v3945, 2147483648
    %v3948 = vmul.f32 %v3946, 1.442695
    %v3949 = vpow.pop %v3948
    %v3950 = vmul.f32 %v3947, 1.442695
    %v3951 = vpow.pop %v3950
    %v3952 = vadd.f32 %v3949, 1.0
    %v3953 = vadd.f32 %v3951, 1.0
    %v3954 = vrcp.pop %v3952
    %v3955 = vmul.f32 1.0, %v3954
    %v3956 = vrcp.pop %v3953
    %v3957 = vmul.f32 1.0, %v3956
    %3958 = vmatprep.subr.mxu0 0.0
    %3959 = vmatpush1.msra.mxu0 %v2119
    %3960 = vmatprep.subr.mxu0 0.0
    %3961 = vmatpush1.msra.mxu0 %v2120
    %3962 = vmatprep.subr.mxu0 0.0
    %3963 = vmatpush1.msra.mxu0 0.0
    %3964 = vmatprep.subr.mxu0 0.0
    %3965 = vmatpush1.msra.mxu0 0.0
    %3966 = vmatprep.subr.mxu0 0.0
    %3967 = vmatpush1.msra.mxu0 0.0
    %3968 = vmatprep.subr.mxu0 0.0
    %3969 = vmatpush1.msra.mxu0 0.0
    %3970 = vmatprep.subr.mxu0 0.0
    %3971 = vmatpush1.msra.mxu0 0.0
    %3972 = vmatprep.subr.mxu0 0.0
    %3973 = vmatpush1.msra.mxu0 0.0
    %3974 = vmatprep.subr.mxu0 0.0
    %3975 = vmatpush1.msra.mxu0 0.0
    %3976 = vmatprep.subr.mxu0 0.0
    %3977 = vmatpush1.msra.mxu0 0.0
    %3978 = vmatprep.subr.mxu0 0.0
    %3979 = vmatpush1.msra.mxu0 0.0
    %3980 = vmatprep.subr.mxu0 0.0
    %3981 = vmatpush1.msra.mxu0 0.0
    %3982 = vmatprep.subr.mxu0 0.0
    %3983 = vmatpush1.msra.mxu0 0.0
    %3984 = vmatprep.subr.mxu0 0.0
    %3985 = vmatpush1.msra.mxu0 0.0
    %3986 = vmatprep.subr.mxu0 0.0
    %3987 = vmatpush1.msra.mxu0 0.0
    %3988 = vmatprep.subr.mxu0 0.0
    %3989 = vmatpush1.msra.mxu0 0.0
    %3990 = vmatprep.subr.mxu0 0.0
    %3991 = vmatpush1.msra.mxu0 0.0
    %3992 = vmatprep.subr.mxu0 0.0
    %3993 = vmatpush1.msra.mxu0 0.0
    %3994 = vmatprep.subr.mxu0 0.0
    %3995 = vmatpush1.msra.mxu0 0.0
    %3996 = vmatprep.subr.mxu0 0.0
    %3997 = vmatpush1.msra.mxu0 0.0
    %3998 = vmatprep.subr.mxu0 0.0
    %3999 = vmatpush1.msra.mxu0 0.0
    %4000 = vmatprep.subr.mxu0 0.0
    %4001 = vmatpush1.msra.mxu0 0.0
    %4002 = vmatprep.subr.mxu0 0.0
    %4003 = vmatpush1.msra.mxu0 0.0
    %4004 = vmatprep.subr.mxu0 0.0
    %4005 = vmatpush1.msra.mxu0 0.0
    %4006 = vmatprep.subr.mxu0 0.0
    %4007 = vmatpush1.msra.mxu0 0.0
    %4008 = vmatprep.subr.mxu0 0.0
    %4009 = vmatpush1.msra.mxu0 0.0
    %4010 = vmatprep.subr.mxu0 0.0
    %4011 = vmatpush1.msra.mxu0 0.0
    %4012 = vmatprep.subr.mxu0 0.0
    %4013 = vmatpush1.msra.mxu0 0.0
    %4014 = vmatprep.subr.mxu0 0.0
    %4015 = vmatpush1.msra.mxu0 0.0
    %4016 = vmatprep.subr.mxu0 0.0
    %4017 = vmatpush1.msra.mxu0 0.0
    %4018 = vmatprep.subr.mxu0 0.0
    %4019 = vmatpush1.msra.mxu0 0.0
    %4020 = vmatprep.subr.mxu0 0.0
    %4021 = vmatpush1.msra.mxu0 0.0
    %4022 = vmatprep.mubr.f32.mxu0 0.0
    %4023 = vmatmul.mubr.f32.gmra.mrb[0].mxu0 %v3867
    %v4024 = vpop.f32.mrb[0].mxu0
    %v4025 = vadd.f32 0.0, %v4024
    %v4026 = vpop.f32.mrb[0].mxu0
    %4027 = vdwg.mxu0
    %v4029 = vrot.slane %v4025, 3
    %v4030 = vrot.slane %v4025, 4
    %v4033 = vadd.f32 %v1841, %v4029
    %v4034 = vadd.f32 %v1846, %v4030
    %v4035 = vxor.u32 %v4033, 2147483648
    %v4036 = vxor.u32 %v4034, 2147483648
    %v4037 = vmul.f32 %v4035, 1.442695
    %v4038 = vpow.pop %v4037
    %v4039 = vmul.f32 %v4036, 1.442695
    %v4040 = vpow.pop %v4039
    %v4041 = vadd.f32 %v4038, 1.0
    %v4042 = vadd.f32 %v4040, 1.0
    %v4043 = vrcp.pop %v4041
    %v4044 = vmul.f32 1.0, %v4043
    %v4045 = vrcp.pop %v4042
    %v4046 = vmul.f32 1.0, %v4045
    %4047 = vmatprep.subr.mxu0 0.0
    %4048 = vmatpush1.msra.mxu0 %v2210
    %4049 = vmatprep.subr.mxu0 0.0
    %4050 = vmatpush1.msra.mxu0 %v2211
    %4051 = vmatprep.subr.mxu0 0.0
    %4052 = vmatpush1.msra.mxu0 0.0
    %4053 = vmatprep.subr.mxu0 0.0
    %4054 = vmatpush1.msra.mxu0 0.0
    %4055 = vmatprep.subr.mxu0 0.0
    %4056 = vmatpush1.msra.mxu0 0.0
    %4057 = vmatprep.subr.mxu0 0.0
    %4058 = vmatpush1.msra.mxu0 0.0
    %4059 = vmatprep.subr.mxu0 0.0
    %4060 = vmatpush1.msra.mxu0 0.0
    %4061 = vmatprep.subr.mxu0 0.0
    %4062 = vmatpush1.msra.mxu0 0.0
    %4063 = vmatprep.subr.mxu0 0.0
    %4064 = vmatpush1.msra.mxu0 0.0
    %4065 = vmatprep.subr.mxu0 0.0
    %4066 = vmatpush1.msra.mxu0 0.0
    %4067 = vmatprep.subr.mxu0 0.0
    %4068 = vmatpush1.msra.mxu0 0.0
    %4069 = vmatprep.subr.mxu0 0.0
    %4070 = vmatpush1.msra.mxu0 0.0
    %4071 = vmatprep.subr.mxu0 0.0
    %4072 = vmatpush1.msra.mxu0 0.0
    %4073 = vmatprep.subr.mxu0 0.0
    %4074 = vmatpush1.msra.mxu0 0.0
    %4075 = vmatprep.subr.mxu0 0.0
    %4076 = vmatpush1.msra.mxu0 0.0
    %4077 = vmatprep.subr.mxu0 0.0
    %4078 = vmatpush1.msra.mxu0 0.0
    %4079 = vmatprep.subr.mxu0 0.0
    %4080 = vmatpush1.msra.mxu0 0.0
    %4081 = vmatprep.subr.mxu0 0.0
    %4082 = vmatpush1.msra.mxu0 0.0
    %4083 = vmatprep.subr.mxu0 0.0
    %4084 = vmatpush1.msra.mxu0 0.0
    %4085 = vmatprep.subr.mxu0 0.0
    %4086 = vmatpush1.msra.mxu0 0.0
    %4087 = vmatprep.subr.mxu0 0.0
    %4088 = vmatpush1.msra.mxu0 0.0
    %4089 = vmatprep.subr.mxu0 0.0
    %4090 = vmatpush1.msra.mxu0 0.0
    %4091 = vmatprep.subr.mxu0 0.0
    %4092 = vmatpush1.msra.mxu0 0.0
    %4093 = vmatprep.subr.mxu0 0.0
    %4094 = vmatpush1.msra.mxu0 0.0
    %4095 = vmatprep.subr.mxu0 0.0
    %4096 = vmatpush1.msra.mxu0 0.0
    %4097 = vmatprep.subr.mxu0 0.0
    %4098 = vmatpush1.msra.mxu0 0.0
    %4099 = vmatprep.subr.mxu0 0.0
    %4100 = vmatpush1.msra.mxu0 0.0
    %4101 = vmatprep.subr.mxu0 0.0
    %4102 = vmatpush1.msra.mxu0 0.0
    %4103 = vmatprep.subr.mxu0 0.0
    %4104 = vmatpush1.msra.mxu0 0.0
    %4105 = vmatprep.subr.mxu0 0.0
    %4106 = vmatpush1.msra.mxu0 0.0
    %4107 = vmatprep.subr.mxu0 0.0
    %4108 = vmatpush1.msra.mxu0 0.0
    %4109 = vmatprep.subr.mxu0 0.0
    %4110 = vmatpush1.msra.mxu0 0.0
    %4111 = vmatprep.mubr.f32.mxu0 0.0
    %4112 = vmatmul.mubr.f32.gmra.mrb[0].mxu0 %v3867
    %v4113 = vpop.f32.mrb[0].mxu0
    %v4114 = vadd.f32 0.0, %v4113
    %v4115 = vpop.f32.mrb[0].mxu0
    %4116 = vdwg.mxu0
    %v4118 = vrot.slane %v4114, 3
    %v4119 = vrot.slane %v4114, 4
    %v4122 = vadd.f32 %v1929, %v4118
    %v4123 = vadd.f32 %v1934, %v4119
    %v4124 = vtanh.pop %v4122
    %v4125 = vtanh.pop %v4123
    %4126 = vmatprep.subr.mxu0 0.0
    %4127 = vmatpush1.msra.mxu0 %v2291
    %4128 = vmatprep.subr.mxu0 0.0
    %4129 = vmatpush1.msra.mxu0 %v2292
    %4130 = vmatprep.subr.mxu0 0.0
    %4131 = vmatpush1.msra.mxu0 0.0
    %4132 = vmatprep.subr.mxu0 0.0
    %4133 = vmatpush1.msra.mxu0 0.0
    %4134 = vmatprep.subr.mxu0 0.0
    %4135 = vmatpush1.msra.mxu0 0.0
    %4136 = vmatprep.subr.mxu0 0.0
    %4137 = vmatpush1.msra.mxu0 0.0
    %4138 = vmatprep.subr.mxu0 0.0
    %4139 = vmatpush1.msra.mxu0 0.0
    %4140 = vmatprep.subr.mxu0 0.0
    %4141 = vmatpush1.msra.mxu0 0.0
    %4142 = vmatprep.subr.mxu0 0.0
    %4143 = vmatpush1.msra.mxu0 0.0
    %4144 = vmatprep.subr.mxu0 0.0
    %4145 = vmatpush1.msra.mxu0 0.0
    %4146 = vmatprep.subr.mxu0 0.0
    %4147 = vmatpush1.msra.mxu0 0.0
    %4148 = vmatprep.subr.mxu0 0.0
    %4149 = vmatpush1.msra.mxu0 0.0
    %4150 = vmatprep.subr.mxu0 0.0
    %4151 = vmatpush1.msra.mxu0 0.0
    %4152 = vmatprep.subr.mxu0 0.0
    %4153 = vmatpush1.msra.mxu0 0.0
    %4154 = vmatprep.subr.mxu0 0.0
    %4155 = vmatpush1.msra.mxu0 0.0
    %4156 = vmatprep.subr.mxu0 0.0
    %4157 = vmatpush1.msra.mxu0 0.0
    %4158 = vmatprep.subr.mxu0 0.0
    %4159 = vmatpush1.msra.mxu0 0.0
    %4160 = vmatprep.subr.mxu0 0.0
    %4161 = vmatpush1.msra.mxu0 0.0
    %4162 = vmatprep.subr.mxu0 0.0
    %4163 = vmatpush1.msra.mxu0 0.0
    %4164 = vmatprep.subr.mxu0 0.0
    %4165 = vmatpush1.msra.mxu0 0.0
    %4166 = vmatprep.subr.mxu0 0.0
    %4167 = vmatpush1.msra.mxu0 0.0
    %4168 = vmatprep.subr.mxu0 0.0
    %4169 = vmatpush1.msra.mxu0 0.0
    %4170 = vmatprep.subr.mxu0 0.0
    %4171 = vmatpush1.msra.mxu0 0.0
    %4172 = vmatprep.subr.mxu0 0.0
    %4173 = vmatpush1.msra.mxu0 0.0
    %4174 = vmatprep.subr.mxu0 0.0
    %4175 = vmatpush1.msra.mxu0 0.0
    %4176 = vmatprep.subr.mxu0 0.0
    %4177 = vmatpush1.msra.mxu0 0.0
    %4178 = vmatprep.subr.mxu0 0.0
    %4179 = vmatpush1.msra.mxu0 0.0
    %4180 = vmatprep.subr.mxu0 0.0
    %4181 = vmatpush1.msra.mxu0 0.0
    %4182 = vmatprep.subr.mxu0 0.0
    %4183 = vmatpush1.msra.mxu0 0.0
    %4184 = vmatprep.subr.mxu0 0.0
    %4185 = vmatpush1.msra.mxu0 0.0
    %4186 = vmatprep.subr.mxu0 0.0
    %4187 = vmatpush1.msra.mxu0 0.0
    %4188 = vmatprep.subr.mxu0 0.0
    %4189 = vmatpush1.msra.mxu0 0.0
    %4190 = vmatprep.mubr.f32.mxu0 0.0
    %4191 = vmatmul.mubr.f32.gmra.mrb[0].mxu0 %v3867
    %v4192 = vpop.f32.mrb[0].mxu0
    %v4193 = vadd.f32 0.0, %v4192
    %v4194 = vpop.f32.mrb[0].mxu0
    %4195 = vdwg.mxu0
    %v4197 = vrot.slane %v4193, 3
    %v4198 = vrot.slane %v4193, 4
    %v4201 = vadd.f32 %v2017, %v4197
    %v4202 = vadd.f32 %v2022, %v4198
    %v4203 = vxor.u32 %v4201, 2147483648
    %v4204 = vxor.u32 %v4202, 2147483648
    %v4205 = vmul.f32 %v4203, 1.442695
    %v4206 = vpow.pop %v4205
    %v4207 = vmul.f32 %v4204, 1.442695
    %v4208 = vpow.pop %v4207
    %v4209 = vadd.f32 %v4206, 1.0
    %v4210 = vadd.f32 %v4208, 1.0
    %v4211 = vrcp.pop %v4209
    %v4212 = vmul.f32 1.0, %v4211
    %v4213 = vrcp.pop %v4210
    %v4214 = vmul.f32 1.0, %v4213
    %v4217 = vrot.slane %v3856, 7
    %v4218 = vrot.slane %v3857, 7
    %v4221 = vmul.f32 %v4044, %v4217
    %v4222 = vmul.f32 %v4046, %v4218
    %v4223 = vmul.f32 %v3955, %v4124
    %v4224 = vmul.f32 %v3957, %v4125
    %v4225 = vadd.f32 %v4221, %v4223
    %v4226 = vadd.f32 %v4222, %v4224
    %v4227 = vtanh.pop %v4225
    %v4228 = vtanh.pop %v4226
    %v4229 = vmul.f32 %v4212, %v4227
    %v4230 = vmul.f32 %v4214, %v4228
    %v4233 = vrot.slane %v4229, 5
    %v4234 = vrot.slane %v4230, 4
    %v4235 = vsel %vm2394, %v4234, %v4233
    %v4236 = vsel %vm411, %v4235, 0
    %4238 = vmatprep.subr.mxu0 0.0
    %4239 = vmatpush1.msra.mxu0 %v2025
    %4240 = vmatprep.subr.mxu0 0.0
    %4241 = vmatpush1.msra.mxu0 %v2026
    %4242 = vmatprep.subr.mxu0 0.0
    %4243 = vmatpush1.msra.mxu0 0.0
    %4244 = vmatprep.subr.mxu0 0.0
    %4245 = vmatpush1.msra.mxu0 0.0
    %4246 = vmatprep.subr.mxu0 0.0
    %4247 = vmatpush1.msra.mxu0 0.0
    %4248 = vmatprep.subr.mxu0 0.0
    %4249 = vmatpush1.msra.mxu0 0.0
    %4250 = vmatprep.subr.mxu0 0.0
    %4251 = vmatpush1.msra.mxu0 0.0
    %4252 = vmatprep.subr.mxu0 0.0
    %4253 = vmatpush1.msra.mxu0 0.0
    %4254 = vmatprep.subr.mxu0 0.0
    %4255 = vmatpush1.msra.mxu0 0.0
    %4256 = vmatprep.subr.mxu0 0.0
    %4257 = vmatpush1.msra.mxu0 0.0
    %4258 = vmatprep.subr.mxu0 0.0
    %4259 = vmatpush1.msra.mxu0 0.0
    %4260 = vmatprep.subr.mxu0 0.0
    %4261 = vmatpush1.msra.mxu0 0.0
    %4262 = vmatprep.subr.mxu0 0.0
    %4263 = vmatpush1.msra.mxu0 0.0
    %4264 = vmatprep.subr.mxu0 0.0
    %4265 = vmatpush1.msra.mxu0 0.0
    %4266 = vmatprep.subr.mxu0 0.0
    %4267 = vmatpush1.msra.mxu0 0.0
    %4268 = vmatprep.subr.mxu0 0.0
    %4269 = vmatpush1.msra.mxu0 0.0
    %4270 = vmatprep.subr.mxu0 0.0
    %4271 = vmatpush1.msra.mxu0 0.0
    %4272 = vmatprep.subr.mxu0 0.0
    %4273 = vmatpush1.msra.mxu0 0.0
    %4274 = vmatprep.subr.mxu0 0.0
    %4275 = vmatpush1.msra.mxu0 0.0
    %4276 = vmatprep.subr.mxu0 0.0
    %4277 = vmatpush1.msra.mxu0 0.0
    %4278 = vmatprep.subr.mxu0 0.0
    %4279 = vmatpush1.msra.mxu0 0.0
    %4280 = vmatprep.subr.mxu0 0.0
    %4281 = vmatpush1.msra.mxu0 0.0
    %4282 = vmatprep.subr.mxu0 0.0
    %4283 = vmatpush1.msra.mxu0 0.0
    %4284 = vmatprep.subr.mxu0 0.0
    %4285 = vmatpush1.msra.mxu0 0.0
    %4286 = vmatprep.subr.mxu0 0.0
    %4287 = vmatpush1.msra.mxu0 0.0
    %4288 = vmatprep.subr.mxu0 0.0
    %4289 = vmatpush1.msra.mxu0 0.0
    %4290 = vmatprep.subr.mxu0 0.0
    %4291 = vmatpush1.msra.mxu0 0.0
    %4292 = vmatprep.subr.mxu0 0.0
    %4293 = vmatpush1.msra.mxu0 0.0
    %4294 = vmatprep.subr.mxu0 0.0
    %4295 = vmatpush1.msra.mxu0 0.0
    %4296 = vmatprep.subr.mxu0 0.0
    %4297 = vmatpush1.msra.mxu0 0.0
    %4298 = vmatprep.subr.mxu0 0.0
    %4299 = vmatpush1.msra.mxu0 0.0
    %4300 = vmatprep.subr.mxu0 0.0
    %4301 = vmatpush1.msra.mxu0 0.0
    %4302 = vmatprep.mubr.f32.mxu0 0.0
    %4303 = vmatmul.mubr.f32.gmra.mrb[0].mxu0 %v4236
    %v4304 = vpop.f32.mrb[0].mxu0
    %v4305 = vadd.f32 0.0, %v4304
    %v4306 = vpop.f32.mrb[0].mxu0
    %4307 = vdwg.mxu0
    %v4309 = vrot.slane %v4305, 2
    %v4310 = vrot.slane %v4305, 3
    %v4313 = vadd.f32 %v1753, %v4309
    %v4314 = vadd.f32 %v1758, %v4310
    %v4315 = vxor.u32 %v4313, 2147483648
    %v4316 = vxor.u32 %v4314, 2147483648
    %v4317 = vmul.f32 %v4315, 1.442695
    %v4318 = vpow.pop %v4317
    %v4319 = vmul.f32 %v4316, 1.442695
    %v4320 = vpow.pop %v4319
    %v4321 = vadd.f32 %v4318, 1.0
    %v4322 = vadd.f32 %v4320, 1.0
    %v4323 = vrcp.pop %v4321
    %v4324 = vmul.f32 1.0, %v4323
    %v4325 = vrcp.pop %v4322
    %v4326 = vmul.f32 1.0, %v4325
    %4327 = vmatprep.subr.mxu0 0.0
    %4328 = vmatpush1.msra.mxu0 %v2119
    %4329 = vmatprep.subr.mxu0 0.0
    %4330 = vmatpush1.msra.mxu0 %v2120
    %4331 = vmatprep.subr.mxu0 0.0
    %4332 = vmatpush1.msra.mxu0 0.0
    %4333 = vmatprep.subr.mxu0 0.0
    %4334 = vmatpush1.msra.mxu0 0.0
    %4335 = vmatprep.subr.mxu0 0.0
    %4336 = vmatpush1.msra.mxu0 0.0
    %4337 = vmatprep.subr.mxu0 0.0
    %4338 = vmatpush1.msra.mxu0 0.0
    %4339 = vmatprep.subr.mxu0 0.0
    %4340 = vmatpush1.msra.mxu0 0.0
    %4341 = vmatprep.subr.mxu0 0.0
    %4342 = vmatpush1.msra.mxu0 0.0
    %4343 = vmatprep.subr.mxu0 0.0
    %4344 = vmatpush1.msra.mxu0 0.0
    %4345 = vmatprep.subr.mxu0 0.0
    %4346 = vmatpush1.msra.mxu0 0.0
    %4347 = vmatprep.subr.mxu0 0.0
    %4348 = vmatpush1.msra.mxu0 0.0
    %4349 = vmatprep.subr.mxu0 0.0
    %4350 = vmatpush1.msra.mxu0 0.0
    %4351 = vmatprep.subr.mxu0 0.0
    %4352 = vmatpush1.msra.mxu0 0.0
    %4353 = vmatprep.subr.mxu0 0.0
    %4354 = vmatpush1.msra.mxu0 0.0
    %4355 = vmatprep.subr.mxu0 0.0
    %4356 = vmatpush1.msra.mxu0 0.0
    %4357 = vmatprep.subr.mxu0 0.0
    %4358 = vmatpush1.msra.mxu0 0.0
    %4359 = vmatprep.subr.mxu0 0.0
    %4360 = vmatpush1.msra.mxu0 0.0
    %4361 = vmatprep.subr.mxu0 0.0
    %4362 = vmatpush1.msra.mxu0 0.0
    %4363 = vmatprep.subr.mxu0 0.0
    %4364 = vmatpush1.msra.mxu0 0.0
    %4365 = vmatprep.subr.mxu0 0.0
    %4366 = vmatpush1.msra.mxu0 0.0
    %4367 = vmatprep.subr.mxu0 0.0
    %4368 = vmatpush1.msra.mxu0 0.0
    %4369 = vmatprep.subr.mxu0 0.0
    %4370 = vmatpush1.msra.mxu0 0.0
    %4371 = vmatprep.subr.mxu0 0.0
    %4372 = vmatpush1.msra.mxu0 0.0
    %4373 = vmatprep.subr.mxu0 0.0
    %4374 = vmatpush1.msra.mxu0 0.0
    %4375 = vmatprep.subr.mxu0 0.0
    %4376 = vmatpush1.msra.mxu0 0.0
    %4377 = vmatprep.subr.mxu0 0.0
    %4378 = vmatpush1.msra.mxu0 0.0
    %4379 = vmatprep.subr.mxu0 0.0
    %4380 = vmatpush1.msra.mxu0 0.0
    %4381 = vmatprep.subr.mxu0 0.0
    %4382 = vmatpush1.msra.mxu0 0.0
    %4383 = vmatprep.subr.mxu0 0.0
    %4384 = vmatpush1.msra.mxu0 0.0
    %4385 = vmatprep.subr.mxu0 0.0
    %4386 = vmatpush1.msra.mxu0 0.0
    %4387 = vmatprep.subr.mxu0 0.0
    %4388 = vmatpush1.msra.mxu0 0.0
    %4389 = vmatprep.subr.mxu0 0.0
    %4390 = vmatpush1.msra.mxu0 0.0
    %4391 = vmatprep.mubr.f32.mxu0 0.0
    %4392 = vmatmul.mubr.f32.gmra.mrb[0].mxu0 %v4236
    %v4393 = vpop.f32.mrb[0].mxu0
    %v4394 = vadd.f32 0.0, %v4393
    %v4395 = vpop.f32.mrb[0].mxu0
    %4396 = vdwg.mxu0
    %v4398 = vrot.slane %v4394, 2
    %v4399 = vrot.slane %v4394, 3
    %v4402 = vadd.f32 %v1841, %v4398
    %v4403 = vadd.f32 %v1846, %v4399
    %v4404 = vxor.u32 %v4402, 2147483648
    %v4405 = vxor.u32 %v4403, 2147483648
    %v4406 = vmul.f32 %v4404, 1.442695
    %v4407 = vpow.pop %v4406
    %v4408 = vmul.f32 %v4405, 1.442695
    %v4409 = vpow.pop %v4408
    %v4410 = vadd.f32 %v4407, 1.0
    %v4411 = vadd.f32 %v4409, 1.0
    %v4412 = vrcp.pop %v4410
    %v4413 = vmul.f32 1.0, %v4412
    %v4414 = vrcp.pop %v4411
    %v4415 = vmul.f32 1.0, %v4414
    %4416 = vmatprep.subr.mxu0 0.0
    %4417 = vmatpush1.msra.mxu0 %v2210
    %4418 = vmatprep.subr.mxu0 0.0
    %4419 = vmatpush1.msra.mxu0 %v2211
    %4420 = vmatprep.subr.mxu0 0.0
    %4421 = vmatpush1.msra.mxu0 0.0
    %4422 = vmatprep.subr.mxu0 0.0
    %4423 = vmatpush1.msra.mxu0 0.0
    %4424 = vmatprep.subr.mxu0 0.0
    %4425 = vmatpush1.msra.mxu0 0.0
    %4426 = vmatprep.subr.mxu0 0.0
    %4427 = vmatpush1.msra.mxu0 0.0
    %4428 = vmatprep.subr.mxu0 0.0
    %4429 = vmatpush1.msra.mxu0 0.0
    %4430 = vmatprep.subr.mxu0 0.0
    %4431 = vmatpush1.msra.mxu0 0.0
    %4432 = vmatprep.subr.mxu0 0.0
    %4433 = vmatpush1.msra.mxu0 0.0
    %4434 = vmatprep.subr.mxu0 0.0
    %4435 = vmatpush1.msra.mxu0 0.0
    %4436 = vmatprep.subr.mxu0 0.0
    %4437 = vmatpush1.msra.mxu0 0.0
    %4438 = vmatprep.subr.mxu0 0.0
    %4439 = vmatpush1.msra.mxu0 0.0
    %4440 = vmatprep.subr.mxu0 0.0
    %4441 = vmatpush1.msra.mxu0 0.0
    %4442 = vmatprep.subr.mxu0 0.0
    %4443 = vmatpush1.msra.mxu0 0.0
    %4444 = vmatprep.subr.mxu0 0.0
    %4445 = vmatpush1.msra.mxu0 0.0
    %4446 = vmatprep.subr.mxu0 0.0
    %4447 = vmatpush1.msra.mxu0 0.0
    %4448 = vmatprep.subr.mxu0 0.0
    %4449 = vmatpush1.msra.mxu0 0.0
    %4450 = vmatprep.subr.mxu0 0.0
    %4451 = vmatpush1.msra.mxu0 0.0
    %4452 = vmatprep.subr.mxu0 0.0
    %4453 = vmatpush1.msra.mxu0 0.0
    %4454 = vmatprep.subr.mxu0 0.0
    %4455 = vmatpush1.msra.mxu0 0.0
    %4456 = vmatprep.subr.mxu0 0.0
    %4457 = vmatpush1.msra.mxu0 0.0
    %4458 = vmatprep.subr.mxu0 0.0
    %4459 = vmatpush1.msra.mxu0 0.0
    %4460 = vmatprep.subr.mxu0 0.0
    %4461 = vmatpush1.msra.mxu0 0.0
    %4462 = vmatprep.subr.mxu0 0.0
    %4463 = vmatpush1.msra.mxu0 0.0
    %4464 = vmatprep.subr.mxu0 0.0
    %4465 = vmatpush1.msra.mxu0 0.0
    %4466 = vmatprep.subr.mxu0 0.0
    %4467 = vmatpush1.msra.mxu0 0.0
    %4468 = vmatprep.subr.mxu0 0.0
    %4469 = vmatpush1.msra.mxu0 0.0
    %4470 = vmatprep.subr.mxu0 0.0
    %4471 = vmatpush1.msra.mxu0 0.0
    %4472 = vmatprep.subr.mxu0 0.0
    %4473 = vmatpush1.msra.mxu0 0.0
    %4474 = vmatprep.subr.mxu0 0.0
    %4475 = vmatpush1.msra.mxu0 0.0
    %4476 = vmatprep.subr.mxu0 0.0
    %4477 = vmatpush1.msra.mxu0 0.0
    %4478 = vmatprep.subr.mxu0 0.0
    %4479 = vmatpush1.msra.mxu0 0.0
    %4480 = vmatprep.mubr.f32.mxu0 0.0
    %4481 = vmatmul.mubr.f32.gmra.mrb[0].mxu0 %v4236
    %v4482 = vpop.f32.mrb[0].mxu0
    %v4483 = vadd.f32 0.0, %v4482
    %v4484 = vpop.f32.mrb[0].mxu0
    %4485 = vdwg.mxu0
    %v4487 = vrot.slane %v4483, 2
    %v4488 = vrot.slane %v4483, 3
    %v4491 = vadd.f32 %v1929, %v4487
    %v4492 = vadd.f32 %v1934, %v4488
    %v4493 = vtanh.pop %v4491
    %v4494 = vtanh.pop %v4492
    %4495 = vmatprep.subr.mxu0 0.0
    %4496 = vmatpush1.msra.mxu0 %v2291
    %4497 = vmatprep.subr.mxu0 0.0
    %4498 = vmatpush1.msra.mxu0 %v2292
    %4499 = vmatprep.subr.mxu0 0.0
    %4500 = vmatpush1.msra.mxu0 0.0
    %4501 = vmatprep.subr.mxu0 0.0
    %4502 = vmatpush1.msra.mxu0 0.0
    %4503 = vmatprep.subr.mxu0 0.0
    %4504 = vmatpush1.msra.mxu0 0.0
    %4505 = vmatprep.subr.mxu0 0.0
    %4506 = vmatpush1.msra.mxu0 0.0
    %4507 = vmatprep.subr.mxu0 0.0
    %4508 = vmatpush1.msra.mxu0 0.0
    %4509 = vmatprep.subr.mxu0 0.0
    %4510 = vmatpush1.msra.mxu0 0.0
    %4511 = vmatprep.subr.mxu0 0.0
    %4512 = vmatpush1.msra.mxu0 0.0
    %4513 = vmatprep.subr.mxu0 0.0
    %4514 = vmatpush1.msra.mxu0 0.0
    %4515 = vmatprep.subr.mxu0 0.0
    %4516 = vmatpush1.msra.mxu0 0.0
    %4517 = vmatprep.subr.mxu0 0.0
    %4518 = vmatpush1.msra.mxu0 0.0
    %4519 = vmatprep.subr.mxu0 0.0
    %4520 = vmatpush1.msra.mxu0 0.0
    %4521 = vmatprep.subr.mxu0 0.0
    %4522 = vmatpush1.msra.mxu0 0.0
    %4523 = vmatprep.subr.mxu0 0.0
    %4524 = vmatpush1.msra.mxu0 0.0
    %4525 = vmatprep.subr.mxu0 0.0
    %4526 = vmatpush1.msra.mxu0 0.0
    %4527 = vmatprep.subr.mxu0 0.0
    %4528 = vmatpush1.msra.mxu0 0.0
    %4529 = vmatprep.subr.mxu0 0.0
    %4530 = vmatpush1.msra.mxu0 0.0
    %4531 = vmatprep.subr.mxu0 0.0
    %4532 = vmatpush1.msra.mxu0 0.0
    %4533 = vmatprep.subr.mxu0 0.0
    %4534 = vmatpush1.msra.mxu0 0.0
    %4535 = vmatprep.subr.mxu0 0.0
    %4536 = vmatpush1.msra.mxu0 0.0
    %4537 = vmatprep.subr.mxu0 0.0
    %4538 = vmatpush1.msra.mxu0 0.0
    %4539 = vmatprep.subr.mxu0 0.0
    %4540 = vmatpush1.msra.mxu0 0.0
    %4541 = vmatprep.subr.mxu0 0.0
    %4542 = vmatpush1.msra.mxu0 0.0
    %4543 = vmatprep.subr.mxu0 0.0
    %4544 = vmatpush1.msra.mxu0 0.0
    %4545 = vmatprep.subr.mxu0 0.0
    %4546 = vmatpush1.msra.mxu0 0.0
    %4547 = vmatprep.subr.mxu0 0.0
    %4548 = vmatpush1.msra.mxu0 0.0
    %4549 = vmatprep.subr.mxu0 0.0
    %4550 = vmatpush1.msra.mxu0 0.0
    %4551 = vmatprep.subr.mxu0 0.0
    %4552 = vmatpush1.msra.mxu0 0.0
    %4553 = vmatprep.subr.mxu0 0.0
    %4554 = vmatpush1.msra.mxu0 0.0
    %4555 = vmatprep.subr.mxu0 0.0
    %4556 = vmatpush1.msra.mxu0 0.0
    %4557 = vmatprep.subr.mxu0 0.0
    %4558 = vmatpush1.msra.mxu0 0.0
    %4559 = vmatprep.mubr.f32.mxu0 0.0
    %4560 = vmatmul.mubr.f32.gmra.mrb[0].mxu0 %v4236
    %v4561 = vpop.f32.mrb[0].mxu0
    %v4562 = vadd.f32 0.0, %v4561
    %v4563 = vpop.f32.mrb[0].mxu0
    %4564 = vdwg.mxu0
    %v4566 = vrot.slane %v4562, 2
    %v4567 = vrot.slane %v4562, 3
    %v4570 = vadd.f32 %v2017, %v4566
    %v4571 = vadd.f32 %v2022, %v4567
    %v4572 = vxor.u32 %v4570, 2147483648
    %v4573 = vxor.u32 %v4571, 2147483648
    %v4574 = vmul.f32 %v4572, 1.442695
    %v4575 = vpow.pop %v4574
    %v4576 = vmul.f32 %v4573, 1.442695
    %v4577 = vpow.pop %v4576
    %v4578 = vadd.f32 %v4575, 1.0
    %v4579 = vadd.f32 %v4577, 1.0
    %v4580 = vrcp.pop %v4578
    %v4581 = vmul.f32 1.0, %v4580
    %v4582 = vrcp.pop %v4579
    %v4583 = vmul.f32 1.0, %v4582
    %v4586 = vrot.slane %v4225, 7
    %v4587 = vrot.slane %v4226, 7
    %v4590 = vmul.f32 %v4413, %v4586
    %v4591 = vmul.f32 %v4415, %v4587
    %v4592 = vmul.f32 %v4324, %v4493
    %v4593 = vmul.f32 %v4326, %v4494
    %v4594 = vadd.f32 %v4590, %v4592
    %v4595 = vadd.f32 %v4591, %v4593
    %v4596 = vtanh.pop %v4594
    %v4597 = vtanh.pop %v4595
    %v4598 = vmul.f32 %v4581, %v4596
    %v4599 = vmul.f32 %v4583, %v4597
    %v4602 = vrot.slane %v4598, 6
    %v4603 = vrot.slane %v4599, 5
    %v4604 = vsel %vm2394, %v4603, %v4602
    %v4605 = vsel %vm411, %v4604, 0
    %4607 = vmatprep.subr.mxu0 0.0
    %4608 = vmatpush1.msra.mxu0 %v2025
    %4609 = vmatprep.subr.mxu0 0.0
    %4610 = vmatpush1.msra.mxu0 %v2026
    %4611 = vmatprep.subr.mxu0 0.0
    %4612 = vmatpush1.msra.mxu0 0.0
    %4613 = vmatprep.subr.mxu0 0.0
    %4614 = vmatpush1.msra.mxu0 0.0
    %4615 = vmatprep.subr.mxu0 0.0
    %4616 = vmatpush1.msra.mxu0 0.0
    %4617 = vmatprep.subr.mxu0 0.0
    %4618 = vmatpush1.msra.mxu0 0.0
    %4619 = vmatprep.subr.mxu0 0.0
    %4620 = vmatpush1.msra.mxu0 0.0
    %4621 = vmatprep.subr.mxu0 0.0
    %4622 = vmatpush1.msra.mxu0 0.0
    %4623 = vmatprep.subr.mxu0 0.0
    %4624 = vmatpush1.msra.mxu0 0.0
    %4625 = vmatprep.subr.mxu0 0.0
    %4626 = vmatpush1.msra.mxu0 0.0
    %4627 = vmatprep.subr.mxu0 0.0
    %4628 = vmatpush1.msra.mxu0 0.0
    %4629 = vmatprep.subr.mxu0 0.0
    %4630 = vmatpush1.msra.mxu0 0.0
    %4631 = vmatprep.subr.mxu0 0.0
    %4632 = vmatpush1.msra.mxu0 0.0
    %4633 = vmatprep.subr.mxu0 0.0
    %4634 = vmatpush1.msra.mxu0 0.0
    %4635 = vmatprep.subr.mxu0 0.0
    %4636 = vmatpush1.msra.mxu0 0.0
    %4637 = vmatprep.subr.mxu0 0.0
    %4638 = vmatpush1.msra.mxu0 0.0
    %4639 = vmatprep.subr.mxu0 0.0
    %4640 = vmatpush1.msra.mxu0 0.0
    %4641 = vmatprep.subr.mxu0 0.0
    %4642 = vmatpush1.msra.mxu0 0.0
    %4643 = vmatprep.subr.mxu0 0.0
    %4644 = vmatpush1.msra.mxu0 0.0
    %4645 = vmatprep.subr.mxu0 0.0
    %4646 = vmatpush1.msra.mxu0 0.0
    %4647 = vmatprep.subr.mxu0 0.0
    %4648 = vmatpush1.msra.mxu0 0.0
    %4649 = vmatprep.subr.mxu0 0.0
    %4650 = vmatpush1.msra.mxu0 0.0
    %4651 = vmatprep.subr.mxu0 0.0
    %4652 = vmatpush1.msra.mxu0 0.0
    %4653 = vmatprep.subr.mxu0 0.0
    %4654 = vmatpush1.msra.mxu0 0.0
    %4655 = vmatprep.subr.mxu0 0.0
    %4656 = vmatpush1.msra.mxu0 0.0
    %4657 = vmatprep.subr.mxu0 0.0
    %4658 = vmatpush1.msra.mxu0 0.0
    %4659 = vmatprep.subr.mxu0 0.0
    %4660 = vmatpush1.msra.mxu0 0.0
    %4661 = vmatprep.subr.mxu0 0.0
    %4662 = vmatpush1.msra.mxu0 0.0
    %4663 = vmatprep.subr.mxu0 0.0
    %4664 = vmatpush1.msra.mxu0 0.0
    %4665 = vmatprep.subr.mxu0 0.0
    %4666 = vmatpush1.msra.mxu0 0.0
    %4667 = vmatprep.subr.mxu0 0.0
    %4668 = vmatpush1.msra.mxu0 0.0
    %4669 = vmatprep.subr.mxu0 0.0
    %4670 = vmatpush1.msra.mxu0 0.0
    %4671 = vmatprep.mubr.f32.mxu0 0.0
    %4672 = vmatmul.mubr.f32.gmra.mrb[0].mxu0 %v4605
    %v4673 = vpop.f32.mrb[0].mxu0
    %v4674 = vadd.f32 0.0, %v4673
    %v4675 = vpop.f32.mrb[0].mxu0
    %4676 = vdwg.mxu0
    %v4678 = vrot.slane %v4674, 1
    %v4679 = vrot.slane %v4674, 2
    %v4682 = vadd.f32 %v1753, %v4678
    %v4683 = vadd.f32 %v1758, %v4679
    %v4684 = vxor.u32 %v4682, 2147483648
    %v4685 = vxor.u32 %v4683, 2147483648
    %v4686 = vmul.f32 %v4684, 1.442695
    %v4687 = vpow.pop %v4686
    %v4688 = vmul.f32 %v4685, 1.442695
    %v4689 = vpow.pop %v4688
    %v4690 = vadd.f32 %v4687, 1.0
    %v4691 = vadd.f32 %v4689, 1.0
    %v4692 = vrcp.pop %v4690
    %v4693 = vmul.f32 1.0, %v4692
    %v4694 = vrcp.pop %v4691
    %v4695 = vmul.f32 1.0, %v4694
    %4696 = vmatprep.subr.mxu0 0.0
    %4697 = vmatpush1.msra.mxu0 %v2119
    %4698 = vmatprep.subr.mxu0 0.0
    %4699 = vmatpush1.msra.mxu0 %v2120
    %4700 = vmatprep.subr.mxu0 0.0
    %4701 = vmatpush1.msra.mxu0 0.0
    %4702 = vmatprep.subr.mxu0 0.0
    %4703 = vmatpush1.msra.mxu0 0.0
    %4704 = vmatprep.subr.mxu0 0.0
    %4705 = vmatpush1.msra.mxu0 0.0
    %4706 = vmatprep.subr.mxu0 0.0
    %4707 = vmatpush1.msra.mxu0 0.0
    %4708 = vmatprep.subr.mxu0 0.0
    %4709 = vmatpush1.msra.mxu0 0.0
    %4710 = vmatprep.subr.mxu0 0.0
    %4711 = vmatpush1.msra.mxu0 0.0
    %4712 = vmatprep.subr.mxu0 0.0
    %4713 = vmatpush1.msra.mxu0 0.0
    %4714 = vmatprep.subr.mxu0 0.0
    %4715 = vmatpush1.msra.mxu0 0.0
    %4716 = vmatprep.subr.mxu0 0.0
    %4717 = vmatpush1.msra.mxu0 0.0
    %4718 = vmatprep.subr.mxu0 0.0
    %4719 = vmatpush1.msra.mxu0 0.0
    %4720 = vmatprep.subr.mxu0 0.0
    %4721 = vmatpush1.msra.mxu0 0.0
    %4722 = vmatprep.subr.mxu0 0.0
    %4723 = vmatpush1.msra.mxu0 0.0
    %4724 = vmatprep.subr.mxu0 0.0
    %4725 = vmatpush1.msra.mxu0 0.0
    %4726 = vmatprep.subr.mxu0 0.0
    %4727 = vmatpush1.msra.mxu0 0.0
    %4728 = vmatprep.subr.mxu0 0.0
    %4729 = vmatpush1.msra.mxu0 0.0
    %4730 = vmatprep.subr.mxu0 0.0
    %4731 = vmatpush1.msra.mxu0 0.0
    %4732 = vmatprep.subr.mxu0 0.0
    %4733 = vmatpush1.msra.mxu0 0.0
    %4734 = vmatprep.subr.mxu0 0.0
    %4735 = vmatpush1.msra.mxu0 0.0
    %4736 = vmatprep.subr.mxu0 0.0
    %4737 = vmatpush1.msra.mxu0 0.0
    %4738 = vmatprep.subr.mxu0 0.0
    %4739 = vmatpush1.msra.mxu0 0.0
    %4740 = vmatprep.subr.mxu0 0.0
    %4741 = vmatpush1.msra.mxu0 0.0
    %4742 = vmatprep.subr.mxu0 0.0
    %4743 = vmatpush1.msra.mxu0 0.0
    %4744 = vmatprep.subr.mxu0 0.0
    %4745 = vmatpush1.msra.mxu0 0.0
    %4746 = vmatprep.subr.mxu0 0.0
    %4747 = vmatpush1.msra.mxu0 0.0
    %4748 = vmatprep.subr.mxu0 0.0
    %4749 = vmatpush1.msra.mxu0 0.0
    %4750 = vmatprep.subr.mxu0 0.0
    %4751 = vmatpush1.msra.mxu0 0.0
    %4752 = vmatprep.subr.mxu0 0.0
    %4753 = vmatpush1.msra.mxu0 0.0
    %4754 = vmatprep.subr.mxu0 0.0
    %4755 = vmatpush1.msra.mxu0 0.0
    %4756 = vmatprep.subr.mxu0 0.0
    %4757 = vmatpush1.msra.mxu0 0.0
    %4758 = vmatprep.subr.mxu0 0.0
    %4759 = vmatpush1.msra.mxu0 0.0
    %4760 = vmatprep.mubr.f32.mxu0 0.0
    %4761 = vmatmul.mubr.f32.gmra.mrb[0].mxu0 %v4605
    %v4762 = vpop.f32.mrb[0].mxu0
    %v4763 = vadd.f32 0.0, %v4762
    %v4764 = vpop.f32.mrb[0].mxu0
    %4765 = vdwg.mxu0
    %v4767 = vrot.slane %v4763, 1
    %v4768 = vrot.slane %v4763, 2
    %v4771 = vadd.f32 %v1841, %v4767
    %v4772 = vadd.f32 %v1846, %v4768
    %v4773 = vxor.u32 %v4771, 2147483648
    %v4774 = vxor.u32 %v4772, 2147483648
    %v4775 = vmul.f32 %v4773, 1.442695
    %v4776 = vpow.pop %v4775
    %v4777 = vmul.f32 %v4774, 1.442695
    %v4778 = vpow.pop %v4777
    %v4779 = vadd.f32 %v4776, 1.0
    %v4780 = vadd.f32 %v4778, 1.0
    %v4781 = vrcp.pop %v4779
    %v4782 = vmul.f32 1.0, %v4781
    %v4783 = vrcp.pop %v4780
    %v4784 = vmul.f32 1.0, %v4783
    %4785 = vmatprep.subr.mxu0 0.0
    %4786 = vmatpush1.msra.mxu0 %v2210
    %4787 = vmatprep.subr.mxu0 0.0
    %4788 = vmatpush1.msra.mxu0 %v2211
    %4789 = vmatprep.subr.mxu0 0.0
    %4790 = vmatpush1.msra.mxu0 0.0
    %4791 = vmatprep.subr.mxu0 0.0
    %4792 = vmatpush1.msra.mxu0 0.0
    %4793 = vmatprep.subr.mxu0 0.0
    %4794 = vmatpush1.msra.mxu0 0.0
    %4795 = vmatprep.subr.mxu0 0.0
    %4796 = vmatpush1.msra.mxu0 0.0
    %4797 = vmatprep.subr.mxu0 0.0
    %4798 = vmatpush1.msra.mxu0 0.0
    %4799 = vmatprep.subr.mxu0 0.0
    %4800 = vmatpush1.msra.mxu0 0.0
    %4801 = vmatprep.subr.mxu0 0.0
    %4802 = vmatpush1.msra.mxu0 0.0
    %4803 = vmatprep.subr.mxu0 0.0
    %4804 = vmatpush1.msra.mxu0 0.0
    %4805 = vmatprep.subr.mxu0 0.0
    %4806 = vmatpush1.msra.mxu0 0.0
    %4807 = vmatprep.subr.mxu0 0.0
    %4808 = vmatpush1.msra.mxu0 0.0
    %4809 = vmatprep.subr.mxu0 0.0
    %4810 = vmatpush1.msra.mxu0 0.0
    %4811 = vmatprep.subr.mxu0 0.0
    %4812 = vmatpush1.msra.mxu0 0.0
    %4813 = vmatprep.subr.mxu0 0.0
    %4814 = vmatpush1.msra.mxu0 0.0
    %4815 = vmatprep.subr.mxu0 0.0
    %4816 = vmatpush1.msra.mxu0 0.0
    %4817 = vmatprep.subr.mxu0 0.0
    %4818 = vmatpush1.msra.mxu0 0.0
    %4819 = vmatprep.subr.mxu0 0.0
    %4820 = vmatpush1.msra.mxu0 0.0
    %4821 = vmatprep.subr.mxu0 0.0
    %4822 = vmatpush1.msra.mxu0 0.0
    %4823 = vmatprep.subr.mxu0 0.0
    %4824 = vmatpush1.msra.mxu0 0.0
    %4825 = vmatprep.subr.mxu0 0.0
    %4826 = vmatpush1.msra.mxu0 0.0
    %4827 = vmatprep.subr.mxu0 0.0
    %4828 = vmatpush1.msra.mxu0 0.0
    %4829 = vmatprep.subr.mxu0 0.0
    %4830 = vmatpush1.msra.mxu0 0.0
    %4831 = vmatprep.subr.mxu0 0.0
    %4832 = vmatpush1.msra.mxu0 0.0
    %4833 = vmatprep.subr.mxu0 0.0
    %4834 = vmatpush1.msra.mxu0 0.0
    %4835 = vmatprep.subr.mxu0 0.0
    %4836 = vmatpush1.msra.mxu0 0.0
    %4837 = vmatprep.subr.mxu0 0.0
    %4838 = vmatpush1.msra.mxu0 0.0
    %4839 = vmatprep.subr.mxu0 0.0
    %4840 = vmatpush1.msra.mxu0 0.0
    %4841 = vmatprep.subr.mxu0 0.0
    %4842 = vmatpush1.msra.mxu0 0.0
    %4843 = vmatprep.subr.mxu0 0.0
    %4844 = vmatpush1.msra.mxu0 0.0
    %4845 = vmatprep.subr.mxu0 0.0
    %4846 = vmatpush1.msra.mxu0 0.0
    %4847 = vmatprep.subr.mxu0 0.0
    %4848 = vmatpush1.msra.mxu0 0.0
    %4849 = vmatprep.mubr.f32.mxu0 0.0
    %4850 = vmatmul.mubr.f32.gmra.mrb[0].mxu0 %v4605
    %v4851 = vpop.f32.mrb[0].mxu0
    %v4852 = vadd.f32 0.0, %v4851
    %v4853 = vpop.f32.mrb[0].mxu0
    %4854 = vdwg.mxu0
    %v4856 = vrot.slane %v4852, 1
    %v4857 = vrot.slane %v4852, 2
    %v4860 = vadd.f32 %v1929, %v4856
    %v4861 = vadd.f32 %v1934, %v4857
    %v4862 = vtanh.pop %v4860
    %v4863 = vtanh.pop %v4861
    %4864 = vmatprep.subr.mxu0 0.0
    %4865 = vmatpush1.msra.mxu0 %v2291
    %4866 = vmatprep.subr.mxu0 0.0
    %4867 = vmatpush1.msra.mxu0 %v2292
    %4868 = vmatprep.subr.mxu0 0.0
    %4869 = vmatpush1.msra.mxu0 0.0
    %4870 = vmatprep.subr.mxu0 0.0
    %4871 = vmatpush1.msra.mxu0 0.0
    %4872 = vmatprep.subr.mxu0 0.0
    %4873 = vmatpush1.msra.mxu0 0.0
    %4874 = vmatprep.subr.mxu0 0.0
    %4875 = vmatpush1.msra.mxu0 0.0
    %4876 = vmatprep.subr.mxu0 0.0
    %4877 = vmatpush1.msra.mxu0 0.0
    %4878 = vmatprep.subr.mxu0 0.0
    %4879 = vmatpush1.msra.mxu0 0.0
    %4880 = vmatprep.subr.mxu0 0.0
    %4881 = vmatpush1.msra.mxu0 0.0
    %4882 = vmatprep.subr.mxu0 0.0
    %4883 = vmatpush1.msra.mxu0 0.0
    %4884 = vmatprep.subr.mxu0 0.0
    %4885 = vmatpush1.msra.mxu0 0.0
    %4886 = vmatprep.subr.mxu0 0.0
    %4887 = vmatpush1.msra.mxu0 0.0
    %4888 = vmatprep.subr.mxu0 0.0
    %4889 = vmatpush1.msra.mxu0 0.0
    %4890 = vmatprep.subr.mxu0 0.0
    %4891 = vmatpush1.msra.mxu0 0.0
    %4892 = vmatprep.subr.mxu0 0.0
    %4893 = vmatpush1.msra.mxu0 0.0
    %4894 = vmatprep.subr.mxu0 0.0
    %4895 = vmatpush1.msra.mxu0 0.0
    %4896 = vmatprep.subr.mxu0 0.0
    %4897 = vmatpush1.msra.mxu0 0.0
    %4898 = vmatprep.subr.mxu0 0.0
    %4899 = vmatpush1.msra.mxu0 0.0
    %4900 = vmatprep.subr.mxu0 0.0
    %4901 = vmatpush1.msra.mxu0 0.0
    %4902 = vmatprep.subr.mxu0 0.0
    %4903 = vmatpush1.msra.mxu0 0.0
    %4904 = vmatprep.subr.mxu0 0.0
    %4905 = vmatpush1.msra.mxu0 0.0
    %4906 = vmatprep.subr.mxu0 0.0
    %4907 = vmatpush1.msra.mxu0 0.0
    %4908 = vmatprep.subr.mxu0 0.0
    %4909 = vmatpush1.msra.mxu0 0.0
    %4910 = vmatprep.subr.mxu0 0.0
    %4911 = vmatpush1.msra.mxu0 0.0
    %4912 = vmatprep.subr.mxu0 0.0
    %4913 = vmatpush1.msra.mxu0 0.0
    %4914 = vmatprep.subr.mxu0 0.0
    %4915 = vmatpush1.msra.mxu0 0.0
    %4916 = vmatprep.subr.mxu0 0.0
    %4917 = vmatpush1.msra.mxu0 0.0
    %4918 = vmatprep.subr.mxu0 0.0
    %4919 = vmatpush1.msra.mxu0 0.0
    %4920 = vmatprep.subr.mxu0 0.0
    %4921 = vmatpush1.msra.mxu0 0.0
    %4922 = vmatprep.subr.mxu0 0.0
    %4923 = vmatpush1.msra.mxu0 0.0
    %4924 = vmatprep.subr.mxu0 0.0
    %4925 = vmatpush1.msra.mxu0 0.0
    %4926 = vmatprep.subr.mxu0 0.0
    %4927 = vmatpush1.msra.mxu0 0.0
    %4928 = vmatprep.mubr.f32.mxu0 0.0
    %4929 = vmatmul.mubr.f32.gmra.mrb[0].mxu0 %v4605
    %v4930 = vpop.f32.mrb[0].mxu0
    %v4931 = vadd.f32 0.0, %v4930
    %v4932 = vpop.f32.mrb[0].mxu0
    %4933 = vdwg.mxu0
    %v4935 = vrot.slane %v4931, 1
    %v4936 = vrot.slane %v4931, 2
    %v4939 = vadd.f32 %v2017, %v4935
    %v4940 = vadd.f32 %v2022, %v4936
    %v4941 = vxor.u32 %v4939, 2147483648
    %v4942 = vxor.u32 %v4940, 2147483648
    %v4943 = vmul.f32 %v4941, 1.442695
    %v4944 = vpow.pop %v4943
    %v4945 = vmul.f32 %v4942, 1.442695
    %v4946 = vpow.pop %v4945
    %v4947 = vadd.f32 %v4944, 1.0
    %v4948 = vadd.f32 %v4946, 1.0
    %v4949 = vrcp.pop %v4947
    %v4950 = vmul.f32 1.0, %v4949
    %v4951 = vrcp.pop %v4948
    %v4952 = vmul.f32 1.0, %v4951
    %v4955 = vrot.slane %v4594, 7
    %v4956 = vrot.slane %v4595, 7
    %v4959 = vmul.f32 %v4782, %v4955
    %v4960 = vmul.f32 %v4784, %v4956
    %v4961 = vmul.f32 %v4693, %v4862
    %v4962 = vmul.f32 %v4695, %v4863
    %v4963 = vadd.f32 %v4959, %v4961
    %v4964 = vadd.f32 %v4960, %v4962
    %v4965 = vtanh.pop %v4963
    %v4966 = vtanh.pop %v4964
    %v4967 = vmul.f32 %v4950, %v4965
    %v4968 = vmul.f32 %v4952, %v4966
    %v4969 = vld [vmem:[%s43] sm:$0xff]
    %v4970 = vld [vmem:[%s43 + $0x8] sm:$0xff]
    %v4971 = vld [vmem:[%s43 + $0x10] sm:$0xff]
    %v4972 = vld [vmem:[%s43 + $0x18] sm:$0xff]
    %v4973 = vld [vmem:[%s47] sm:$0x1]
    %v4975 = vlaneseq
    %v4976 = vshrl.u32 %v4975, 7
    %v4977 = vsub.s32 0, %v4976
    %v4978 = vrot.slane %v4973, %v4977
    %v4980 = vrot.slane %v1667, 7
    %v4981 = vrot.slane %v1668, 6
    %v4982 = vsel %vm2394, %v4981, %v4980
    %v4983 = vsel %vm249, %v4982, 0
    %4985 = vmatprep.subr.mxu0 0.0
    %4986 = vmatpush1.msra.mxu0 %v4969
    %4987 = vmatprep.subr.mxu0 0.0
    %4988 = vmatpush1.msra.mxu0 %v4970
    %4989 = vmatprep.subr.mxu0 0.0
    %4990 = vmatpush1.msra.mxu0 %v4971
    %4991 = vmatprep.subr.mxu0 0.0
    %4992 = vmatpush1.msra.mxu0 %v4972
    %4993 = vmatprep.subr.mxu0 0.0
    %4994 = vmatpush1.msra.mxu0 0.0
    %4995 = vmatprep.subr.mxu0 0.0
    %4996 = vmatpush1.msra.mxu0 0.0
    %4997 = vmatprep.subr.mxu0 0.0
    %4998 = vmatpush1.msra.mxu0 0.0
    %4999 = vmatprep.subr.mxu0 0.0
    %5000 = vmatpush1.msra.mxu0 0.0
    %5001 = vmatprep.subr.mxu0 0.0
    %5002 = vmatpush1.msra.mxu0 0.0
    %5003 = vmatprep.subr.mxu0 0.0
    %5004 = vmatpush1.msra.mxu0 0.0
    %5005 = vmatprep.subr.mxu0 0.0
    %5006 = vmatpush1.msra.mxu0 0.0
    %5007 = vmatprep.subr.mxu0 0.0
    %5008 = vmatpush1.msra.mxu0 0.0
    %5009 = vmatprep.subr.mxu0 0.0
    %5010 = vmatpush1.msra.mxu0 0.0
    %5011 = vmatprep.subr.mxu0 0.0
    %5012 = vmatpush1.msra.mxu0 0.0
    %5013 = vmatprep.subr.mxu0 0.0
    %5014 = vmatpush1.msra.mxu0 0.0
    %5015 = vmatprep.subr.mxu0 0.0
    %5016 = vmatpush1.msra.mxu0 0.0
    %5017 = vmatprep.subr.mxu0 0.0
    %5018 = vmatpush1.msra.mxu0 0.0
    %5019 = vmatprep.subr.mxu0 0.0
    %5020 = vmatpush1.msra.mxu0 0.0
    %5021 = vmatprep.subr.mxu0 0.0
    %5022 = vmatpush1.msra.mxu0 0.0
    %5023 = vmatprep.subr.mxu0 0.0
    %5024 = vmatpush1.msra.mxu0 0.0
    %5025 = vmatprep.subr.mxu0 0.0
    %5026 = vmatpush1.msra.mxu0 0.0
    %5027 = vmatprep.subr.mxu0 0.0
    %5028 = vmatpush1.msra.mxu0 0.0
    %5029 = vmatprep.subr.mxu0 0.0
    %5030 = vmatpush1.msra.mxu0 0.0
    %5031 = vmatprep.subr.mxu0 0.0
    %5032 = vmatpush1.msra.mxu0 0.0
    %5033 = vmatprep.subr.mxu0 0.0
    %5034 = vmatpush1.msra.mxu0 0.0
    %5035 = vmatprep.subr.mxu0 0.0
    %5036 = vmatpush1.msra.mxu0 0.0
    %5037 = vmatprep.subr.mxu0 0.0
    %5038 = vmatpush1.msra.mxu0 0.0
    %5039 = vmatprep.subr.mxu0 0.0
    %5040 = vmatpush1.msra.mxu0 0.0
    %5041 = vmatprep.subr.mxu0 0.0
    %5042 = vmatpush1.msra.mxu0 0.0
    %5043 = vmatprep.subr.mxu0 0.0
    %5044 = vmatpush1.msra.mxu0 0.0
    %5045 = vmatprep.subr.mxu0 0.0
    %5046 = vmatpush1.msra.mxu0 0.0
    %5047 = vmatprep.subr.mxu0 0.0
    %5048 = vmatpush1.msra.mxu0 0.0
    %5049 = vmatprep.mubr.f32.mxu0 0.0
    %5050 = vmatmul.mubr.f32.gmra.mrb[0].mxu0 %v4983
    %v5051 = vpop.f32.mrb[0].mxu0
    %v5052 = vadd.f32 %v4978, %v5051
    %v5053 = vpop.f32.mrb[0].mxu0
    %5054 = vdwg.mxu0
    %v5055 = vxor.u32 %v5052, 2147483648
    %v5056 = vmul.f32 %v5055, 1.442695
    %v5057 = vpow.pop %v5056
    %v5058 = vadd.f32 %v5057, 1.0
    %v5059 = vrcp.pop %v5058
    %v5060 = vmul.f32 1.0, %v5059
    %s5061 = scalar_lea.vmem %s43, 64
    %v5062 = vld [vmem:[%s5061] sm:$0xff]
    %v5063 = vld [vmem:[%s5061 + $0x8] sm:$0xff]
    %v5064 = vld [vmem:[%s5061 + $0x10] sm:$0xff]
    %v5065 = vld [vmem:[%s5061 + $0x18] sm:$0xff]
    %s5066 = scalar_lea.vmem %s47, 2
    %v5067 = vld [vmem:[%s5066] sm:$0x1]
    %v5069 = vlaneseq
    %v5070 = vshrl.u32 %v5069, 7
    %v5071 = vsub.s32 0, %v5070
    %v5072 = vrot.slane %v5067, %v5071
    %5074 = vmatprep.subr.mxu0 0.0
    %5075 = vmatpush1.msra.mxu0 %v5062
    %5076 = vmatprep.subr.mxu0 0.0
    %5077 = vmatpush1.msra.mxu0 %v5063
    %5078 = vmatprep.subr.mxu0 0.0
    %5079 = vmatpush1.msra.mxu0 %v5064
    %5080 = vmatprep.subr.mxu0 0.0
    %5081 = vmatpush1.msra.mxu0 %v5065
    %5082 = vmatprep.subr.mxu0 0.0
    %5083 = vmatpush1.msra.mxu0 0.0
    %5084 = vmatprep.subr.mxu0 0.0
    %5085 = vmatpush1.msra.mxu0 0.0
    %5086 = vmatprep.subr.mxu0 0.0
    %5087 = vmatpush1.msra.mxu0 0.0
    %5088 = vmatprep.subr.mxu0 0.0
    %5089 = vmatpush1.msra.mxu0 0.0
    %5090 = vmatprep.subr.mxu0 0.0
    %5091 = vmatpush1.msra.mxu0 0.0
    %5092 = vmatprep.subr.mxu0 0.0
    %5093 = vmatpush1.msra.mxu0 0.0
    %5094 = vmatprep.subr.mxu0 0.0
    %5095 = vmatpush1.msra.mxu0 0.0
    %5096 = vmatprep.subr.mxu0 0.0
    %5097 = vmatpush1.msra.mxu0 0.0
    %5098 = vmatprep.subr.mxu0 0.0
    %5099 = vmatpush1.msra.mxu0 0.0
    %5100 = vmatprep.subr.mxu0 0.0
    %5101 = vmatpush1.msra.mxu0 0.0
    %5102 = vmatprep.subr.mxu0 0.0
    %5103 = vmatpush1.msra.mxu0 0.0
    %5104 = vmatprep.subr.mxu0 0.0
    %5105 = vmatpush1.msra.mxu0 0.0
    %5106 = vmatprep.subr.mxu0 0.0
    %5107 = vmatpush1.msra.mxu0 0.0
    %5108 = vmatprep.subr.mxu0 0.0
    %5109 = vmatpush1.msra.mxu0 0.0
    %5110 = vmatprep.subr.mxu0 0.0
    %5111 = vmatpush1.msra.mxu0 0.0
    %5112 = vmatprep.subr.mxu0 0.0
    %5113 = vmatpush1.msra.mxu0 0.0
    %5114 = vmatprep.subr.mxu0 0.0
    %5115 = vmatpush1.msra.mxu0 0.0
    %5116 = vmatprep.subr.mxu0 0.0
    %5117 = vmatpush1.msra.mxu0 0.0
    %5118 = vmatprep.subr.mxu0 0.0
    %5119 = vmatpush1.msra.mxu0 0.0
    %5120 = vmatprep.subr.mxu0 0.0
    %5121 = vmatpush1.msra.mxu0 0.0
    %5122 = vmatprep.subr.mxu0 0.0
    %5123 = vmatpush1.msra.mxu0 0.0
    %5124 = vmatprep.subr.mxu0 0.0
    %5125 = vmatpush1.msra.mxu0 0.0
    %5126 = vmatprep.subr.mxu0 0.0
    %5127 = vmatpush1.msra.mxu0 0.0
    %5128 = vmatprep.subr.mxu0 0.0
    %5129 = vmatpush1.msra.mxu0 0.0
    %5130 = vmatprep.subr.mxu0 0.0
    %5131 = vmatpush1.msra.mxu0 0.0
    %5132 = vmatprep.subr.mxu0 0.0
    %5133 = vmatpush1.msra.mxu0 0.0
    %5134 = vmatprep.subr.mxu0 0.0
    %5135 = vmatpush1.msra.mxu0 0.0
    %5136 = vmatprep.subr.mxu0 0.0
    %5137 = vmatpush1.msra.mxu0 0.0
    %5138 = vmatprep.mubr.f32.mxu0 0.0
    %5139 = vmatmul.mubr.f32.gmra.mrb[0].mxu0 %v4983
    %v5140 = vpop.f32.mrb[0].mxu0
    %v5141 = vadd.f32 %v5072, %v5140
    %v5142 = vpop.f32.mrb[0].mxu0
    %5143 = vdwg.mxu0
    %v5144 = vtanh.pop %v5141
    %s5145 = scalar_lea.vmem %s43, 96
    %v5146 = vld [vmem:[%s5145] sm:$0xff]
    %v5147 = vld [vmem:[%s5145 + $0x8] sm:$0xff]
    %v5148 = vld [vmem:[%s5145 + $0x10] sm:$0xff]
    %v5149 = vld [vmem:[%s5145 + $0x18] sm:$0xff]
    %s5150 = scalar_lea.vmem %s47, 3
    %v5151 = vld [vmem:[%s5150] sm:$0x1]
    %v5153 = vlaneseq
    %v5154 = vshrl.u32 %v5153, 7
    %v5155 = vsub.s32 0, %v5154
    %v5156 = vrot.slane %v5151, %v5155
    %5158 = vmatprep.subr.mxu0 0.0
    %5159 = vmatpush1.msra.mxu0 %v5146
    %5160 = vmatprep.subr.mxu0 0.0
    %5161 = vmatpush1.msra.mxu0 %v5147
    %5162 = vmatprep.subr.mxu0 0.0
    %5163 = vmatpush1.msra.mxu0 %v5148
    %5164 = vmatprep.subr.mxu0 0.0
    %5165 = vmatpush1.msra.mxu0 %v5149
    %5166 = vmatprep.subr.mxu0 0.0
    %5167 = vmatpush1.msra.mxu0 0.0
    %5168 = vmatprep.subr.mxu0 0.0
    %5169 = vmatpush1.msra.mxu0 0.0
    %5170 = vmatprep.subr.mxu0 0.0
    %5171 = vmatpush1.msra.mxu0 0.0
    %5172 = vmatprep.subr.mxu0 0.0
    %5173 = vmatpush1.msra.mxu0 0.0
    %5174 = vmatprep.subr.mxu0 0.0
    %5175 = vmatpush1.msra.mxu0 0.0
    %5176 = vmatprep.subr.mxu0 0.0
    %5177 = vmatpush1.msra.mxu0 0.0
    %5178 = vmatprep.subr.mxu0 0.0
    %5179 = vmatpush1.msra.mxu0 0.0
    %5180 = vmatprep.subr.mxu0 0.0
    %5181 = vmatpush1.msra.mxu0 0.0
    %5182 = vmatprep.subr.mxu0 0.0
    %5183 = vmatpush1.msra.mxu0 0.0
    %5184 = vmatprep.subr.mxu0 0.0
    %5185 = vmatpush1.msra.mxu0 0.0
    %5186 = vmatprep.subr.mxu0 0.0
    %5187 = vmatpush1.msra.mxu0 0.0
    %5188 = vmatprep.subr.mxu0 0.0
    %5189 = vmatpush1.msra.mxu0 0.0
    %5190 = vmatprep.subr.mxu0 0.0
    %5191 = vmatpush1.msra.mxu0 0.0
    %5192 = vmatprep.subr.mxu0 0.0
    %5193 = vmatpush1.msra.mxu0 0.0
    %5194 = vmatprep.subr.mxu0 0.0
    %5195 = vmatpush1.msra.mxu0 0.0
    %5196 = vmatprep.subr.mxu0 0.0
    %5197 = vmatpush1.msra.mxu0 0.0
    %5198 = vmatprep.subr.mxu0 0.0
    %5199 = vmatpush1.msra.mxu0 0.0
    %5200 = vmatprep.subr.mxu0 0.0
    %5201 = vmatpush1.msra.mxu0 0.0
    %5202 = vmatprep.subr.mxu0 0.0
    %5203 = vmatpush1.msra.mxu0 0.0
    %5204 = vmatprep.subr.mxu0 0.0
    %5205 = vmatpush1.msra.mxu0 0.0
    %5206 = vmatprep.subr.mxu0 0.0
    %5207 = vmatpush1.msra.mxu0 0.0
    %5208 = vmatprep.subr.mxu0 0.0
    %5209 = vmatpush1.msra.mxu0 0.0
    %5210 = vmatprep.subr.mxu0 0.0
    %5211 = vmatpush1.msra.mxu0 0.0
    %5212 = vmatprep.subr.mxu0 0.0
    %5213 = vmatpush1.msra.mxu0 0.0
    %5214 = vmatprep.subr.mxu0 0.0
    %5215 = vmatpush1.msra.mxu0 0.0
    %5216 = vmatprep.subr.mxu0 0.0
    %5217 = vmatpush1.msra.mxu0 0.0
    %5218 = vmatprep.subr.mxu0 0.0
    %5219 = vmatpush1.msra.mxu0 0.0
    %5220 = vmatprep.subr.mxu0 0.0
    %5221 = vmatpush1.msra.mxu0 0.0
    %5222 = vmatprep.mubr.f32.mxu0 0.0
    %5223 = vmatmul.mubr.f32.gmra.mrb[0].mxu0 %v4983
    %v5224 = vpop.f32.mrb[0].mxu0
    %v5225 = vadd.f32 %v5156, %v5224
    %v5226 = vpop.f32.mrb[0].mxu0
    %5227 = vdwg.mxu0
    %v5228 = vxor.u32 %v5225, 2147483648
    %v5229 = vmul.f32 %v5228, 1.442695
    %v5230 = vpow.pop %v5229
    %v5231 = vadd.f32 %v5230, 1.0
    %v5232 = vrcp.pop %v5231
    %v5233 = vmul.f32 1.0, %v5232
    %v5234 = vmul.f32 %v5060, %v5144
    %v5235 = vtanh.pop %v5234
    %v5236 = vmul.f32 %v5233, %v5235
    %v5237 = vld [vmem:[%s49] sm:$0x3]
    %5238 = vset.pattern.permute.xlu0 0
    %5239 = vperm.xlu0 %5238, %v5237
    %v5240 = vpop.permute.xlu0 %5239
    %vm5241 = vcmp.eq.s32.totalorder %v134, %v5240
    %v5242 = vsel %vm5241, 1, 0
    %v5243 = vcvt.s32.f32 %v5242
    %v5244 = vld [vmem:[%s51] sm:$0xf]
    %vm5245 = vcmask 31744
    %v5247 = vsel %vm5245, %v5243, 0
    %v5250 = vsel %vm168, %v5244, 0
    %5252 = vmatprep.subr.mxu0 0.0
    %5253 = vmatpush1.msra.mxu0 %v5250
    %5254 = vmatprep.subr.mxu0 0.0
    %5255 = vmatpush1.msra.mxu0 0.0
    %5256 = vmatprep.subr.mxu0 0.0
    %5257 = vmatpush1.msra.mxu0 0.0
    %5258 = vmatprep.subr.mxu0 0.0
    %5259 = vmatpush1.msra.mxu0 0.0
    %5260 = vmatprep.subr.mxu0 0.0
    %5261 = vmatpush1.msra.mxu0 0.0
    %5262 = vmatprep.subr.mxu0 0.0
    %5263 = vmatpush1.msra.mxu0 0.0
    %5264 = vmatprep.subr.mxu0 0.0
    %5265 = vmatpush1.msra.mxu0 0.0
    %5266 = vmatprep.subr.mxu0 0.0
    %5267 = vmatpush1.msra.mxu0 0.0
    %5268 = vmatprep.subr.mxu0 0.0
    %5269 = vmatpush1.msra.mxu0 0.0
    %5270 = vmatprep.subr.mxu0 0.0
    %5271 = vmatpush1.msra.mxu0 0.0
    %5272 = vmatprep.subr.mxu0 0.0
    %5273 = vmatpush1.msra.mxu0 0.0
    %5274 = vmatprep.subr.mxu0 0.0
    %5275 = vmatpush1.msra.mxu0 0.0
    %5276 = vmatprep.subr.mxu0 0.0
    %5277 = vmatpush1.msra.mxu0 0.0
    %5278 = vmatprep.subr.mxu0 0.0
    %5279 = vmatpush1.msra.mxu0 0.0
    %5280 = vmatprep.subr.mxu0 0.0
    %5281 = vmatpush1.msra.mxu0 0.0
    %5282 = vmatprep.subr.mxu0 0.0
    %5283 = vmatpush1.msra.mxu0 0.0
    %5284 = vmatprep.subr.mxu0 0.0
    %5285 = vmatpush1.msra.mxu0 0.0
    %5286 = vmatprep.subr.mxu0 0.0
    %5287 = vmatpush1.msra.mxu0 0.0
    %5288 = vmatprep.subr.mxu0 0.0
    %5289 = vmatpush1.msra.mxu0 0.0
    %5290 = vmatprep.subr.mxu0 0.0
    %5291 = vmatpush1.msra.mxu0 0.0
    %5292 = vmatprep.subr.mxu0 0.0
    %5293 = vmatpush1.msra.mxu0 0.0
    %5294 = vmatprep.subr.mxu0 0.0
    %5295 = vmatpush1.msra.mxu0 0.0
    %5296 = vmatprep.subr.mxu0 0.0
    %5297 = vmatpush1.msra.mxu0 0.0
    %5298 = vmatprep.subr.mxu0 0.0
    %5299 = vmatpush1.msra.mxu0 0.0
    %5300 = vmatprep.subr.mxu0 0.0
    %5301 = vmatpush1.msra.mxu0 0.0
    %5302 = vmatprep.subr.mxu0 0.0
    %5303 = vmatpush1.msra.mxu0 0.0
    %5304 = vmatprep.subr.mxu0 0.0
    %5305 = vmatpush1.msra.mxu0 0.0
    %5306 = vmatprep.subr.mxu0 0.0
    %5307 = vmatpush1.msra.mxu0 0.0
    %5308 = vmatprep.subr.mxu0 0.0
    %5309 = vmatpush1.msra.mxu0 0.0
    %5310 = vmatprep.subr.mxu0 0.0
    %5311 = vmatpush1.msra.mxu0 0.0
    %5312 = vmatprep.subr.mxu0 0.0
    %5313 = vmatpush1.msra.mxu0 0.0
    %5314 = vmatprep.subr.mxu0 0.0
    %5315 = vmatpush1.msra.mxu0 0.0
    %5316 = vmatprep.mubr.f32.mxu0 0.0
    %5317 = vmatmul.mubr.f32.gmra.mrb[0].mxu0 %v5247
    %v5318 = vpop.f32.mrb[0].mxu0
    %v5319 = vadd.f32 0.0, %v5318
    %v5320 = vpop.f32.mrb[0].mxu0
    %5321 = vdwg.mxu0
    %v5322 = vld [vmem:[%s53] sm:$0x3]
    %v5323 = vld [vmem:[%s55] sm:$0x1]
    %v5324 = vld [vmem:[%s57] sm:$0x1]
    %v5326 = vlaneseq
    %v5327 = vshrl.u32 %v5326, 7
    %v5328 = vsub.s32 0, %v5327
    %v5329 = vrot.slane %v5324, %v5328
    %vm5331 = vcmask 7168
    %v5333 = vsel %vm5331, %v5322, 0
    %vm5335 = vcmask 1040384
    %v5337 = vsel %vm5335, %v5323, 0
    %5339 = vmatprep.subr.mxu0 0.0
    %5340 = vmatpush1.msra.mxu0 %v5337
    %5341 = vmatprep.subr.mxu0 0.0
    %5342 = vmatpush1.msra.mxu0 0.0
    %5343 = vmatprep.subr.mxu0 0.0
    %5344 = vmatpush1.msra.mxu0 0.0
    %5345 = vmatprep.subr.mxu0 0.0
    %5346 = vmatpush1.msra.mxu0 0.0
    %5347 = vmatprep.subr.mxu0 0.0
    %5348 = vmatpush1.msra.mxu0 0.0
    %5349 = vmatprep.subr.mxu0 0.0
    %5350 = vmatpush1.msra.mxu0 0.0
    %5351 = vmatprep.subr.mxu0 0.0
    %5352 = vmatpush1.msra.mxu0 0.0
    %5353 = vmatprep.subr.mxu0 0.0
    %5354 = vmatpush1.msra.mxu0 0.0
    %5355 = vmatprep.subr.mxu0 0.0
    %5356 = vmatpush1.msra.mxu0 0.0
    %5357 = vmatprep.subr.mxu0 0.0
    %5358 = vmatpush1.msra.mxu0 0.0
    %5359 = vmatprep.subr.mxu0 0.0
    %5360 = vmatpush1.msra.mxu0 0.0
    %5361 = vmatprep.subr.mxu0 0.0
    %5362 = vmatpush1.msra.mxu0 0.0
    %5363 = vmatprep.subr.mxu0 0.0
    %5364 = vmatpush1.msra.mxu0 0.0
    %5365 = vmatprep.subr.mxu0 0.0
    %5366 = vmatpush1.msra.mxu0 0.0
    %5367 = vmatprep.subr.mxu0 0.0
    %5368 = vmatpush1.msra.mxu0 0.0
    %5369 = vmatprep.subr.mxu0 0.0
    %5370 = vmatpush1.msra.mxu0 0.0
    %5371 = vmatprep.subr.mxu0 0.0
    %5372 = vmatpush1.msra.mxu0 0.0
    %5373 = vmatprep.subr.mxu0 0.0
    %5374 = vmatpush1.msra.mxu0 0.0
    %5375 = vmatprep.subr.mxu0 0.0
    %5376 = vmatpush1.msra.mxu0 0.0
    %5377 = vmatprep.subr.mxu0 0.0
    %5378 = vmatpush1.msra.mxu0 0.0
    %5379 = vmatprep.subr.mxu0 0.0
    %5380 = vmatpush1.msra.mxu0 0.0
    %5381 = vmatprep.subr.mxu0 0.0
    %5382 = vmatpush1.msra.mxu0 0.0
    %5383 = vmatprep.subr.mxu0 0.0
    %5384 = vmatpush1.msra.mxu0 0.0
    %5385 = vmatprep.subr.mxu0 0.0
    %5386 = vmatpush1.msra.mxu0 0.0
    %5387 = vmatprep.subr.mxu0 0.0
    %5388 = vmatpush1.msra.mxu0 0.0
    %5389 = vmatprep.subr.mxu0 0.0
    %5390 = vmatpush1.msra.mxu0 0.0
    %5391 = vmatprep.subr.mxu0 0.0
    %5392 = vmatpush1.msra.mxu0 0.0
    %5393 = vmatprep.subr.mxu0 0.0
    %5394 = vmatpush1.msra.mxu0 0.0
    %5395 = vmatprep.subr.mxu0 0.0
    %5396 = vmatpush1.msra.mxu0 0.0
    %5397 = vmatprep.subr.mxu0 0.0
    %5398 = vmatpush1.msra.mxu0 0.0
    %5399 = vmatprep.subr.mxu0 0.0
    %5400 = vmatpush1.msra.mxu0 0.0
    %5401 = vmatprep.subr.mxu0 0.0
    %5402 = vmatpush1.msra.mxu0 0.0
    %5403 = vmatprep.mubr.f32.mxu0 0.0
    %5404 = vmatmul.mubr.f32.gmra.mrb[0].mxu0 %v5333
    %v5405 = vpop.f32.mrb[0].mxu0
    %v5406 = vadd.f32 %v5329, %v5405
    %v5407 = vpop.f32.mrb[0].mxu0
    %5408 = vdwg.mxu0
    %v5409 = vld [vmem:[%s59] sm:$0xff]
    %v5410 = vld [vmem:[%s59 + $0x8] sm:$0xff]
    %v5411 = vld [vmem:[%s59 + $0x10] sm:$0xff]
    %v5412 = vld [vmem:[%s59 + $0x18] sm:$0xff]
    %v5413 = vld [vmem:[%s59 + $0x20] sm:$0xff]
    %v5414 = vld [vmem:[%s59 + $0x28] sm:$0xff]
    %v5415 = vld [vmem:[%s59 + $0x30] sm:$0xff]
    %v5416 = vld [vmem:[%s59 + $0x38] sm:$0xff]
    %v5417 = vld [vmem:[%s59 + $0x40] sm:$0xff]
    %v5419 = vsel %vm411, %v5236, 0
    %5421 = vmatprep.subr.mxu0 0.0
    %5422 = vmatpush1.msra.mxu0 %v5411
    %5423 = vmatprep.subr.mxu0 0.0
    %5424 = vmatpush1.msra.mxu0 %v5412
    %5425 = vmatprep.subr.mxu0 0.0
    %5426 = vmatpush1.msra.mxu0 0.0
    %5427 = vmatprep.subr.mxu0 0.0
    %5428 = vmatpush1.msra.mxu0 0.0
    %5429 = vmatprep.subr.mxu0 0.0
    %5430 = vmatpush1.msra.mxu0 0.0
    %5431 = vmatprep.subr.mxu0 0.0
    %5432 = vmatpush1.msra.mxu0 0.0
    %5433 = vmatprep.subr.mxu0 0.0
    %5434 = vmatpush1.msra.mxu0 0.0
    %5435 = vmatprep.subr.mxu0 0.0
    %5436 = vmatpush1.msra.mxu0 0.0
    %5437 = vmatprep.subr.mxu0 0.0
    %5438 = vmatpush1.msra.mxu0 0.0
    %5439 = vmatprep.subr.mxu0 0.0
    %5440 = vmatpush1.msra.mxu0 0.0
    %5441 = vmatprep.subr.mxu0 0.0
    %5442 = vmatpush1.msra.mxu0 0.0
    %5443 = vmatprep.subr.mxu0 0.0
    %5444 = vmatpush1.msra.mxu0 0.0
    %5445 = vmatprep.subr.mxu0 0.0
    %5446 = vmatpush1.msra.mxu0 0.0
    %5447 = vmatprep.subr.mxu0 0.0
    %5448 = vmatpush1.msra.mxu0 0.0
    %5449 = vmatprep.subr.mxu0 0.0
    %5450 = vmatpush1.msra.mxu0 0.0
    %5451 = vmatprep.subr.mxu0 0.0
    %5452 = vmatpush1.msra.mxu0 0.0
    %5453 = vmatprep.subr.mxu0 0.0
    %5454 = vmatpush1.msra.mxu0 0.0
    %5455 = vmatprep.subr.mxu0 0.0
    %5456 = vmatpush1.msra.mxu0 0.0
    %5457 = vmatprep.subr.mxu0 0.0
    %5458 = vmatpush1.msra.mxu0 0.0
    %5459 = vmatprep.subr.mxu0 0.0
    %5460 = vmatpush1.msra.mxu0 0.0
    %5461 = vmatprep.subr.mxu0 0.0
    %5462 = vmatpush1.msra.mxu0 0.0
    %5463 = vmatprep.subr.mxu0 0.0
    %5464 = vmatpush1.msra.mxu0 0.0
    %5465 = vmatprep.subr.mxu0 0.0
    %5466 = vmatpush1.msra.mxu0 0.0
    %5467 = vmatprep.subr.mxu0 0.0
    %5468 = vmatpush1.msra.mxu0 0.0
    %5469 = vmatprep.subr.mxu0 0.0
    %5470 = vmatpush1.msra.mxu0 0.0
    %5471 = vmatprep.subr.mxu0 0.0
    %5472 = vmatpush1.msra.mxu0 0.0
    %5473 = vmatprep.subr.mxu0 0.0
    %5474 = vmatpush1.msra.mxu0 0.0
    %5475 = vmatprep.subr.mxu0 0.0
    %5476 = vmatpush1.msra.mxu0 0.0
    %5477 = vmatprep.subr.mxu0 0.0
    %5478 = vmatpush1.msra.mxu0 0.0
    %5479 = vmatprep.subr.mxu0 0.0
    %5480 = vmatpush1.msra.mxu0 0.0
    %5481 = vmatprep.subr.mxu0 0.0
    %5482 = vmatpush1.msra.mxu0 0.0
    %5483 = vmatprep.subr.mxu0 0.0
    %5484 = vmatpush1.msra.mxu0 0.0
    %5485 = vmatprep.mubr.f32.mxu0 0.0
    %5486 = vmatmul.mubr.f32.gmra.mrb[0].mxu0 %v5419
    %v5487 = vpop.f32.mrb[0].mxu0
    %v5488 = vadd.f32 0.0, %v5487
    %v5489 = vpop.f32.mrb[0].mxu0
    %5490 = vdwg.mxu0
    %v5493 = vrot.slane %v4967, 7
    %v5494 = vrot.slane %v4968, 6
    %v5495 = vsel %vm2394, %v5494, %v5493
    %v5496 = vsel %vm411, %v5495, 0
    %5498 = vmatprep.subr.mxu0 0.0
    %5499 = vmatpush1.msra.mxu0 %v5409
    %5500 = vmatprep.subr.mxu0 0.0
    %5501 = vmatpush1.msra.mxu0 %v5410
    %5502 = vmatprep.subr.mxu0 0.0
    %5503 = vmatpush1.msra.mxu0 0.0
    %5504 = vmatprep.subr.mxu0 0.0
    %5505 = vmatpush1.msra.mxu0 0.0
    %5506 = vmatprep.subr.mxu0 0.0
    %5507 = vmatpush1.msra.mxu0 0.0
    %5508 = vmatprep.subr.mxu0 0.0
    %5509 = vmatpush1.msra.mxu0 0.0
    %5510 = vmatprep.subr.mxu0 0.0
    %5511 = vmatpush1.msra.mxu0 0.0
    %5512 = vmatprep.subr.mxu0 0.0
    %5513 = vmatpush1.msra.mxu0 0.0
    %5514 = vmatprep.subr.mxu0 0.0
    %5515 = vmatpush1.msra.mxu0 0.0
    %5516 = vmatprep.subr.mxu0 0.0
    %5517 = vmatpush1.msra.mxu0 0.0
    %5518 = vmatprep.subr.mxu0 0.0
    %5519 = vmatpush1.msra.mxu0 0.0
    %5520 = vmatprep.subr.mxu0 0.0
    %5521 = vmatpush1.msra.mxu0 0.0
    %5522 = vmatprep.subr.mxu0 0.0
    %5523 = vmatpush1.msra.mxu0 0.0
    %5524 = vmatprep.subr.mxu0 0.0
    %5525 = vmatpush1.msra.mxu0 0.0
    %5526 = vmatprep.subr.mxu0 0.0
    %5527 = vmatpush1.msra.mxu0 0.0
    %5528 = vmatprep.subr.mxu0 0.0
    %5529 = vmatpush1.msra.mxu0 0.0
    %5530 = vmatprep.subr.mxu0 0.0
    %5531 = vmatpush1.msra.mxu0 0.0
    %5532 = vmatprep.subr.mxu0 0.0
    %5533 = vmatpush1.msra.mxu0 0.0
    %5534 = vmatprep.subr.mxu0 0.0
    %5535 = vmatpush1.msra.mxu0 0.0
    %5536 = vmatprep.subr.mxu0 0.0
    %5537 = vmatpush1.msra.mxu0 0.0
    %5538 = vmatprep.subr.mxu0 0.0
    %5539 = vmatpush1.msra.mxu0 0.0
    %5540 = vmatprep.subr.mxu0 0.0
    %5541 = vmatpush1.msra.mxu0 0.0
    %5542 = vmatprep.subr.mxu0 0.0
    %5543 = vmatpush1.msra.mxu0 0.0
    %5544 = vmatprep.subr.mxu0 0.0
    %5545 = vmatpush1.msra.mxu0 0.0
    %5546 = vmatprep.subr.mxu0 0.0
    %5547 = vmatpush1.msra.mxu0 0.0
    %5548 = vmatprep.subr.mxu0 0.0
    %5549 = vmatpush1.msra.mxu0 0.0
    %5550 = vmatprep.subr.mxu0 0.0
    %5551 = vmatpush1.msra.mxu0 0.0
    %5552 = vmatprep.subr.mxu0 0.0
    %5553 = vmatpush1.msra.mxu0 0.0
    %5554 = vmatprep.subr.mxu0 0.0
    %5555 = vmatpush1.msra.mxu0 0.0
    %5556 = vmatprep.subr.mxu0 0.0
    %5557 = vmatpush1.msra.mxu0 0.0
    %5558 = vmatprep.subr.mxu0 0.0
    %5559 = vmatpush1.msra.mxu0 0.0
    %5560 = vmatprep.subr.mxu0 0.0
    %5561 = vmatpush1.msra.mxu0 0.0
    %5562 = vmatprep.mubr.f32.mxu0 0.0
    %5563 = vmatmul.mubr.f32.gmra.mrb[0].mxu0 %v5496
    %v5564 = vpop.f32.mrb[0].mxu0
    %v5565 = vadd.f32 %v5488, %v5564
    %v5566 = vpop.f32.mrb[0].mxu0
    %5567 = vdwg.mxu0
    %v5569 = vsel %vm492, %v5319, 0
    %5571 = vmatprep.subr.mxu0 0.0
    %5572 = vmatpush1.msra.mxu0 %v5413
    %5573 = vmatprep.subr.mxu0 0.0
    %5574 = vmatpush1.msra.mxu0 0.0
    %5575 = vmatprep.subr.mxu0 0.0
    %5576 = vmatpush1.msra.mxu0 0.0
    %5577 = vmatprep.subr.mxu0 0.0
    %5578 = vmatpush1.msra.mxu0 0.0
    %5579 = vmatprep.subr.mxu0 0.0
    %5580 = vmatpush1.msra.mxu0 0.0
    %5581 = vmatprep.subr.mxu0 0.0
    %5582 = vmatpush1.msra.mxu0 0.0
    %5583 = vmatprep.subr.mxu0 0.0
    %5584 = vmatpush1.msra.mxu0 0.0
    %5585 = vmatprep.subr.mxu0 0.0
    %5586 = vmatpush1.msra.mxu0 0.0
    %5587 = vmatprep.subr.mxu0 0.0
    %5588 = vmatpush1.msra.mxu0 0.0
    %5589 = vmatprep.subr.mxu0 0.0
    %5590 = vmatpush1.msra.mxu0 0.0
    %5591 = vmatprep.subr.mxu0 0.0
    %5592 = vmatpush1.msra.mxu0 0.0
    %5593 = vmatprep.subr.mxu0 0.0
    %5594 = vmatpush1.msra.mxu0 0.0
    %5595 = vmatprep.subr.mxu0 0.0
    %5596 = vmatpush1.msra.mxu0 0.0
    %5597 = vmatprep.subr.mxu0 0.0
    %5598 = vmatpush1.msra.mxu0 0.0
    %5599 = vmatprep.subr.mxu0 0.0
    %5600 = vmatpush1.msra.mxu0 0.0
    %5601 = vmatprep.subr.mxu0 0.0
    %5602 = vmatpush1.msra.mxu0 0.0
    %5603 = vmatprep.subr.mxu0 0.0
    %5604 = vmatpush1.msra.mxu0 0.0
    %5605 = vmatprep.subr.mxu0 0.0
    %5606 = vmatpush1.msra.mxu0 0.0
    %5607 = vmatprep.subr.mxu0 0.0
    %5608 = vmatpush1.msra.mxu0 0.0
    %5609 = vmatprep.subr.mxu0 0.0
    %5610 = vmatpush1.msra.mxu0 0.0
    %5611 = vmatprep.subr.mxu0 0.0
    %5612 = vmatpush1.msra.mxu0 0.0
    %5613 = vmatprep.subr.mxu0 0.0
    %5614 = vmatpush1.msra.mxu0 0.0
    %5615 = vmatprep.subr.mxu0 0.0
    %5616 = vmatpush1.msra.mxu0 0.0
    %5617 = vmatprep.subr.mxu0 0.0
    %5618 = vmatpush1.msra.mxu0 0.0
    %5619 = vmatprep.subr.mxu0 0.0
    %5620 = vmatpush1.msra.mxu0 0.0
    %5621 = vmatprep.subr.mxu0 0.0
    %5622 = vmatpush1.msra.mxu0 0.0
    %5623 = vmatprep.subr.mxu0 0.0
    %5624 = vmatpush1.msra.mxu0 0.0
    %5625 = vmatprep.subr.mxu0 0.0
    %5626 = vmatpush1.msra.mxu0 0.0
    %5627 = vmatprep.subr.mxu0 0.0
    %5628 = vmatpush1.msra.mxu0 0.0
    %5629 = vmatprep.subr.mxu0 0.0
    %5630 = vmatpush1.msra.mxu0 0.0
    %5631 = vmatprep.subr.mxu0 0.0
    %5632 = vmatpush1.msra.mxu0 0.0
    %5633 = vmatprep.subr.mxu0 0.0
    %5634 = vmatpush1.msra.mxu0 0.0
    %5635 = vmatprep.mubr.f32.mxu0 0.0
    %5636 = vmatmul.mubr.f32.gmra.mrb[0].mxu0 %v5569
    %v5637 = vpop.f32.mrb[0].mxu0
    %v5638 = vadd.f32 0.0, %v5637
    %v5639 = vpop.f32.mrb[0].mxu0
    %5640 = vdwg.mxu0
    %v5641 = vadd.f32 %v5565, %v5638
    %v5643 = vsel %vm249, %v5406, 0
    %5645 = vmatprep.subr.mxu0 0.0
    %5646 = vmatpush1.msra.mxu0 %v5414
    %5647 = vmatprep.subr.mxu0 0.0
    %5648 = vmatpush1.msra.mxu0 %v5415
    %5649 = vmatprep.subr.mxu0 0.0
    %5650 = vmatpush1.msra.mxu0 %v5416
    %5651 = vmatprep.subr.mxu0 0.0
    %5652 = vmatpush1.msra.mxu0 %v5417
    %5653 = vmatprep.subr.mxu0 0.0
    %5654 = vmatpush1.msra.mxu0 0.0
    %5655 = vmatprep.subr.mxu0 0.0
    %5656 = vmatpush1.msra.mxu0 0.0
    %5657 = vmatprep.subr.mxu0 0.0
    %5658 = vmatpush1.msra.mxu0 0.0
    %5659 = vmatprep.subr.mxu0 0.0
    %5660 = vmatpush1.msra.mxu0 0.0
    %5661 = vmatprep.subr.mxu0 0.0
    %5662 = vmatpush1.msra.mxu0 0.0
    %5663 = vmatprep.subr.mxu0 0.0
    %5664 = vmatpush1.msra.mxu0 0.0
    %5665 = vmatprep.subr.mxu0 0.0
    %5666 = vmatpush1.msra.mxu0 0.0
    %5667 = vmatprep.subr.mxu0 0.0
    %5668 = vmatpush1.msra.mxu0 0.0
    %5669 = vmatprep.subr.mxu0 0.0
    %5670 = vmatpush1.msra.mxu0 0.0
    %5671 = vmatprep.subr.mxu0 0.0
    %5672 = vmatpush1.msra.mxu0 0.0
    %5673 = vmatprep.subr.mxu0 0.0
    %5674 = vmatpush1.msra.mxu0 0.0
    %5675 = vmatprep.subr.mxu0 0.0
    %5676 = vmatpush1.msra.mxu0 0.0
    %5677 = vmatprep.subr.mxu0 0.0
    %5678 = vmatpush1.msra.mxu0 0.0
    %5679 = vmatprep.subr.mxu0 0.0
    %5680 = vmatpush1.msra.mxu0 0.0
    %5681 = vmatprep.subr.mxu0 0.0
    %5682 = vmatpush1.msra.mxu0 0.0
    %5683 = vmatprep.subr.mxu0 0.0
    %5684 = vmatpush1.msra.mxu0 0.0
    %5685 = vmatprep.subr.mxu0 0.0
    %5686 = vmatpush1.msra.mxu0 0.0
    %5687 = vmatprep.subr.mxu0 0.0
    %5688 = vmatpush1.msra.mxu0 0.0
    %5689 = vmatprep.subr.mxu0 0.0
    %5690 = vmatpush1.msra.mxu0 0.0
    %5691 = vmatprep.subr.mxu0 0.0
    %5692 = vmatpush1.msra.mxu0 0.0
    %5693 = vmatprep.subr.mxu0 0.0
    %5694 = vmatpush1.msra.mxu0 0.0
    %5695 = vmatprep.subr.mxu0 0.0
    %5696 = vmatpush1.msra.mxu0 0.0
    %5697 = vmatprep.subr.mxu0 0.0
    %5698 = vmatpush1.msra.mxu0 0.0
    %5699 = vmatprep.subr.mxu0 0.0
    %5700 = vmatpush1.msra.mxu0 0.0
    %5701 = vmatprep.subr.mxu0 0.0
    %5702 = vmatpush1.msra.mxu0 0.0
    %5703 = vmatprep.subr.mxu0 0.0
    %5704 = vmatpush1.msra.mxu0 0.0
    %5705 = vmatprep.subr.mxu0 0.0
    %5706 = vmatpush1.msra.mxu0 0.0
    %5707 = vmatprep.subr.mxu0 0.0
    %5708 = vmatpush1.msra.mxu0 0.0
    %5709 = vmatprep.mubr.f32.mxu0 0.0
    %5710 = vmatmul.mubr.f32.gmra.mrb[0].mxu0 %v5643
    %v5711 = vpop.f32.mrb[0].mxu0
    %v5712 = vadd.f32 0.0, %v5711
    %v5713 = vpop.f32.mrb[0].mxu0
    %5714 = vdwg.mxu0
    %v5715 = vadd.f32 %v5641, %v5712
    %v5716 = vld [vmem:[%s61] sm:$0x1]
    %v5718 = vlaneseq
    %v5719 = vshrl.u32 %v5718, 7
    %v5720 = vsub.s32 0, %v5719
    %v5721 = vrot.slane %v5716, %v5720
    %v5723 = vadd.f32 %v5715, %v5721
    %vm5724 = vcmask 17408
    %5725 = vst.msk [vmem:[#allocation2] sm:$0x3] %vm5724, %v5723
    // Predicated region
    $region126: #{forward.1} parent=1 // pred_check
      _
    $region127: #{forward.1} parent=1 // pred_check_branch
      %5727 = sbr.rel (0) target = $region129
    $region128: #{forward.1} parent=1 // pred_region
      %s5729 = ssub.s32 32, 32
      %5730 = vsyncadd [#allocation3], %s5729
      %s5732 = sshll.u32 [#allocation2], 4
      %s5733 = int_to_ptr.vmem [resolvable:$true] %s5732
      %5735 = dma.vmem_to_hbm [thread:$0]  %s5733, 32, %s63, [#allocation3]
    $region129: #{forward.1} parent=1 // pred_fallthru
      _
    // Predicated region
    $region130: #{forward.1} parent=1 // pred_check
      _
    $region131: #{forward.1} parent=1 // pred_check_branch
      %5737 = sbr.rel (0) target = $region133
    $region132: #{forward.1} parent=1 // pred_region
      %5738 = dma.done [#allocation3], 32
    $region133: #{forward.1} parent=1 // pred_fallthru
      _
    %5739 = vsyncpa [#allocation3], 1

</llo_original>
